<compile_context>
chip_gen: v7x
topology: tpu7x:2x2x1
jax: 0.10.0
libtpu: 0.0.40
codegen_flags: <defaults>
</compile_context>

<pallas_src>
import jax
import jax.numpy as jnp
import numpy as np
from jax.experimental import pallas as pl
from jax.experimental.pallas import tpu as pltpu

TWO_PI = 2.0 * np.pi


def modulation_kernel(phase_ref, xre_ref, xim_ref, ore_ref, oim_ref):
    # Trig + elementwise complex multiply; all hidden under the block DMA
    # on v5e/v6e (mem-bound regime).
    theta = TWO_PI * phase_ref[...]
    c = jnp.cos(theta)
    s = jnp.sin(theta)
    xr = xre_ref[...]
    xi = xim_ref[...]
    # (xr + i*xi) * (c + i*s)
    ore_ref[...] = xr * c - xi * s
    oim_ref[...] = xr * s + xi * c


def _tpu_memory_params():
    """Generation-aware (vmem_limit_bytes, target_block_bytes_per_plane)."""
    vmem_cap = None
    try:
        info = pltpu.get_tpu_info()
        cap = getattr(info, "vmem_capacity_bytes", None)
        if cap is not None and int(cap) > 0:
            vmem_cap = int(cap)
    except Exception:
        vmem_cap = None
    if vmem_cap is None:
        kind = ""
        try:
            kind = jax.devices()[0].device_kind.lower()
        except Exception:
            pass
        # v7x has 64 MiB VMEM per TensorCore; v4/v5e/v6e have 128 MiB.
        vmem_cap = (64 << 20) if "v7" in kind else (128 << 20)

    # Leave headroom under physical VMEM: <= 75% of capacity, never above
    # 100 MiB, and never below 32 MiB (v5e's scoped default is only 16 MiB).
    vmem_limit = int(max(32 << 20, min(100 << 20, (vmem_cap * 3) // 4)))
    # 5 planes (phase, x_re, x_im, out_re, out_im) x 2 pipeline buffers must
    # fit with margin: tile <= vmem_limit / 12  (=> 8 MiB on v5e/v6e, 4 MiB on v7x).
    target_block_bytes = int(max(1 << 20, min(8 << 20, vmem_limit // 12)))
    return vmem_limit, target_block_bytes


def _choose_tiles(rows, cols, target_block_bytes):
    """Pick (tm, tn) for float32 planes of shape (rows, cols)."""
    bytes_per = 4
    # tn: full width if an 8-row tile fits the per-plane budget, otherwise the
    # largest multiple of 128 such that 8 * tn * 4 <= budget.
    max_tn = max(128, (target_block_bytes // (8 * bytes_per)) // 128 * 128)
    tn = cols if cols <= max_tn else max_tn  # callers guarantee cols % 128 == 0 here

    # tm: as many rows as fit the per-plane budget (multiple of 8, or full dim).
    tm_budget = max(8, (target_block_bytes // (tn * bytes_per)) // 8 * 8)
    tm = rows if tm_budget >= rows else tm_budget

    # Never let the grid collapse to a single step: with >= 2 steps the
    # "parallel" semantics can shard across TensorCores (v7x has 2) and the
    # pipeline can overlap DMA with compute.
    if rows > 8 and pl.cdiv(rows, tm) * pl.cdiv(cols, tn) < 2:
        tm = min(tm, 8 * pl.cdiv(pl.cdiv(rows, 2), 8))
    return tm, tn


def modulation_layer_forward(x_re, x_im, phase_values, *,
                             target_block_bytes=None, vmem_limit_bytes=None):
    """Apply exp(j*2*pi*phase) modulation elementwise; returns (out_re, out_im)."""
    M, N = phase_values.shape
    assert x_re.shape == (M, N) and x_im.shape == (M, N)

    phase_values = phase_values.astype(jnp.float32)
    x_re = x_re.astype(jnp.float32)
    x_im = x_im.astype(jnp.float32)

    auto_vmem, auto_block = _tpu_memory_params()
    if vmem_limit_bytes is None:
        vmem_limit_bytes = auto_vmem
    if target_block_bytes is None:
        target_block_bytes = auto_block

    total = M * N
    pad = 0
    if N % 128 == 0:
        # Already lane-dense; keep native layout (avoids a relayout copy).
        rows, cols = M, N
        planes = (phase_values, x_re, x_im)
    else:
        # Purely elementwise op: relabel (and pad once if needed) into a
        # lane-dense (rows, cols) slab with cols a multiple of 128 so the
        # output stores are full-width vst instead of masked vst.msk.
        cols = 0
        for cand in (1024, 512, 256, 128):
            if total % cand == 0:
                cols = cand
                break
        if cols == 0:
            cols = 1024 if total >= 8 * 1024 else 128
            pad = (-total) % cols
        rows = (total + pad) // cols

        def to_slab(a):
            flat = a.reshape(total)
            if pad:
                flat = jnp.pad(flat, (0, pad))
            return flat.reshape(rows, cols)

        planes = tuple(to_slab(a) for a in (phase_values, x_re, x_im))

    tm, tn = _choose_tiles(rows, cols, target_block_bytes)
    grid = (pl.cdiv(rows, tm), pl.cdiv(cols, tn))
    spec = pl.BlockSpec((tm, tn), lambda i, j: (i, j))

    n_elem = rows * cols
    cost = pl.CostEstimate(flops=8 * n_elem,
                           transcendentals=2 * n_elem,
                           bytes_accessed=5 * 4 * n_elem)

    out_re, out_im = pl.pallas_call(
        modulation_kernel,
        out_shape=(jax.ShapeDtypeStruct((rows, cols), jnp.float32),
                   jax.ShapeDtypeStruct((rows, cols), jnp.float32)),
        grid=grid,
        in_specs=[spec, spec, spec],
        out_specs=(spec, spec),
        compiler_params=pltpu.CompilerParams(
            dimension_semantics=("parallel", "parallel"),
            vmem_limit_bytes=int(vmem_limit_bytes)),
        cost_estimate=cost,
    )(*planes)

    if (rows, cols) != (M, N):
        def from_slab(a):
            flat = a.reshape(rows * cols)
            if pad:
                flat = flat[:total]
            return flat.reshape(M, N)

        out_re = from_slab(out_re)
        out_im = from_slab(out_im)
    return out_re, out_im


if __name__ == "__main__":
    # Shapes consistent with the module: M = 250 (from the spec), pick N = 256.
    M_, N_ = 250, 256

    key = jax.random.PRNGKey(0)
    k_phase, k_re, k_im = jax.random.split(key, 3)

    # deterministic "parameter" init: uniform(a=0, b=2), matching nn.init.uniform_
    phase_values = jax.random.uniform(
        k_phase, (M_, N_), dtype=jnp.float32, minval=0.0, maxval=2.0)
    # deterministic complex input (real + imag planes)
    x_re = jax.random.normal(k_re, (M_, N_), dtype=jnp.float32)
    x_im = jax.random.normal(k_im, (M_, N_), dtype=jnp.float32)

    out_re, out_im = modulation_layer_forward(x_re, x_im, phase_values)
    jax.block_until_ready((out_re, out_im))

    # Host reference in complex128 (matches PyTorch's promotion).
    ph = np.asarray(phase_values, dtype=np.float64)
    ref = (np.asarray(x_re, np.float64) + 1j * np.asarray(x_im, np.float64)) \
        * np.exp(1j * TWO_PI * ph)
    np.testing.assert_allclose(np.asarray(out_re), ref.real, atol=1e-4, rtol=1e-4)
    np.testing.assert_allclose(np.asarray(out_im), ref.imag, atol=1e-4, rtol=1e-4)

    # Also exercise the lane-dense-slab path (N not a multiple of 128).
    M2, N2 = 13, 100
    k2a, k2b, k2c = jax.random.split(jax.random.PRNGKey(1), 3)
    p2 = jax.random.uniform(k2a, (M2, N2), dtype=jnp.float32, minval=0.0, maxval=2.0)
    r2 = jax.random.normal(k2b, (M2, N2), dtype=jnp.float32)
    i2 = jax.random.normal(k2c, (M2, N2), dtype=jnp.float32)
    o2r, o2i = modulation_layer_forward(r2, i2, p2)
    jax.block_until_ready((o2r, o2i))
    ref2 = (np.asarray(r2, np.float64) + 1j * np.asarray(i2, np.float64)) \
        * np.exp(1j * TWO_PI * np.asarray(p2, np.float64))
    np.testing.assert_allclose(np.asarray(o2r), ref2.real, atol=1e-4, rtol=1e-4)
    np.testing.assert_allclose(np.asarray(o2i), ref2.imag, atol=1e-4, rtol=1e-4)

    print("KERNEL_OK")
</pallas_src>

<mosaic_0001>
module attributes {stable_mosaic.version = 11 : i64} {
  func.func @modulation_kernel(%arg0: i32, %arg1: i32, %arg2: memref<128x256xf32, #tpu.memory_space<vmem>>, %arg3: memref<128x256xf32, #tpu.memory_space<vmem>>, %arg4: memref<128x256xf32, #tpu.memory_space<vmem>>, %arg5: memref<128x256xf32, #tpu.memory_space<vmem>>, %arg6: memref<128x256xf32, #tpu.memory_space<vmem>>) attributes {dimension_semantics = [#tpu.dimension_semantics<parallel>, #tpu.dimension_semantics<parallel>], iteration_bounds = array<i64: 2, 1>, scalar_prefetch = 0 : i64, scratch_operands = 0 : i64, tpu.core_type = #tpu.core_type<tc>, window_params = [{transform_indices = @transform_0, window_bounds = array<i64: 128, 256>}, {transform_indices = @transform_1, window_bounds = array<i64: 128, 256>}, {transform_indices = @transform_2, window_bounds = array<i64: 128, 256>}, {transform_indices = @transform_3, window_bounds = array<i64: 128, 256>}, {transform_indices = @transform_4, window_bounds = array<i64: 128, 256>}]} {
    %c0 = arith.constant 0 : index
    %c0_0 = arith.constant 0 : index
    %0 = vector.load %arg2[%c0, %c0_0] : memref<128x256xf32, #tpu.memory_space<vmem>>, vector<128x256xf32>
    %cst = arith.constant 6.28318548 : f32
    %1 = vector.broadcast %cst : f32 to vector<128x256xf32>
    %2 = arith.mulf %1, %0 : vector<128x256xf32>
    %3 = math.cos %2 : vector<128x256xf32>
    %4 = math.sin %2 : vector<128x256xf32>
    %c0_1 = arith.constant 0 : index
    %c0_2 = arith.constant 0 : index
    %5 = vector.load %arg3[%c0_1, %c0_2] : memref<128x256xf32, #tpu.memory_space<vmem>>, vector<128x256xf32>
    %c0_3 = arith.constant 0 : index
    %c0_4 = arith.constant 0 : index
    %6 = vector.load %arg4[%c0_3, %c0_4] : memref<128x256xf32, #tpu.memory_space<vmem>>, vector<128x256xf32>
    %7 = arith.mulf %5, %3 : vector<128x256xf32>
    %8 = arith.mulf %6, %4 : vector<128x256xf32>
    %9 = arith.subf %7, %8 : vector<128x256xf32>
    %c0_5 = arith.constant 0 : index
    %c0_6 = arith.constant 0 : index
    %10 = vector.load %arg5[%c0_5, %c0_6] : memref<128x256xf32, #tpu.memory_space<vmem>>, vector<128x256xf32>
    tpu.vector_store %arg5[%c0_5, %c0_6], %9 {strides = array<i32>} : memref<128x256xf32, #tpu.memory_space<vmem>>, vector<128x256xf32>,
    %11 = arith.mulf %5, %4 : vector<128x256xf32>
    %12 = arith.mulf %6, %3 : vector<128x256xf32>
    %13 = arith.addf %11, %12 : vector<128x256xf32>
    %c0_7 = arith.constant 0 : index
    %c0_8 = arith.constant 0 : index
    %14 = vector.load %arg6[%c0_7, %c0_8] : memref<128x256xf32, #tpu.memory_space<vmem>>, vector<128x256xf32>
    tpu.vector_store %arg6[%c0_7, %c0_8], %13 {strides = array<i32>} : memref<128x256xf32, #tpu.memory_space<vmem>>, vector<128x256xf32>,
    return
  }
  func.func @transform_0(%arg0: i32, %arg1: i32) -> (i32, i32) {
    %c0_i32 = arith.constant 0 : i32
    return %arg0, %arg1 : i32, i32
  }
  func.func @transform_1(%arg0: i32, %arg1: i32) -> (i32, i32) {
    %c0_i32 = arith.constant 0 : i32
    return %arg0, %arg1 : i32, i32
  }
  func.func @transform_2(%arg0: i32, %arg1: i32) -> (i32, i32) {
    %c0_i32 = arith.constant 0 : i32
    return %arg0, %arg1 : i32, i32
  }
  func.func @transform_3(%arg0: i32, %arg1: i32) -> (i32, i32) {
    %c0_i32 = arith.constant 0 : i32
    return %arg0, %arg1 : i32, i32
  }
  func.func @transform_4(%arg0: i32, %arg1: i32) -> (i32, i32) {
    %c0_i32 = arith.constant 0 : i32
    return %arg0, %arg1 : i32, i32
  }
}

</mosaic_0001>

<llo_original>
// kernel: tpu_custom_call.1
$region0: #{tpu_custom_call.1}
  #allocation0 [shape = 'u32[]', space=smem, size = 0x4, offset = 0x4, fixed_abs, tag = 'smem constant byte address 0x4 - core index']
  #allocation1 [shape = 'u32[144,128]{1,0:T(1,128)}', space=vmem, size = 0x12000, scoped, tag = 'internal scratch']
  %s0 = inlined_call_operand.hbm [shape: f32[250,256], index: 0, kind: input, shape index: {}]
  %s1 = inlined_call_operand.hbm [shape: f32[250,256], index: 1, kind: input, shape index: {}]
  %s2 = inlined_call_operand.hbm [shape: f32[250,256], index: 2, kind: input, shape index: {}]
  %s3 = inlined_call_operand.hbm [shape: f32[250,256], index: 3, kind: output, shape index: {0}]
  %s4 = inlined_call_operand.hbm [shape: f32[250,256], index: 4, kind: output, shape index: {1}]
  %5 = xla_tuple %s3, %s4
  %s6 = sld [smem:[#allocation0]]
  $region65: #{tpu_custom_call.1} parent=0
    _
  %s8 = ssub.s32 1, %s6
  %s9 = scalar_select 0, %s8, %s6
  $region1: #{tpu_custom_call.1} parent=0
    #allocation2 [shape = 'u8[262144]{0}', space=vmem, size = 0x40000, scoped, tag = 'input window, operand 0']
    #allocation3 [shape = 's32[2]{0}', space=sflag, size = 0x8, scoped, tag = 'scoped memory for tpu_custom_call.1']
    #allocation4 [shape = 's32[2]{0}', space=sflag, size = 0x8, scoped, tag = 'scoped memory for tpu_custom_call.1']
    #allocation5 [shape = 'u8[262144]{0}', space=vmem, size = 0x40000, scoped, tag = 'input window, operand 1']
    #allocation6 [shape = 's32[2]{0}', space=sflag, size = 0x8, scoped, tag = 'scoped memory for tpu_custom_call.1']
    #allocation7 [shape = 'u8[262144]{0}', space=vmem, size = 0x40000, scoped, tag = 'input window, operand 2']
    #allocation8 [shape = 'u8[262144]{0}', space=vmem, size = 0x40000, scoped, tag = 'output window, operand 0']
    #allocation9 [shape = 'u8[262144]{0}', space=vmem, size = 0x40000, scoped, tag = 'output window, operand 1']
    #allocation10 [shape = 's32[2]{0}', space=sflag, size = 0x8, scoped, tag = 'scoped memory for tpu_custom_call.1']
    %10 = vsyncpa [#allocation3], 0
    %s11 = scalar_lea.sflag [#allocation3], 1
    %12 = vsyncpa %s11, 0
    %13 = vsyncpa [#allocation6], 0
    %s14 = scalar_lea.sflag [#allocation6], 1
    %15 = vsyncpa %s14, 0
    %16 = vsyncpa [#allocation4], 0
    %s17 = scalar_lea.sflag [#allocation4], 1
    %18 = vsyncpa %s17, 0
    %19 = vsyncpa [#allocation10], 0
    %s20 = scalar_lea.sflag [#allocation10], 1
    %21 = vsyncpa %s20, 0
    loop: start=0, step=1, limit=4
    $region2: #{tpu_custom_call.1} parent=1 // loop_pre_header
      _
    $region3: #{tpu_custom_call.1} parent=1 // loop_header
      %s23 = sphi 0, %s27
      %p24 = scmp.ge.s32.totalorder %s23, 4
      %s30 = sphi 0, %s42
      %s31 = sphi 0, %s38
      %s32 = sphi 0, %s30
      %s33 = sphi 0, %s31
      %s34 = sphi 0, %s32
      %s35 = sphi 0, %s33
      %s47 = sphi 0, %s49
      %s50 = sphi 0, %s47
      %s51 = sphi 0, %s50
      %s67 = sphi 0, %s51
      %s75 = sphi 0, %s77
      %s78 = sphi 0, %s75
      %s79 = sphi 0, %s78
      %s95 = sphi 0, %s79
      %s103 = sphi 0, %s105
      %s106 = sphi 0, %s103
      %s107 = sphi 0, %s106
      %s123 = sphi 0, %s107
      %s131 = sphi 0, %s133
      %s134 = sphi 0, %s131
      %s135 = sphi 0, %s134
      %s151 = sphi 0, %s135
      %s159 = sphi 0, %s161
      %s162 = sphi 0, %s159
      %s163 = sphi 0, %s162
      %s179 = sphi 0, %s163
    $region4: #{tpu_custom_call.1} parent=1 // loop_header_branch
      %26 = sbr.rel (%p24) target = $region8
    $region5: #{tpu_custom_call.1} parent=1 // loop_body
      %s28 = ssub.s32 %s23, 1
      %s29 = ssub.s32 %s23, 2
      %s36 = sadd.s32 1, %s31
      %p37 = scmp.ge.s32.totalorder %s36, 1
      %s38 = scalar_select %p37, 0, %s36
      %s39 = sadd.s32 1, %s30
      %s40 = scalar_select %p37, %s39, %s30
      %p41 = scmp.ge.s32.totalorder %s40, 2
      %s42 = scalar_select %p41, 0, %s40
      %s43 = ssub.s32 %s30, %s42
      %s44 = ssub.s32 %s31, %s38
      %s45 = sor.u32 %s43, %s44
      %p46 = scmp.eq.s32.totalorder %s45, 0
      %s48 = sadd.s32 %s47, 1
      %s49 = scalar_select %p46, %s47, %s48
      %p52 = pneg %p46
      %p53 = scmp.eq.s32.totalorder %s23, 1
      %p54 = por %p52, %p53
      %p55 = scmp.ne.s32.totalorder %s47, %s50
      %p56 = scmp.eq.s32.totalorder %s23, 0
      %p57 = por %p55, %p56
      %p58 = scmp.ne.s32.totalorder %s47, %s50
      %p59 = scmp.eq.s32.totalorder %s28, 1
      %p60 = por %p58, %p59
      %p61 = scmp.ne.s32.totalorder %s50, %s51
      %p62 = scmp.eq.s32.totalorder %s28, 0
      %p63 = por %p61, %p62
      %p64 = scmp.ne.s32.totalorder %s50, %s51
      %p65 = scmp.eq.s32.totalorder %s29, 1
      %p66 = por %p64, %p65
      %p68 = scmp.ne.s32.totalorder %s51, %s67
      %p69 = scmp.eq.s32.totalorder %s29, 0
      %p70 = por %p68, %p69
      %s71 = ssub.s32 %s30, %s42
      %s72 = ssub.s32 %s31, %s38
      %s73 = sor.u32 %s71, %s72
      %p74 = scmp.eq.s32.totalorder %s73, 0
      %s76 = sadd.s32 %s75, 1
      %s77 = scalar_select %p74, %s75, %s76
      %p80 = pneg %p74
      %p81 = scmp.eq.s32.totalorder %s23, 1
      %p82 = por %p80, %p81
      %p83 = scmp.ne.s32.totalorder %s75, %s78
      %p84 = scmp.eq.s32.totalorder %s23, 0
      %p85 = por %p83, %p84
      %p86 = scmp.ne.s32.totalorder %s75, %s78
      %p87 = scmp.eq.s32.totalorder %s28, 1
      %p88 = por %p86, %p87
      %p89 = scmp.ne.s32.totalorder %s78, %s79
      %p90 = scmp.eq.s32.totalorder %s28, 0
      %p91 = por %p89, %p90
      %p92 = scmp.ne.s32.totalorder %s78, %s79
      %p93 = scmp.eq.s32.totalorder %s29, 1
      %p94 = por %p92, %p93
      %p96 = scmp.ne.s32.totalorder %s79, %s95
      %p97 = scmp.eq.s32.totalorder %s29, 0
      %p98 = por %p96, %p97
      %s99 = ssub.s32 %s30, %s42
      %s100 = ssub.s32 %s31, %s38
      %s101 = sor.u32 %s99, %s100
      %p102 = scmp.eq.s32.totalorder %s101, 0
      %s104 = sadd.s32 %s103, 1
      %s105 = scalar_select %p102, %s103, %s104
      %p108 = pneg %p102
      %p109 = scmp.eq.s32.totalorder %s23, 1
      %p110 = por %p108, %p109
      %p111 = scmp.ne.s32.totalorder %s103, %s106
      %p112 = scmp.eq.s32.totalorder %s23, 0
      %p113 = por %p111, %p112
      %p114 = scmp.ne.s32.totalorder %s103, %s106
      %p115 = scmp.eq.s32.totalorder %s28, 1
      %p116 = por %p114, %p115
      %p117 = scmp.ne.s32.totalorder %s106, %s107
      %p118 = scmp.eq.s32.totalorder %s28, 0
      %p119 = por %p117, %p118
      %p120 = scmp.ne.s32.totalorder %s106, %s107
      %p121 = scmp.eq.s32.totalorder %s29, 1
      %p122 = por %p120, %p121
      %p124 = scmp.ne.s32.totalorder %s107, %s123
      %p125 = scmp.eq.s32.totalorder %s29, 0
      %p126 = por %p124, %p125
      %s127 = ssub.s32 %s30, %s42
      %s128 = ssub.s32 %s31, %s38
      %s129 = sor.u32 %s127, %s128
      %p130 = scmp.eq.s32.totalorder %s129, 0
      %s132 = sadd.s32 %s131, 1
      %s133 = scalar_select %p130, %s131, %s132
      %p136 = pneg %p130
      %p137 = scmp.eq.s32.totalorder %s23, 1
      %p138 = por %p136, %p137
      %p139 = scmp.ne.s32.totalorder %s131, %s134
      %p140 = scmp.eq.s32.totalorder %s23, 0
      %p141 = por %p139, %p140
      %p142 = scmp.ne.s32.totalorder %s131, %s134
      %p143 = scmp.eq.s32.totalorder %s28, 1
      %p144 = por %p142, %p143
      %p145 = scmp.ne.s32.totalorder %s134, %s135
      %p146 = scmp.eq.s32.totalorder %s28, 0
      %p147 = por %p145, %p146
      %p148 = scmp.ne.s32.totalorder %s134, %s135
      %p149 = scmp.eq.s32.totalorder %s29, 1
      %p150 = por %p148, %p149
      %p152 = scmp.ne.s32.totalorder %s135, %s151
      %p153 = scmp.eq.s32.totalorder %s29, 0
      %p154 = por %p152, %p153
      %s155 = ssub.s32 %s30, %s42
      %s156 = ssub.s32 %s31, %s38
      %s157 = sor.u32 %s155, %s156
      %p158 = scmp.eq.s32.totalorder %s157, 0
      %s160 = sadd.s32 %s159, 1
      %s161 = scalar_select %p158, %s159, %s160
      %p164 = pneg %p158
      %p165 = scmp.eq.s32.totalorder %s23, 1
      %p166 = por %p164, %p165
      %p167 = scmp.ne.s32.totalorder %s159, %s162
      %p168 = scmp.eq.s32.totalorder %s23, 0
      %p169 = por %p167, %p168
      %p170 = scmp.ne.s32.totalorder %s159, %s162
      %p171 = scmp.eq.s32.totalorder %s28, 1
      %p172 = por %p170, %p171
      %p173 = scmp.ne.s32.totalorder %s162, %s163
      %p174 = scmp.eq.s32.totalorder %s28, 0
      %p175 = por %p173, %p174
      %p176 = scmp.ne.s32.totalorder %s162, %s163
      %p177 = scmp.eq.s32.totalorder %s29, 1
      %p178 = por %p176, %p177
      %p180 = scmp.ne.s32.totalorder %s163, %s179
      %p181 = scmp.eq.s32.totalorder %s29, 0
      %p182 = por %p180, %p181
      %p183 = scmp.le.s32.totalorder 1, %s23
      %p184 = scmp.lt.s32.totalorder %s23, 3
      %p185 = pnand %p183, %p184
      %p186 = pneg %p185
      // Predicated region
      $region9: #{tpu_custom_call.1} parent=5 // pred_check
        _
      $region10: #{tpu_custom_call.1} parent=5 // pred_check_branch
        %188 = sbr.rel (%p185) target = $region12
      $region11: #{tpu_custom_call.1} parent=5 // pred_region
        %s189 = ssub.s32 %s23, 1
      $region12: #{tpu_custom_call.1} parent=5 // pred_fallthru
        _
      %p190 = scmp.lt.s32.totalorder %s23, 2
      // Predicated region
      $region13: #{tpu_custom_call.1} parent=5 // pred_check
        %p191 = pneg %p190
      $region14: #{tpu_custom_call.1} parent=5 // pred_check_branch
        %193 = sbr.rel (%p191) target = $region16
      $region15: #{tpu_custom_call.1} parent=5 // pred_region
        // Predicated region
        $region17: #{tpu_custom_call.1} parent=15 // pred_check
          %p194 = pneg %p57
        $region18: #{tpu_custom_call.1} parent=15 // pred_check_branch
          %196 = sbr.rel (%p194) target = $region20
        $region19: #{tpu_custom_call.1} parent=15 // pred_region
          %s197 = sand.u32 %s47, 1
          %s198 = scalar_lea.sflag [#allocation3], %s197
          %s199 = sand.u32 %s47, 1
          %s200 = smul.addr %s199, 256
          %s201 = scalar_lea.vmem [#allocation2], %s200
          %s202 = smul.u32 16, %s30
          %s203 = smul.u32 2, %s31
          %s205 = ssub.s32 4096, 4096
          %206 = vsyncadd %s198, %s205
          %s207 = smul.addr %s202, 2
          %s208 = sadd.s32 %s203, %s207
          %s209 = smul.addr %s208, 128
          %s210 = scalar_lea.hbm %s0, %s209
          %s211 = sshll.u32 %s201, 4
          %s212 = int_to_ptr.vmem [resolvable:$true] %s211
          %217 = dma.hbm_to_vmem [thread:$0]  %s210, 4096, %s212, %s198, 256, 256, 16
        $region20: #{tpu_custom_call.1} parent=15 // pred_fallthru
          _
        // Predicated region
        $region21: #{tpu_custom_call.1} parent=15 // pred_check
          %p218 = pneg %p85
        $region22: #{tpu_custom_call.1} parent=15 // pred_check_branch
          %220 = sbr.rel (%p218) target = $region24
        $region23: #{tpu_custom_call.1} parent=15 // pred_region
          %s221 = sand.u32 %s23, 1
          %s222 = scalar_lea.sflag [#allocation6], %s221
          %s223 = sand.u32 %s75, 1
          %s224 = smul.addr %s223, 256
          %s225 = scalar_lea.vmem [#allocation5], %s224
          %s226 = smul.u32 16, %s30
          %s227 = smul.u32 2, %s31
          %s229 = ssub.s32 4096, 4096
          %230 = vsyncadd %s222, %s229
          %s231 = smul.addr %s226, 2
          %s232 = sadd.s32 %s227, %s231
          %s233 = smul.addr %s232, 128
          %s234 = scalar_lea.hbm %s1, %s233
          %s235 = sshll.u32 %s225, 4
          %s236 = int_to_ptr.vmem [resolvable:$true] %s235
          %241 = dma.hbm_to_vmem [thread:$0]  %s234, 4096, %s236, %s222, 256, 256, 16
        $region24: #{tpu_custom_call.1} parent=15 // pred_fallthru
          _
        // Predicated region
        $region25: #{tpu_custom_call.1} parent=15 // pred_check
          %p242 = pneg %p113
        $region26: #{tpu_custom_call.1} parent=15 // pred_check_branch
          %244 = sbr.rel (%p242) target = $region28
        $region27: #{tpu_custom_call.1} parent=15 // pred_region
          %s245 = sand.u32 %s23, 1
          %s246 = scalar_lea.sflag [#allocation6], %s245
          %s247 = sand.u32 %s103, 1
          %s248 = smul.addr %s247, 256
          %s249 = scalar_lea.vmem [#allocation7], %s248
          %s250 = smul.u32 16, %s30
          %s251 = smul.u32 2, %s31
          %s253 = ssub.s32 4096, 4096
          %254 = vsyncadd %s246, %s253
          %s255 = smul.addr %s250, 2
          %s256 = sadd.s32 %s251, %s255
          %s257 = smul.addr %s256, 128
          %s258 = scalar_lea.hbm %s2, %s257
          %s259 = sshll.u32 %s249, 4
          %s260 = int_to_ptr.vmem [resolvable:$true] %s259
          %265 = dma.hbm_to_vmem [thread:$0]  %s258, 4096, %s260, %s246, 256, 256, 16
        $region28: #{tpu_custom_call.1} parent=15 // pred_fallthru
          _
      $region16: #{tpu_custom_call.1} parent=5 // pred_fallthru
        _
      %p266 = scmp.le.s32.totalorder 1, %s23
      %p267 = scmp.lt.s32.totalorder %s23, 3
      %p268 = pnand %p266, %p267
      %p269 = pneg %p268
      // Predicated region
      $region29: #{tpu_custom_call.1} parent=5 // pred_check
        _
      $region30: #{tpu_custom_call.1} parent=5 // pred_check_branch
        %271 = sbr.rel (%p268) target = $region32
      $region31: #{tpu_custom_call.1} parent=5 // pred_region
        %s272 = ssub.s32 %s23, 1
        %s273 = sand.u32 %s50, 1
        %s274 = scalar_lea.sflag [#allocation3], %s273
        %s275 = sand.u32 %s50, 1
        %s276 = smul.addr %s275, 256
        %s277 = scalar_lea.vmem [#allocation2], %s276
        // Predicated region
        $region33: #{tpu_custom_call.1} parent=31 // pred_check
          %p278 = pneg %p63
        $region34: #{tpu_custom_call.1} parent=31 // pred_check_branch
          %280 = sbr.rel (%p278) target = $region36
        $region35: #{tpu_custom_call.1} parent=31 // pred_region
          %281 = dma.done %s274, 4096
        $region36: #{tpu_custom_call.1} parent=31 // pred_fallthru
          _
        %s282 = sand.u32 %s28, 1
        %s283 = scalar_lea.sflag [#allocation6], %s282
        %s284 = sand.u32 %s78, 1
        %s285 = smul.addr %s284, 256
        %s286 = scalar_lea.vmem [#allocation5], %s285
        // Predicated region
        $region37: #{tpu_custom_call.1} parent=31 // pred_check
          %p287 = pneg %p91
        $region38: #{tpu_custom_call.1} parent=31 // pred_check_branch
          %289 = sbr.rel (%p287) target = $region40
        $region39: #{tpu_custom_call.1} parent=31 // pred_region
          %290 = dma.done %s283, 4096
        $region40: #{tpu_custom_call.1} parent=31 // pred_fallthru
          _
        %s291 = sand.u32 %s28, 1
        %s292 = scalar_lea.sflag [#allocation6], %s291
        %s293 = sand.u32 %s106, 1
        %s294 = smul.addr %s293, 256
        %s295 = scalar_lea.vmem [#allocation7], %s294
        // Predicated region
        $region41: #{tpu_custom_call.1} parent=31 // pred_check
          %p296 = pneg %p119
        $region42: #{tpu_custom_call.1} parent=31 // pred_check_branch
          %298 = sbr.rel (%p296) target = $region44
        $region43: #{tpu_custom_call.1} parent=31 // pred_region
          %299 = dma.done %s292, 4096
        $region44: #{tpu_custom_call.1} parent=31 // pred_fallthru
          _
        %s300 = sand.u32 %s50, 1
        %s301 = scalar_lea.sflag [#allocation3], %s300
        %s302 = sand.u32 %s50, 1
        %s303 = smul.addr %s302, 256
        %s304 = scalar_lea.vmem [#allocation2], %s303
        %p305 = pneg %p63
        %p306 = pneg %p60
        %s307 = sand.u32 %s28, 1
        %s308 = scalar_lea.sflag [#allocation6], %s307
        %s309 = sand.u32 %s78, 1
        %s310 = smul.addr %s309, 256
        %s311 = scalar_lea.vmem [#allocation5], %s310
        %p312 = pneg %p91
        %p313 = pneg %p88
        %s314 = sand.u32 %s28, 1
        %s315 = scalar_lea.sflag [#allocation6], %s314
        %s316 = sand.u32 %s106, 1
        %s317 = smul.addr %s316, 256
        %s318 = scalar_lea.vmem [#allocation7], %s317
        %p319 = pneg %p119
        %p320 = pneg %p116
        %p321 = pneg %p147
        %p322 = pneg %p144
        %s323 = sand.u32 %s134, 1
        %s324 = scalar_lea.sflag [#allocation4], %s323
        %s325 = sand.u32 %s134, 1
        %s326 = smul.addr %s325, 256
        %s327 = scalar_lea.vmem [#allocation8], %s326
        %p328 = pneg %p175
        %p329 = pneg %p172
        %s330 = sand.u32 %s162, 1
        %s331 = scalar_lea.sflag [#allocation10], %s330
        %s332 = sand.u32 %s162, 1
        %s333 = smul.addr %s332, 256
        %s334 = scalar_lea.vmem [#allocation9], %s333
        %s335 = smul.u32 16, %s32
        %s336 = smul.u32 2, %s33
        %s337 = smul.u32 16, %s32
        %s338 = smul.u32 2, %s33
        %s339 = smul.u32 16, %s32
        %s340 = smul.u32 2, %s33
        %s341 = smul.u32 16, %s32
        %s342 = smul.u32 2, %s33
        %s343 = smul.u32 16, %s32
        %s344 = smul.u32 2, %s33
        %v345 = vld [vmem:[%s277] sm:$0xff]
        %v346 = vld [vmem:[%s277 + $0x8] sm:$0xff]
        %v347 = vld [vmem:[%s277 + $0x10] sm:$0xff]
        %v348 = vld [vmem:[%s277 + $0x18] sm:$0xff]
        %v349 = vld [vmem:[%s277 + $0x20] sm:$0xff]
        %v350 = vld [vmem:[%s277 + $0x28] sm:$0xff]
        %v351 = vld [vmem:[%s277 + $0x30] sm:$0xff]
        %v352 = vld [vmem:[%s277 + $0x38] sm:$0xff]
        %v353 = vld [vmem:[%s277 + $0x40] sm:$0xff]
        %v354 = vld [vmem:[%s277 + $0x48] sm:$0xff]
        %v355 = vld [vmem:[%s277 + $0x50] sm:$0xff]
        %v356 = vld [vmem:[%s277 + $0x58] sm:$0xff]
        %v357 = vld [vmem:[%s277 + $0x60] sm:$0xff]
        %v358 = vld [vmem:[%s277 + $0x68] sm:$0xff]
        %v359 = vld [vmem:[%s277 + $0x70] sm:$0xff]
        %v360 = vld [vmem:[%s277 + $0x78] sm:$0xff]
        %v361 = vld [vmem:[%s277 + $0x80] sm:$0xff]
        %v362 = vld [vmem:[%s277 + $0x88] sm:$0xff]
        %v363 = vld [vmem:[%s277 + $0x90] sm:$0xff]
        %v364 = vld [vmem:[%s277 + $0x98] sm:$0xff]
        %v365 = vld [vmem:[%s277 + $0xa0] sm:$0xff]
        %v366 = vld [vmem:[%s277 + $0xa8] sm:$0xff]
        %v367 = vld [vmem:[%s277 + $0xb0] sm:$0xff]
        %v368 = vld [vmem:[%s277 + $0xb8] sm:$0xff]
        %v369 = vld [vmem:[%s277 + $0xc0] sm:$0xff]
        %v370 = vld [vmem:[%s277 + $0xc8] sm:$0xff]
        %v371 = vld [vmem:[%s277 + $0xd0] sm:$0xff]
        %v372 = vld [vmem:[%s277 + $0xd8] sm:$0xff]
        %v373 = vld [vmem:[%s277 + $0xe0] sm:$0xff]
        %v374 = vld [vmem:[%s277 + $0xe8] sm:$0xff]
        %v375 = vld [vmem:[%s277 + $0xf0] sm:$0xff]
        %v376 = vld [vmem:[%s277 + $0xf8] sm:$0xff]
        %v377 = vmul.f32 %v345, 6.2831855
        %v378 = vmul.f32 %v346, 6.2831855
        %v379 = vmul.f32 %v347, 6.2831855
        %v380 = vmul.f32 %v348, 6.2831855
        %v381 = vmul.f32 %v349, 6.2831855
        %v382 = vmul.f32 %v350, 6.2831855
        %v383 = vmul.f32 %v351, 6.2831855
        %v384 = vmul.f32 %v352, 6.2831855
        %v385 = vmul.f32 %v353, 6.2831855
        %v386 = vmul.f32 %v354, 6.2831855
        %v387 = vmul.f32 %v355, 6.2831855
        %v388 = vmul.f32 %v356, 6.2831855
        %v389 = vmul.f32 %v357, 6.2831855
        %v390 = vmul.f32 %v358, 6.2831855
        %v391 = vmul.f32 %v359, 6.2831855
        %v392 = vmul.f32 %v360, 6.2831855
        %v393 = vmul.f32 %v361, 6.2831855
        %v394 = vmul.f32 %v362, 6.2831855
        %v395 = vmul.f32 %v363, 6.2831855
        %v396 = vmul.f32 %v364, 6.2831855
        %v397 = vmul.f32 %v365, 6.2831855
        %v398 = vmul.f32 %v366, 6.2831855
        %v399 = vmul.f32 %v367, 6.2831855
        %v400 = vmul.f32 %v368, 6.2831855
        %v401 = vmul.f32 %v369, 6.2831855
        %v402 = vmul.f32 %v370, 6.2831855
        %v403 = vmul.f32 %v371, 6.2831855
        %v404 = vmul.f32 %v372, 6.2831855
        %v405 = vmul.f32 %v373, 6.2831855
        %v406 = vmul.f32 %v374, 6.2831855
        %v407 = vmul.f32 %v375, 6.2831855
        %v408 = vmul.f32 %v376, 6.2831855
        %v409 = vand.u32 2147483647, %v377
        %vm410 = vcmp.le.f32.partialorder %v409, 0.7853982
        %vm411 = vcmp.lt.s32.totalorder %v377, 0
        %v412 = vand.u32 %v377, 2139095040
        %v413 = vshrl.u32 %v412, 23
        %v414 = vsub.s32 %v413, 127
        %v415 = vand.u32 2147483647, %v377
        %v416 = vand.u32 %v415, 8388607
        %v417 = vor.u32 %v416, 8388608
        %v418 = vsub.s32 0, %v417
        %v419 = vadd.s32 %v414, 1
        %vm420 = vcmp.gt.s32.totalorder %v419, 0
        %v421 = vsel %vm420, %v419, 0
        %v422 = vshrl.u32 %v421, 5
        %v423 = vand.u32 %v421, 31
        %v424 = vsub.s32 32, %v423
        %v425 = vshrl.u32 683565275, %v424
        %v426 = vshll.u32 683565275, %v423
        %v427 = vshrl.u32 2475754826, %v424
        %v428 = vor.u32 %v426, %v427
        %v429 = vshll.u32 2475754826, %v423
        %v430 = vshrl.u32 2131351028, %v424
        %v431 = vor.u32 %v429, %v430
        %v432 = vshll.u32 2131351028, %v423
        %v433 = vshrl.u32 2102212464, %v424
        %v434 = vor.u32 %v432, %v433
        %v435 = vshll.u32 2102212464, %v423
        %v436 = vshrl.u32 920167782, %v424
        %v437 = vor.u32 %v435, %v436
        %v438 = vshll.u32 920167782, %v423
        %v439 = vshrl.u32 1326507024, %v424
        %v440 = vor.u32 %v438, %v439
        %vm441 = vcmp.lt.s32.totalorder %v422, 1
        %vm442 = vcmp.lt.s32.totalorder %v422, 2
        %vm443 = vcmp.lt.s32.totalorder %v422, 3
        %vm444 = vcmp.lt.s32.totalorder %v422, 4
        %v445 = vsel %vm441, %v425, %v428
        %v446 = vsel %vm444, %v434, 2102212464
        %v447 = vsel %vm443, %v431, %v446
        %v448 = vsel %vm442, %v445, %v447
        %v449 = vsel %vm441, %v428, %v431
        %v450 = vsel %vm444, %v437, 920167782
        %v451 = vsel %vm443, %v434, %v450
        %v452 = vsel %vm442, %v449, %v451
        %v453 = vsel %vm441, %v431, %v434
        %v454 = vsel %vm444, %v440, 1326507024
        %v455 = vsel %vm443, %v437, %v454
        %v456 = vsel %vm442, %v453, %v455
        %v457 = vshll.u32 %v417, 8
        %v458 = vmul.u32.u64.compose %v457, %v456
        %v459 = vextract.low.u32 %v458
        %v460 = vextract.high.u32 %v458
        %v461 = vmul.u32.u64.compose %v457, %v452
        %v462 = vextract.low.u32 %v461
        %v463 = vextract.high.u32 %v461
        %v464 = vmul.u32 %v457, %v448
        %v465 = vadd.s32 %v460, %v462
        %vm466 = vc.u32 %v460, %v462
        %v467 = vadd.s32 %v463, 1
        %v468 = vsel %vm466, %v467, %v463
        %v469 = vadd.s32 %v464, %v468
        %v470 = vadd.s32 %v469, 536870912
        %v471 = vshrl.u32 %v470, 30
        %v472 = vshll.u32 %v471, 30
        %v473 = vsub.s32 %v469, %v472
        %vm474 = vcmp.lt.s32.totalorder %v473, 0
        %v475 = vsub.s32 0, %v473
        %v476 = vsel %vm474, %v475, %v473
        %v477 = vclz %v476
        %v478 = vsub.s32 %v477, 2
        %vm479 = vcmp.gt.s32.totalorder 0, %v478
        %v480 = vsel %vm479, 0, %v478
        %v481 = vsub.s32 32, %v480
        %v482 = vshll.u32 %v473, %v480
        %v483 = vshrl.u32 %v465, %v481
        %v484 = vor.u32 %v482, %v483
        %v485 = vsub.s32 4294967266, %v480
        %v486 = vadd.s32 %v485, 127
        %v487 = vshll.u32 %v486, 23
        %v488 = vor.u32 4788187, %v487
        %v489 = vand.u32 2147483647, %v488
        %v491 = vcvt.s32.f32 %v484
        %v492 = vmul.f32 %v491, %v489
        %v493 = vxor.u32 %v492, 2147483648
        %v494 = vsel %vm411, %v493, %v492
        %v495 = vsub.s32 4, %v471
        %v496 = vsel %vm411, %v495, %v471
        %v497 = vsel %vm410, %v377, %v494
        %v498 = vsel %vm410, 0, %v496
        %v499 = vcosq.f32.pop %v497
        %v500 = vsinq.f32.pop %v497
        %vm501 = vweird.f32 %v377
        %v502 = vand.u32 %v498, 3
        %vm503 = vcmp.lt.s32.totalorder %v502, 2
        %vm504 = vcmp.eq.s32.totalorder %v502, 0
        %v505 = vxor.u32 %v500, 2147483648
        %v506 = vsel %vm504, %v499, %v505
        %vm507 = vcmp.eq.s32.totalorder %v502, 2
        %v508 = vxor.u32 %v499, 2147483648
        %v509 = vsel %vm507, %v508, %v500
        %v510 = vsel %vm503, %v506, %v509
        %v511 = vsel %vm501, nan, %v510
        %v512 = vand.u32 2147483647, %v378
        %vm513 = vcmp.le.f32.partialorder %v512, 0.7853982
        %vm514 = vcmp.lt.s32.totalorder %v378, 0
        %v515 = vand.u32 %v378, 2139095040
        %v516 = vshrl.u32 %v515, 23
        %v517 = vsub.s32 %v516, 127
        %v518 = vand.u32 2147483647, %v378
        %v519 = vand.u32 %v518, 8388607
        %v520 = vor.u32 %v519, 8388608
        %v521 = vsub.s32 0, %v520
        %v522 = vadd.s32 %v517, 1
        %vm523 = vcmp.gt.s32.totalorder %v522, 0
        %v524 = vsel %vm523, %v522, 0
        %v525 = vshrl.u32 %v524, 5
        %v526 = vand.u32 %v524, 31
        %v527 = vsub.s32 32, %v526
        %v528 = vshrl.u32 683565275, %v527
        %v529 = vshll.u32 683565275, %v526
        %v530 = vshrl.u32 2475754826, %v527
        %v531 = vor.u32 %v529, %v530
        %v532 = vshll.u32 2475754826, %v526
        %v533 = vshrl.u32 2131351028, %v527
        %v534 = vor.u32 %v532, %v533
        %v535 = vshll.u32 2131351028, %v526
        %v536 = vshrl.u32 2102212464, %v527
        %v537 = vor.u32 %v535, %v536
        %v538 = vshll.u32 2102212464, %v526
        %v539 = vshrl.u32 920167782, %v527
        %v540 = vor.u32 %v538, %v539
        %v541 = vshll.u32 920167782, %v526
        %v542 = vshrl.u32 1326507024, %v527
        %v543 = vor.u32 %v541, %v542
        %vm544 = vcmp.lt.s32.totalorder %v525, 1
        %vm545 = vcmp.lt.s32.totalorder %v525, 2
        %vm546 = vcmp.lt.s32.totalorder %v525, 3
        %vm547 = vcmp.lt.s32.totalorder %v525, 4
        %v548 = vsel %vm544, %v528, %v531
        %v549 = vsel %vm547, %v537, 2102212464
        %v550 = vsel %vm546, %v534, %v549
        %v551 = vsel %vm545, %v548, %v550
        %v552 = vsel %vm544, %v531, %v534
        %v553 = vsel %vm547, %v540, 920167782
        %v554 = vsel %vm546, %v537, %v553
        %v555 = vsel %vm545, %v552, %v554
        %v556 = vsel %vm544, %v534, %v537
        %v557 = vsel %vm547, %v543, 1326507024
        %v558 = vsel %vm546, %v540, %v557
        %v559 = vsel %vm545, %v556, %v558
        %v560 = vshll.u32 %v520, 8
        %v561 = vmul.u32.u64.compose %v560, %v559
        %v562 = vextract.low.u32 %v561
        %v563 = vextract.high.u32 %v561
        %v564 = vmul.u32.u64.compose %v560, %v555
        %v565 = vextract.low.u32 %v564
        %v566 = vextract.high.u32 %v564
        %v567 = vmul.u32 %v560, %v551
        %v568 = vadd.s32 %v563, %v565
        %vm569 = vc.u32 %v563, %v565
        %v570 = vadd.s32 %v566, 1
        %v571 = vsel %vm569, %v570, %v566
        %v572 = vadd.s32 %v567, %v571
        %v573 = vadd.s32 %v572, 536870912
        %v574 = vshrl.u32 %v573, 30
        %v575 = vshll.u32 %v574, 30
        %v576 = vsub.s32 %v572, %v575
        %vm577 = vcmp.lt.s32.totalorder %v576, 0
        %v578 = vsub.s32 0, %v576
        %v579 = vsel %vm577, %v578, %v576
        %v580 = vclz %v579
        %v581 = vsub.s32 %v580, 2
        %vm582 = vcmp.gt.s32.totalorder 0, %v581
        %v583 = vsel %vm582, 0, %v581
        %v584 = vsub.s32 32, %v583
        %v585 = vshll.u32 %v576, %v583
        %v586 = vshrl.u32 %v568, %v584
        %v587 = vor.u32 %v585, %v586
        %v588 = vsub.s32 4294967266, %v583
        %v589 = vadd.s32 %v588, 127
        %v590 = vshll.u32 %v589, 23
        %v591 = vor.u32 4788187, %v590
        %v592 = vand.u32 2147483647, %v591
        %v594 = vcvt.s32.f32 %v587
        %v595 = vmul.f32 %v594, %v592
        %v596 = vxor.u32 %v595, 2147483648
        %v597 = vsel %vm514, %v596, %v595
        %v598 = vsub.s32 4, %v574
        %v599 = vsel %vm514, %v598, %v574
        %v600 = vsel %vm513, %v378, %v597
        %v601 = vsel %vm513, 0, %v599
        %v602 = vcosq.f32.pop %v600
        %v603 = vsinq.f32.pop %v600
        %vm604 = vweird.f32 %v378
        %v605 = vand.u32 %v601, 3
        %vm606 = vcmp.lt.s32.totalorder %v605, 2
        %vm607 = vcmp.eq.s32.totalorder %v605, 0
        %v608 = vxor.u32 %v603, 2147483648
        %v609 = vsel %vm607, %v602, %v608
        %vm610 = vcmp.eq.s32.totalorder %v605, 2
        %v611 = vxor.u32 %v602, 2147483648
        %v612 = vsel %vm610, %v611, %v603
        %v613 = vsel %vm606, %v609, %v612
        %v614 = vsel %vm604, nan, %v613
        %v615 = vand.u32 2147483647, %v379
        %vm616 = vcmp.le.f32.partialorder %v615, 0.7853982
        %vm617 = vcmp.lt.s32.totalorder %v379, 0
        %v618 = vand.u32 %v379, 2139095040
        %v619 = vshrl.u32 %v618, 23
        %v620 = vsub.s32 %v619, 127
        %v621 = vand.u32 2147483647, %v379
        %v622 = vand.u32 %v621, 8388607
        %v623 = vor.u32 %v622, 8388608
        %v624 = vsub.s32 0, %v623
        %v625 = vadd.s32 %v620, 1
        %vm626 = vcmp.gt.s32.totalorder %v625, 0
        %v627 = vsel %vm626, %v625, 0
        %v628 = vshrl.u32 %v627, 5
        %v629 = vand.u32 %v627, 31
        %v630 = vsub.s32 32, %v629
        %v631 = vshrl.u32 683565275, %v630
        %v632 = vshll.u32 683565275, %v629
        %v633 = vshrl.u32 2475754826, %v630
        %v634 = vor.u32 %v632, %v633
        %v635 = vshll.u32 2475754826, %v629
        %v636 = vshrl.u32 2131351028, %v630
        %v637 = vor.u32 %v635, %v636
        %v638 = vshll.u32 2131351028, %v629
        %v639 = vshrl.u32 2102212464, %v630
        %v640 = vor.u32 %v638, %v639
        %v641 = vshll.u32 2102212464, %v629
        %v642 = vshrl.u32 920167782, %v630
        %v643 = vor.u32 %v641, %v642
        %v644 = vshll.u32 920167782, %v629
        %v645 = vshrl.u32 1326507024, %v630
        %v646 = vor.u32 %v644, %v645
        %vm647 = vcmp.lt.s32.totalorder %v628, 1
        %vm648 = vcmp.lt.s32.totalorder %v628, 2
        %vm649 = vcmp.lt.s32.totalorder %v628, 3
        %vm650 = vcmp.lt.s32.totalorder %v628, 4
        %v651 = vsel %vm647, %v631, %v634
        %v652 = vsel %vm650, %v640, 2102212464
        %v653 = vsel %vm649, %v637, %v652
        %v654 = vsel %vm648, %v651, %v653
        %v655 = vsel %vm647, %v634, %v637
        %v656 = vsel %vm650, %v643, 920167782
        %v657 = vsel %vm649, %v640, %v656
        %v658 = vsel %vm648, %v655, %v657
        %v659 = vsel %vm647, %v637, %v640
        %v660 = vsel %vm650, %v646, 1326507024
        %v661 = vsel %vm649, %v643, %v660
        %v662 = vsel %vm648, %v659, %v661
        %v663 = vshll.u32 %v623, 8
        %v664 = vmul.u32.u64.compose %v663, %v662
        %v665 = vextract.low.u32 %v664
        %v666 = vextract.high.u32 %v664
        %v667 = vmul.u32.u64.compose %v663, %v658
        %v668 = vextract.low.u32 %v667
        %v669 = vextract.high.u32 %v667
        %v670 = vmul.u32 %v663, %v654
        %v671 = vadd.s32 %v666, %v668
        %vm672 = vc.u32 %v666, %v668
        %v673 = vadd.s32 %v669, 1
        %v674 = vsel %vm672, %v673, %v669
        %v675 = vadd.s32 %v670, %v674
        %v676 = vadd.s32 %v675, 536870912
        %v677 = vshrl.u32 %v676, 30
        %v678 = vshll.u32 %v677, 30
        %v679 = vsub.s32 %v675, %v678
        %vm680 = vcmp.lt.s32.totalorder %v679, 0
        %v681 = vsub.s32 0, %v679
        %v682 = vsel %vm680, %v681, %v679
        %v683 = vclz %v682
        %v684 = vsub.s32 %v683, 2
        %vm685 = vcmp.gt.s32.totalorder 0, %v684
        %v686 = vsel %vm685, 0, %v684
        %v687 = vsub.s32 32, %v686
        %v688 = vshll.u32 %v679, %v686
        %v689 = vshrl.u32 %v671, %v687
        %v690 = vor.u32 %v688, %v689
        %v691 = vsub.s32 4294967266, %v686
        %v692 = vadd.s32 %v691, 127
        %v693 = vshll.u32 %v692, 23
        %v694 = vor.u32 4788187, %v693
        %v695 = vand.u32 2147483647, %v694
        %v697 = vcvt.s32.f32 %v690
        %v698 = vmul.f32 %v697, %v695
        %v699 = vxor.u32 %v698, 2147483648
        %v700 = vsel %vm617, %v699, %v698
        %v701 = vsub.s32 4, %v677
        %v702 = vsel %vm617, %v701, %v677
        %v703 = vsel %vm616, %v379, %v700
        %v704 = vsel %vm616, 0, %v702
        %v705 = vcosq.f32.pop %v703
        %v706 = vsinq.f32.pop %v703
        %vm707 = vweird.f32 %v379
        %v708 = vand.u32 %v704, 3
        %vm709 = vcmp.lt.s32.totalorder %v708, 2
        %vm710 = vcmp.eq.s32.totalorder %v708, 0
        %v711 = vxor.u32 %v706, 2147483648
        %v712 = vsel %vm710, %v705, %v711
        %vm713 = vcmp.eq.s32.totalorder %v708, 2
        %v714 = vxor.u32 %v705, 2147483648
        %v715 = vsel %vm713, %v714, %v706
        %v716 = vsel %vm709, %v712, %v715
        %v717 = vsel %vm707, nan, %v716
        %v718 = vand.u32 2147483647, %v380
        %vm719 = vcmp.le.f32.partialorder %v718, 0.7853982
        %vm720 = vcmp.lt.s32.totalorder %v380, 0
        %v721 = vand.u32 %v380, 2139095040
        %v722 = vshrl.u32 %v721, 23
        %v723 = vsub.s32 %v722, 127
        %v724 = vand.u32 2147483647, %v380
        %v725 = vand.u32 %v724, 8388607
        %v726 = vor.u32 %v725, 8388608
        %v727 = vsub.s32 0, %v726
        %v728 = vadd.s32 %v723, 1
        %vm729 = vcmp.gt.s32.totalorder %v728, 0
        %v730 = vsel %vm729, %v728, 0
        %v731 = vshrl.u32 %v730, 5
        %v732 = vand.u32 %v730, 31
        %v733 = vsub.s32 32, %v732
        %v734 = vshrl.u32 683565275, %v733
        %v735 = vshll.u32 683565275, %v732
        %v736 = vshrl.u32 2475754826, %v733
        %v737 = vor.u32 %v735, %v736
        %v738 = vshll.u32 2475754826, %v732
        %v739 = vshrl.u32 2131351028, %v733
        %v740 = vor.u32 %v738, %v739
        %v741 = vshll.u32 2131351028, %v732
        %v742 = vshrl.u32 2102212464, %v733
        %v743 = vor.u32 %v741, %v742
        %v744 = vshll.u32 2102212464, %v732
        %v745 = vshrl.u32 920167782, %v733
        %v746 = vor.u32 %v744, %v745
        %v747 = vshll.u32 920167782, %v732
        %v748 = vshrl.u32 1326507024, %v733
        %v749 = vor.u32 %v747, %v748
        %vm750 = vcmp.lt.s32.totalorder %v731, 1
        %vm751 = vcmp.lt.s32.totalorder %v731, 2
        %vm752 = vcmp.lt.s32.totalorder %v731, 3
        %vm753 = vcmp.lt.s32.totalorder %v731, 4
        %v754 = vsel %vm750, %v734, %v737
        %v755 = vsel %vm753, %v743, 2102212464
        %v756 = vsel %vm752, %v740, %v755
        %v757 = vsel %vm751, %v754, %v756
        %v758 = vsel %vm750, %v737, %v740
        %v759 = vsel %vm753, %v746, 920167782
        %v760 = vsel %vm752, %v743, %v759
        %v761 = vsel %vm751, %v758, %v760
        %v762 = vsel %vm750, %v740, %v743
        %v763 = vsel %vm753, %v749, 1326507024
        %v764 = vsel %vm752, %v746, %v763
        %v765 = vsel %vm751, %v762, %v764
        %v766 = vshll.u32 %v726, 8
        %v767 = vmul.u32.u64.compose %v766, %v765
        %v768 = vextract.low.u32 %v767
        %v769 = vextract.high.u32 %v767
        %v770 = vmul.u32.u64.compose %v766, %v761
        %v771 = vextract.low.u32 %v770
        %v772 = vextract.high.u32 %v770
        %v773 = vmul.u32 %v766, %v757
        %v774 = vadd.s32 %v769, %v771
        %vm775 = vc.u32 %v769, %v771
        %v776 = vadd.s32 %v772, 1
        %v777 = vsel %vm775, %v776, %v772
        %v778 = vadd.s32 %v773, %v777
        %v779 = vadd.s32 %v778, 536870912
        %v780 = vshrl.u32 %v779, 30
        %v781 = vshll.u32 %v780, 30
        %v782 = vsub.s32 %v778, %v781
        %vm783 = vcmp.lt.s32.totalorder %v782, 0
        %v784 = vsub.s32 0, %v782
        %v785 = vsel %vm783, %v784, %v782
        %v786 = vclz %v785
        %v787 = vsub.s32 %v786, 2
        %vm788 = vcmp.gt.s32.totalorder 0, %v787
        %v789 = vsel %vm788, 0, %v787
        %v790 = vsub.s32 32, %v789
        %v791 = vshll.u32 %v782, %v789
        %v792 = vshrl.u32 %v774, %v790
        %v793 = vor.u32 %v791, %v792
        %v794 = vsub.s32 4294967266, %v789
        %v795 = vadd.s32 %v794, 127
        %v796 = vshll.u32 %v795, 23
        %v797 = vor.u32 4788187, %v796
        %v798 = vand.u32 2147483647, %v797
        %v800 = vcvt.s32.f32 %v793
        %v801 = vmul.f32 %v800, %v798
        %v802 = vxor.u32 %v801, 2147483648
        %v803 = vsel %vm720, %v802, %v801
        %v804 = vsub.s32 4, %v780
        %v805 = vsel %vm720, %v804, %v780
        %v806 = vsel %vm719, %v380, %v803
        %v807 = vsel %vm719, 0, %v805
        %v808 = vcosq.f32.pop %v806
        %v809 = vsinq.f32.pop %v806
        %vm810 = vweird.f32 %v380
        %v811 = vand.u32 %v807, 3
        %vm812 = vcmp.lt.s32.totalorder %v811, 2
        %vm813 = vcmp.eq.s32.totalorder %v811, 0
        %v814 = vxor.u32 %v809, 2147483648
        %v815 = vsel %vm813, %v808, %v814
        %vm816 = vcmp.eq.s32.totalorder %v811, 2
        %v817 = vxor.u32 %v808, 2147483648
        %v818 = vsel %vm816, %v817, %v809
        %v819 = vsel %vm812, %v815, %v818
        %v820 = vsel %vm810, nan, %v819
        %v821 = vand.u32 2147483647, %v381
        %vm822 = vcmp.le.f32.partialorder %v821, 0.7853982
        %vm823 = vcmp.lt.s32.totalorder %v381, 0
        %v824 = vand.u32 %v381, 2139095040
        %v825 = vshrl.u32 %v824, 23
        %v826 = vsub.s32 %v825, 127
        %v827 = vand.u32 2147483647, %v381
        %v828 = vand.u32 %v827, 8388607
        %v829 = vor.u32 %v828, 8388608
        %v830 = vsub.s32 0, %v829
        %v831 = vadd.s32 %v826, 1
        %vm832 = vcmp.gt.s32.totalorder %v831, 0
        %v833 = vsel %vm832, %v831, 0
        %v834 = vshrl.u32 %v833, 5
        %v835 = vand.u32 %v833, 31
        %v836 = vsub.s32 32, %v835
        %v837 = vshrl.u32 683565275, %v836
        %v838 = vshll.u32 683565275, %v835
        %v839 = vshrl.u32 2475754826, %v836
        %v840 = vor.u32 %v838, %v839
        %v841 = vshll.u32 2475754826, %v835
        %v842 = vshrl.u32 2131351028, %v836
        %v843 = vor.u32 %v841, %v842
        %v844 = vshll.u32 2131351028, %v835
        %v845 = vshrl.u32 2102212464, %v836
        %v846 = vor.u32 %v844, %v845
        %v847 = vshll.u32 2102212464, %v835
        %v848 = vshrl.u32 920167782, %v836
        %v849 = vor.u32 %v847, %v848
        %v850 = vshll.u32 920167782, %v835
        %v851 = vshrl.u32 1326507024, %v836
        %v852 = vor.u32 %v850, %v851
        %vm853 = vcmp.lt.s32.totalorder %v834, 1
        %vm854 = vcmp.lt.s32.totalorder %v834, 2
        %vm855 = vcmp.lt.s32.totalorder %v834, 3
        %vm856 = vcmp.lt.s32.totalorder %v834, 4
        %v857 = vsel %vm853, %v837, %v840
        %v858 = vsel %vm856, %v846, 2102212464
        %v859 = vsel %vm855, %v843, %v858
        %v860 = vsel %vm854, %v857, %v859
        %v861 = vsel %vm853, %v840, %v843
        %v862 = vsel %vm856, %v849, 920167782
        %v863 = vsel %vm855, %v846, %v862
        %v864 = vsel %vm854, %v861, %v863
        %v865 = vsel %vm853, %v843, %v846
        %v866 = vsel %vm856, %v852, 1326507024
        %v867 = vsel %vm855, %v849, %v866
        %v868 = vsel %vm854, %v865, %v867
        %v869 = vshll.u32 %v829, 8
        %v870 = vmul.u32.u64.compose %v869, %v868
        %v871 = vextract.low.u32 %v870
        %v872 = vextract.high.u32 %v870
        %v873 = vmul.u32.u64.compose %v869, %v864
        %v874 = vextract.low.u32 %v873
        %v875 = vextract.high.u32 %v873
        %v876 = vmul.u32 %v869, %v860
        %v877 = vadd.s32 %v872, %v874
        %vm878 = vc.u32 %v872, %v874
        %v879 = vadd.s32 %v875, 1
        %v880 = vsel %vm878, %v879, %v875
        %v881 = vadd.s32 %v876, %v880
        %v882 = vadd.s32 %v881, 536870912
        %v883 = vshrl.u32 %v882, 30
        %v884 = vshll.u32 %v883, 30
        %v885 = vsub.s32 %v881, %v884
        %vm886 = vcmp.lt.s32.totalorder %v885, 0
        %v887 = vsub.s32 0, %v885
        %v888 = vsel %vm886, %v887, %v885
        %v889 = vclz %v888
        %v890 = vsub.s32 %v889, 2
        %vm891 = vcmp.gt.s32.totalorder 0, %v890
        %v892 = vsel %vm891, 0, %v890
        %v893 = vsub.s32 32, %v892
        %v894 = vshll.u32 %v885, %v892
        %v895 = vshrl.u32 %v877, %v893
        %v896 = vor.u32 %v894, %v895
        %v897 = vsub.s32 4294967266, %v892
        %v898 = vadd.s32 %v897, 127
        %v899 = vshll.u32 %v898, 23
        %v900 = vor.u32 4788187, %v899
        %v901 = vand.u32 2147483647, %v900
        %v903 = vcvt.s32.f32 %v896
        %v904 = vmul.f32 %v903, %v901
        %v905 = vxor.u32 %v904, 2147483648
        %v906 = vsel %vm823, %v905, %v904
        %v907 = vsub.s32 4, %v883
        %v908 = vsel %vm823, %v907, %v883
        %v909 = vsel %vm822, %v381, %v906
        %v910 = vsel %vm822, 0, %v908
        %v911 = vcosq.f32.pop %v909
        %v912 = vsinq.f32.pop %v909
        %vm913 = vweird.f32 %v381
        %v914 = vand.u32 %v910, 3
        %vm915 = vcmp.lt.s32.totalorder %v914, 2
        %vm916 = vcmp.eq.s32.totalorder %v914, 0
        %v917 = vxor.u32 %v912, 2147483648
        %v918 = vsel %vm916, %v911, %v917
        %vm919 = vcmp.eq.s32.totalorder %v914, 2
        %v920 = vxor.u32 %v911, 2147483648
        %v921 = vsel %vm919, %v920, %v912
        %v922 = vsel %vm915, %v918, %v921
        %v923 = vsel %vm913, nan, %v922
        %v924 = vand.u32 2147483647, %v382
        %vm925 = vcmp.le.f32.partialorder %v924, 0.7853982
        %vm926 = vcmp.lt.s32.totalorder %v382, 0
        %v927 = vand.u32 %v382, 2139095040
        %v928 = vshrl.u32 %v927, 23
        %v929 = vsub.s32 %v928, 127
        %v930 = vand.u32 2147483647, %v382
        %v931 = vand.u32 %v930, 8388607
        %v932 = vor.u32 %v931, 8388608
        %v933 = vsub.s32 0, %v932
        %v934 = vadd.s32 %v929, 1
        %vm935 = vcmp.gt.s32.totalorder %v934, 0
        %v936 = vsel %vm935, %v934, 0
        %v937 = vshrl.u32 %v936, 5
        %v938 = vand.u32 %v936, 31
        %v939 = vsub.s32 32, %v938
        %v940 = vshrl.u32 683565275, %v939
        %v941 = vshll.u32 683565275, %v938
        %v942 = vshrl.u32 2475754826, %v939
        %v943 = vor.u32 %v941, %v942
        %v944 = vshll.u32 2475754826, %v938
        %v945 = vshrl.u32 2131351028, %v939
        %v946 = vor.u32 %v944, %v945
        %v947 = vshll.u32 2131351028, %v938
        %v948 = vshrl.u32 2102212464, %v939
        %v949 = vor.u32 %v947, %v948
        %v950 = vshll.u32 2102212464, %v938
        %v951 = vshrl.u32 920167782, %v939
        %v952 = vor.u32 %v950, %v951
        %v953 = vshll.u32 920167782, %v938
        %v954 = vshrl.u32 1326507024, %v939
        %v955 = vor.u32 %v953, %v954
        %vm956 = vcmp.lt.s32.totalorder %v937, 1
        %vm957 = vcmp.lt.s32.totalorder %v937, 2
        %vm958 = vcmp.lt.s32.totalorder %v937, 3
        %vm959 = vcmp.lt.s32.totalorder %v937, 4
        %v960 = vsel %vm956, %v940, %v943
        %v961 = vsel %vm959, %v949, 2102212464
        %v962 = vsel %vm958, %v946, %v961
        %v963 = vsel %vm957, %v960, %v962
        %v964 = vsel %vm956, %v943, %v946
        %v965 = vsel %vm959, %v952, 920167782
        %v966 = vsel %vm958, %v949, %v965
        %v967 = vsel %vm957, %v964, %v966
        %v968 = vsel %vm956, %v946, %v949
        %v969 = vsel %vm959, %v955, 1326507024
        %v970 = vsel %vm958, %v952, %v969
        %v971 = vsel %vm957, %v968, %v970
        %v972 = vshll.u32 %v932, 8
        %v973 = vmul.u32.u64.compose %v972, %v971
        %v974 = vextract.low.u32 %v973
        %v975 = vextract.high.u32 %v973
        %v976 = vmul.u32.u64.compose %v972, %v967
        %v977 = vextract.low.u32 %v976
        %v978 = vextract.high.u32 %v976
        %v979 = vmul.u32 %v972, %v963
        %v980 = vadd.s32 %v975, %v977
        %vm981 = vc.u32 %v975, %v977
        %v982 = vadd.s32 %v978, 1
        %v983 = vsel %vm981, %v982, %v978
        %v984 = vadd.s32 %v979, %v983
        %v985 = vadd.s32 %v984, 536870912
        %v986 = vshrl.u32 %v985, 30
        %v987 = vshll.u32 %v986, 30
        %v988 = vsub.s32 %v984, %v987
        %vm989 = vcmp.lt.s32.totalorder %v988, 0
        %v990 = vsub.s32 0, %v988
        %v991 = vsel %vm989, %v990, %v988
        %v992 = vclz %v991
        %v993 = vsub.s32 %v992, 2
        %vm994 = vcmp.gt.s32.totalorder 0, %v993
        %v995 = vsel %vm994, 0, %v993
        %v996 = vsub.s32 32, %v995
        %v997 = vshll.u32 %v988, %v995
        %v998 = vshrl.u32 %v980, %v996
        %v999 = vor.u32 %v997, %v998
        %v1000 = vsub.s32 4294967266, %v995
        %v1001 = vadd.s32 %v1000, 127
        %v1002 = vshll.u32 %v1001, 23
        %v1003 = vor.u32 4788187, %v1002
        %v1004 = vand.u32 2147483647, %v1003
        %v1006 = vcvt.s32.f32 %v999
        %v1007 = vmul.f32 %v1006, %v1004
        %v1008 = vxor.u32 %v1007, 2147483648
        %v1009 = vsel %vm926, %v1008, %v1007
        %v1010 = vsub.s32 4, %v986
        %v1011 = vsel %vm926, %v1010, %v986
        %v1012 = vsel %vm925, %v382, %v1009
        %v1013 = vsel %vm925, 0, %v1011
        %v1014 = vcosq.f32.pop %v1012
        %v1015 = vsinq.f32.pop %v1012
        %vm1016 = vweird.f32 %v382
        %v1017 = vand.u32 %v1013, 3
        %vm1018 = vcmp.lt.s32.totalorder %v1017, 2
        %vm1019 = vcmp.eq.s32.totalorder %v1017, 0
        %v1020 = vxor.u32 %v1015, 2147483648
        %v1021 = vsel %vm1019, %v1014, %v1020
        %vm1022 = vcmp.eq.s32.totalorder %v1017, 2
        %v1023 = vxor.u32 %v1014, 2147483648
        %v1024 = vsel %vm1022, %v1023, %v1015
        %v1025 = vsel %vm1018, %v1021, %v1024
        %v1026 = vsel %vm1016, nan, %v1025
        %v1027 = vand.u32 2147483647, %v383
        %vm1028 = vcmp.le.f32.partialorder %v1027, 0.7853982
        %vm1029 = vcmp.lt.s32.totalorder %v383, 0
        %v1030 = vand.u32 %v383, 2139095040
        %v1031 = vshrl.u32 %v1030, 23
        %v1032 = vsub.s32 %v1031, 127
        %v1033 = vand.u32 2147483647, %v383
        %v1034 = vand.u32 %v1033, 8388607
        %v1035 = vor.u32 %v1034, 8388608
        %v1036 = vsub.s32 0, %v1035
        %v1037 = vadd.s32 %v1032, 1
        %vm1038 = vcmp.gt.s32.totalorder %v1037, 0
        %v1039 = vsel %vm1038, %v1037, 0
        %v1040 = vshrl.u32 %v1039, 5
        %v1041 = vand.u32 %v1039, 31
        %v1042 = vsub.s32 32, %v1041
        %v1043 = vshrl.u32 683565275, %v1042
        %v1044 = vshll.u32 683565275, %v1041
        %v1045 = vshrl.u32 2475754826, %v1042
        %v1046 = vor.u32 %v1044, %v1045
        %v1047 = vshll.u32 2475754826, %v1041
        %v1048 = vshrl.u32 2131351028, %v1042
        %v1049 = vor.u32 %v1047, %v1048
        %v1050 = vshll.u32 2131351028, %v1041
        %v1051 = vshrl.u32 2102212464, %v1042
        %v1052 = vor.u32 %v1050, %v1051
        %v1053 = vshll.u32 2102212464, %v1041
        %v1054 = vshrl.u32 920167782, %v1042
        %v1055 = vor.u32 %v1053, %v1054
        %v1056 = vshll.u32 920167782, %v1041
        %v1057 = vshrl.u32 1326507024, %v1042
        %v1058 = vor.u32 %v1056, %v1057
        %vm1059 = vcmp.lt.s32.totalorder %v1040, 1
        %vm1060 = vcmp.lt.s32.totalorder %v1040, 2
        %vm1061 = vcmp.lt.s32.totalorder %v1040, 3
        %vm1062 = vcmp.lt.s32.totalorder %v1040, 4
        %v1063 = vsel %vm1059, %v1043, %v1046
        %v1064 = vsel %vm1062, %v1052, 2102212464
        %v1065 = vsel %vm1061, %v1049, %v1064
        %v1066 = vsel %vm1060, %v1063, %v1065
        %v1067 = vsel %vm1059, %v1046, %v1049
        %v1068 = vsel %vm1062, %v1055, 920167782
        %v1069 = vsel %vm1061, %v1052, %v1068
        %v1070 = vsel %vm1060, %v1067, %v1069
        %v1071 = vsel %vm1059, %v1049, %v1052
        %v1072 = vsel %vm1062, %v1058, 1326507024
        %v1073 = vsel %vm1061, %v1055, %v1072
        %v1074 = vsel %vm1060, %v1071, %v1073
        %v1075 = vshll.u32 %v1035, 8
        %v1076 = vmul.u32.u64.compose %v1075, %v1074
        %v1077 = vextract.low.u32 %v1076
        %v1078 = vextract.high.u32 %v1076
        %v1079 = vmul.u32.u64.compose %v1075, %v1070
        %v1080 = vextract.low.u32 %v1079
        %v1081 = vextract.high.u32 %v1079
        %v1082 = vmul.u32 %v1075, %v1066
        %v1083 = vadd.s32 %v1078, %v1080
        %vm1084 = vc.u32 %v1078, %v1080
        %v1085 = vadd.s32 %v1081, 1
        %v1086 = vsel %vm1084, %v1085, %v1081
        %v1087 = vadd.s32 %v1082, %v1086
        %v1088 = vadd.s32 %v1087, 536870912
        %v1089 = vshrl.u32 %v1088, 30
        %v1090 = vshll.u32 %v1089, 30
        %v1091 = vsub.s32 %v1087, %v1090
        %vm1092 = vcmp.lt.s32.totalorder %v1091, 0
        %v1093 = vsub.s32 0, %v1091
        %v1094 = vsel %vm1092, %v1093, %v1091
        %v1095 = vclz %v1094
        %v1096 = vsub.s32 %v1095, 2
        %vm1097 = vcmp.gt.s32.totalorder 0, %v1096
        %v1098 = vsel %vm1097, 0, %v1096
        %v1099 = vsub.s32 32, %v1098
        %v1100 = vshll.u32 %v1091, %v1098
        %v1101 = vshrl.u32 %v1083, %v1099
        %v1102 = vor.u32 %v1100, %v1101
        %v1103 = vsub.s32 4294967266, %v1098
        %v1104 = vadd.s32 %v1103, 127
        %v1105 = vshll.u32 %v1104, 23
        %v1106 = vor.u32 4788187, %v1105
        %v1107 = vand.u32 2147483647, %v1106
        %v1109 = vcvt.s32.f32 %v1102
        %v1110 = vmul.f32 %v1109, %v1107
        %v1111 = vxor.u32 %v1110, 2147483648
        %v1112 = vsel %vm1029, %v1111, %v1110
        %v1113 = vsub.s32 4, %v1089
        %v1114 = vsel %vm1029, %v1113, %v1089
        %v1115 = vsel %vm1028, %v383, %v1112
        %v1116 = vsel %vm1028, 0, %v1114
        %v1117 = vcosq.f32.pop %v1115
        %v1118 = vsinq.f32.pop %v1115
        %vm1119 = vweird.f32 %v383
        %v1120 = vand.u32 %v1116, 3
        %vm1121 = vcmp.lt.s32.totalorder %v1120, 2
        %vm1122 = vcmp.eq.s32.totalorder %v1120, 0
        %v1123 = vxor.u32 %v1118, 2147483648
        %v1124 = vsel %vm1122, %v1117, %v1123
        %vm1125 = vcmp.eq.s32.totalorder %v1120, 2
        %v1126 = vxor.u32 %v1117, 2147483648
        %v1127 = vsel %vm1125, %v1126, %v1118
        %v1128 = vsel %vm1121, %v1124, %v1127
        %v1129 = vsel %vm1119, nan, %v1128
        %v1130 = vand.u32 2147483647, %v384
        %vm1131 = vcmp.le.f32.partialorder %v1130, 0.7853982
        %vm1132 = vcmp.lt.s32.totalorder %v384, 0
        %v1133 = vand.u32 %v384, 2139095040
        %v1134 = vshrl.u32 %v1133, 23
        %v1135 = vsub.s32 %v1134, 127
        %v1136 = vand.u32 2147483647, %v384
        %v1137 = vand.u32 %v1136, 8388607
        %v1138 = vor.u32 %v1137, 8388608
        %v1139 = vsub.s32 0, %v1138
        %v1140 = vadd.s32 %v1135, 1
        %vm1141 = vcmp.gt.s32.totalorder %v1140, 0
        %v1142 = vsel %vm1141, %v1140, 0
        %v1143 = vshrl.u32 %v1142, 5
        %v1144 = vand.u32 %v1142, 31
        %v1145 = vsub.s32 32, %v1144
        %v1146 = vshrl.u32 683565275, %v1145
        %v1147 = vshll.u32 683565275, %v1144
        %v1148 = vshrl.u32 2475754826, %v1145
        %v1149 = vor.u32 %v1147, %v1148
        %v1150 = vshll.u32 2475754826, %v1144
        %v1151 = vshrl.u32 2131351028, %v1145
        %v1152 = vor.u32 %v1150, %v1151
        %v1153 = vshll.u32 2131351028, %v1144
        %v1154 = vshrl.u32 2102212464, %v1145
        %v1155 = vor.u32 %v1153, %v1154
        %v1156 = vshll.u32 2102212464, %v1144
        %v1157 = vshrl.u32 920167782, %v1145
        %v1158 = vor.u32 %v1156, %v1157
        %v1159 = vshll.u32 920167782, %v1144
        %v1160 = vshrl.u32 1326507024, %v1145
        %v1161 = vor.u32 %v1159, %v1160
        %vm1162 = vcmp.lt.s32.totalorder %v1143, 1
        %vm1163 = vcmp.lt.s32.totalorder %v1143, 2
        %vm1164 = vcmp.lt.s32.totalorder %v1143, 3
        %vm1165 = vcmp.lt.s32.totalorder %v1143, 4
        %v1166 = vsel %vm1162, %v1146, %v1149
        %v1167 = vsel %vm1165, %v1155, 2102212464
        %v1168 = vsel %vm1164, %v1152, %v1167
        %v1169 = vsel %vm1163, %v1166, %v1168
        %v1170 = vsel %vm1162, %v1149, %v1152
        %v1171 = vsel %vm1165, %v1158, 920167782
        %v1172 = vsel %vm1164, %v1155, %v1171
        %v1173 = vsel %vm1163, %v1170, %v1172
        %v1174 = vsel %vm1162, %v1152, %v1155
        %v1175 = vsel %vm1165, %v1161, 1326507024
        %v1176 = vsel %vm1164, %v1158, %v1175
        %v1177 = vsel %vm1163, %v1174, %v1176
        %v1178 = vshll.u32 %v1138, 8
        %v1179 = vmul.u32.u64.compose %v1178, %v1177
        %v1180 = vextract.low.u32 %v1179
        %v1181 = vextract.high.u32 %v1179
        %v1182 = vmul.u32.u64.compose %v1178, %v1173
        %v1183 = vextract.low.u32 %v1182
        %v1184 = vextract.high.u32 %v1182
        %v1185 = vmul.u32 %v1178, %v1169
        %v1186 = vadd.s32 %v1181, %v1183
        %vm1187 = vc.u32 %v1181, %v1183
        %v1188 = vadd.s32 %v1184, 1
        %v1189 = vsel %vm1187, %v1188, %v1184
        %v1190 = vadd.s32 %v1185, %v1189
        %v1191 = vadd.s32 %v1190, 536870912
        %v1192 = vshrl.u32 %v1191, 30
        %v1193 = vshll.u32 %v1192, 30
        %v1194 = vsub.s32 %v1190, %v1193
        %vm1195 = vcmp.lt.s32.totalorder %v1194, 0
        %v1196 = vsub.s32 0, %v1194
        %v1197 = vsel %vm1195, %v1196, %v1194
        %v1198 = vclz %v1197
        %v1199 = vsub.s32 %v1198, 2
        %vm1200 = vcmp.gt.s32.totalorder 0, %v1199
        %v1201 = vsel %vm1200, 0, %v1199
        %v1202 = vsub.s32 32, %v1201
        %v1203 = vshll.u32 %v1194, %v1201
        %v1204 = vshrl.u32 %v1186, %v1202
        %v1205 = vor.u32 %v1203, %v1204
        %v1206 = vsub.s32 4294967266, %v1201
        %v1207 = vadd.s32 %v1206, 127
        %v1208 = vshll.u32 %v1207, 23
        %v1209 = vor.u32 4788187, %v1208
        %v1210 = vand.u32 2147483647, %v1209
        %v1212 = vcvt.s32.f32 %v1205
        %v1213 = vmul.f32 %v1212, %v1210
        %v1214 = vxor.u32 %v1213, 2147483648
        %v1215 = vsel %vm1132, %v1214, %v1213
        %v1216 = vsub.s32 4, %v1192
        %v1217 = vsel %vm1132, %v1216, %v1192
        %v1218 = vsel %vm1131, %v384, %v1215
        %v1219 = vsel %vm1131, 0, %v1217
        %v1220 = vcosq.f32.pop %v1218
        %v1221 = vsinq.f32.pop %v1218
        %vm1222 = vweird.f32 %v384
        %v1223 = vand.u32 %v1219, 3
        %vm1224 = vcmp.lt.s32.totalorder %v1223, 2
        %vm1225 = vcmp.eq.s32.totalorder %v1223, 0
        %v1226 = vxor.u32 %v1221, 2147483648
        %v1227 = vsel %vm1225, %v1220, %v1226
        %vm1228 = vcmp.eq.s32.totalorder %v1223, 2
        %v1229 = vxor.u32 %v1220, 2147483648
        %v1230 = vsel %vm1228, %v1229, %v1221
        %v1231 = vsel %vm1224, %v1227, %v1230
        %v1232 = vsel %vm1222, nan, %v1231
        %v1233 = vand.u32 2147483647, %v385
        %vm1234 = vcmp.le.f32.partialorder %v1233, 0.7853982
        %vm1235 = vcmp.lt.s32.totalorder %v385, 0
        %v1236 = vand.u32 %v385, 2139095040
        %v1237 = vshrl.u32 %v1236, 23
        %v1238 = vsub.s32 %v1237, 127
        %v1239 = vand.u32 2147483647, %v385
        %v1240 = vand.u32 %v1239, 8388607
        %v1241 = vor.u32 %v1240, 8388608
        %v1242 = vsub.s32 0, %v1241
        %v1243 = vadd.s32 %v1238, 1
        %vm1244 = vcmp.gt.s32.totalorder %v1243, 0
        %v1245 = vsel %vm1244, %v1243, 0
        %v1246 = vshrl.u32 %v1245, 5
        %v1247 = vand.u32 %v1245, 31
        %v1248 = vsub.s32 32, %v1247
        %v1249 = vshrl.u32 683565275, %v1248
        %v1250 = vshll.u32 683565275, %v1247
        %v1251 = vshrl.u32 2475754826, %v1248
        %v1252 = vor.u32 %v1250, %v1251
        %v1253 = vshll.u32 2475754826, %v1247
        %v1254 = vshrl.u32 2131351028, %v1248
        %v1255 = vor.u32 %v1253, %v1254
        %v1256 = vshll.u32 2131351028, %v1247
        %v1257 = vshrl.u32 2102212464, %v1248
        %v1258 = vor.u32 %v1256, %v1257
        %v1259 = vshll.u32 2102212464, %v1247
        %v1260 = vshrl.u32 920167782, %v1248
        %v1261 = vor.u32 %v1259, %v1260
        %v1262 = vshll.u32 920167782, %v1247
        %v1263 = vshrl.u32 1326507024, %v1248
        %v1264 = vor.u32 %v1262, %v1263
        %vm1265 = vcmp.lt.s32.totalorder %v1246, 1
        %vm1266 = vcmp.lt.s32.totalorder %v1246, 2
        %vm1267 = vcmp.lt.s32.totalorder %v1246, 3
        %vm1268 = vcmp.lt.s32.totalorder %v1246, 4
        %v1269 = vsel %vm1265, %v1249, %v1252
        %v1270 = vsel %vm1268, %v1258, 2102212464
        %v1271 = vsel %vm1267, %v1255, %v1270
        %v1272 = vsel %vm1266, %v1269, %v1271
        %v1273 = vsel %vm1265, %v1252, %v1255
        %v1274 = vsel %vm1268, %v1261, 920167782
        %v1275 = vsel %vm1267, %v1258, %v1274
        %v1276 = vsel %vm1266, %v1273, %v1275
        %v1277 = vsel %vm1265, %v1255, %v1258
        %v1278 = vsel %vm1268, %v1264, 1326507024
        %v1279 = vsel %vm1267, %v1261, %v1278
        %v1280 = vsel %vm1266, %v1277, %v1279
        %v1281 = vshll.u32 %v1241, 8
        %v1282 = vmul.u32.u64.compose %v1281, %v1280
        %v1283 = vextract.low.u32 %v1282
        %v1284 = vextract.high.u32 %v1282
        %v1285 = vmul.u32.u64.compose %v1281, %v1276
        %v1286 = vextract.low.u32 %v1285
        %v1287 = vextract.high.u32 %v1285
        %v1288 = vmul.u32 %v1281, %v1272
        %v1289 = vadd.s32 %v1284, %v1286
        %vm1290 = vc.u32 %v1284, %v1286
        %v1291 = vadd.s32 %v1287, 1
        %v1292 = vsel %vm1290, %v1291, %v1287
        %v1293 = vadd.s32 %v1288, %v1292
        %v1294 = vadd.s32 %v1293, 536870912
        %v1295 = vshrl.u32 %v1294, 30
        %v1296 = vshll.u32 %v1295, 30
        %v1297 = vsub.s32 %v1293, %v1296
        %vm1298 = vcmp.lt.s32.totalorder %v1297, 0
        %v1299 = vsub.s32 0, %v1297
        %v1300 = vsel %vm1298, %v1299, %v1297
        %v1301 = vclz %v1300
        %v1302 = vsub.s32 %v1301, 2
        %vm1303 = vcmp.gt.s32.totalorder 0, %v1302
        %v1304 = vsel %vm1303, 0, %v1302
        %v1305 = vsub.s32 32, %v1304
        %v1306 = vshll.u32 %v1297, %v1304
        %v1307 = vshrl.u32 %v1289, %v1305
        %v1308 = vor.u32 %v1306, %v1307
        %v1309 = vsub.s32 4294967266, %v1304
        %v1310 = vadd.s32 %v1309, 127
        %v1311 = vshll.u32 %v1310, 23
        %v1312 = vor.u32 4788187, %v1311
        %v1313 = vand.u32 2147483647, %v1312
        %v1315 = vcvt.s32.f32 %v1308
        %v1316 = vmul.f32 %v1315, %v1313
        %v1317 = vxor.u32 %v1316, 2147483648
        %v1318 = vsel %vm1235, %v1317, %v1316
        %v1319 = vsub.s32 4, %v1295
        %v1320 = vsel %vm1235, %v1319, %v1295
        %v1321 = vsel %vm1234, %v385, %v1318
        %v1322 = vsel %vm1234, 0, %v1320
        %v1323 = vcosq.f32.pop %v1321
        %v1324 = vsinq.f32.pop %v1321
        %vm1325 = vweird.f32 %v385
        %v1326 = vand.u32 %v1322, 3
        %vm1327 = vcmp.lt.s32.totalorder %v1326, 2
        %vm1328 = vcmp.eq.s32.totalorder %v1326, 0
        %v1329 = vxor.u32 %v1324, 2147483648
        %v1330 = vsel %vm1328, %v1323, %v1329
        %vm1331 = vcmp.eq.s32.totalorder %v1326, 2
        %v1332 = vxor.u32 %v1323, 2147483648
        %v1333 = vsel %vm1331, %v1332, %v1324
        %v1334 = vsel %vm1327, %v1330, %v1333
        %v1335 = vsel %vm1325, nan, %v1334
        %v1336 = vand.u32 2147483647, %v386
        %vm1337 = vcmp.le.f32.partialorder %v1336, 0.7853982
        %vm1338 = vcmp.lt.s32.totalorder %v386, 0
        %v1339 = vand.u32 %v386, 2139095040
        %v1340 = vshrl.u32 %v1339, 23
        %v1341 = vsub.s32 %v1340, 127
        %v1342 = vand.u32 2147483647, %v386
        %v1343 = vand.u32 %v1342, 8388607
        %v1344 = vor.u32 %v1343, 8388608
        %v1345 = vsub.s32 0, %v1344
        %v1346 = vadd.s32 %v1341, 1
        %vm1347 = vcmp.gt.s32.totalorder %v1346, 0
        %v1348 = vsel %vm1347, %v1346, 0
        %v1349 = vshrl.u32 %v1348, 5
        %v1350 = vand.u32 %v1348, 31
        %v1351 = vsub.s32 32, %v1350
        %v1352 = vshrl.u32 683565275, %v1351
        %v1353 = vshll.u32 683565275, %v1350
        %v1354 = vshrl.u32 2475754826, %v1351
        %v1355 = vor.u32 %v1353, %v1354
        %v1356 = vshll.u32 2475754826, %v1350
        %v1357 = vshrl.u32 2131351028, %v1351
        %v1358 = vor.u32 %v1356, %v1357
        %v1359 = vshll.u32 2131351028, %v1350
        %v1360 = vshrl.u32 2102212464, %v1351
        %v1361 = vor.u32 %v1359, %v1360
        %v1362 = vshll.u32 2102212464, %v1350
        %v1363 = vshrl.u32 920167782, %v1351
        %v1364 = vor.u32 %v1362, %v1363
        %v1365 = vshll.u32 920167782, %v1350
        %v1366 = vshrl.u32 1326507024, %v1351
        %v1367 = vor.u32 %v1365, %v1366
        %vm1368 = vcmp.lt.s32.totalorder %v1349, 1
        %vm1369 = vcmp.lt.s32.totalorder %v1349, 2
        %vm1370 = vcmp.lt.s32.totalorder %v1349, 3
        %vm1371 = vcmp.lt.s32.totalorder %v1349, 4
        %v1372 = vsel %vm1368, %v1352, %v1355
        %v1373 = vsel %vm1371, %v1361, 2102212464
        %v1374 = vsel %vm1370, %v1358, %v1373
        %v1375 = vsel %vm1369, %v1372, %v1374
        %v1376 = vsel %vm1368, %v1355, %v1358
        %v1377 = vsel %vm1371, %v1364, 920167782
        %v1378 = vsel %vm1370, %v1361, %v1377
        %v1379 = vsel %vm1369, %v1376, %v1378
        %v1380 = vsel %vm1368, %v1358, %v1361
        %v1381 = vsel %vm1371, %v1367, 1326507024
        %v1382 = vsel %vm1370, %v1364, %v1381
        %v1383 = vsel %vm1369, %v1380, %v1382
        %v1384 = vshll.u32 %v1344, 8
        %v1385 = vmul.u32.u64.compose %v1384, %v1383
        %v1386 = vextract.low.u32 %v1385
        %v1387 = vextract.high.u32 %v1385
        %v1388 = vmul.u32.u64.compose %v1384, %v1379
        %v1389 = vextract.low.u32 %v1388
        %v1390 = vextract.high.u32 %v1388
        %v1391 = vmul.u32 %v1384, %v1375
        %v1392 = vadd.s32 %v1387, %v1389
        %vm1393 = vc.u32 %v1387, %v1389
        %v1394 = vadd.s32 %v1390, 1
        %v1395 = vsel %vm1393, %v1394, %v1390
        %v1396 = vadd.s32 %v1391, %v1395
        %v1397 = vadd.s32 %v1396, 536870912
        %v1398 = vshrl.u32 %v1397, 30
        %v1399 = vshll.u32 %v1398, 30
        %v1400 = vsub.s32 %v1396, %v1399
        %vm1401 = vcmp.lt.s32.totalorder %v1400, 0
        %v1402 = vsub.s32 0, %v1400
        %v1403 = vsel %vm1401, %v1402, %v1400
        %v1404 = vclz %v1403
        %v1405 = vsub.s32 %v1404, 2
        %vm1406 = vcmp.gt.s32.totalorder 0, %v1405
        %v1407 = vsel %vm1406, 0, %v1405
        %v1408 = vsub.s32 32, %v1407
        %v1409 = vshll.u32 %v1400, %v1407
        %v1410 = vshrl.u32 %v1392, %v1408
        %v1411 = vor.u32 %v1409, %v1410
        %v1412 = vsub.s32 4294967266, %v1407
        %v1413 = vadd.s32 %v1412, 127
        %v1414 = vshll.u32 %v1413, 23
        %v1415 = vor.u32 4788187, %v1414
        %v1416 = vand.u32 2147483647, %v1415
        %v1418 = vcvt.s32.f32 %v1411
        %v1419 = vmul.f32 %v1418, %v1416
        %v1420 = vxor.u32 %v1419, 2147483648
        %v1421 = vsel %vm1338, %v1420, %v1419
        %v1422 = vsub.s32 4, %v1398
        %v1423 = vsel %vm1338, %v1422, %v1398
        %v1424 = vsel %vm1337, %v386, %v1421
        %v1425 = vsel %vm1337, 0, %v1423
        %v1426 = vcosq.f32.pop %v1424
        %v1427 = vsinq.f32.pop %v1424
        %vm1428 = vweird.f32 %v386
        %v1429 = vand.u32 %v1425, 3
        %vm1430 = vcmp.lt.s32.totalorder %v1429, 2
        %vm1431 = vcmp.eq.s32.totalorder %v1429, 0
        %v1432 = vxor.u32 %v1427, 2147483648
        %v1433 = vsel %vm1431, %v1426, %v1432
        %vm1434 = vcmp.eq.s32.totalorder %v1429, 2
        %v1435 = vxor.u32 %v1426, 2147483648
        %v1436 = vsel %vm1434, %v1435, %v1427
        %v1437 = vsel %vm1430, %v1433, %v1436
        %v1438 = vsel %vm1428, nan, %v1437
        %v1439 = vand.u32 2147483647, %v387
        %vm1440 = vcmp.le.f32.partialorder %v1439, 0.7853982
        %vm1441 = vcmp.lt.s32.totalorder %v387, 0
        %v1442 = vand.u32 %v387, 2139095040
        %v1443 = vshrl.u32 %v1442, 23
        %v1444 = vsub.s32 %v1443, 127
        %v1445 = vand.u32 2147483647, %v387
        %v1446 = vand.u32 %v1445, 8388607
        %v1447 = vor.u32 %v1446, 8388608
        %v1448 = vsub.s32 0, %v1447
        %v1449 = vadd.s32 %v1444, 1
        %vm1450 = vcmp.gt.s32.totalorder %v1449, 0
        %v1451 = vsel %vm1450, %v1449, 0
        %v1452 = vshrl.u32 %v1451, 5
        %v1453 = vand.u32 %v1451, 31
        %v1454 = vsub.s32 32, %v1453
        %v1455 = vshrl.u32 683565275, %v1454
        %v1456 = vshll.u32 683565275, %v1453
        %v1457 = vshrl.u32 2475754826, %v1454
        %v1458 = vor.u32 %v1456, %v1457
        %v1459 = vshll.u32 2475754826, %v1453
        %v1460 = vshrl.u32 2131351028, %v1454
        %v1461 = vor.u32 %v1459, %v1460
        %v1462 = vshll.u32 2131351028, %v1453
        %v1463 = vshrl.u32 2102212464, %v1454
        %v1464 = vor.u32 %v1462, %v1463
        %v1465 = vshll.u32 2102212464, %v1453
        %v1466 = vshrl.u32 920167782, %v1454
        %v1467 = vor.u32 %v1465, %v1466
        %v1468 = vshll.u32 920167782, %v1453
        %v1469 = vshrl.u32 1326507024, %v1454
        %v1470 = vor.u32 %v1468, %v1469
        %vm1471 = vcmp.lt.s32.totalorder %v1452, 1
        %vm1472 = vcmp.lt.s32.totalorder %v1452, 2
        %vm1473 = vcmp.lt.s32.totalorder %v1452, 3
        %vm1474 = vcmp.lt.s32.totalorder %v1452, 4
        %v1475 = vsel %vm1471, %v1455, %v1458
        %v1476 = vsel %vm1474, %v1464, 2102212464
        %v1477 = vsel %vm1473, %v1461, %v1476
        %v1478 = vsel %vm1472, %v1475, %v1477
        %v1479 = vsel %vm1471, %v1458, %v1461
        %v1480 = vsel %vm1474, %v1467, 920167782
        %v1481 = vsel %vm1473, %v1464, %v1480
        %v1482 = vsel %vm1472, %v1479, %v1481
        %v1483 = vsel %vm1471, %v1461, %v1464
        %v1484 = vsel %vm1474, %v1470, 1326507024
        %v1485 = vsel %vm1473, %v1467, %v1484
        %v1486 = vsel %vm1472, %v1483, %v1485
        %v1487 = vshll.u32 %v1447, 8
        %v1488 = vmul.u32.u64.compose %v1487, %v1486
        %v1489 = vextract.low.u32 %v1488
        %v1490 = vextract.high.u32 %v1488
        %v1491 = vmul.u32.u64.compose %v1487, %v1482
        %v1492 = vextract.low.u32 %v1491
        %v1493 = vextract.high.u32 %v1491
        %v1494 = vmul.u32 %v1487, %v1478
        %v1495 = vadd.s32 %v1490, %v1492
        %vm1496 = vc.u32 %v1490, %v1492
        %v1497 = vadd.s32 %v1493, 1
        %v1498 = vsel %vm1496, %v1497, %v1493
        %v1499 = vadd.s32 %v1494, %v1498
        %v1500 = vadd.s32 %v1499, 536870912
        %v1501 = vshrl.u32 %v1500, 30
        %v1502 = vshll.u32 %v1501, 30
        %v1503 = vsub.s32 %v1499, %v1502
        %vm1504 = vcmp.lt.s32.totalorder %v1503, 0
        %v1505 = vsub.s32 0, %v1503
        %v1506 = vsel %vm1504, %v1505, %v1503
        %v1507 = vclz %v1506
        %v1508 = vsub.s32 %v1507, 2
        %vm1509 = vcmp.gt.s32.totalorder 0, %v1508
        %v1510 = vsel %vm1509, 0, %v1508
        %v1511 = vsub.s32 32, %v1510
        %v1512 = vshll.u32 %v1503, %v1510
        %v1513 = vshrl.u32 %v1495, %v1511
        %v1514 = vor.u32 %v1512, %v1513
        %v1515 = vsub.s32 4294967266, %v1510
        %v1516 = vadd.s32 %v1515, 127
        %v1517 = vshll.u32 %v1516, 23
        %v1518 = vor.u32 4788187, %v1517
        %v1519 = vand.u32 2147483647, %v1518
        %v1521 = vcvt.s32.f32 %v1514
        %v1522 = vmul.f32 %v1521, %v1519
        %v1523 = vxor.u32 %v1522, 2147483648
        %v1524 = vsel %vm1441, %v1523, %v1522
        %v1525 = vsub.s32 4, %v1501
        %v1526 = vsel %vm1441, %v1525, %v1501
        %v1527 = vsel %vm1440, %v387, %v1524
        %v1528 = vsel %vm1440, 0, %v1526
        %v1529 = vcosq.f32.pop %v1527
        %v1530 = vsinq.f32.pop %v1527
        %vm1531 = vweird.f32 %v387
        %v1532 = vand.u32 %v1528, 3
        %vm1533 = vcmp.lt.s32.totalorder %v1532, 2
        %vm1534 = vcmp.eq.s32.totalorder %v1532, 0
        %v1535 = vxor.u32 %v1530, 2147483648
        %v1536 = vsel %vm1534, %v1529, %v1535
        %vm1537 = vcmp.eq.s32.totalorder %v1532, 2
        %v1538 = vxor.u32 %v1529, 2147483648
        %v1539 = vsel %vm1537, %v1538, %v1530
        %v1540 = vsel %vm1533, %v1536, %v1539
        %v1541 = vsel %vm1531, nan, %v1540
        %v1542 = vand.u32 2147483647, %v388
        %vm1543 = vcmp.le.f32.partialorder %v1542, 0.7853982
        %vm1544 = vcmp.lt.s32.totalorder %v388, 0
        %v1545 = vand.u32 %v388, 2139095040
        %v1546 = vshrl.u32 %v1545, 23
        %v1547 = vsub.s32 %v1546, 127
        %v1548 = vand.u32 2147483647, %v388
        %v1549 = vand.u32 %v1548, 8388607
        %v1550 = vor.u32 %v1549, 8388608
        %v1551 = vsub.s32 0, %v1550
        %v1552 = vadd.s32 %v1547, 1
        %vm1553 = vcmp.gt.s32.totalorder %v1552, 0
        %v1554 = vsel %vm1553, %v1552, 0
        %v1555 = vshrl.u32 %v1554, 5
        %v1556 = vand.u32 %v1554, 31
        %v1557 = vsub.s32 32, %v1556
        %v1558 = vshrl.u32 683565275, %v1557
        %v1559 = vshll.u32 683565275, %v1556
        %v1560 = vshrl.u32 2475754826, %v1557
        %v1561 = vor.u32 %v1559, %v1560
        %v1562 = vshll.u32 2475754826, %v1556
        %v1563 = vshrl.u32 2131351028, %v1557
        %v1564 = vor.u32 %v1562, %v1563
        %v1565 = vshll.u32 2131351028, %v1556
        %v1566 = vshrl.u32 2102212464, %v1557
        %v1567 = vor.u32 %v1565, %v1566
        %v1568 = vshll.u32 2102212464, %v1556
        %v1569 = vshrl.u32 920167782, %v1557
        %v1570 = vor.u32 %v1568, %v1569
        %v1571 = vshll.u32 920167782, %v1556
        %v1572 = vshrl.u32 1326507024, %v1557
        %v1573 = vor.u32 %v1571, %v1572
        %vm1574 = vcmp.lt.s32.totalorder %v1555, 1
        %vm1575 = vcmp.lt.s32.totalorder %v1555, 2
        %vm1576 = vcmp.lt.s32.totalorder %v1555, 3
        %vm1577 = vcmp.lt.s32.totalorder %v1555, 4
        %v1578 = vsel %vm1574, %v1558, %v1561
        %v1579 = vsel %vm1577, %v1567, 2102212464
        %v1580 = vsel %vm1576, %v1564, %v1579
        %v1581 = vsel %vm1575, %v1578, %v1580
        %v1582 = vsel %vm1574, %v1561, %v1564
        %v1583 = vsel %vm1577, %v1570, 920167782
        %v1584 = vsel %vm1576, %v1567, %v1583
        %v1585 = vsel %vm1575, %v1582, %v1584
        %v1586 = vsel %vm1574, %v1564, %v1567
        %v1587 = vsel %vm1577, %v1573, 1326507024
        %v1588 = vsel %vm1576, %v1570, %v1587
        %v1589 = vsel %vm1575, %v1586, %v1588
        %v1590 = vshll.u32 %v1550, 8
        %v1591 = vmul.u32.u64.compose %v1590, %v1589
        %v1592 = vextract.low.u32 %v1591
        %v1593 = vextract.high.u32 %v1591
        %v1594 = vmul.u32.u64.compose %v1590, %v1585
        %v1595 = vextract.low.u32 %v1594
        %v1596 = vextract.high.u32 %v1594
        %v1597 = vmul.u32 %v1590, %v1581
        %v1598 = vadd.s32 %v1593, %v1595
        %vm1599 = vc.u32 %v1593, %v1595
        %v1600 = vadd.s32 %v1596, 1
        %v1601 = vsel %vm1599, %v1600, %v1596
        %v1602 = vadd.s32 %v1597, %v1601
        %v1603 = vadd.s32 %v1602, 536870912
        %v1604 = vshrl.u32 %v1603, 30
        %v1605 = vshll.u32 %v1604, 30
        %v1606 = vsub.s32 %v1602, %v1605
        %vm1607 = vcmp.lt.s32.totalorder %v1606, 0
        %v1608 = vsub.s32 0, %v1606
        %v1609 = vsel %vm1607, %v1608, %v1606
        %v1610 = vclz %v1609
        %v1611 = vsub.s32 %v1610, 2
        %vm1612 = vcmp.gt.s32.totalorder 0, %v1611
        %v1613 = vsel %vm1612, 0, %v1611
        %v1614 = vsub.s32 32, %v1613
        %v1615 = vshll.u32 %v1606, %v1613
        %v1616 = vshrl.u32 %v1598, %v1614
        %v1617 = vor.u32 %v1615, %v1616
        %v1618 = vsub.s32 4294967266, %v1613
        %v1619 = vadd.s32 %v1618, 127
        %v1620 = vshll.u32 %v1619, 23
        %v1621 = vor.u32 4788187, %v1620
        %v1622 = vand.u32 2147483647, %v1621
        %v1624 = vcvt.s32.f32 %v1617
        %v1625 = vmul.f32 %v1624, %v1622
        %v1626 = vxor.u32 %v1625, 2147483648
        %v1627 = vsel %vm1544, %v1626, %v1625
        %v1628 = vsub.s32 4, %v1604
        %v1629 = vsel %vm1544, %v1628, %v1604
        %v1630 = vsel %vm1543, %v388, %v1627
        %v1631 = vsel %vm1543, 0, %v1629
        %v1632 = vcosq.f32.pop %v1630
        %v1633 = vsinq.f32.pop %v1630
        %vm1634 = vweird.f32 %v388
        %v1635 = vand.u32 %v1631, 3
        %vm1636 = vcmp.lt.s32.totalorder %v1635, 2
        %vm1637 = vcmp.eq.s32.totalorder %v1635, 0
        %v1638 = vxor.u32 %v1633, 2147483648
        %v1639 = vsel %vm1637, %v1632, %v1638
        %vm1640 = vcmp.eq.s32.totalorder %v1635, 2
        %v1641 = vxor.u32 %v1632, 2147483648
        %v1642 = vsel %vm1640, %v1641, %v1633
        %v1643 = vsel %vm1636, %v1639, %v1642
        %v1644 = vsel %vm1634, nan, %v1643
        %v1645 = vand.u32 2147483647, %v389
        %vm1646 = vcmp.le.f32.partialorder %v1645, 0.7853982
        %vm1647 = vcmp.lt.s32.totalorder %v389, 0
        %v1648 = vand.u32 %v389, 2139095040
        %v1649 = vshrl.u32 %v1648, 23
        %v1650 = vsub.s32 %v1649, 127
        %v1651 = vand.u32 2147483647, %v389
        %v1652 = vand.u32 %v1651, 8388607
        %v1653 = vor.u32 %v1652, 8388608
        %v1654 = vsub.s32 0, %v1653
        %v1655 = vadd.s32 %v1650, 1
        %vm1656 = vcmp.gt.s32.totalorder %v1655, 0
        %v1657 = vsel %vm1656, %v1655, 0
        %v1658 = vshrl.u32 %v1657, 5
        %v1659 = vand.u32 %v1657, 31
        %v1660 = vsub.s32 32, %v1659
        %v1661 = vshrl.u32 683565275, %v1660
        %v1662 = vshll.u32 683565275, %v1659
        %v1663 = vshrl.u32 2475754826, %v1660
        %v1664 = vor.u32 %v1662, %v1663
        %v1665 = vshll.u32 2475754826, %v1659
        %v1666 = vshrl.u32 2131351028, %v1660
        %v1667 = vor.u32 %v1665, %v1666
        %v1668 = vshll.u32 2131351028, %v1659
        %v1669 = vshrl.u32 2102212464, %v1660
        %v1670 = vor.u32 %v1668, %v1669
        %v1671 = vshll.u32 2102212464, %v1659
        %v1672 = vshrl.u32 920167782, %v1660
        %v1673 = vor.u32 %v1671, %v1672
        %v1674 = vshll.u32 920167782, %v1659
        %v1675 = vshrl.u32 1326507024, %v1660
        %v1676 = vor.u32 %v1674, %v1675
        %vm1677 = vcmp.lt.s32.totalorder %v1658, 1
        %vm1678 = vcmp.lt.s32.totalorder %v1658, 2
        %vm1679 = vcmp.lt.s32.totalorder %v1658, 3
        %vm1680 = vcmp.lt.s32.totalorder %v1658, 4
        %v1681 = vsel %vm1677, %v1661, %v1664
        %v1682 = vsel %vm1680, %v1670, 2102212464
        %v1683 = vsel %vm1679, %v1667, %v1682
        %v1684 = vsel %vm1678, %v1681, %v1683
        %v1685 = vsel %vm1677, %v1664, %v1667
        %v1686 = vsel %vm1680, %v1673, 920167782
        %v1687 = vsel %vm1679, %v1670, %v1686
        %v1688 = vsel %vm1678, %v1685, %v1687
        %v1689 = vsel %vm1677, %v1667, %v1670
        %v1690 = vsel %vm1680, %v1676, 1326507024
        %v1691 = vsel %vm1679, %v1673, %v1690
        %v1692 = vsel %vm1678, %v1689, %v1691
        %v1693 = vshll.u32 %v1653, 8
        %v1694 = vmul.u32.u64.compose %v1693, %v1692
        %v1695 = vextract.low.u32 %v1694
        %v1696 = vextract.high.u32 %v1694
        %v1697 = vmul.u32.u64.compose %v1693, %v1688
        %v1698 = vextract.low.u32 %v1697
        %v1699 = vextract.high.u32 %v1697
        %v1700 = vmul.u32 %v1693, %v1684
        %v1701 = vadd.s32 %v1696, %v1698
        %vm1702 = vc.u32 %v1696, %v1698
        %v1703 = vadd.s32 %v1699, 1
        %v1704 = vsel %vm1702, %v1703, %v1699
        %v1705 = vadd.s32 %v1700, %v1704
        %v1706 = vadd.s32 %v1705, 536870912
        %v1707 = vshrl.u32 %v1706, 30
        %v1708 = vshll.u32 %v1707, 30
        %v1709 = vsub.s32 %v1705, %v1708
        %vm1710 = vcmp.lt.s32.totalorder %v1709, 0
        %v1711 = vsub.s32 0, %v1709
        %v1712 = vsel %vm1710, %v1711, %v1709
        %v1713 = vclz %v1712
        %v1714 = vsub.s32 %v1713, 2
        %vm1715 = vcmp.gt.s32.totalorder 0, %v1714
        %v1716 = vsel %vm1715, 0, %v1714
        %v1717 = vsub.s32 32, %v1716
        %v1718 = vshll.u32 %v1709, %v1716
        %v1719 = vshrl.u32 %v1701, %v1717
        %v1720 = vor.u32 %v1718, %v1719
        %v1721 = vsub.s32 4294967266, %v1716
        %v1722 = vadd.s32 %v1721, 127
        %v1723 = vshll.u32 %v1722, 23
        %v1724 = vor.u32 4788187, %v1723
        %v1725 = vand.u32 2147483647, %v1724
        %v1727 = vcvt.s32.f32 %v1720
        %v1728 = vmul.f32 %v1727, %v1725
        %v1729 = vxor.u32 %v1728, 2147483648
        %v1730 = vsel %vm1647, %v1729, %v1728
        %v1731 = vsub.s32 4, %v1707
        %v1732 = vsel %vm1647, %v1731, %v1707
        %v1733 = vsel %vm1646, %v389, %v1730
        %v1734 = vsel %vm1646, 0, %v1732
        %v1735 = vcosq.f32.pop %v1733
        %v1736 = vsinq.f32.pop %v1733
        %vm1737 = vweird.f32 %v389
        %v1738 = vand.u32 %v1734, 3
        %vm1739 = vcmp.lt.s32.totalorder %v1738, 2
        %vm1740 = vcmp.eq.s32.totalorder %v1738, 0
        %v1741 = vxor.u32 %v1736, 2147483648
        %v1742 = vsel %vm1740, %v1735, %v1741
        %vm1743 = vcmp.eq.s32.totalorder %v1738, 2
        %v1744 = vxor.u32 %v1735, 2147483648
        %v1745 = vsel %vm1743, %v1744, %v1736
        %v1746 = vsel %vm1739, %v1742, %v1745
        %v1747 = vsel %vm1737, nan, %v1746
        %v1748 = vand.u32 2147483647, %v390
        %vm1749 = vcmp.le.f32.partialorder %v1748, 0.7853982
        %vm1750 = vcmp.lt.s32.totalorder %v390, 0
        %v1751 = vand.u32 %v390, 2139095040
        %v1752 = vshrl.u32 %v1751, 23
        %v1753 = vsub.s32 %v1752, 127
        %v1754 = vand.u32 2147483647, %v390
        %v1755 = vand.u32 %v1754, 8388607
        %v1756 = vor.u32 %v1755, 8388608
        %v1757 = vsub.s32 0, %v1756
        %v1758 = vadd.s32 %v1753, 1
        %vm1759 = vcmp.gt.s32.totalorder %v1758, 0
        %v1760 = vsel %vm1759, %v1758, 0
        %v1761 = vshrl.u32 %v1760, 5
        %v1762 = vand.u32 %v1760, 31
        %v1763 = vsub.s32 32, %v1762
        %v1764 = vshrl.u32 683565275, %v1763
        %v1765 = vshll.u32 683565275, %v1762
        %v1766 = vshrl.u32 2475754826, %v1763
        %v1767 = vor.u32 %v1765, %v1766
        %v1768 = vshll.u32 2475754826, %v1762
        %v1769 = vshrl.u32 2131351028, %v1763
        %v1770 = vor.u32 %v1768, %v1769
        %v1771 = vshll.u32 2131351028, %v1762
        %v1772 = vshrl.u32 2102212464, %v1763
        %v1773 = vor.u32 %v1771, %v1772
        %v1774 = vshll.u32 2102212464, %v1762
        %v1775 = vshrl.u32 920167782, %v1763
        %v1776 = vor.u32 %v1774, %v1775
        %v1777 = vshll.u32 920167782, %v1762
        %v1778 = vshrl.u32 1326507024, %v1763
        %v1779 = vor.u32 %v1777, %v1778
        %vm1780 = vcmp.lt.s32.totalorder %v1761, 1
        %vm1781 = vcmp.lt.s32.totalorder %v1761, 2
        %vm1782 = vcmp.lt.s32.totalorder %v1761, 3
        %vm1783 = vcmp.lt.s32.totalorder %v1761, 4
        %v1784 = vsel %vm1780, %v1764, %v1767
        %v1785 = vsel %vm1783, %v1773, 2102212464
        %v1786 = vsel %vm1782, %v1770, %v1785
        %v1787 = vsel %vm1781, %v1784, %v1786
        %v1788 = vsel %vm1780, %v1767, %v1770
        %v1789 = vsel %vm1783, %v1776, 920167782
        %v1790 = vsel %vm1782, %v1773, %v1789
        %v1791 = vsel %vm1781, %v1788, %v1790
        %v1792 = vsel %vm1780, %v1770, %v1773
        %v1793 = vsel %vm1783, %v1779, 1326507024
        %v1794 = vsel %vm1782, %v1776, %v1793
        %v1795 = vsel %vm1781, %v1792, %v1794
        %v1796 = vshll.u32 %v1756, 8
        %v1797 = vmul.u32.u64.compose %v1796, %v1795
        %v1798 = vextract.low.u32 %v1797
        %v1799 = vextract.high.u32 %v1797
        %v1800 = vmul.u32.u64.compose %v1796, %v1791
        %v1801 = vextract.low.u32 %v1800
        %v1802 = vextract.high.u32 %v1800
        %v1803 = vmul.u32 %v1796, %v1787
        %v1804 = vadd.s32 %v1799, %v1801
        %vm1805 = vc.u32 %v1799, %v1801
        %v1806 = vadd.s32 %v1802, 1
        %v1807 = vsel %vm1805, %v1806, %v1802
        %v1808 = vadd.s32 %v1803, %v1807
        %v1809 = vadd.s32 %v1808, 536870912
        %v1810 = vshrl.u32 %v1809, 30
        %v1811 = vshll.u32 %v1810, 30
        %v1812 = vsub.s32 %v1808, %v1811
        %vm1813 = vcmp.lt.s32.totalorder %v1812, 0
        %v1814 = vsub.s32 0, %v1812
        %v1815 = vsel %vm1813, %v1814, %v1812
        %v1816 = vclz %v1815
        %v1817 = vsub.s32 %v1816, 2
        %vm1818 = vcmp.gt.s32.totalorder 0, %v1817
        %v1819 = vsel %vm1818, 0, %v1817
        %v1820 = vsub.s32 32, %v1819
        %v1821 = vshll.u32 %v1812, %v1819
        %v1822 = vshrl.u32 %v1804, %v1820
        %v1823 = vor.u32 %v1821, %v1822
        %v1824 = vsub.s32 4294967266, %v1819
        %v1825 = vadd.s32 %v1824, 127
        %v1826 = vshll.u32 %v1825, 23
        %v1827 = vor.u32 4788187, %v1826
        %v1828 = vand.u32 2147483647, %v1827
        %v1830 = vcvt.s32.f32 %v1823
        %v1831 = vmul.f32 %v1830, %v1828
        %v1832 = vxor.u32 %v1831, 2147483648
        %v1833 = vsel %vm1750, %v1832, %v1831
        %v1834 = vsub.s32 4, %v1810
        %v1835 = vsel %vm1750, %v1834, %v1810
        %v1836 = vsel %vm1749, %v390, %v1833
        %v1837 = vsel %vm1749, 0, %v1835
        %v1838 = vcosq.f32.pop %v1836
        %v1839 = vsinq.f32.pop %v1836
        %vm1840 = vweird.f32 %v390
        %v1841 = vand.u32 %v1837, 3
        %vm1842 = vcmp.lt.s32.totalorder %v1841, 2
        %vm1843 = vcmp.eq.s32.totalorder %v1841, 0
        %v1844 = vxor.u32 %v1839, 2147483648
        %v1845 = vsel %vm1843, %v1838, %v1844
        %vm1846 = vcmp.eq.s32.totalorder %v1841, 2
        %v1847 = vxor.u32 %v1838, 2147483648
        %v1848 = vsel %vm1846, %v1847, %v1839
        %v1849 = vsel %vm1842, %v1845, %v1848
        %v1850 = vsel %vm1840, nan, %v1849
        %v1851 = vand.u32 2147483647, %v391
        %vm1852 = vcmp.le.f32.partialorder %v1851, 0.7853982
        %vm1853 = vcmp.lt.s32.totalorder %v391, 0
        %v1854 = vand.u32 %v391, 2139095040
        %v1855 = vshrl.u32 %v1854, 23
        %v1856 = vsub.s32 %v1855, 127
        %v1857 = vand.u32 2147483647, %v391
        %v1858 = vand.u32 %v1857, 8388607
        %v1859 = vor.u32 %v1858, 8388608
        %v1860 = vsub.s32 0, %v1859
        %v1861 = vadd.s32 %v1856, 1
        %vm1862 = vcmp.gt.s32.totalorder %v1861, 0
        %v1863 = vsel %vm1862, %v1861, 0
        %v1864 = vshrl.u32 %v1863, 5
        %v1865 = vand.u32 %v1863, 31
        %v1866 = vsub.s32 32, %v1865
        %v1867 = vshrl.u32 683565275, %v1866
        %v1868 = vshll.u32 683565275, %v1865
        %v1869 = vshrl.u32 2475754826, %v1866
        %v1870 = vor.u32 %v1868, %v1869
        %v1871 = vshll.u32 2475754826, %v1865
        %v1872 = vshrl.u32 2131351028, %v1866
        %v1873 = vor.u32 %v1871, %v1872
        %v1874 = vshll.u32 2131351028, %v1865
        %v1875 = vshrl.u32 2102212464, %v1866
        %v1876 = vor.u32 %v1874, %v1875
        %v1877 = vshll.u32 2102212464, %v1865
        %v1878 = vshrl.u32 920167782, %v1866
        %v1879 = vor.u32 %v1877, %v1878
        %v1880 = vshll.u32 920167782, %v1865
        %v1881 = vshrl.u32 1326507024, %v1866
        %v1882 = vor.u32 %v1880, %v1881
        %vm1883 = vcmp.lt.s32.totalorder %v1864, 1
        %vm1884 = vcmp.lt.s32.totalorder %v1864, 2
        %vm1885 = vcmp.lt.s32.totalorder %v1864, 3
        %vm1886 = vcmp.lt.s32.totalorder %v1864, 4
        %v1887 = vsel %vm1883, %v1867, %v1870
        %v1888 = vsel %vm1886, %v1876, 2102212464
        %v1889 = vsel %vm1885, %v1873, %v1888
        %v1890 = vsel %vm1884, %v1887, %v1889
        %v1891 = vsel %vm1883, %v1870, %v1873
        %v1892 = vsel %vm1886, %v1879, 920167782
        %v1893 = vsel %vm1885, %v1876, %v1892
        %v1894 = vsel %vm1884, %v1891, %v1893
        %v1895 = vsel %vm1883, %v1873, %v1876
        %v1896 = vsel %vm1886, %v1882, 1326507024
        %v1897 = vsel %vm1885, %v1879, %v1896
        %v1898 = vsel %vm1884, %v1895, %v1897
        %v1899 = vshll.u32 %v1859, 8
        %v1900 = vmul.u32.u64.compose %v1899, %v1898
        %v1901 = vextract.low.u32 %v1900
        %v1902 = vextract.high.u32 %v1900
        %v1903 = vmul.u32.u64.compose %v1899, %v1894
        %v1904 = vextract.low.u32 %v1903
        %v1905 = vextract.high.u32 %v1903
        %v1906 = vmul.u32 %v1899, %v1890
        %v1907 = vadd.s32 %v1902, %v1904
        %vm1908 = vc.u32 %v1902, %v1904
        %v1909 = vadd.s32 %v1905, 1
        %v1910 = vsel %vm1908, %v1909, %v1905
        %v1911 = vadd.s32 %v1906, %v1910
        %v1912 = vadd.s32 %v1911, 536870912
        %v1913 = vshrl.u32 %v1912, 30
        %v1914 = vshll.u32 %v1913, 30
        %v1915 = vsub.s32 %v1911, %v1914
        %vm1916 = vcmp.lt.s32.totalorder %v1915, 0
        %v1917 = vsub.s32 0, %v1915
        %v1918 = vsel %vm1916, %v1917, %v1915
        %v1919 = vclz %v1918
        %v1920 = vsub.s32 %v1919, 2
        %vm1921 = vcmp.gt.s32.totalorder 0, %v1920
        %v1922 = vsel %vm1921, 0, %v1920
        %v1923 = vsub.s32 32, %v1922
        %v1924 = vshll.u32 %v1915, %v1922
        %v1925 = vshrl.u32 %v1907, %v1923
        %v1926 = vor.u32 %v1924, %v1925
        %v1927 = vsub.s32 4294967266, %v1922
        %v1928 = vadd.s32 %v1927, 127
        %v1929 = vshll.u32 %v1928, 23
        %v1930 = vor.u32 4788187, %v1929
        %v1931 = vand.u32 2147483647, %v1930
        %v1933 = vcvt.s32.f32 %v1926
        %v1934 = vmul.f32 %v1933, %v1931
        %v1935 = vxor.u32 %v1934, 2147483648
        %v1936 = vsel %vm1853, %v1935, %v1934
        %v1937 = vsub.s32 4, %v1913
        %v1938 = vsel %vm1853, %v1937, %v1913
        %v1939 = vsel %vm1852, %v391, %v1936
        %v1940 = vsel %vm1852, 0, %v1938
        %v1941 = vcosq.f32.pop %v1939
        %v1942 = vsinq.f32.pop %v1939
        %vm1943 = vweird.f32 %v391
        %v1944 = vand.u32 %v1940, 3
        %vm1945 = vcmp.lt.s32.totalorder %v1944, 2
        %vm1946 = vcmp.eq.s32.totalorder %v1944, 0
        %v1947 = vxor.u32 %v1942, 2147483648
        %v1948 = vsel %vm1946, %v1941, %v1947
        %vm1949 = vcmp.eq.s32.totalorder %v1944, 2
        %v1950 = vxor.u32 %v1941, 2147483648
        %v1951 = vsel %vm1949, %v1950, %v1942
        %v1952 = vsel %vm1945, %v1948, %v1951
        %v1953 = vsel %vm1943, nan, %v1952
        %v1954 = vand.u32 2147483647, %v392
        %vm1955 = vcmp.le.f32.partialorder %v1954, 0.7853982
        %vm1956 = vcmp.lt.s32.totalorder %v392, 0
        %v1957 = vand.u32 %v392, 2139095040
        %v1958 = vshrl.u32 %v1957, 23
        %v1959 = vsub.s32 %v1958, 127
        %v1960 = vand.u32 2147483647, %v392
        %v1961 = vand.u32 %v1960, 8388607
        %v1962 = vor.u32 %v1961, 8388608
        %v1963 = vsub.s32 0, %v1962
        %v1964 = vadd.s32 %v1959, 1
        %vm1965 = vcmp.gt.s32.totalorder %v1964, 0
        %v1966 = vsel %vm1965, %v1964, 0
        %v1967 = vshrl.u32 %v1966, 5
        %v1968 = vand.u32 %v1966, 31
        %v1969 = vsub.s32 32, %v1968
        %v1970 = vshrl.u32 683565275, %v1969
        %v1971 = vshll.u32 683565275, %v1968
        %v1972 = vshrl.u32 2475754826, %v1969
        %v1973 = vor.u32 %v1971, %v1972
        %v1974 = vshll.u32 2475754826, %v1968
        %v1975 = vshrl.u32 2131351028, %v1969
        %v1976 = vor.u32 %v1974, %v1975
        %v1977 = vshll.u32 2131351028, %v1968
        %v1978 = vshrl.u32 2102212464, %v1969
        %v1979 = vor.u32 %v1977, %v1978
        %v1980 = vshll.u32 2102212464, %v1968
        %v1981 = vshrl.u32 920167782, %v1969
        %v1982 = vor.u32 %v1980, %v1981
        %v1983 = vshll.u32 920167782, %v1968
        %v1984 = vshrl.u32 1326507024, %v1969
        %v1985 = vor.u32 %v1983, %v1984
        %vm1986 = vcmp.lt.s32.totalorder %v1967, 1
        %vm1987 = vcmp.lt.s32.totalorder %v1967, 2
        %vm1988 = vcmp.lt.s32.totalorder %v1967, 3
        %vm1989 = vcmp.lt.s32.totalorder %v1967, 4
        %v1990 = vsel %vm1986, %v1970, %v1973
        %v1991 = vsel %vm1989, %v1979, 2102212464
        %v1992 = vsel %vm1988, %v1976, %v1991
        %v1993 = vsel %vm1987, %v1990, %v1992
        %v1994 = vsel %vm1986, %v1973, %v1976
        %v1995 = vsel %vm1989, %v1982, 920167782
        %v1996 = vsel %vm1988, %v1979, %v1995
        %v1997 = vsel %vm1987, %v1994, %v1996
        %v1998 = vsel %vm1986, %v1976, %v1979
        %v1999 = vsel %vm1989, %v1985, 1326507024
        %v2000 = vsel %vm1988, %v1982, %v1999
        %v2001 = vsel %vm1987, %v1998, %v2000
        %v2002 = vshll.u32 %v1962, 8
        %v2003 = vmul.u32.u64.compose %v2002, %v2001
        %v2004 = vextract.low.u32 %v2003
        %v2005 = vextract.high.u32 %v2003
        %v2006 = vmul.u32.u64.compose %v2002, %v1997
        %v2007 = vextract.low.u32 %v2006
        %v2008 = vextract.high.u32 %v2006
        %v2009 = vmul.u32 %v2002, %v1993
        %v2010 = vadd.s32 %v2005, %v2007
        %vm2011 = vc.u32 %v2005, %v2007
        %v2012 = vadd.s32 %v2008, 1
        %v2013 = vsel %vm2011, %v2012, %v2008
        %v2014 = vadd.s32 %v2009, %v2013
        %v2015 = vadd.s32 %v2014, 536870912
        %v2016 = vshrl.u32 %v2015, 30
        %v2017 = vshll.u32 %v2016, 30
        %v2018 = vsub.s32 %v2014, %v2017
        %vm2019 = vcmp.lt.s32.totalorder %v2018, 0
        %v2020 = vsub.s32 0, %v2018
        %v2021 = vsel %vm2019, %v2020, %v2018
        %v2022 = vclz %v2021
        %v2023 = vsub.s32 %v2022, 2
        %vm2024 = vcmp.gt.s32.totalorder 0, %v2023
        %v2025 = vsel %vm2024, 0, %v2023
        %v2026 = vsub.s32 32, %v2025
        %v2027 = vshll.u32 %v2018, %v2025
        %v2028 = vshrl.u32 %v2010, %v2026
        %v2029 = vor.u32 %v2027, %v2028
        %v2030 = vsub.s32 4294967266, %v2025
        %v2031 = vadd.s32 %v2030, 127
        %v2032 = vshll.u32 %v2031, 23
        %v2033 = vor.u32 4788187, %v2032
        %v2034 = vand.u32 2147483647, %v2033
        %v2036 = vcvt.s32.f32 %v2029
        %v2037 = vmul.f32 %v2036, %v2034
        %v2038 = vxor.u32 %v2037, 2147483648
        %v2039 = vsel %vm1956, %v2038, %v2037
        %v2040 = vsub.s32 4, %v2016
        %v2041 = vsel %vm1956, %v2040, %v2016
        %v2042 = vsel %vm1955, %v392, %v2039
        %v2043 = vsel %vm1955, 0, %v2041
        %v2044 = vcosq.f32.pop %v2042
        %v2045 = vsinq.f32.pop %v2042
        %vm2046 = vweird.f32 %v392
        %v2047 = vand.u32 %v2043, 3
        %vm2048 = vcmp.lt.s32.totalorder %v2047, 2
        %vm2049 = vcmp.eq.s32.totalorder %v2047, 0
        %v2050 = vxor.u32 %v2045, 2147483648
        %v2051 = vsel %vm2049, %v2044, %v2050
        %vm2052 = vcmp.eq.s32.totalorder %v2047, 2
        %v2053 = vxor.u32 %v2044, 2147483648
        %v2054 = vsel %vm2052, %v2053, %v2045
        %v2055 = vsel %vm2048, %v2051, %v2054
        %v2056 = vsel %vm2046, nan, %v2055
        %v2057 = vand.u32 2147483647, %v393
        %vm2058 = vcmp.le.f32.partialorder %v2057, 0.7853982
        %vm2059 = vcmp.lt.s32.totalorder %v393, 0
        %v2060 = vand.u32 %v393, 2139095040
        %v2061 = vshrl.u32 %v2060, 23
        %v2062 = vsub.s32 %v2061, 127
        %v2063 = vand.u32 2147483647, %v393
        %v2064 = vand.u32 %v2063, 8388607
        %v2065 = vor.u32 %v2064, 8388608
        %v2066 = vsub.s32 0, %v2065
        %v2067 = vadd.s32 %v2062, 1
        %vm2068 = vcmp.gt.s32.totalorder %v2067, 0
        %v2069 = vsel %vm2068, %v2067, 0
        %v2070 = vshrl.u32 %v2069, 5
        %v2071 = vand.u32 %v2069, 31
        %v2072 = vsub.s32 32, %v2071
        %v2073 = vshrl.u32 683565275, %v2072
        %v2074 = vshll.u32 683565275, %v2071
        %v2075 = vshrl.u32 2475754826, %v2072
        %v2076 = vor.u32 %v2074, %v2075
        %v2077 = vshll.u32 2475754826, %v2071
        %v2078 = vshrl.u32 2131351028, %v2072
        %v2079 = vor.u32 %v2077, %v2078
        %v2080 = vshll.u32 2131351028, %v2071
        %v2081 = vshrl.u32 2102212464, %v2072
        %v2082 = vor.u32 %v2080, %v2081
        %v2083 = vshll.u32 2102212464, %v2071
        %v2084 = vshrl.u32 920167782, %v2072
        %v2085 = vor.u32 %v2083, %v2084
        %v2086 = vshll.u32 920167782, %v2071
        %v2087 = vshrl.u32 1326507024, %v2072
        %v2088 = vor.u32 %v2086, %v2087
        %vm2089 = vcmp.lt.s32.totalorder %v2070, 1
        %vm2090 = vcmp.lt.s32.totalorder %v2070, 2
        %vm2091 = vcmp.lt.s32.totalorder %v2070, 3
        %vm2092 = vcmp.lt.s32.totalorder %v2070, 4
        %v2093 = vsel %vm2089, %v2073, %v2076
        %v2094 = vsel %vm2092, %v2082, 2102212464
        %v2095 = vsel %vm2091, %v2079, %v2094
        %v2096 = vsel %vm2090, %v2093, %v2095
        %v2097 = vsel %vm2089, %v2076, %v2079
        %v2098 = vsel %vm2092, %v2085, 920167782
        %v2099 = vsel %vm2091, %v2082, %v2098
        %v2100 = vsel %vm2090, %v2097, %v2099
        %v2101 = vsel %vm2089, %v2079, %v2082
        %v2102 = vsel %vm2092, %v2088, 1326507024
        %v2103 = vsel %vm2091, %v2085, %v2102
        %v2104 = vsel %vm2090, %v2101, %v2103
        %v2105 = vshll.u32 %v2065, 8
        %v2106 = vmul.u32.u64.compose %v2105, %v2104
        %v2107 = vextract.low.u32 %v2106
        %v2108 = vextract.high.u32 %v2106
        %v2109 = vmul.u32.u64.compose %v2105, %v2100
        %v2110 = vextract.low.u32 %v2109
        %v2111 = vextract.high.u32 %v2109
        %v2112 = vmul.u32 %v2105, %v2096
        %v2113 = vadd.s32 %v2108, %v2110
        %vm2114 = vc.u32 %v2108, %v2110
        %v2115 = vadd.s32 %v2111, 1
        %v2116 = vsel %vm2114, %v2115, %v2111
        %v2117 = vadd.s32 %v2112, %v2116
        %v2118 = vadd.s32 %v2117, 536870912
        %v2119 = vshrl.u32 %v2118, 30
        %v2120 = vshll.u32 %v2119, 30
        %v2121 = vsub.s32 %v2117, %v2120
        %vm2122 = vcmp.lt.s32.totalorder %v2121, 0
        %v2123 = vsub.s32 0, %v2121
        %v2124 = vsel %vm2122, %v2123, %v2121
        %v2125 = vclz %v2124
        %v2126 = vsub.s32 %v2125, 2
        %vm2127 = vcmp.gt.s32.totalorder 0, %v2126
        %v2128 = vsel %vm2127, 0, %v2126
        %v2129 = vsub.s32 32, %v2128
        %v2130 = vshll.u32 %v2121, %v2128
        %v2131 = vshrl.u32 %v2113, %v2129
        %v2132 = vor.u32 %v2130, %v2131
        %v2133 = vsub.s32 4294967266, %v2128
        %v2134 = vadd.s32 %v2133, 127
        %v2135 = vshll.u32 %v2134, 23
        %v2136 = vor.u32 4788187, %v2135
        %v2137 = vand.u32 2147483647, %v2136
        %v2139 = vcvt.s32.f32 %v2132
        %v2140 = vmul.f32 %v2139, %v2137
        %v2141 = vxor.u32 %v2140, 2147483648
        %v2142 = vsel %vm2059, %v2141, %v2140
        %v2143 = vsub.s32 4, %v2119
        %v2144 = vsel %vm2059, %v2143, %v2119
        %v2145 = vsel %vm2058, %v393, %v2142
        %v2146 = vsel %vm2058, 0, %v2144
        %v2147 = vcosq.f32.pop %v2145
        %v2148 = vsinq.f32.pop %v2145
        %vm2149 = vweird.f32 %v393
        %v2150 = vand.u32 %v2146, 3
        %vm2151 = vcmp.lt.s32.totalorder %v2150, 2
        %vm2152 = vcmp.eq.s32.totalorder %v2150, 0
        %v2153 = vxor.u32 %v2148, 2147483648
        %v2154 = vsel %vm2152, %v2147, %v2153
        %vm2155 = vcmp.eq.s32.totalorder %v2150, 2
        %v2156 = vxor.u32 %v2147, 2147483648
        %v2157 = vsel %vm2155, %v2156, %v2148
        %v2158 = vsel %vm2151, %v2154, %v2157
        %v2159 = vsel %vm2149, nan, %v2158
        %v2160 = vand.u32 2147483647, %v394
        %vm2161 = vcmp.le.f32.partialorder %v2160, 0.7853982
        %vm2162 = vcmp.lt.s32.totalorder %v394, 0
        %v2163 = vand.u32 %v394, 2139095040
        %v2164 = vshrl.u32 %v2163, 23
        %v2165 = vsub.s32 %v2164, 127
        %v2166 = vand.u32 2147483647, %v394
        %v2167 = vand.u32 %v2166, 8388607
        %v2168 = vor.u32 %v2167, 8388608
        %v2169 = vsub.s32 0, %v2168
        %v2170 = vadd.s32 %v2165, 1
        %vm2171 = vcmp.gt.s32.totalorder %v2170, 0
        %v2172 = vsel %vm2171, %v2170, 0
        %v2173 = vshrl.u32 %v2172, 5
        %v2174 = vand.u32 %v2172, 31
        %v2175 = vsub.s32 32, %v2174
        %v2176 = vshrl.u32 683565275, %v2175
        %v2177 = vshll.u32 683565275, %v2174
        %v2178 = vshrl.u32 2475754826, %v2175
        %v2179 = vor.u32 %v2177, %v2178
        %v2180 = vshll.u32 2475754826, %v2174
        %v2181 = vshrl.u32 2131351028, %v2175
        %v2182 = vor.u32 %v2180, %v2181
        %v2183 = vshll.u32 2131351028, %v2174
        %v2184 = vshrl.u32 2102212464, %v2175
        %v2185 = vor.u32 %v2183, %v2184
        %v2186 = vshll.u32 2102212464, %v2174
        %v2187 = vshrl.u32 920167782, %v2175
        %v2188 = vor.u32 %v2186, %v2187
        %v2189 = vshll.u32 920167782, %v2174
        %v2190 = vshrl.u32 1326507024, %v2175
        %v2191 = vor.u32 %v2189, %v2190
        %vm2192 = vcmp.lt.s32.totalorder %v2173, 1
        %vm2193 = vcmp.lt.s32.totalorder %v2173, 2
        %vm2194 = vcmp.lt.s32.totalorder %v2173, 3
        %vm2195 = vcmp.lt.s32.totalorder %v2173, 4
        %v2196 = vsel %vm2192, %v2176, %v2179
        %v2197 = vsel %vm2195, %v2185, 2102212464
        %v2198 = vsel %vm2194, %v2182, %v2197
        %v2199 = vsel %vm2193, %v2196, %v2198
        %v2200 = vsel %vm2192, %v2179, %v2182
        %v2201 = vsel %vm2195, %v2188, 920167782
        %v2202 = vsel %vm2194, %v2185, %v2201
        %v2203 = vsel %vm2193, %v2200, %v2202
        %v2204 = vsel %vm2192, %v2182, %v2185
        %v2205 = vsel %vm2195, %v2191, 1326507024
        %v2206 = vsel %vm2194, %v2188, %v2205
        %v2207 = vsel %vm2193, %v2204, %v2206
        %v2208 = vshll.u32 %v2168, 8
        %v2209 = vmul.u32.u64.compose %v2208, %v2207
        %v2210 = vextract.low.u32 %v2209
        %v2211 = vextract.high.u32 %v2209
        %v2212 = vmul.u32.u64.compose %v2208, %v2203
        %v2213 = vextract.low.u32 %v2212
        %v2214 = vextract.high.u32 %v2212
        %v2215 = vmul.u32 %v2208, %v2199
        %v2216 = vadd.s32 %v2211, %v2213
        %vm2217 = vc.u32 %v2211, %v2213
        %v2218 = vadd.s32 %v2214, 1
        %v2219 = vsel %vm2217, %v2218, %v2214
        %v2220 = vadd.s32 %v2215, %v2219
        %v2221 = vadd.s32 %v2220, 536870912
        %v2222 = vshrl.u32 %v2221, 30
        %v2223 = vshll.u32 %v2222, 30
        %v2224 = vsub.s32 %v2220, %v2223
        %vm2225 = vcmp.lt.s32.totalorder %v2224, 0
        %v2226 = vsub.s32 0, %v2224
        %v2227 = vsel %vm2225, %v2226, %v2224
        %v2228 = vclz %v2227
        %v2229 = vsub.s32 %v2228, 2
        %vm2230 = vcmp.gt.s32.totalorder 0, %v2229
        %v2231 = vsel %vm2230, 0, %v2229
        %v2232 = vsub.s32 32, %v2231
        %v2233 = vshll.u32 %v2224, %v2231
        %v2234 = vshrl.u32 %v2216, %v2232
        %v2235 = vor.u32 %v2233, %v2234
        %v2236 = vsub.s32 4294967266, %v2231
        %v2237 = vadd.s32 %v2236, 127
        %v2238 = vshll.u32 %v2237, 23
        %v2239 = vor.u32 4788187, %v2238
        %v2240 = vand.u32 2147483647, %v2239
        %v2242 = vcvt.s32.f32 %v2235
        %v2243 = vmul.f32 %v2242, %v2240
        %v2244 = vxor.u32 %v2243, 2147483648
        %v2245 = vsel %vm2162, %v2244, %v2243
        %v2246 = vsub.s32 4, %v2222
        %v2247 = vsel %vm2162, %v2246, %v2222
        %v2248 = vsel %vm2161, %v394, %v2245
        %v2249 = vsel %vm2161, 0, %v2247
        %v2250 = vcosq.f32.pop %v2248
        %v2251 = vsinq.f32.pop %v2248
        %vm2252 = vweird.f32 %v394
        %v2253 = vand.u32 %v2249, 3
        %vm2254 = vcmp.lt.s32.totalorder %v2253, 2
        %vm2255 = vcmp.eq.s32.totalorder %v2253, 0
        %v2256 = vxor.u32 %v2251, 2147483648
        %v2257 = vsel %vm2255, %v2250, %v2256
        %vm2258 = vcmp.eq.s32.totalorder %v2253, 2
        %v2259 = vxor.u32 %v2250, 2147483648
        %v2260 = vsel %vm2258, %v2259, %v2251
        %v2261 = vsel %vm2254, %v2257, %v2260
        %v2262 = vsel %vm2252, nan, %v2261
        %v2263 = vand.u32 2147483647, %v395
        %vm2264 = vcmp.le.f32.partialorder %v2263, 0.7853982
        %vm2265 = vcmp.lt.s32.totalorder %v395, 0
        %v2266 = vand.u32 %v395, 2139095040
        %v2267 = vshrl.u32 %v2266, 23
        %v2268 = vsub.s32 %v2267, 127
        %v2269 = vand.u32 2147483647, %v395
        %v2270 = vand.u32 %v2269, 8388607
        %v2271 = vor.u32 %v2270, 8388608
        %v2272 = vsub.s32 0, %v2271
        %v2273 = vadd.s32 %v2268, 1
        %vm2274 = vcmp.gt.s32.totalorder %v2273, 0
        %v2275 = vsel %vm2274, %v2273, 0
        %v2276 = vshrl.u32 %v2275, 5
        %v2277 = vand.u32 %v2275, 31
        %v2278 = vsub.s32 32, %v2277
        %v2279 = vshrl.u32 683565275, %v2278
        %v2280 = vshll.u32 683565275, %v2277
        %v2281 = vshrl.u32 2475754826, %v2278
        %v2282 = vor.u32 %v2280, %v2281
        %v2283 = vshll.u32 2475754826, %v2277
        %v2284 = vshrl.u32 2131351028, %v2278
        %v2285 = vor.u32 %v2283, %v2284
        %v2286 = vshll.u32 2131351028, %v2277
        %v2287 = vshrl.u32 2102212464, %v2278
        %v2288 = vor.u32 %v2286, %v2287
        %v2289 = vshll.u32 2102212464, %v2277
        %v2290 = vshrl.u32 920167782, %v2278
        %v2291 = vor.u32 %v2289, %v2290
        %v2292 = vshll.u32 920167782, %v2277
        %v2293 = vshrl.u32 1326507024, %v2278
        %v2294 = vor.u32 %v2292, %v2293
        %vm2295 = vcmp.lt.s32.totalorder %v2276, 1
        %vm2296 = vcmp.lt.s32.totalorder %v2276, 2
        %vm2297 = vcmp.lt.s32.totalorder %v2276, 3
        %vm2298 = vcmp.lt.s32.totalorder %v2276, 4
        %v2299 = vsel %vm2295, %v2279, %v2282
        %v2300 = vsel %vm2298, %v2288, 2102212464
        %v2301 = vsel %vm2297, %v2285, %v2300
        %v2302 = vsel %vm2296, %v2299, %v2301
        %v2303 = vsel %vm2295, %v2282, %v2285
        %v2304 = vsel %vm2298, %v2291, 920167782
        %v2305 = vsel %vm2297, %v2288, %v2304
        %v2306 = vsel %vm2296, %v2303, %v2305
        %v2307 = vsel %vm2295, %v2285, %v2288
        %v2308 = vsel %vm2298, %v2294, 1326507024
        %v2309 = vsel %vm2297, %v2291, %v2308
        %v2310 = vsel %vm2296, %v2307, %v2309
        %v2311 = vshll.u32 %v2271, 8
        %v2312 = vmul.u32.u64.compose %v2311, %v2310
        %v2313 = vextract.low.u32 %v2312
        %v2314 = vextract.high.u32 %v2312
        %v2315 = vmul.u32.u64.compose %v2311, %v2306
        %v2316 = vextract.low.u32 %v2315
        %v2317 = vextract.high.u32 %v2315
        %v2318 = vmul.u32 %v2311, %v2302
        %v2319 = vadd.s32 %v2314, %v2316
        %vm2320 = vc.u32 %v2314, %v2316
        %v2321 = vadd.s32 %v2317, 1
        %v2322 = vsel %vm2320, %v2321, %v2317
        %v2323 = vadd.s32 %v2318, %v2322
        %v2324 = vadd.s32 %v2323, 536870912
        %v2325 = vshrl.u32 %v2324, 30
        %v2326 = vshll.u32 %v2325, 30
        %v2327 = vsub.s32 %v2323, %v2326
        %vm2328 = vcmp.lt.s32.totalorder %v2327, 0
        %v2329 = vsub.s32 0, %v2327
        %v2330 = vsel %vm2328, %v2329, %v2327
        %v2331 = vclz %v2330
        %v2332 = vsub.s32 %v2331, 2
        %vm2333 = vcmp.gt.s32.totalorder 0, %v2332
        %v2334 = vsel %vm2333, 0, %v2332
        %v2335 = vsub.s32 32, %v2334
        %v2336 = vshll.u32 %v2327, %v2334
        %v2337 = vshrl.u32 %v2319, %v2335
        %v2338 = vor.u32 %v2336, %v2337
        %v2339 = vsub.s32 4294967266, %v2334
        %v2340 = vadd.s32 %v2339, 127
        %v2341 = vshll.u32 %v2340, 23
        %v2342 = vor.u32 4788187, %v2341
        %v2343 = vand.u32 2147483647, %v2342
        %v2345 = vcvt.s32.f32 %v2338
        %v2346 = vmul.f32 %v2345, %v2343
        %v2347 = vxor.u32 %v2346, 2147483648
        %v2348 = vsel %vm2265, %v2347, %v2346
        %v2349 = vsub.s32 4, %v2325
        %v2350 = vsel %vm2265, %v2349, %v2325
        %v2351 = vsel %vm2264, %v395, %v2348
        %v2352 = vsel %vm2264, 0, %v2350
        %v2353 = vcosq.f32.pop %v2351
        %v2354 = vsinq.f32.pop %v2351
        %vm2355 = vweird.f32 %v395
        %v2356 = vand.u32 %v2352, 3
        %vm2357 = vcmp.lt.s32.totalorder %v2356, 2
        %vm2358 = vcmp.eq.s32.totalorder %v2356, 0
        %v2359 = vxor.u32 %v2354, 2147483648
        %v2360 = vsel %vm2358, %v2353, %v2359
        %vm2361 = vcmp.eq.s32.totalorder %v2356, 2
        %v2362 = vxor.u32 %v2353, 2147483648
        %v2363 = vsel %vm2361, %v2362, %v2354
        %v2364 = vsel %vm2357, %v2360, %v2363
        %v2365 = vsel %vm2355, nan, %v2364
        %v2366 = vand.u32 2147483647, %v396
        %vm2367 = vcmp.le.f32.partialorder %v2366, 0.7853982
        %vm2368 = vcmp.lt.s32.totalorder %v396, 0
        %v2369 = vand.u32 %v396, 2139095040
        %v2370 = vshrl.u32 %v2369, 23
        %v2371 = vsub.s32 %v2370, 127
        %v2372 = vand.u32 2147483647, %v396
        %v2373 = vand.u32 %v2372, 8388607
        %v2374 = vor.u32 %v2373, 8388608
        %v2375 = vsub.s32 0, %v2374
        %v2376 = vadd.s32 %v2371, 1
        %vm2377 = vcmp.gt.s32.totalorder %v2376, 0
        %v2378 = vsel %vm2377, %v2376, 0
        %v2379 = vshrl.u32 %v2378, 5
        %v2380 = vand.u32 %v2378, 31
        %v2381 = vsub.s32 32, %v2380
        %v2382 = vshrl.u32 683565275, %v2381
        %v2383 = vshll.u32 683565275, %v2380
        %v2384 = vshrl.u32 2475754826, %v2381
        %v2385 = vor.u32 %v2383, %v2384
        %v2386 = vshll.u32 2475754826, %v2380
        %v2387 = vshrl.u32 2131351028, %v2381
        %v2388 = vor.u32 %v2386, %v2387
        %v2389 = vshll.u32 2131351028, %v2380
        %v2390 = vshrl.u32 2102212464, %v2381
        %v2391 = vor.u32 %v2389, %v2390
        %v2392 = vshll.u32 2102212464, %v2380
        %v2393 = vshrl.u32 920167782, %v2381
        %v2394 = vor.u32 %v2392, %v2393
        %v2395 = vshll.u32 920167782, %v2380
        %v2396 = vshrl.u32 1326507024, %v2381
        %v2397 = vor.u32 %v2395, %v2396
        %vm2398 = vcmp.lt.s32.totalorder %v2379, 1
        %vm2399 = vcmp.lt.s32.totalorder %v2379, 2
        %vm2400 = vcmp.lt.s32.totalorder %v2379, 3
        %vm2401 = vcmp.lt.s32.totalorder %v2379, 4
        %v2402 = vsel %vm2398, %v2382, %v2385
        %v2403 = vsel %vm2401, %v2391, 2102212464
        %v2404 = vsel %vm2400, %v2388, %v2403
        %v2405 = vsel %vm2399, %v2402, %v2404
        %v2406 = vsel %vm2398, %v2385, %v2388
        %v2407 = vsel %vm2401, %v2394, 920167782
        %v2408 = vsel %vm2400, %v2391, %v2407
        %v2409 = vsel %vm2399, %v2406, %v2408
        %v2410 = vsel %vm2398, %v2388, %v2391
        %v2411 = vsel %vm2401, %v2397, 1326507024
        %v2412 = vsel %vm2400, %v2394, %v2411
        %v2413 = vsel %vm2399, %v2410, %v2412
        %v2414 = vshll.u32 %v2374, 8
        %v2415 = vmul.u32.u64.compose %v2414, %v2413
        %v2416 = vextract.low.u32 %v2415
        %v2417 = vextract.high.u32 %v2415
        %v2418 = vmul.u32.u64.compose %v2414, %v2409
        %v2419 = vextract.low.u32 %v2418
        %v2420 = vextract.high.u32 %v2418
        %v2421 = vmul.u32 %v2414, %v2405
        %v2422 = vadd.s32 %v2417, %v2419
        %vm2423 = vc.u32 %v2417, %v2419
        %v2424 = vadd.s32 %v2420, 1
        %v2425 = vsel %vm2423, %v2424, %v2420
        %v2426 = vadd.s32 %v2421, %v2425
        %v2427 = vadd.s32 %v2426, 536870912
        %v2428 = vshrl.u32 %v2427, 30
        %v2429 = vshll.u32 %v2428, 30
        %v2430 = vsub.s32 %v2426, %v2429
        %vm2431 = vcmp.lt.s32.totalorder %v2430, 0
        %v2432 = vsub.s32 0, %v2430
        %v2433 = vsel %vm2431, %v2432, %v2430
        %v2434 = vclz %v2433
        %v2435 = vsub.s32 %v2434, 2
        %vm2436 = vcmp.gt.s32.totalorder 0, %v2435
        %v2437 = vsel %vm2436, 0, %v2435
        %v2438 = vsub.s32 32, %v2437
        %v2439 = vshll.u32 %v2430, %v2437
        %v2440 = vshrl.u32 %v2422, %v2438
        %v2441 = vor.u32 %v2439, %v2440
        %v2442 = vsub.s32 4294967266, %v2437
        %v2443 = vadd.s32 %v2442, 127
        %v2444 = vshll.u32 %v2443, 23
        %v2445 = vor.u32 4788187, %v2444
        %v2446 = vand.u32 2147483647, %v2445
        %v2448 = vcvt.s32.f32 %v2441
        %v2449 = vmul.f32 %v2448, %v2446
        %v2450 = vxor.u32 %v2449, 2147483648
        %v2451 = vsel %vm2368, %v2450, %v2449
        %v2452 = vsub.s32 4, %v2428
        %v2453 = vsel %vm2368, %v2452, %v2428
        %v2454 = vsel %vm2367, %v396, %v2451
        %v2455 = vsel %vm2367, 0, %v2453
        %v2456 = vcosq.f32.pop %v2454
        %v2457 = vsinq.f32.pop %v2454
        %vm2458 = vweird.f32 %v396
        %v2459 = vand.u32 %v2455, 3
        %vm2460 = vcmp.lt.s32.totalorder %v2459, 2
        %vm2461 = vcmp.eq.s32.totalorder %v2459, 0
        %v2462 = vxor.u32 %v2457, 2147483648
        %v2463 = vsel %vm2461, %v2456, %v2462
        %vm2464 = vcmp.eq.s32.totalorder %v2459, 2
        %v2465 = vxor.u32 %v2456, 2147483648
        %v2466 = vsel %vm2464, %v2465, %v2457
        %v2467 = vsel %vm2460, %v2463, %v2466
        %v2468 = vsel %vm2458, nan, %v2467
        %v2469 = vand.u32 2147483647, %v397
        %vm2470 = vcmp.le.f32.partialorder %v2469, 0.7853982
        %vm2471 = vcmp.lt.s32.totalorder %v397, 0
        %v2472 = vand.u32 %v397, 2139095040
        %v2473 = vshrl.u32 %v2472, 23
        %v2474 = vsub.s32 %v2473, 127
        %v2475 = vand.u32 2147483647, %v397
        %v2476 = vand.u32 %v2475, 8388607
        %v2477 = vor.u32 %v2476, 8388608
        %v2478 = vsub.s32 0, %v2477
        %v2479 = vadd.s32 %v2474, 1
        %vm2480 = vcmp.gt.s32.totalorder %v2479, 0
        %v2481 = vsel %vm2480, %v2479, 0
        %v2482 = vshrl.u32 %v2481, 5
        %v2483 = vand.u32 %v2481, 31
        %v2484 = vsub.s32 32, %v2483
        %v2485 = vshrl.u32 683565275, %v2484
        %v2486 = vshll.u32 683565275, %v2483
        %v2487 = vshrl.u32 2475754826, %v2484
        %v2488 = vor.u32 %v2486, %v2487
        %v2489 = vshll.u32 2475754826, %v2483
        %v2490 = vshrl.u32 2131351028, %v2484
        %v2491 = vor.u32 %v2489, %v2490
        %v2492 = vshll.u32 2131351028, %v2483
        %v2493 = vshrl.u32 2102212464, %v2484
        %v2494 = vor.u32 %v2492, %v2493
        %v2495 = vshll.u32 2102212464, %v2483
        %v2496 = vshrl.u32 920167782, %v2484
        %v2497 = vor.u32 %v2495, %v2496
        %v2498 = vshll.u32 920167782, %v2483
        %v2499 = vshrl.u32 1326507024, %v2484
        %v2500 = vor.u32 %v2498, %v2499
        %vm2501 = vcmp.lt.s32.totalorder %v2482, 1
        %vm2502 = vcmp.lt.s32.totalorder %v2482, 2
        %vm2503 = vcmp.lt.s32.totalorder %v2482, 3
        %vm2504 = vcmp.lt.s32.totalorder %v2482, 4
        %v2505 = vsel %vm2501, %v2485, %v2488
        %v2506 = vsel %vm2504, %v2494, 2102212464
        %v2507 = vsel %vm2503, %v2491, %v2506
        %v2508 = vsel %vm2502, %v2505, %v2507
        %v2509 = vsel %vm2501, %v2488, %v2491
        %v2510 = vsel %vm2504, %v2497, 920167782
        %v2511 = vsel %vm2503, %v2494, %v2510
        %v2512 = vsel %vm2502, %v2509, %v2511
        %v2513 = vsel %vm2501, %v2491, %v2494
        %v2514 = vsel %vm2504, %v2500, 1326507024
        %v2515 = vsel %vm2503, %v2497, %v2514
        %v2516 = vsel %vm2502, %v2513, %v2515
        %v2517 = vshll.u32 %v2477, 8
        %v2518 = vmul.u32.u64.compose %v2517, %v2516
        %v2519 = vextract.low.u32 %v2518
        %v2520 = vextract.high.u32 %v2518
        %v2521 = vmul.u32.u64.compose %v2517, %v2512
        %v2522 = vextract.low.u32 %v2521
        %v2523 = vextract.high.u32 %v2521
        %v2524 = vmul.u32 %v2517, %v2508
        %v2525 = vadd.s32 %v2520, %v2522
        %vm2526 = vc.u32 %v2520, %v2522
        %v2527 = vadd.s32 %v2523, 1
        %v2528 = vsel %vm2526, %v2527, %v2523
        %v2529 = vadd.s32 %v2524, %v2528
        %v2530 = vadd.s32 %v2529, 536870912
        %v2531 = vshrl.u32 %v2530, 30
        %v2532 = vshll.u32 %v2531, 30
        %v2533 = vsub.s32 %v2529, %v2532
        %vm2534 = vcmp.lt.s32.totalorder %v2533, 0
        %v2535 = vsub.s32 0, %v2533
        %v2536 = vsel %vm2534, %v2535, %v2533
        %v2537 = vclz %v2536
        %v2538 = vsub.s32 %v2537, 2
        %vm2539 = vcmp.gt.s32.totalorder 0, %v2538
        %v2540 = vsel %vm2539, 0, %v2538
        %v2541 = vsub.s32 32, %v2540
        %v2542 = vshll.u32 %v2533, %v2540
        %v2543 = vshrl.u32 %v2525, %v2541
        %v2544 = vor.u32 %v2542, %v2543
        %v2545 = vsub.s32 4294967266, %v2540
        %v2546 = vadd.s32 %v2545, 127
        %v2547 = vshll.u32 %v2546, 23
        %v2548 = vor.u32 4788187, %v2547
        %v2549 = vand.u32 2147483647, %v2548
        %v2551 = vcvt.s32.f32 %v2544
        %v2552 = vmul.f32 %v2551, %v2549
        %v2553 = vxor.u32 %v2552, 2147483648
        %v2554 = vsel %vm2471, %v2553, %v2552
        %v2555 = vsub.s32 4, %v2531
        %v2556 = vsel %vm2471, %v2555, %v2531
        %v2557 = vsel %vm2470, %v397, %v2554
        %v2558 = vsel %vm2470, 0, %v2556
        %v2559 = vcosq.f32.pop %v2557
        %v2560 = vsinq.f32.pop %v2557
        %vm2561 = vweird.f32 %v397
        %v2562 = vand.u32 %v2558, 3
        %vm2563 = vcmp.lt.s32.totalorder %v2562, 2
        %vm2564 = vcmp.eq.s32.totalorder %v2562, 0
        %v2565 = vxor.u32 %v2560, 2147483648
        %v2566 = vsel %vm2564, %v2559, %v2565
        %vm2567 = vcmp.eq.s32.totalorder %v2562, 2
        %v2568 = vxor.u32 %v2559, 2147483648
        %v2569 = vsel %vm2567, %v2568, %v2560
        %v2570 = vsel %vm2563, %v2566, %v2569
        %v2571 = vsel %vm2561, nan, %v2570
        %v2572 = vand.u32 2147483647, %v398
        %vm2573 = vcmp.le.f32.partialorder %v2572, 0.7853982
        %vm2574 = vcmp.lt.s32.totalorder %v398, 0
        %v2575 = vand.u32 %v398, 2139095040
        %v2576 = vshrl.u32 %v2575, 23
        %v2577 = vsub.s32 %v2576, 127
        %v2578 = vand.u32 2147483647, %v398
        %v2579 = vand.u32 %v2578, 8388607
        %v2580 = vor.u32 %v2579, 8388608
        %v2581 = vsub.s32 0, %v2580
        %v2582 = vadd.s32 %v2577, 1
        %vm2583 = vcmp.gt.s32.totalorder %v2582, 0
        %v2584 = vsel %vm2583, %v2582, 0
        %v2585 = vshrl.u32 %v2584, 5
        %v2586 = vand.u32 %v2584, 31
        %v2587 = vsub.s32 32, %v2586
        %v2588 = vshrl.u32 683565275, %v2587
        %v2589 = vshll.u32 683565275, %v2586
        %v2590 = vshrl.u32 2475754826, %v2587
        %v2591 = vor.u32 %v2589, %v2590
        %v2592 = vshll.u32 2475754826, %v2586
        %v2593 = vshrl.u32 2131351028, %v2587
        %v2594 = vor.u32 %v2592, %v2593
        %v2595 = vshll.u32 2131351028, %v2586
        %v2596 = vshrl.u32 2102212464, %v2587
        %v2597 = vor.u32 %v2595, %v2596
        %v2598 = vshll.u32 2102212464, %v2586
        %v2599 = vshrl.u32 920167782, %v2587
        %v2600 = vor.u32 %v2598, %v2599
        %v2601 = vshll.u32 920167782, %v2586
        %v2602 = vshrl.u32 1326507024, %v2587
        %v2603 = vor.u32 %v2601, %v2602
        %vm2604 = vcmp.lt.s32.totalorder %v2585, 1
        %vm2605 = vcmp.lt.s32.totalorder %v2585, 2
        %vm2606 = vcmp.lt.s32.totalorder %v2585, 3
        %vm2607 = vcmp.lt.s32.totalorder %v2585, 4
        %v2608 = vsel %vm2604, %v2588, %v2591
        %v2609 = vsel %vm2607, %v2597, 2102212464
        %v2610 = vsel %vm2606, %v2594, %v2609
        %v2611 = vsel %vm2605, %v2608, %v2610
        %v2612 = vsel %vm2604, %v2591, %v2594
        %v2613 = vsel %vm2607, %v2600, 920167782
        %v2614 = vsel %vm2606, %v2597, %v2613
        %v2615 = vsel %vm2605, %v2612, %v2614
        %v2616 = vsel %vm2604, %v2594, %v2597
        %v2617 = vsel %vm2607, %v2603, 1326507024
        %v2618 = vsel %vm2606, %v2600, %v2617
        %v2619 = vsel %vm2605, %v2616, %v2618
        %v2620 = vshll.u32 %v2580, 8
        %v2621 = vmul.u32.u64.compose %v2620, %v2619
        %v2622 = vextract.low.u32 %v2621
        %v2623 = vextract.high.u32 %v2621
        %v2624 = vmul.u32.u64.compose %v2620, %v2615
        %v2625 = vextract.low.u32 %v2624
        %v2626 = vextract.high.u32 %v2624
        %v2627 = vmul.u32 %v2620, %v2611
        %v2628 = vadd.s32 %v2623, %v2625
        %vm2629 = vc.u32 %v2623, %v2625
        %v2630 = vadd.s32 %v2626, 1
        %v2631 = vsel %vm2629, %v2630, %v2626
        %v2632 = vadd.s32 %v2627, %v2631
        %v2633 = vadd.s32 %v2632, 536870912
        %v2634 = vshrl.u32 %v2633, 30
        %v2635 = vshll.u32 %v2634, 30
        %v2636 = vsub.s32 %v2632, %v2635
        %vm2637 = vcmp.lt.s32.totalorder %v2636, 0
        %v2638 = vsub.s32 0, %v2636
        %v2639 = vsel %vm2637, %v2638, %v2636
        %v2640 = vclz %v2639
        %v2641 = vsub.s32 %v2640, 2
        %vm2642 = vcmp.gt.s32.totalorder 0, %v2641
        %v2643 = vsel %vm2642, 0, %v2641
        %v2644 = vsub.s32 32, %v2643
        %v2645 = vshll.u32 %v2636, %v2643
        %v2646 = vshrl.u32 %v2628, %v2644
        %v2647 = vor.u32 %v2645, %v2646
        %v2648 = vsub.s32 4294967266, %v2643
        %v2649 = vadd.s32 %v2648, 127
        %v2650 = vshll.u32 %v2649, 23
        %v2651 = vor.u32 4788187, %v2650
        %v2652 = vand.u32 2147483647, %v2651
        %v2654 = vcvt.s32.f32 %v2647
        %v2655 = vmul.f32 %v2654, %v2652
        %v2656 = vxor.u32 %v2655, 2147483648
        %v2657 = vsel %vm2574, %v2656, %v2655
        %v2658 = vsub.s32 4, %v2634
        %v2659 = vsel %vm2574, %v2658, %v2634
        %v2660 = vsel %vm2573, %v398, %v2657
        %v2661 = vsel %vm2573, 0, %v2659
        %v2662 = vcosq.f32.pop %v2660
        %v2663 = vsinq.f32.pop %v2660
        %vm2664 = vweird.f32 %v398
        %v2665 = vand.u32 %v2661, 3
        %vm2666 = vcmp.lt.s32.totalorder %v2665, 2
        %vm2667 = vcmp.eq.s32.totalorder %v2665, 0
        %v2668 = vxor.u32 %v2663, 2147483648
        %v2669 = vsel %vm2667, %v2662, %v2668
        %vm2670 = vcmp.eq.s32.totalorder %v2665, 2
        %v2671 = vxor.u32 %v2662, 2147483648
        %v2672 = vsel %vm2670, %v2671, %v2663
        %v2673 = vsel %vm2666, %v2669, %v2672
        %v2674 = vsel %vm2664, nan, %v2673
        %v2675 = vand.u32 2147483647, %v399
        %vm2676 = vcmp.le.f32.partialorder %v2675, 0.7853982
        %vm2677 = vcmp.lt.s32.totalorder %v399, 0
        %v2678 = vand.u32 %v399, 2139095040
        %v2679 = vshrl.u32 %v2678, 23
        %v2680 = vsub.s32 %v2679, 127
        %v2681 = vand.u32 2147483647, %v399
        %v2682 = vand.u32 %v2681, 8388607
        %v2683 = vor.u32 %v2682, 8388608
        %v2684 = vsub.s32 0, %v2683
        %v2685 = vadd.s32 %v2680, 1
        %vm2686 = vcmp.gt.s32.totalorder %v2685, 0
        %v2687 = vsel %vm2686, %v2685, 0
        %v2688 = vshrl.u32 %v2687, 5
        %v2689 = vand.u32 %v2687, 31
        %v2690 = vsub.s32 32, %v2689
        %v2691 = vshrl.u32 683565275, %v2690
        %v2692 = vshll.u32 683565275, %v2689
        %v2693 = vshrl.u32 2475754826, %v2690
        %v2694 = vor.u32 %v2692, %v2693
        %v2695 = vshll.u32 2475754826, %v2689
        %v2696 = vshrl.u32 2131351028, %v2690
        %v2697 = vor.u32 %v2695, %v2696
        %v2698 = vshll.u32 2131351028, %v2689
        %v2699 = vshrl.u32 2102212464, %v2690
        %v2700 = vor.u32 %v2698, %v2699
        %v2701 = vshll.u32 2102212464, %v2689
        %v2702 = vshrl.u32 920167782, %v2690
        %v2703 = vor.u32 %v2701, %v2702
        %v2704 = vshll.u32 920167782, %v2689
        %v2705 = vshrl.u32 1326507024, %v2690
        %v2706 = vor.u32 %v2704, %v2705
        %vm2707 = vcmp.lt.s32.totalorder %v2688, 1
        %vm2708 = vcmp.lt.s32.totalorder %v2688, 2
        %vm2709 = vcmp.lt.s32.totalorder %v2688, 3
        %vm2710 = vcmp.lt.s32.totalorder %v2688, 4
        %v2711 = vsel %vm2707, %v2691, %v2694
        %v2712 = vsel %vm2710, %v2700, 2102212464
        %v2713 = vsel %vm2709, %v2697, %v2712
        %v2714 = vsel %vm2708, %v2711, %v2713
        %v2715 = vsel %vm2707, %v2694, %v2697
        %v2716 = vsel %vm2710, %v2703, 920167782
        %v2717 = vsel %vm2709, %v2700, %v2716
        %v2718 = vsel %vm2708, %v2715, %v2717
        %v2719 = vsel %vm2707, %v2697, %v2700
        %v2720 = vsel %vm2710, %v2706, 1326507024
        %v2721 = vsel %vm2709, %v2703, %v2720
        %v2722 = vsel %vm2708, %v2719, %v2721
        %v2723 = vshll.u32 %v2683, 8
        %v2724 = vmul.u32.u64.compose %v2723, %v2722
        %v2725 = vextract.low.u32 %v2724
        %v2726 = vextract.high.u32 %v2724
        %v2727 = vmul.u32.u64.compose %v2723, %v2718
        %v2728 = vextract.low.u32 %v2727
        %v2729 = vextract.high.u32 %v2727
        %v2730 = vmul.u32 %v2723, %v2714
        %v2731 = vadd.s32 %v2726, %v2728
        %vm2732 = vc.u32 %v2726, %v2728
        %v2733 = vadd.s32 %v2729, 1
        %v2734 = vsel %vm2732, %v2733, %v2729
        %v2735 = vadd.s32 %v2730, %v2734
        %v2736 = vadd.s32 %v2735, 536870912
        %v2737 = vshrl.u32 %v2736, 30
        %v2738 = vshll.u32 %v2737, 30
        %v2739 = vsub.s32 %v2735, %v2738
        %vm2740 = vcmp.lt.s32.totalorder %v2739, 0
        %v2741 = vsub.s32 0, %v2739
        %v2742 = vsel %vm2740, %v2741, %v2739
        %v2743 = vclz %v2742
        %v2744 = vsub.s32 %v2743, 2
        %vm2745 = vcmp.gt.s32.totalorder 0, %v2744
        %v2746 = vsel %vm2745, 0, %v2744
        %v2747 = vsub.s32 32, %v2746
        %v2748 = vshll.u32 %v2739, %v2746
        %v2749 = vshrl.u32 %v2731, %v2747
        %v2750 = vor.u32 %v2748, %v2749
        %v2751 = vsub.s32 4294967266, %v2746
        %v2752 = vadd.s32 %v2751, 127
        %v2753 = vshll.u32 %v2752, 23
        %v2754 = vor.u32 4788187, %v2753
        %v2755 = vand.u32 2147483647, %v2754
        %v2757 = vcvt.s32.f32 %v2750
        %v2758 = vmul.f32 %v2757, %v2755
        %v2759 = vxor.u32 %v2758, 2147483648
        %v2760 = vsel %vm2677, %v2759, %v2758
        %v2761 = vsub.s32 4, %v2737
        %v2762 = vsel %vm2677, %v2761, %v2737
        %v2763 = vsel %vm2676, %v399, %v2760
        %v2764 = vsel %vm2676, 0, %v2762
        %v2765 = vcosq.f32.pop %v2763
        %v2766 = vsinq.f32.pop %v2763
        %vm2767 = vweird.f32 %v399
        %v2768 = vand.u32 %v2764, 3
        %vm2769 = vcmp.lt.s32.totalorder %v2768, 2
        %vm2770 = vcmp.eq.s32.totalorder %v2768, 0
        %v2771 = vxor.u32 %v2766, 2147483648
        %v2772 = vsel %vm2770, %v2765, %v2771
        %vm2773 = vcmp.eq.s32.totalorder %v2768, 2
        %v2774 = vxor.u32 %v2765, 2147483648
        %v2775 = vsel %vm2773, %v2774, %v2766
        %v2776 = vsel %vm2769, %v2772, %v2775
        %v2777 = vsel %vm2767, nan, %v2776
        %v2778 = vand.u32 2147483647, %v400
        %vm2779 = vcmp.le.f32.partialorder %v2778, 0.7853982
        %vm2780 = vcmp.lt.s32.totalorder %v400, 0
        %v2781 = vand.u32 %v400, 2139095040
        %v2782 = vshrl.u32 %v2781, 23
        %v2783 = vsub.s32 %v2782, 127
        %v2784 = vand.u32 2147483647, %v400
        %v2785 = vand.u32 %v2784, 8388607
        %v2786 = vor.u32 %v2785, 8388608
        %v2787 = vsub.s32 0, %v2786
        %v2788 = vadd.s32 %v2783, 1
        %vm2789 = vcmp.gt.s32.totalorder %v2788, 0
        %v2790 = vsel %vm2789, %v2788, 0
        %v2791 = vshrl.u32 %v2790, 5
        %v2792 = vand.u32 %v2790, 31
        %v2793 = vsub.s32 32, %v2792
        %v2794 = vshrl.u32 683565275, %v2793
        %v2795 = vshll.u32 683565275, %v2792
        %v2796 = vshrl.u32 2475754826, %v2793
        %v2797 = vor.u32 %v2795, %v2796
        %v2798 = vshll.u32 2475754826, %v2792
        %v2799 = vshrl.u32 2131351028, %v2793
        %v2800 = vor.u32 %v2798, %v2799
        %v2801 = vshll.u32 2131351028, %v2792
        %v2802 = vshrl.u32 2102212464, %v2793
        %v2803 = vor.u32 %v2801, %v2802
        %v2804 = vshll.u32 2102212464, %v2792
        %v2805 = vshrl.u32 920167782, %v2793
        %v2806 = vor.u32 %v2804, %v2805
        %v2807 = vshll.u32 920167782, %v2792
        %v2808 = vshrl.u32 1326507024, %v2793
        %v2809 = vor.u32 %v2807, %v2808
        %vm2810 = vcmp.lt.s32.totalorder %v2791, 1
        %vm2811 = vcmp.lt.s32.totalorder %v2791, 2
        %vm2812 = vcmp.lt.s32.totalorder %v2791, 3
        %vm2813 = vcmp.lt.s32.totalorder %v2791, 4
        %v2814 = vsel %vm2810, %v2794, %v2797
        %v2815 = vsel %vm2813, %v2803, 2102212464
        %v2816 = vsel %vm2812, %v2800, %v2815
        %v2817 = vsel %vm2811, %v2814, %v2816
        %v2818 = vsel %vm2810, %v2797, %v2800
        %v2819 = vsel %vm2813, %v2806, 920167782
        %v2820 = vsel %vm2812, %v2803, %v2819
        %v2821 = vsel %vm2811, %v2818, %v2820
        %v2822 = vsel %vm2810, %v2800, %v2803
        %v2823 = vsel %vm2813, %v2809, 1326507024
        %v2824 = vsel %vm2812, %v2806, %v2823
        %v2825 = vsel %vm2811, %v2822, %v2824
        %v2826 = vshll.u32 %v2786, 8
        %v2827 = vmul.u32.u64.compose %v2826, %v2825
        %v2828 = vextract.low.u32 %v2827
        %v2829 = vextract.high.u32 %v2827
        %v2830 = vmul.u32.u64.compose %v2826, %v2821
        %v2831 = vextract.low.u32 %v2830
        %v2832 = vextract.high.u32 %v2830
        %v2833 = vmul.u32 %v2826, %v2817
        %v2834 = vadd.s32 %v2829, %v2831
        %vm2835 = vc.u32 %v2829, %v2831
        %v2836 = vadd.s32 %v2832, 1
        %v2837 = vsel %vm2835, %v2836, %v2832
        %v2838 = vadd.s32 %v2833, %v2837
        %v2839 = vadd.s32 %v2838, 536870912
        %v2840 = vshrl.u32 %v2839, 30
        %v2841 = vshll.u32 %v2840, 30
        %v2842 = vsub.s32 %v2838, %v2841
        %vm2843 = vcmp.lt.s32.totalorder %v2842, 0
        %v2844 = vsub.s32 0, %v2842
        %v2845 = vsel %vm2843, %v2844, %v2842
        %v2846 = vclz %v2845
        %v2847 = vsub.s32 %v2846, 2
        %vm2848 = vcmp.gt.s32.totalorder 0, %v2847
        %v2849 = vsel %vm2848, 0, %v2847
        %v2850 = vsub.s32 32, %v2849
        %v2851 = vshll.u32 %v2842, %v2849
        %v2852 = vshrl.u32 %v2834, %v2850
        %v2853 = vor.u32 %v2851, %v2852
        %v2854 = vsub.s32 4294967266, %v2849
        %v2855 = vadd.s32 %v2854, 127
        %v2856 = vshll.u32 %v2855, 23
        %v2857 = vor.u32 4788187, %v2856
        %v2858 = vand.u32 2147483647, %v2857
        %v2860 = vcvt.s32.f32 %v2853
        %v2861 = vmul.f32 %v2860, %v2858
        %v2862 = vxor.u32 %v2861, 2147483648
        %v2863 = vsel %vm2780, %v2862, %v2861
        %v2864 = vsub.s32 4, %v2840
        %v2865 = vsel %vm2780, %v2864, %v2840
        %v2866 = vsel %vm2779, %v400, %v2863
        %v2867 = vsel %vm2779, 0, %v2865
        %v2868 = vcosq.f32.pop %v2866
        %v2869 = vsinq.f32.pop %v2866
        %vm2870 = vweird.f32 %v400
        %v2871 = vand.u32 %v2867, 3
        %vm2872 = vcmp.lt.s32.totalorder %v2871, 2
        %vm2873 = vcmp.eq.s32.totalorder %v2871, 0
        %v2874 = vxor.u32 %v2869, 2147483648
        %v2875 = vsel %vm2873, %v2868, %v2874
        %vm2876 = vcmp.eq.s32.totalorder %v2871, 2
        %v2877 = vxor.u32 %v2868, 2147483648
        %v2878 = vsel %vm2876, %v2877, %v2869
        %v2879 = vsel %vm2872, %v2875, %v2878
        %v2880 = vsel %vm2870, nan, %v2879
        %v2881 = vand.u32 2147483647, %v401
        %vm2882 = vcmp.le.f32.partialorder %v2881, 0.7853982
        %vm2883 = vcmp.lt.s32.totalorder %v401, 0
        %v2884 = vand.u32 %v401, 2139095040
        %v2885 = vshrl.u32 %v2884, 23
        %v2886 = vsub.s32 %v2885, 127
        %v2887 = vand.u32 2147483647, %v401
        %v2888 = vand.u32 %v2887, 8388607
        %v2889 = vor.u32 %v2888, 8388608
        %v2890 = vsub.s32 0, %v2889
        %v2891 = vadd.s32 %v2886, 1
        %vm2892 = vcmp.gt.s32.totalorder %v2891, 0
        %v2893 = vsel %vm2892, %v2891, 0
        %v2894 = vshrl.u32 %v2893, 5
        %v2895 = vand.u32 %v2893, 31
        %v2896 = vsub.s32 32, %v2895
        %v2897 = vshrl.u32 683565275, %v2896
        %v2898 = vshll.u32 683565275, %v2895
        %v2899 = vshrl.u32 2475754826, %v2896
        %v2900 = vor.u32 %v2898, %v2899
        %v2901 = vshll.u32 2475754826, %v2895
        %v2902 = vshrl.u32 2131351028, %v2896
        %v2903 = vor.u32 %v2901, %v2902
        %v2904 = vshll.u32 2131351028, %v2895
        %v2905 = vshrl.u32 2102212464, %v2896
        %v2906 = vor.u32 %v2904, %v2905
        %v2907 = vshll.u32 2102212464, %v2895
        %v2908 = vshrl.u32 920167782, %v2896
        %v2909 = vor.u32 %v2907, %v2908
        %v2910 = vshll.u32 920167782, %v2895
        %v2911 = vshrl.u32 1326507024, %v2896
        %v2912 = vor.u32 %v2910, %v2911
        %vm2913 = vcmp.lt.s32.totalorder %v2894, 1
        %vm2914 = vcmp.lt.s32.totalorder %v2894, 2
        %vm2915 = vcmp.lt.s32.totalorder %v2894, 3
        %vm2916 = vcmp.lt.s32.totalorder %v2894, 4
        %v2917 = vsel %vm2913, %v2897, %v2900
        %v2918 = vsel %vm2916, %v2906, 2102212464
        %v2919 = vsel %vm2915, %v2903, %v2918
        %v2920 = vsel %vm2914, %v2917, %v2919
        %v2921 = vsel %vm2913, %v2900, %v2903
        %v2922 = vsel %vm2916, %v2909, 920167782
        %v2923 = vsel %vm2915, %v2906, %v2922
        %v2924 = vsel %vm2914, %v2921, %v2923
        %v2925 = vsel %vm2913, %v2903, %v2906
        %v2926 = vsel %vm2916, %v2912, 1326507024
        %v2927 = vsel %vm2915, %v2909, %v2926
        %v2928 = vsel %vm2914, %v2925, %v2927
        %v2929 = vshll.u32 %v2889, 8
        %v2930 = vmul.u32.u64.compose %v2929, %v2928
        %v2931 = vextract.low.u32 %v2930
        %v2932 = vextract.high.u32 %v2930
        %v2933 = vmul.u32.u64.compose %v2929, %v2924
        %v2934 = vextract.low.u32 %v2933
        %v2935 = vextract.high.u32 %v2933
        %v2936 = vmul.u32 %v2929, %v2920
        %v2937 = vadd.s32 %v2932, %v2934
        %vm2938 = vc.u32 %v2932, %v2934
        %v2939 = vadd.s32 %v2935, 1
        %v2940 = vsel %vm2938, %v2939, %v2935
        %v2941 = vadd.s32 %v2936, %v2940
        %v2942 = vadd.s32 %v2941, 536870912
        %v2943 = vshrl.u32 %v2942, 30
        %v2944 = vshll.u32 %v2943, 30
        %v2945 = vsub.s32 %v2941, %v2944
        %vm2946 = vcmp.lt.s32.totalorder %v2945, 0
        %v2947 = vsub.s32 0, %v2945
        %v2948 = vsel %vm2946, %v2947, %v2945
        %v2949 = vclz %v2948
        %v2950 = vsub.s32 %v2949, 2
        %vm2951 = vcmp.gt.s32.totalorder 0, %v2950
        %v2952 = vsel %vm2951, 0, %v2950
        %v2953 = vsub.s32 32, %v2952
        %v2954 = vshll.u32 %v2945, %v2952
        %v2955 = vshrl.u32 %v2937, %v2953
        %v2956 = vor.u32 %v2954, %v2955
        %v2957 = vsub.s32 4294967266, %v2952
        %v2958 = vadd.s32 %v2957, 127
        %v2959 = vshll.u32 %v2958, 23
        %v2960 = vor.u32 4788187, %v2959
        %v2961 = vand.u32 2147483647, %v2960
        %v2963 = vcvt.s32.f32 %v2956
        %v2964 = vmul.f32 %v2963, %v2961
        %v2965 = vxor.u32 %v2964, 2147483648
        %v2966 = vsel %vm2883, %v2965, %v2964
        %v2967 = vsub.s32 4, %v2943
        %v2968 = vsel %vm2883, %v2967, %v2943
        %v2969 = vsel %vm2882, %v401, %v2966
        %v2970 = vsel %vm2882, 0, %v2968
        %v2971 = vcosq.f32.pop %v2969
        %v2972 = vsinq.f32.pop %v2969
        %vm2973 = vweird.f32 %v401
        %v2974 = vand.u32 %v2970, 3
        %vm2975 = vcmp.lt.s32.totalorder %v2974, 2
        %vm2976 = vcmp.eq.s32.totalorder %v2974, 0
        %v2977 = vxor.u32 %v2972, 2147483648
        %v2978 = vsel %vm2976, %v2971, %v2977
        %vm2979 = vcmp.eq.s32.totalorder %v2974, 2
        %v2980 = vxor.u32 %v2971, 2147483648
        %v2981 = vsel %vm2979, %v2980, %v2972
        %v2982 = vsel %vm2975, %v2978, %v2981
        %v2983 = vsel %vm2973, nan, %v2982
        %v2984 = vand.u32 2147483647, %v402
        %vm2985 = vcmp.le.f32.partialorder %v2984, 0.7853982
        %vm2986 = vcmp.lt.s32.totalorder %v402, 0
        %v2987 = vand.u32 %v402, 2139095040
        %v2988 = vshrl.u32 %v2987, 23
        %v2989 = vsub.s32 %v2988, 127
        %v2990 = vand.u32 2147483647, %v402
        %v2991 = vand.u32 %v2990, 8388607
        %v2992 = vor.u32 %v2991, 8388608
        %v2993 = vsub.s32 0, %v2992
        %v2994 = vadd.s32 %v2989, 1
        %vm2995 = vcmp.gt.s32.totalorder %v2994, 0
        %v2996 = vsel %vm2995, %v2994, 0
        %v2997 = vshrl.u32 %v2996, 5
        %v2998 = vand.u32 %v2996, 31
        %v2999 = vsub.s32 32, %v2998
        %v3000 = vshrl.u32 683565275, %v2999
        %v3001 = vshll.u32 683565275, %v2998
        %v3002 = vshrl.u32 2475754826, %v2999
        %v3003 = vor.u32 %v3001, %v3002
        %v3004 = vshll.u32 2475754826, %v2998
        %v3005 = vshrl.u32 2131351028, %v2999
        %v3006 = vor.u32 %v3004, %v3005
        %v3007 = vshll.u32 2131351028, %v2998
        %v3008 = vshrl.u32 2102212464, %v2999
        %v3009 = vor.u32 %v3007, %v3008
        %v3010 = vshll.u32 2102212464, %v2998
        %v3011 = vshrl.u32 920167782, %v2999
        %v3012 = vor.u32 %v3010, %v3011
        %v3013 = vshll.u32 920167782, %v2998
        %v3014 = vshrl.u32 1326507024, %v2999
        %v3015 = vor.u32 %v3013, %v3014
        %vm3016 = vcmp.lt.s32.totalorder %v2997, 1
        %vm3017 = vcmp.lt.s32.totalorder %v2997, 2
        %vm3018 = vcmp.lt.s32.totalorder %v2997, 3
        %vm3019 = vcmp.lt.s32.totalorder %v2997, 4
        %v3020 = vsel %vm3016, %v3000, %v3003
        %v3021 = vsel %vm3019, %v3009, 2102212464
        %v3022 = vsel %vm3018, %v3006, %v3021
        %v3023 = vsel %vm3017, %v3020, %v3022
        %v3024 = vsel %vm3016, %v3003, %v3006
        %v3025 = vsel %vm3019, %v3012, 920167782
        %v3026 = vsel %vm3018, %v3009, %v3025
        %v3027 = vsel %vm3017, %v3024, %v3026
        %v3028 = vsel %vm3016, %v3006, %v3009
        %v3029 = vsel %vm3019, %v3015, 1326507024
        %v3030 = vsel %vm3018, %v3012, %v3029
        %v3031 = vsel %vm3017, %v3028, %v3030
        %v3032 = vshll.u32 %v2992, 8
        %v3033 = vmul.u32.u64.compose %v3032, %v3031
        %v3034 = vextract.low.u32 %v3033
        %v3035 = vextract.high.u32 %v3033
        %v3036 = vmul.u32.u64.compose %v3032, %v3027
        %v3037 = vextract.low.u32 %v3036
        %v3038 = vextract.high.u32 %v3036
        %v3039 = vmul.u32 %v3032, %v3023
        %v3040 = vadd.s32 %v3035, %v3037
        %vm3041 = vc.u32 %v3035, %v3037
        %v3042 = vadd.s32 %v3038, 1
        %v3043 = vsel %vm3041, %v3042, %v3038
        %v3044 = vadd.s32 %v3039, %v3043
        %v3045 = vadd.s32 %v3044, 536870912
        %v3046 = vshrl.u32 %v3045, 30
        %v3047 = vshll.u32 %v3046, 30
        %v3048 = vsub.s32 %v3044, %v3047
        %vm3049 = vcmp.lt.s32.totalorder %v3048, 0
        %v3050 = vsub.s32 0, %v3048
        %v3051 = vsel %vm3049, %v3050, %v3048
        %v3052 = vclz %v3051
        %v3053 = vsub.s32 %v3052, 2
        %vm3054 = vcmp.gt.s32.totalorder 0, %v3053
        %v3055 = vsel %vm3054, 0, %v3053
        %v3056 = vsub.s32 32, %v3055
        %v3057 = vshll.u32 %v3048, %v3055
        %v3058 = vshrl.u32 %v3040, %v3056
        %v3059 = vor.u32 %v3057, %v3058
        %v3060 = vsub.s32 4294967266, %v3055
        %v3061 = vadd.s32 %v3060, 127
        %v3062 = vshll.u32 %v3061, 23
        %v3063 = vor.u32 4788187, %v3062
        %v3064 = vand.u32 2147483647, %v3063
        %v3066 = vcvt.s32.f32 %v3059
        %v3067 = vmul.f32 %v3066, %v3064
        %v3068 = vxor.u32 %v3067, 2147483648
        %v3069 = vsel %vm2986, %v3068, %v3067
        %v3070 = vsub.s32 4, %v3046
        %v3071 = vsel %vm2986, %v3070, %v3046
        %v3072 = vsel %vm2985, %v402, %v3069
        %v3073 = vsel %vm2985, 0, %v3071
        %v3074 = vcosq.f32.pop %v3072
        %v3075 = vsinq.f32.pop %v3072
        %vm3076 = vweird.f32 %v402
        %v3077 = vand.u32 %v3073, 3
        %vm3078 = vcmp.lt.s32.totalorder %v3077, 2
        %vm3079 = vcmp.eq.s32.totalorder %v3077, 0
        %v3080 = vxor.u32 %v3075, 2147483648
        %v3081 = vsel %vm3079, %v3074, %v3080
        %vm3082 = vcmp.eq.s32.totalorder %v3077, 2
        %v3083 = vxor.u32 %v3074, 2147483648
        %v3084 = vsel %vm3082, %v3083, %v3075
        %v3085 = vsel %vm3078, %v3081, %v3084
        %v3086 = vsel %vm3076, nan, %v3085
        %v3087 = vand.u32 2147483647, %v403
        %vm3088 = vcmp.le.f32.partialorder %v3087, 0.7853982
        %vm3089 = vcmp.lt.s32.totalorder %v403, 0
        %v3090 = vand.u32 %v403, 2139095040
        %v3091 = vshrl.u32 %v3090, 23
        %v3092 = vsub.s32 %v3091, 127
        %v3093 = vand.u32 2147483647, %v403
        %v3094 = vand.u32 %v3093, 8388607
        %v3095 = vor.u32 %v3094, 8388608
        %v3096 = vsub.s32 0, %v3095
        %v3097 = vadd.s32 %v3092, 1
        %vm3098 = vcmp.gt.s32.totalorder %v3097, 0
        %v3099 = vsel %vm3098, %v3097, 0
        %v3100 = vshrl.u32 %v3099, 5
        %v3101 = vand.u32 %v3099, 31
        %v3102 = vsub.s32 32, %v3101
        %v3103 = vshrl.u32 683565275, %v3102
        %v3104 = vshll.u32 683565275, %v3101
        %v3105 = vshrl.u32 2475754826, %v3102
        %v3106 = vor.u32 %v3104, %v3105
        %v3107 = vshll.u32 2475754826, %v3101
        %v3108 = vshrl.u32 2131351028, %v3102
        %v3109 = vor.u32 %v3107, %v3108
        %v3110 = vshll.u32 2131351028, %v3101
        %v3111 = vshrl.u32 2102212464, %v3102
        %v3112 = vor.u32 %v3110, %v3111
        %v3113 = vshll.u32 2102212464, %v3101
        %v3114 = vshrl.u32 920167782, %v3102
        %v3115 = vor.u32 %v3113, %v3114
        %v3116 = vshll.u32 920167782, %v3101
        %v3117 = vshrl.u32 1326507024, %v3102
        %v3118 = vor.u32 %v3116, %v3117
        %vm3119 = vcmp.lt.s32.totalorder %v3100, 1
        %vm3120 = vcmp.lt.s32.totalorder %v3100, 2
        %vm3121 = vcmp.lt.s32.totalorder %v3100, 3
        %vm3122 = vcmp.lt.s32.totalorder %v3100, 4
        %v3123 = vsel %vm3119, %v3103, %v3106
        %v3124 = vsel %vm3122, %v3112, 2102212464
        %v3125 = vsel %vm3121, %v3109, %v3124
        %v3126 = vsel %vm3120, %v3123, %v3125
        %v3127 = vsel %vm3119, %v3106, %v3109
        %v3128 = vsel %vm3122, %v3115, 920167782
        %v3129 = vsel %vm3121, %v3112, %v3128
        %v3130 = vsel %vm3120, %v3127, %v3129
        %v3131 = vsel %vm3119, %v3109, %v3112
        %v3132 = vsel %vm3122, %v3118, 1326507024
        %v3133 = vsel %vm3121, %v3115, %v3132
        %v3134 = vsel %vm3120, %v3131, %v3133
        %v3135 = vshll.u32 %v3095, 8
        %v3136 = vmul.u32.u64.compose %v3135, %v3134
        %v3137 = vextract.low.u32 %v3136
        %v3138 = vextract.high.u32 %v3136
        %v3139 = vmul.u32.u64.compose %v3135, %v3130
        %v3140 = vextract.low.u32 %v3139
        %v3141 = vextract.high.u32 %v3139
        %v3142 = vmul.u32 %v3135, %v3126
        %v3143 = vadd.s32 %v3138, %v3140
        %vm3144 = vc.u32 %v3138, %v3140
        %v3145 = vadd.s32 %v3141, 1
        %v3146 = vsel %vm3144, %v3145, %v3141
        %v3147 = vadd.s32 %v3142, %v3146
        %v3148 = vadd.s32 %v3147, 536870912
        %v3149 = vshrl.u32 %v3148, 30
        %v3150 = vshll.u32 %v3149, 30
        %v3151 = vsub.s32 %v3147, %v3150
        %vm3152 = vcmp.lt.s32.totalorder %v3151, 0
        %v3153 = vsub.s32 0, %v3151
        %v3154 = vsel %vm3152, %v3153, %v3151
        %v3155 = vclz %v3154
        %v3156 = vsub.s32 %v3155, 2
        %vm3157 = vcmp.gt.s32.totalorder 0, %v3156
        %v3158 = vsel %vm3157, 0, %v3156
        %v3159 = vsub.s32 32, %v3158
        %v3160 = vshll.u32 %v3151, %v3158
        %v3161 = vshrl.u32 %v3143, %v3159
        %v3162 = vor.u32 %v3160, %v3161
        %v3163 = vsub.s32 4294967266, %v3158
        %v3164 = vadd.s32 %v3163, 127
        %v3165 = vshll.u32 %v3164, 23
        %v3166 = vor.u32 4788187, %v3165
        %v3167 = vand.u32 2147483647, %v3166
        %v3169 = vcvt.s32.f32 %v3162
        %v3170 = vmul.f32 %v3169, %v3167
        %v3171 = vxor.u32 %v3170, 2147483648
        %v3172 = vsel %vm3089, %v3171, %v3170
        %v3173 = vsub.s32 4, %v3149
        %v3174 = vsel %vm3089, %v3173, %v3149
        %v3175 = vsel %vm3088, %v403, %v3172
        %v3176 = vsel %vm3088, 0, %v3174
        %v3177 = vcosq.f32.pop %v3175
        %v3178 = vsinq.f32.pop %v3175
        %vm3179 = vweird.f32 %v403
        %v3180 = vand.u32 %v3176, 3
        %vm3181 = vcmp.lt.s32.totalorder %v3180, 2
        %vm3182 = vcmp.eq.s32.totalorder %v3180, 0
        %v3183 = vxor.u32 %v3178, 2147483648
        %v3184 = vsel %vm3182, %v3177, %v3183
        %vm3185 = vcmp.eq.s32.totalorder %v3180, 2
        %v3186 = vxor.u32 %v3177, 2147483648
        %v3187 = vsel %vm3185, %v3186, %v3178
        %v3188 = vsel %vm3181, %v3184, %v3187
        %v3189 = vsel %vm3179, nan, %v3188
        %v3190 = vand.u32 2147483647, %v404
        %vm3191 = vcmp.le.f32.partialorder %v3190, 0.7853982
        %vm3192 = vcmp.lt.s32.totalorder %v404, 0
        %v3193 = vand.u32 %v404, 2139095040
        %v3194 = vshrl.u32 %v3193, 23
        %v3195 = vsub.s32 %v3194, 127
        %v3196 = vand.u32 2147483647, %v404
        %v3197 = vand.u32 %v3196, 8388607
        %v3198 = vor.u32 %v3197, 8388608
        %v3199 = vsub.s32 0, %v3198
        %v3200 = vadd.s32 %v3195, 1
        %vm3201 = vcmp.gt.s32.totalorder %v3200, 0
        %v3202 = vsel %vm3201, %v3200, 0
        %v3203 = vshrl.u32 %v3202, 5
        %v3204 = vand.u32 %v3202, 31
        %v3205 = vsub.s32 32, %v3204
        %v3206 = vshrl.u32 683565275, %v3205
        %v3207 = vshll.u32 683565275, %v3204
        %v3208 = vshrl.u32 2475754826, %v3205
        %v3209 = vor.u32 %v3207, %v3208
        %v3210 = vshll.u32 2475754826, %v3204
        %v3211 = vshrl.u32 2131351028, %v3205
        %v3212 = vor.u32 %v3210, %v3211
        %v3213 = vshll.u32 2131351028, %v3204
        %v3214 = vshrl.u32 2102212464, %v3205
        %v3215 = vor.u32 %v3213, %v3214
        %v3216 = vshll.u32 2102212464, %v3204
        %v3217 = vshrl.u32 920167782, %v3205
        %v3218 = vor.u32 %v3216, %v3217
        %v3219 = vshll.u32 920167782, %v3204
        %v3220 = vshrl.u32 1326507024, %v3205
        %v3221 = vor.u32 %v3219, %v3220
        %vm3222 = vcmp.lt.s32.totalorder %v3203, 1
        %vm3223 = vcmp.lt.s32.totalorder %v3203, 2
        %vm3224 = vcmp.lt.s32.totalorder %v3203, 3
        %vm3225 = vcmp.lt.s32.totalorder %v3203, 4
        %v3226 = vsel %vm3222, %v3206, %v3209
        %v3227 = vsel %vm3225, %v3215, 2102212464
        %v3228 = vsel %vm3224, %v3212, %v3227
        %v3229 = vsel %vm3223, %v3226, %v3228
        %v3230 = vsel %vm3222, %v3209, %v3212
        %v3231 = vsel %vm3225, %v3218, 920167782
        %v3232 = vsel %vm3224, %v3215, %v3231
        %v3233 = vsel %vm3223, %v3230, %v3232
        %v3234 = vsel %vm3222, %v3212, %v3215
        %v3235 = vsel %vm3225, %v3221, 1326507024
        %v3236 = vsel %vm3224, %v3218, %v3235
        %v3237 = vsel %vm3223, %v3234, %v3236
        %v3238 = vshll.u32 %v3198, 8
        %v3239 = vmul.u32.u64.compose %v3238, %v3237
        %v3240 = vextract.low.u32 %v3239
        %v3241 = vextract.high.u32 %v3239
        %v3242 = vmul.u32.u64.compose %v3238, %v3233
        %v3243 = vextract.low.u32 %v3242
        %v3244 = vextract.high.u32 %v3242
        %v3245 = vmul.u32 %v3238, %v3229
        %v3246 = vadd.s32 %v3241, %v3243
        %vm3247 = vc.u32 %v3241, %v3243
        %v3248 = vadd.s32 %v3244, 1
        %v3249 = vsel %vm3247, %v3248, %v3244
        %v3250 = vadd.s32 %v3245, %v3249
        %v3251 = vadd.s32 %v3250, 536870912
        %v3252 = vshrl.u32 %v3251, 30
        %v3253 = vshll.u32 %v3252, 30
        %v3254 = vsub.s32 %v3250, %v3253
        %vm3255 = vcmp.lt.s32.totalorder %v3254, 0
        %v3256 = vsub.s32 0, %v3254
        %v3257 = vsel %vm3255, %v3256, %v3254
        %v3258 = vclz %v3257
        %v3259 = vsub.s32 %v3258, 2
        %vm3260 = vcmp.gt.s32.totalorder 0, %v3259
        %v3261 = vsel %vm3260, 0, %v3259
        %v3262 = vsub.s32 32, %v3261
        %v3263 = vshll.u32 %v3254, %v3261
        %v3264 = vshrl.u32 %v3246, %v3262
        %v3265 = vor.u32 %v3263, %v3264
        %v3266 = vsub.s32 4294967266, %v3261
        %v3267 = vadd.s32 %v3266, 127
        %v3268 = vshll.u32 %v3267, 23
        %v3269 = vor.u32 4788187, %v3268
        %v3270 = vand.u32 2147483647, %v3269
        %v3272 = vcvt.s32.f32 %v3265
        %v3273 = vmul.f32 %v3272, %v3270
        %v3274 = vxor.u32 %v3273, 2147483648
        %v3275 = vsel %vm3192, %v3274, %v3273
        %v3276 = vsub.s32 4, %v3252
        %v3277 = vsel %vm3192, %v3276, %v3252
        %v3278 = vsel %vm3191, %v404, %v3275
        %v3279 = vsel %vm3191, 0, %v3277
        %v3280 = vcosq.f32.pop %v3278
        %v3281 = vsinq.f32.pop %v3278
        %vm3282 = vweird.f32 %v404
        %v3283 = vand.u32 %v3279, 3
        %vm3284 = vcmp.lt.s32.totalorder %v3283, 2
        %vm3285 = vcmp.eq.s32.totalorder %v3283, 0
        %v3286 = vxor.u32 %v3281, 2147483648
        %v3287 = vsel %vm3285, %v3280, %v3286
        %vm3288 = vcmp.eq.s32.totalorder %v3283, 2
        %v3289 = vxor.u32 %v3280, 2147483648
        %v3290 = vsel %vm3288, %v3289, %v3281
        %v3291 = vsel %vm3284, %v3287, %v3290
        %v3292 = vsel %vm3282, nan, %v3291
        %v3293 = vand.u32 2147483647, %v405
        %vm3294 = vcmp.le.f32.partialorder %v3293, 0.7853982
        %vm3295 = vcmp.lt.s32.totalorder %v405, 0
        %v3296 = vand.u32 %v405, 2139095040
        %v3297 = vshrl.u32 %v3296, 23
        %v3298 = vsub.s32 %v3297, 127
        %v3299 = vand.u32 2147483647, %v405
        %v3300 = vand.u32 %v3299, 8388607
        %v3301 = vor.u32 %v3300, 8388608
        %v3302 = vsub.s32 0, %v3301
        %v3303 = vadd.s32 %v3298, 1
        %vm3304 = vcmp.gt.s32.totalorder %v3303, 0
        %v3305 = vsel %vm3304, %v3303, 0
        %v3306 = vshrl.u32 %v3305, 5
        %v3307 = vand.u32 %v3305, 31
        %v3308 = vsub.s32 32, %v3307
        %v3309 = vshrl.u32 683565275, %v3308
        %v3310 = vshll.u32 683565275, %v3307
        %v3311 = vshrl.u32 2475754826, %v3308
        %v3312 = vor.u32 %v3310, %v3311
        %v3313 = vshll.u32 2475754826, %v3307
        %v3314 = vshrl.u32 2131351028, %v3308
        %v3315 = vor.u32 %v3313, %v3314
        %v3316 = vshll.u32 2131351028, %v3307
        %v3317 = vshrl.u32 2102212464, %v3308
        %v3318 = vor.u32 %v3316, %v3317
        %v3319 = vshll.u32 2102212464, %v3307
        %v3320 = vshrl.u32 920167782, %v3308
        %v3321 = vor.u32 %v3319, %v3320
        %v3322 = vshll.u32 920167782, %v3307
        %v3323 = vshrl.u32 1326507024, %v3308
        %v3324 = vor.u32 %v3322, %v3323
        %vm3325 = vcmp.lt.s32.totalorder %v3306, 1
        %vm3326 = vcmp.lt.s32.totalorder %v3306, 2
        %vm3327 = vcmp.lt.s32.totalorder %v3306, 3
        %vm3328 = vcmp.lt.s32.totalorder %v3306, 4
        %v3329 = vsel %vm3325, %v3309, %v3312
        %v3330 = vsel %vm3328, %v3318, 2102212464
        %v3331 = vsel %vm3327, %v3315, %v3330
        %v3332 = vsel %vm3326, %v3329, %v3331
        %v3333 = vsel %vm3325, %v3312, %v3315
        %v3334 = vsel %vm3328, %v3321, 920167782
        %v3335 = vsel %vm3327, %v3318, %v3334
        %v3336 = vsel %vm3326, %v3333, %v3335
        %v3337 = vsel %vm3325, %v3315, %v3318
        %v3338 = vsel %vm3328, %v3324, 1326507024
        %v3339 = vsel %vm3327, %v3321, %v3338
        %v3340 = vsel %vm3326, %v3337, %v3339
        %v3341 = vshll.u32 %v3301, 8
        %v3342 = vmul.u32.u64.compose %v3341, %v3340
        %v3343 = vextract.low.u32 %v3342
        %v3344 = vextract.high.u32 %v3342
        %v3345 = vmul.u32.u64.compose %v3341, %v3336
        %v3346 = vextract.low.u32 %v3345
        %v3347 = vextract.high.u32 %v3345
        %v3348 = vmul.u32 %v3341, %v3332
        %v3349 = vadd.s32 %v3344, %v3346
        %vm3350 = vc.u32 %v3344, %v3346
        %v3351 = vadd.s32 %v3347, 1
        %v3352 = vsel %vm3350, %v3351, %v3347
        %v3353 = vadd.s32 %v3348, %v3352
        %v3354 = vadd.s32 %v3353, 536870912
        %v3355 = vshrl.u32 %v3354, 30
        %v3356 = vshll.u32 %v3355, 30
        %v3357 = vsub.s32 %v3353, %v3356
        %vm3358 = vcmp.lt.s32.totalorder %v3357, 0
        %v3359 = vsub.s32 0, %v3357
        %v3360 = vsel %vm3358, %v3359, %v3357
        %v3361 = vclz %v3360
        %v3362 = vsub.s32 %v3361, 2
        %vm3363 = vcmp.gt.s32.totalorder 0, %v3362
        %v3364 = vsel %vm3363, 0, %v3362
        %v3365 = vsub.s32 32, %v3364
        %v3366 = vshll.u32 %v3357, %v3364
        %v3367 = vshrl.u32 %v3349, %v3365
        %v3368 = vor.u32 %v3366, %v3367
        %v3369 = vsub.s32 4294967266, %v3364
        %v3370 = vadd.s32 %v3369, 127
        %v3371 = vshll.u32 %v3370, 23
        %v3372 = vor.u32 4788187, %v3371
        %v3373 = vand.u32 2147483647, %v3372
        %v3375 = vcvt.s32.f32 %v3368
        %v3376 = vmul.f32 %v3375, %v3373
        %v3377 = vxor.u32 %v3376, 2147483648
        %v3378 = vsel %vm3295, %v3377, %v3376
        %v3379 = vsub.s32 4, %v3355
        %v3380 = vsel %vm3295, %v3379, %v3355
        %v3381 = vsel %vm3294, %v405, %v3378
        %v3382 = vsel %vm3294, 0, %v3380
        %v3383 = vcosq.f32.pop %v3381
        %v3384 = vsinq.f32.pop %v3381
        %vm3385 = vweird.f32 %v405
        %v3386 = vand.u32 %v3382, 3
        %vm3387 = vcmp.lt.s32.totalorder %v3386, 2
        %vm3388 = vcmp.eq.s32.totalorder %v3386, 0
        %v3389 = vxor.u32 %v3384, 2147483648
        %v3390 = vsel %vm3388, %v3383, %v3389
        %vm3391 = vcmp.eq.s32.totalorder %v3386, 2
        %v3392 = vxor.u32 %v3383, 2147483648
        %v3393 = vsel %vm3391, %v3392, %v3384
        %v3394 = vsel %vm3387, %v3390, %v3393
        %v3395 = vsel %vm3385, nan, %v3394
        %v3396 = vand.u32 2147483647, %v406
        %vm3397 = vcmp.le.f32.partialorder %v3396, 0.7853982
        %vm3398 = vcmp.lt.s32.totalorder %v406, 0
        %v3399 = vand.u32 %v406, 2139095040
        %v3400 = vshrl.u32 %v3399, 23
        %v3401 = vsub.s32 %v3400, 127
        %v3402 = vand.u32 2147483647, %v406
        %v3403 = vand.u32 %v3402, 8388607
        %v3404 = vor.u32 %v3403, 8388608
        %v3405 = vsub.s32 0, %v3404
        %v3406 = vadd.s32 %v3401, 1
        %vm3407 = vcmp.gt.s32.totalorder %v3406, 0
        %v3408 = vsel %vm3407, %v3406, 0
        %v3409 = vshrl.u32 %v3408, 5
        %v3410 = vand.u32 %v3408, 31
        %v3411 = vsub.s32 32, %v3410
        %v3412 = vshrl.u32 683565275, %v3411
        %v3413 = vshll.u32 683565275, %v3410
        %v3414 = vshrl.u32 2475754826, %v3411
        %v3415 = vor.u32 %v3413, %v3414
        %v3416 = vshll.u32 2475754826, %v3410
        %v3417 = vshrl.u32 2131351028, %v3411
        %v3418 = vor.u32 %v3416, %v3417
        %v3419 = vshll.u32 2131351028, %v3410
        %v3420 = vshrl.u32 2102212464, %v3411
        %v3421 = vor.u32 %v3419, %v3420
        %v3422 = vshll.u32 2102212464, %v3410
        %v3423 = vshrl.u32 920167782, %v3411
        %v3424 = vor.u32 %v3422, %v3423
        %v3425 = vshll.u32 920167782, %v3410
        %v3426 = vshrl.u32 1326507024, %v3411
        %v3427 = vor.u32 %v3425, %v3426
        %vm3428 = vcmp.lt.s32.totalorder %v3409, 1
        %vm3429 = vcmp.lt.s32.totalorder %v3409, 2
        %vm3430 = vcmp.lt.s32.totalorder %v3409, 3
        %vm3431 = vcmp.lt.s32.totalorder %v3409, 4
        %v3432 = vsel %vm3428, %v3412, %v3415
        %v3433 = vsel %vm3431, %v3421, 2102212464
        %v3434 = vsel %vm3430, %v3418, %v3433
        %v3435 = vsel %vm3429, %v3432, %v3434
        %v3436 = vsel %vm3428, %v3415, %v3418
        %v3437 = vsel %vm3431, %v3424, 920167782
        %v3438 = vsel %vm3430, %v3421, %v3437
        %v3439 = vsel %vm3429, %v3436, %v3438
        %v3440 = vsel %vm3428, %v3418, %v3421
        %v3441 = vsel %vm3431, %v3427, 1326507024
        %v3442 = vsel %vm3430, %v3424, %v3441
        %v3443 = vsel %vm3429, %v3440, %v3442
        %v3444 = vshll.u32 %v3404, 8
        %v3445 = vmul.u32.u64.compose %v3444, %v3443
        %v3446 = vextract.low.u32 %v3445
        %v3447 = vextract.high.u32 %v3445
        %v3448 = vmul.u32.u64.compose %v3444, %v3439
        %v3449 = vextract.low.u32 %v3448
        %v3450 = vextract.high.u32 %v3448
        %v3451 = vmul.u32 %v3444, %v3435
        %v3452 = vadd.s32 %v3447, %v3449
        %vm3453 = vc.u32 %v3447, %v3449
        %v3454 = vadd.s32 %v3450, 1
        %v3455 = vsel %vm3453, %v3454, %v3450
        %v3456 = vadd.s32 %v3451, %v3455
        %v3457 = vadd.s32 %v3456, 536870912
        %v3458 = vshrl.u32 %v3457, 30
        %v3459 = vshll.u32 %v3458, 30
        %v3460 = vsub.s32 %v3456, %v3459
        %vm3461 = vcmp.lt.s32.totalorder %v3460, 0
        %v3462 = vsub.s32 0, %v3460
        %v3463 = vsel %vm3461, %v3462, %v3460
        %v3464 = vclz %v3463
        %v3465 = vsub.s32 %v3464, 2
        %vm3466 = vcmp.gt.s32.totalorder 0, %v3465
        %v3467 = vsel %vm3466, 0, %v3465
        %v3468 = vsub.s32 32, %v3467
        %v3469 = vshll.u32 %v3460, %v3467
        %v3470 = vshrl.u32 %v3452, %v3468
        %v3471 = vor.u32 %v3469, %v3470
        %v3472 = vsub.s32 4294967266, %v3467
        %v3473 = vadd.s32 %v3472, 127
        %v3474 = vshll.u32 %v3473, 23
        %v3475 = vor.u32 4788187, %v3474
        %v3476 = vand.u32 2147483647, %v3475
        %v3478 = vcvt.s32.f32 %v3471
        %v3479 = vmul.f32 %v3478, %v3476
        %v3480 = vxor.u32 %v3479, 2147483648
        %v3481 = vsel %vm3398, %v3480, %v3479
        %v3482 = vsub.s32 4, %v3458
        %v3483 = vsel %vm3398, %v3482, %v3458
        %v3484 = vsel %vm3397, %v406, %v3481
        %v3485 = vsel %vm3397, 0, %v3483
        %v3486 = vcosq.f32.pop %v3484
        %v3487 = vsinq.f32.pop %v3484
        %vm3488 = vweird.f32 %v406
        %v3489 = vand.u32 %v3485, 3
        %vm3490 = vcmp.lt.s32.totalorder %v3489, 2
        %vm3491 = vcmp.eq.s32.totalorder %v3489, 0
        %v3492 = vxor.u32 %v3487, 2147483648
        %v3493 = vsel %vm3491, %v3486, %v3492
        %vm3494 = vcmp.eq.s32.totalorder %v3489, 2
        %v3495 = vxor.u32 %v3486, 2147483648
        %v3496 = vsel %vm3494, %v3495, %v3487
        %v3497 = vsel %vm3490, %v3493, %v3496
        %v3498 = vsel %vm3488, nan, %v3497
        %v3499 = vand.u32 2147483647, %v407
        %vm3500 = vcmp.le.f32.partialorder %v3499, 0.7853982
        %vm3501 = vcmp.lt.s32.totalorder %v407, 0
        %v3502 = vand.u32 %v407, 2139095040
        %v3503 = vshrl.u32 %v3502, 23
        %v3504 = vsub.s32 %v3503, 127
        %v3505 = vand.u32 2147483647, %v407
        %v3506 = vand.u32 %v3505, 8388607
        %v3507 = vor.u32 %v3506, 8388608
        %v3508 = vsub.s32 0, %v3507
        %v3509 = vadd.s32 %v3504, 1
        %vm3510 = vcmp.gt.s32.totalorder %v3509, 0
        %v3511 = vsel %vm3510, %v3509, 0
        %v3512 = vshrl.u32 %v3511, 5
        %v3513 = vand.u32 %v3511, 31
        %v3514 = vsub.s32 32, %v3513
        %v3515 = vshrl.u32 683565275, %v3514
        %v3516 = vshll.u32 683565275, %v3513
        %v3517 = vshrl.u32 2475754826, %v3514
        %v3518 = vor.u32 %v3516, %v3517
        %v3519 = vshll.u32 2475754826, %v3513
        %v3520 = vshrl.u32 2131351028, %v3514
        %v3521 = vor.u32 %v3519, %v3520
        %v3522 = vshll.u32 2131351028, %v3513
        %v3523 = vshrl.u32 2102212464, %v3514
        %v3524 = vor.u32 %v3522, %v3523
        %v3525 = vshll.u32 2102212464, %v3513
        %v3526 = vshrl.u32 920167782, %v3514
        %v3527 = vor.u32 %v3525, %v3526
        %v3528 = vshll.u32 920167782, %v3513
        %v3529 = vshrl.u32 1326507024, %v3514
        %v3530 = vor.u32 %v3528, %v3529
        %vm3531 = vcmp.lt.s32.totalorder %v3512, 1
        %vm3532 = vcmp.lt.s32.totalorder %v3512, 2
        %vm3533 = vcmp.lt.s32.totalorder %v3512, 3
        %vm3534 = vcmp.lt.s32.totalorder %v3512, 4
        %v3535 = vsel %vm3531, %v3515, %v3518
        %v3536 = vsel %vm3534, %v3524, 2102212464
        %v3537 = vsel %vm3533, %v3521, %v3536
        %v3538 = vsel %vm3532, %v3535, %v3537
        %v3539 = vsel %vm3531, %v3518, %v3521
        %v3540 = vsel %vm3534, %v3527, 920167782
        %v3541 = vsel %vm3533, %v3524, %v3540
        %v3542 = vsel %vm3532, %v3539, %v3541
        %v3543 = vsel %vm3531, %v3521, %v3524
        %v3544 = vsel %vm3534, %v3530, 1326507024
        %v3545 = vsel %vm3533, %v3527, %v3544
        %v3546 = vsel %vm3532, %v3543, %v3545
        %v3547 = vshll.u32 %v3507, 8
        %v3548 = vmul.u32.u64.compose %v3547, %v3546
        %v3549 = vextract.low.u32 %v3548
        %v3550 = vextract.high.u32 %v3548
        %v3551 = vmul.u32.u64.compose %v3547, %v3542
        %v3552 = vextract.low.u32 %v3551
        %v3553 = vextract.high.u32 %v3551
        %v3554 = vmul.u32 %v3547, %v3538
        %v3555 = vadd.s32 %v3550, %v3552
        %vm3556 = vc.u32 %v3550, %v3552
        %v3557 = vadd.s32 %v3553, 1
        %v3558 = vsel %vm3556, %v3557, %v3553
        %v3559 = vadd.s32 %v3554, %v3558
        %v3560 = vadd.s32 %v3559, 536870912
        %v3561 = vshrl.u32 %v3560, 30
        %v3562 = vshll.u32 %v3561, 30
        %v3563 = vsub.s32 %v3559, %v3562
        %vm3564 = vcmp.lt.s32.totalorder %v3563, 0
        %v3565 = vsub.s32 0, %v3563
        %v3566 = vsel %vm3564, %v3565, %v3563
        %v3567 = vclz %v3566
        %v3568 = vsub.s32 %v3567, 2
        %vm3569 = vcmp.gt.s32.totalorder 0, %v3568
        %v3570 = vsel %vm3569, 0, %v3568
        %v3571 = vsub.s32 32, %v3570
        %v3572 = vshll.u32 %v3563, %v3570
        %v3573 = vshrl.u32 %v3555, %v3571
        %v3574 = vor.u32 %v3572, %v3573
        %v3575 = vsub.s32 4294967266, %v3570
        %v3576 = vadd.s32 %v3575, 127
        %v3577 = vshll.u32 %v3576, 23
        %v3578 = vor.u32 4788187, %v3577
        %v3579 = vand.u32 2147483647, %v3578
        %v3581 = vcvt.s32.f32 %v3574
        %v3582 = vmul.f32 %v3581, %v3579
        %v3583 = vxor.u32 %v3582, 2147483648
        %v3584 = vsel %vm3501, %v3583, %v3582
        %v3585 = vsub.s32 4, %v3561
        %v3586 = vsel %vm3501, %v3585, %v3561
        %v3587 = vsel %vm3500, %v407, %v3584
        %v3588 = vsel %vm3500, 0, %v3586
        %v3589 = vcosq.f32.pop %v3587
        %v3590 = vsinq.f32.pop %v3587
        %vm3591 = vweird.f32 %v407
        %v3592 = vand.u32 %v3588, 3
        %vm3593 = vcmp.lt.s32.totalorder %v3592, 2
        %vm3594 = vcmp.eq.s32.totalorder %v3592, 0
        %v3595 = vxor.u32 %v3590, 2147483648
        %v3596 = vsel %vm3594, %v3589, %v3595
        %vm3597 = vcmp.eq.s32.totalorder %v3592, 2
        %v3598 = vxor.u32 %v3589, 2147483648
        %v3599 = vsel %vm3597, %v3598, %v3590
        %v3600 = vsel %vm3593, %v3596, %v3599
        %v3601 = vsel %vm3591, nan, %v3600
        %v3602 = vand.u32 2147483647, %v408
        %vm3603 = vcmp.le.f32.partialorder %v3602, 0.7853982
        %vm3604 = vcmp.lt.s32.totalorder %v408, 0
        %v3605 = vand.u32 %v408, 2139095040
        %v3606 = vshrl.u32 %v3605, 23
        %v3607 = vsub.s32 %v3606, 127
        %v3608 = vand.u32 2147483647, %v408
        %v3609 = vand.u32 %v3608, 8388607
        %v3610 = vor.u32 %v3609, 8388608
        %v3611 = vsub.s32 0, %v3610
        %v3612 = vadd.s32 %v3607, 1
        %vm3613 = vcmp.gt.s32.totalorder %v3612, 0
        %v3614 = vsel %vm3613, %v3612, 0
        %v3615 = vshrl.u32 %v3614, 5
        %v3616 = vand.u32 %v3614, 31
        %v3617 = vsub.s32 32, %v3616
        %v3618 = vshrl.u32 683565275, %v3617
        %v3619 = vshll.u32 683565275, %v3616
        %v3620 = vshrl.u32 2475754826, %v3617
        %v3621 = vor.u32 %v3619, %v3620
        %v3622 = vshll.u32 2475754826, %v3616
        %v3623 = vshrl.u32 2131351028, %v3617
        %v3624 = vor.u32 %v3622, %v3623
        %v3625 = vshll.u32 2131351028, %v3616
        %v3626 = vshrl.u32 2102212464, %v3617
        %v3627 = vor.u32 %v3625, %v3626
        %v3628 = vshll.u32 2102212464, %v3616
        %v3629 = vshrl.u32 920167782, %v3617
        %v3630 = vor.u32 %v3628, %v3629
        %v3631 = vshll.u32 920167782, %v3616
        %v3632 = vshrl.u32 1326507024, %v3617
        %v3633 = vor.u32 %v3631, %v3632
        %vm3634 = vcmp.lt.s32.totalorder %v3615, 1
        %vm3635 = vcmp.lt.s32.totalorder %v3615, 2
        %vm3636 = vcmp.lt.s32.totalorder %v3615, 3
        %vm3637 = vcmp.lt.s32.totalorder %v3615, 4
        %v3638 = vsel %vm3634, %v3618, %v3621
        %v3639 = vsel %vm3637, %v3627, 2102212464
        %v3640 = vsel %vm3636, %v3624, %v3639
        %v3641 = vsel %vm3635, %v3638, %v3640
        %v3642 = vsel %vm3634, %v3621, %v3624
        %v3643 = vsel %vm3637, %v3630, 920167782
        %v3644 = vsel %vm3636, %v3627, %v3643
        %v3645 = vsel %vm3635, %v3642, %v3644
        %v3646 = vsel %vm3634, %v3624, %v3627
        %v3647 = vsel %vm3637, %v3633, 1326507024
        %v3648 = vsel %vm3636, %v3630, %v3647
        %v3649 = vsel %vm3635, %v3646, %v3648
        %v3650 = vshll.u32 %v3610, 8
        %v3651 = vmul.u32.u64.compose %v3650, %v3649
        %v3652 = vextract.low.u32 %v3651
        %v3653 = vextract.high.u32 %v3651
        %v3654 = vmul.u32.u64.compose %v3650, %v3645
        %v3655 = vextract.low.u32 %v3654
        %v3656 = vextract.high.u32 %v3654
        %v3657 = vmul.u32 %v3650, %v3641
        %v3658 = vadd.s32 %v3653, %v3655
        %vm3659 = vc.u32 %v3653, %v3655
        %v3660 = vadd.s32 %v3656, 1
        %v3661 = vsel %vm3659, %v3660, %v3656
        %v3662 = vadd.s32 %v3657, %v3661
        %v3663 = vadd.s32 %v3662, 536870912
        %v3664 = vshrl.u32 %v3663, 30
        %v3665 = vshll.u32 %v3664, 30
        %v3666 = vsub.s32 %v3662, %v3665
        %vm3667 = vcmp.lt.s32.totalorder %v3666, 0
        %v3668 = vsub.s32 0, %v3666
        %v3669 = vsel %vm3667, %v3668, %v3666
        %v3670 = vclz %v3669
        %v3671 = vsub.s32 %v3670, 2
        %vm3672 = vcmp.gt.s32.totalorder 0, %v3671
        %v3673 = vsel %vm3672, 0, %v3671
        %v3674 = vsub.s32 32, %v3673
        %v3675 = vshll.u32 %v3666, %v3673
        %v3676 = vshrl.u32 %v3658, %v3674
        %v3677 = vor.u32 %v3675, %v3676
        %v3678 = vsub.s32 4294967266, %v3673
        %v3679 = vadd.s32 %v3678, 127
        %v3680 = vshll.u32 %v3679, 23
        %v3681 = vor.u32 4788187, %v3680
        %v3682 = vand.u32 2147483647, %v3681
        %v3684 = vcvt.s32.f32 %v3677
        %v3685 = vmul.f32 %v3684, %v3682
        %v3686 = vxor.u32 %v3685, 2147483648
        %v3687 = vsel %vm3604, %v3686, %v3685
        %v3688 = vsub.s32 4, %v3664
        %v3689 = vsel %vm3604, %v3688, %v3664
        %v3690 = vsel %vm3603, %v408, %v3687
        %v3691 = vsel %vm3603, 0, %v3689
        %v3692 = vcosq.f32.pop %v3690
        %v3693 = vsinq.f32.pop %v3690
        %vm3694 = vweird.f32 %v408
        %v3695 = vand.u32 %v3691, 3
        %vm3696 = vcmp.lt.s32.totalorder %v3695, 2
        %vm3697 = vcmp.eq.s32.totalorder %v3695, 0
        %v3698 = vxor.u32 %v3693, 2147483648
        %v3699 = vsel %vm3697, %v3692, %v3698
        %vm3700 = vcmp.eq.s32.totalorder %v3695, 2
        %v3701 = vxor.u32 %v3692, 2147483648
        %v3702 = vsel %vm3700, %v3701, %v3693
        %v3703 = vsel %vm3696, %v3699, %v3702
        %v3704 = vsel %vm3694, nan, %v3703
        %v3705 = vand.u32 2147483647, %v377
        %vm3706 = vcmp.le.f32.partialorder %v3705, 0.7853982
        %vm3707 = vcmp.lt.s32.totalorder %v377, 0
        %v3708 = vand.u32 %v377, 2139095040
        %v3709 = vshrl.u32 %v3708, 23
        %v3710 = vsub.s32 %v3709, 127
        %v3711 = vand.u32 2147483647, %v377
        %v3712 = vand.u32 %v3711, 8388607
        %v3713 = vor.u32 %v3712, 8388608
        %v3714 = vsub.s32 0, %v3713
        %v3715 = vadd.s32 %v3710, 1
        %vm3716 = vcmp.gt.s32.totalorder %v3715, 0
        %v3717 = vsel %vm3716, %v3715, 0
        %v3718 = vshrl.u32 %v3717, 5
        %v3719 = vand.u32 %v3717, 31
        %v3720 = vsub.s32 32, %v3719
        %v3721 = vshrl.u32 683565275, %v3720
        %v3722 = vshll.u32 683565275, %v3719
        %v3723 = vshrl.u32 2475754826, %v3720
        %v3724 = vor.u32 %v3722, %v3723
        %v3725 = vshll.u32 2475754826, %v3719
        %v3726 = vshrl.u32 2131351028, %v3720
        %v3727 = vor.u32 %v3725, %v3726
        %v3728 = vshll.u32 2131351028, %v3719
        %v3729 = vshrl.u32 2102212464, %v3720
        %v3730 = vor.u32 %v3728, %v3729
        %v3731 = vshll.u32 2102212464, %v3719
        %v3732 = vshrl.u32 920167782, %v3720
        %v3733 = vor.u32 %v3731, %v3732
        %v3734 = vshll.u32 920167782, %v3719
        %v3735 = vshrl.u32 1326507024, %v3720
        %v3736 = vor.u32 %v3734, %v3735
        %vm3737 = vcmp.lt.s32.totalorder %v3718, 1
        %vm3738 = vcmp.lt.s32.totalorder %v3718, 2
        %vm3739 = vcmp.lt.s32.totalorder %v3718, 3
        %vm3740 = vcmp.lt.s32.totalorder %v3718, 4
        %v3741 = vsel %vm3737, %v3721, %v3724
        %v3742 = vsel %vm3740, %v3730, 2102212464
        %v3743 = vsel %vm3739, %v3727, %v3742
        %v3744 = vsel %vm3738, %v3741, %v3743
        %v3745 = vsel %vm3737, %v3724, %v3727
        %v3746 = vsel %vm3740, %v3733, 920167782
        %v3747 = vsel %vm3739, %v3730, %v3746
        %v3748 = vsel %vm3738, %v3745, %v3747
        %v3749 = vsel %vm3737, %v3727, %v3730
        %v3750 = vsel %vm3740, %v3736, 1326507024
        %v3751 = vsel %vm3739, %v3733, %v3750
        %v3752 = vsel %vm3738, %v3749, %v3751
        %v3753 = vshll.u32 %v3713, 8
        %v3754 = vmul.u32.u64.compose %v3753, %v3752
        %v3755 = vextract.low.u32 %v3754
        %v3756 = vextract.high.u32 %v3754
        %v3757 = vmul.u32.u64.compose %v3753, %v3748
        %v3758 = vextract.low.u32 %v3757
        %v3759 = vextract.high.u32 %v3757
        %v3760 = vmul.u32 %v3753, %v3744
        %v3761 = vadd.s32 %v3756, %v3758
        %vm3762 = vc.u32 %v3756, %v3758
        %v3763 = vadd.s32 %v3759, 1
        %v3764 = vsel %vm3762, %v3763, %v3759
        %v3765 = vadd.s32 %v3760, %v3764
        %v3766 = vadd.s32 %v3765, 536870912
        %v3767 = vshrl.u32 %v3766, 30
        %v3768 = vshll.u32 %v3767, 30
        %v3769 = vsub.s32 %v3765, %v3768
        %vm3770 = vcmp.lt.s32.totalorder %v3769, 0
        %v3771 = vsub.s32 0, %v3769
        %v3772 = vsel %vm3770, %v3771, %v3769
        %v3773 = vclz %v3772
        %v3774 = vsub.s32 %v3773, 2
        %vm3775 = vcmp.gt.s32.totalorder 0, %v3774
        %v3776 = vsel %vm3775, 0, %v3774
        %v3777 = vsub.s32 32, %v3776
        %v3778 = vshll.u32 %v3769, %v3776
        %v3779 = vshrl.u32 %v3761, %v3777
        %v3780 = vor.u32 %v3778, %v3779
        %v3781 = vsub.s32 4294967266, %v3776
        %v3782 = vadd.s32 %v3781, 127
        %v3783 = vshll.u32 %v3782, 23
        %v3784 = vor.u32 4788187, %v3783
        %v3785 = vand.u32 2147483647, %v3784
        %v3787 = vcvt.s32.f32 %v3780
        %v3788 = vmul.f32 %v3787, %v3785
        %v3789 = vxor.u32 %v3788, 2147483648
        %v3790 = vsel %vm3707, %v3789, %v3788
        %v3791 = vsub.s32 4, %v3767
        %v3792 = vsel %vm3707, %v3791, %v3767
        %v3793 = vsel %vm3706, %v377, %v3790
        %v3794 = vsel %vm3706, 0, %v3792
        %v3795 = vcosq.f32.pop %v3793
        %v3796 = vsinq.f32.pop %v3793
        %vm3797 = vweird.f32 %v377
        %v3798 = vadd.s32 %v3794, 3
        %v3799 = vand.u32 %v3798, 3
        %vm3800 = vcmp.lt.s32.totalorder %v3799, 2
        %vm3801 = vcmp.eq.s32.totalorder %v3799, 0
        %v3802 = vxor.u32 %v3796, 2147483648
        %v3803 = vsel %vm3801, %v3795, %v3802
        %vm3804 = vcmp.eq.s32.totalorder %v3799, 2
        %v3805 = vxor.u32 %v3795, 2147483648
        %v3806 = vsel %vm3804, %v3805, %v3796
        %v3807 = vsel %vm3800, %v3803, %v3806
        %v3808 = vsel %vm3797, nan, %v3807
        %v3809 = vand.u32 2147483647, %v378
        %vm3810 = vcmp.le.f32.partialorder %v3809, 0.7853982
        %vm3811 = vcmp.lt.s32.totalorder %v378, 0
        %v3812 = vand.u32 %v378, 2139095040
        %v3813 = vshrl.u32 %v3812, 23
        %v3814 = vsub.s32 %v3813, 127
        %v3815 = vand.u32 2147483647, %v378
        %v3816 = vand.u32 %v3815, 8388607
        %v3817 = vor.u32 %v3816, 8388608
        %v3818 = vsub.s32 0, %v3817
        %v3819 = vadd.s32 %v3814, 1
        %vm3820 = vcmp.gt.s32.totalorder %v3819, 0
        %v3821 = vsel %vm3820, %v3819, 0
        %v3822 = vshrl.u32 %v3821, 5
        %v3823 = vand.u32 %v3821, 31
        %v3824 = vsub.s32 32, %v3823
        %v3825 = vshrl.u32 683565275, %v3824
        %v3826 = vshll.u32 683565275, %v3823
        %v3827 = vshrl.u32 2475754826, %v3824
        %v3828 = vor.u32 %v3826, %v3827
        %v3829 = vshll.u32 2475754826, %v3823
        %v3830 = vshrl.u32 2131351028, %v3824
        %v3831 = vor.u32 %v3829, %v3830
        %v3832 = vshll.u32 2131351028, %v3823
        %v3833 = vshrl.u32 2102212464, %v3824
        %v3834 = vor.u32 %v3832, %v3833
        %v3835 = vshll.u32 2102212464, %v3823
        %v3836 = vshrl.u32 920167782, %v3824
        %v3837 = vor.u32 %v3835, %v3836
        %v3838 = vshll.u32 920167782, %v3823
        %v3839 = vshrl.u32 1326507024, %v3824
        %v3840 = vor.u32 %v3838, %v3839
        %vm3841 = vcmp.lt.s32.totalorder %v3822, 1
        %vm3842 = vcmp.lt.s32.totalorder %v3822, 2
        %vm3843 = vcmp.lt.s32.totalorder %v3822, 3
        %vm3844 = vcmp.lt.s32.totalorder %v3822, 4
        %v3845 = vsel %vm3841, %v3825, %v3828
        %v3846 = vsel %vm3844, %v3834, 2102212464
        %v3847 = vsel %vm3843, %v3831, %v3846
        %v3848 = vsel %vm3842, %v3845, %v3847
        %v3849 = vsel %vm3841, %v3828, %v3831
        %v3850 = vsel %vm3844, %v3837, 920167782
        %v3851 = vsel %vm3843, %v3834, %v3850
        %v3852 = vsel %vm3842, %v3849, %v3851
        %v3853 = vsel %vm3841, %v3831, %v3834
        %v3854 = vsel %vm3844, %v3840, 1326507024
        %v3855 = vsel %vm3843, %v3837, %v3854
        %v3856 = vsel %vm3842, %v3853, %v3855
        %v3857 = vshll.u32 %v3817, 8
        %v3858 = vmul.u32.u64.compose %v3857, %v3856
        %v3859 = vextract.low.u32 %v3858
        %v3860 = vextract.high.u32 %v3858
        %v3861 = vmul.u32.u64.compose %v3857, %v3852
        %v3862 = vextract.low.u32 %v3861
        %v3863 = vextract.high.u32 %v3861
        %v3864 = vmul.u32 %v3857, %v3848
        %v3865 = vadd.s32 %v3860, %v3862
        %vm3866 = vc.u32 %v3860, %v3862
        %v3867 = vadd.s32 %v3863, 1
        %v3868 = vsel %vm3866, %v3867, %v3863
        %v3869 = vadd.s32 %v3864, %v3868
        %v3870 = vadd.s32 %v3869, 536870912
        %v3871 = vshrl.u32 %v3870, 30
        %v3872 = vshll.u32 %v3871, 30
        %v3873 = vsub.s32 %v3869, %v3872
        %vm3874 = vcmp.lt.s32.totalorder %v3873, 0
        %v3875 = vsub.s32 0, %v3873
        %v3876 = vsel %vm3874, %v3875, %v3873
        %v3877 = vclz %v3876
        %v3878 = vsub.s32 %v3877, 2
        %vm3879 = vcmp.gt.s32.totalorder 0, %v3878
        %v3880 = vsel %vm3879, 0, %v3878
        %v3881 = vsub.s32 32, %v3880
        %v3882 = vshll.u32 %v3873, %v3880
        %v3883 = vshrl.u32 %v3865, %v3881
        %v3884 = vor.u32 %v3882, %v3883
        %v3885 = vsub.s32 4294967266, %v3880
        %v3886 = vadd.s32 %v3885, 127
        %v3887 = vshll.u32 %v3886, 23
        %v3888 = vor.u32 4788187, %v3887
        %v3889 = vand.u32 2147483647, %v3888
        %v3891 = vcvt.s32.f32 %v3884
        %v3892 = vmul.f32 %v3891, %v3889
        %v3893 = vxor.u32 %v3892, 2147483648
        %v3894 = vsel %vm3811, %v3893, %v3892
        %v3895 = vsub.s32 4, %v3871
        %v3896 = vsel %vm3811, %v3895, %v3871
        %v3897 = vsel %vm3810, %v378, %v3894
        %v3898 = vsel %vm3810, 0, %v3896
        %v3899 = vcosq.f32.pop %v3897
        %v3900 = vsinq.f32.pop %v3897
        %vm3901 = vweird.f32 %v378
        %v3902 = vadd.s32 %v3898, 3
        %v3903 = vand.u32 %v3902, 3
        %vm3904 = vcmp.lt.s32.totalorder %v3903, 2
        %vm3905 = vcmp.eq.s32.totalorder %v3903, 0
        %v3906 = vxor.u32 %v3900, 2147483648
        %v3907 = vsel %vm3905, %v3899, %v3906
        %vm3908 = vcmp.eq.s32.totalorder %v3903, 2
        %v3909 = vxor.u32 %v3899, 2147483648
        %v3910 = vsel %vm3908, %v3909, %v3900
        %v3911 = vsel %vm3904, %v3907, %v3910
        %v3912 = vsel %vm3901, nan, %v3911
        %v3913 = vand.u32 2147483647, %v379
        %vm3914 = vcmp.le.f32.partialorder %v3913, 0.7853982
        %vm3915 = vcmp.lt.s32.totalorder %v379, 0
        %v3916 = vand.u32 %v379, 2139095040
        %v3917 = vshrl.u32 %v3916, 23
        %v3918 = vsub.s32 %v3917, 127
        %v3919 = vand.u32 2147483647, %v379
        %v3920 = vand.u32 %v3919, 8388607
        %v3921 = vor.u32 %v3920, 8388608
        %v3922 = vsub.s32 0, %v3921
        %v3923 = vadd.s32 %v3918, 1
        %vm3924 = vcmp.gt.s32.totalorder %v3923, 0
        %v3925 = vsel %vm3924, %v3923, 0
        %v3926 = vshrl.u32 %v3925, 5
        %v3927 = vand.u32 %v3925, 31
        %v3928 = vsub.s32 32, %v3927
        %v3929 = vshrl.u32 683565275, %v3928
        %v3930 = vshll.u32 683565275, %v3927
        %v3931 = vshrl.u32 2475754826, %v3928
        %v3932 = vor.u32 %v3930, %v3931
        %v3933 = vshll.u32 2475754826, %v3927
        %v3934 = vshrl.u32 2131351028, %v3928
        %v3935 = vor.u32 %v3933, %v3934
        %v3936 = vshll.u32 2131351028, %v3927
        %v3937 = vshrl.u32 2102212464, %v3928
        %v3938 = vor.u32 %v3936, %v3937
        %v3939 = vshll.u32 2102212464, %v3927
        %v3940 = vshrl.u32 920167782, %v3928
        %v3941 = vor.u32 %v3939, %v3940
        %v3942 = vshll.u32 920167782, %v3927
        %v3943 = vshrl.u32 1326507024, %v3928
        %v3944 = vor.u32 %v3942, %v3943
        %vm3945 = vcmp.lt.s32.totalorder %v3926, 1
        %vm3946 = vcmp.lt.s32.totalorder %v3926, 2
        %vm3947 = vcmp.lt.s32.totalorder %v3926, 3
        %vm3948 = vcmp.lt.s32.totalorder %v3926, 4
        %v3949 = vsel %vm3945, %v3929, %v3932
        %v3950 = vsel %vm3948, %v3938, 2102212464
        %v3951 = vsel %vm3947, %v3935, %v3950
        %v3952 = vsel %vm3946, %v3949, %v3951
        %v3953 = vsel %vm3945, %v3932, %v3935
        %v3954 = vsel %vm3948, %v3941, 920167782
        %v3955 = vsel %vm3947, %v3938, %v3954
        %v3956 = vsel %vm3946, %v3953, %v3955
        %v3957 = vsel %vm3945, %v3935, %v3938
        %v3958 = vsel %vm3948, %v3944, 1326507024
        %v3959 = vsel %vm3947, %v3941, %v3958
        %v3960 = vsel %vm3946, %v3957, %v3959
        %v3961 = vshll.u32 %v3921, 8
        %v3962 = vmul.u32.u64.compose %v3961, %v3960
        %v3963 = vextract.low.u32 %v3962
        %v3964 = vextract.high.u32 %v3962
        %v3965 = vmul.u32.u64.compose %v3961, %v3956
        %v3966 = vextract.low.u32 %v3965
        %v3967 = vextract.high.u32 %v3965
        %v3968 = vmul.u32 %v3961, %v3952
        %v3969 = vadd.s32 %v3964, %v3966
        %vm3970 = vc.u32 %v3964, %v3966
        %v3971 = vadd.s32 %v3967, 1
        %v3972 = vsel %vm3970, %v3971, %v3967
        %v3973 = vadd.s32 %v3968, %v3972
        %v3974 = vadd.s32 %v3973, 536870912
        %v3975 = vshrl.u32 %v3974, 30
        %v3976 = vshll.u32 %v3975, 30
        %v3977 = vsub.s32 %v3973, %v3976
        %vm3978 = vcmp.lt.s32.totalorder %v3977, 0
        %v3979 = vsub.s32 0, %v3977
        %v3980 = vsel %vm3978, %v3979, %v3977
        %v3981 = vclz %v3980
        %v3982 = vsub.s32 %v3981, 2
        %vm3983 = vcmp.gt.s32.totalorder 0, %v3982
        %v3984 = vsel %vm3983, 0, %v3982
        %v3985 = vsub.s32 32, %v3984
        %v3986 = vshll.u32 %v3977, %v3984
        %v3987 = vshrl.u32 %v3969, %v3985
        %v3988 = vor.u32 %v3986, %v3987
        %v3989 = vsub.s32 4294967266, %v3984
        %v3990 = vadd.s32 %v3989, 127
        %v3991 = vshll.u32 %v3990, 23
        %v3992 = vor.u32 4788187, %v3991
        %v3993 = vand.u32 2147483647, %v3992
        %v3995 = vcvt.s32.f32 %v3988
        %v3996 = vmul.f32 %v3995, %v3993
        %v3997 = vxor.u32 %v3996, 2147483648
        %v3998 = vsel %vm3915, %v3997, %v3996
        %v3999 = vsub.s32 4, %v3975
        %v4000 = vsel %vm3915, %v3999, %v3975
        %v4001 = vsel %vm3914, %v379, %v3998
        %v4002 = vsel %vm3914, 0, %v4000
        %v4003 = vcosq.f32.pop %v4001
        %v4004 = vsinq.f32.pop %v4001
        %vm4005 = vweird.f32 %v379
        %v4006 = vadd.s32 %v4002, 3
        %v4007 = vand.u32 %v4006, 3
        %vm4008 = vcmp.lt.s32.totalorder %v4007, 2
        %vm4009 = vcmp.eq.s32.totalorder %v4007, 0
        %v4010 = vxor.u32 %v4004, 2147483648
        %v4011 = vsel %vm4009, %v4003, %v4010
        %vm4012 = vcmp.eq.s32.totalorder %v4007, 2
        %v4013 = vxor.u32 %v4003, 2147483648
        %v4014 = vsel %vm4012, %v4013, %v4004
        %v4015 = vsel %vm4008, %v4011, %v4014
        %v4016 = vsel %vm4005, nan, %v4015
        %v4017 = vand.u32 2147483647, %v380
        %vm4018 = vcmp.le.f32.partialorder %v4017, 0.7853982
        %vm4019 = vcmp.lt.s32.totalorder %v380, 0
        %v4020 = vand.u32 %v380, 2139095040
        %v4021 = vshrl.u32 %v4020, 23
        %v4022 = vsub.s32 %v4021, 127
        %v4023 = vand.u32 2147483647, %v380
        %v4024 = vand.u32 %v4023, 8388607
        %v4025 = vor.u32 %v4024, 8388608
        %v4026 = vsub.s32 0, %v4025
        %v4027 = vadd.s32 %v4022, 1
        %vm4028 = vcmp.gt.s32.totalorder %v4027, 0
        %v4029 = vsel %vm4028, %v4027, 0
        %v4030 = vshrl.u32 %v4029, 5
        %v4031 = vand.u32 %v4029, 31
        %v4032 = vsub.s32 32, %v4031
        %v4033 = vshrl.u32 683565275, %v4032
        %v4034 = vshll.u32 683565275, %v4031
        %v4035 = vshrl.u32 2475754826, %v4032
        %v4036 = vor.u32 %v4034, %v4035
        %v4037 = vshll.u32 2475754826, %v4031
        %v4038 = vshrl.u32 2131351028, %v4032
        %v4039 = vor.u32 %v4037, %v4038
        %v4040 = vshll.u32 2131351028, %v4031
        %v4041 = vshrl.u32 2102212464, %v4032
        %v4042 = vor.u32 %v4040, %v4041
        %v4043 = vshll.u32 2102212464, %v4031
        %v4044 = vshrl.u32 920167782, %v4032
        %v4045 = vor.u32 %v4043, %v4044
        %v4046 = vshll.u32 920167782, %v4031
        %v4047 = vshrl.u32 1326507024, %v4032
        %v4048 = vor.u32 %v4046, %v4047
        %vm4049 = vcmp.lt.s32.totalorder %v4030, 1
        %vm4050 = vcmp.lt.s32.totalorder %v4030, 2
        %vm4051 = vcmp.lt.s32.totalorder %v4030, 3
        %vm4052 = vcmp.lt.s32.totalorder %v4030, 4
        %v4053 = vsel %vm4049, %v4033, %v4036
        %v4054 = vsel %vm4052, %v4042, 2102212464
        %v4055 = vsel %vm4051, %v4039, %v4054
        %v4056 = vsel %vm4050, %v4053, %v4055
        %v4057 = vsel %vm4049, %v4036, %v4039
        %v4058 = vsel %vm4052, %v4045, 920167782
        %v4059 = vsel %vm4051, %v4042, %v4058
        %v4060 = vsel %vm4050, %v4057, %v4059
        %v4061 = vsel %vm4049, %v4039, %v4042
        %v4062 = vsel %vm4052, %v4048, 1326507024
        %v4063 = vsel %vm4051, %v4045, %v4062
        %v4064 = vsel %vm4050, %v4061, %v4063
        %v4065 = vshll.u32 %v4025, 8
        %v4066 = vmul.u32.u64.compose %v4065, %v4064
        %v4067 = vextract.low.u32 %v4066
        %v4068 = vextract.high.u32 %v4066
        %v4069 = vmul.u32.u64.compose %v4065, %v4060
        %v4070 = vextract.low.u32 %v4069
        %v4071 = vextract.high.u32 %v4069
        %v4072 = vmul.u32 %v4065, %v4056
        %v4073 = vadd.s32 %v4068, %v4070
        %vm4074 = vc.u32 %v4068, %v4070
        %v4075 = vadd.s32 %v4071, 1
        %v4076 = vsel %vm4074, %v4075, %v4071
        %v4077 = vadd.s32 %v4072, %v4076
        %v4078 = vadd.s32 %v4077, 536870912
        %v4079 = vshrl.u32 %v4078, 30
        %v4080 = vshll.u32 %v4079, 30
        %v4081 = vsub.s32 %v4077, %v4080
        %vm4082 = vcmp.lt.s32.totalorder %v4081, 0
        %v4083 = vsub.s32 0, %v4081
        %v4084 = vsel %vm4082, %v4083, %v4081
        %v4085 = vclz %v4084
        %v4086 = vsub.s32 %v4085, 2
        %vm4087 = vcmp.gt.s32.totalorder 0, %v4086
        %v4088 = vsel %vm4087, 0, %v4086
        %v4089 = vsub.s32 32, %v4088
        %v4090 = vshll.u32 %v4081, %v4088
        %v4091 = vshrl.u32 %v4073, %v4089
        %v4092 = vor.u32 %v4090, %v4091
        %v4093 = vsub.s32 4294967266, %v4088
        %v4094 = vadd.s32 %v4093, 127
        %v4095 = vshll.u32 %v4094, 23
        %v4096 = vor.u32 4788187, %v4095
        %v4097 = vand.u32 2147483647, %v4096
        %v4099 = vcvt.s32.f32 %v4092
        %v4100 = vmul.f32 %v4099, %v4097
        %v4101 = vxor.u32 %v4100, 2147483648
        %v4102 = vsel %vm4019, %v4101, %v4100
        %v4103 = vsub.s32 4, %v4079
        %v4104 = vsel %vm4019, %v4103, %v4079
        %v4105 = vsel %vm4018, %v380, %v4102
        %v4106 = vsel %vm4018, 0, %v4104
        %v4107 = vcosq.f32.pop %v4105
        %v4108 = vsinq.f32.pop %v4105
        %vm4109 = vweird.f32 %v380
        %v4110 = vadd.s32 %v4106, 3
        %v4111 = vand.u32 %v4110, 3
        %vm4112 = vcmp.lt.s32.totalorder %v4111, 2
        %vm4113 = vcmp.eq.s32.totalorder %v4111, 0
        %v4114 = vxor.u32 %v4108, 2147483648
        %v4115 = vsel %vm4113, %v4107, %v4114
        %vm4116 = vcmp.eq.s32.totalorder %v4111, 2
        %v4117 = vxor.u32 %v4107, 2147483648
        %v4118 = vsel %vm4116, %v4117, %v4108
        %v4119 = vsel %vm4112, %v4115, %v4118
        %v4120 = vsel %vm4109, nan, %v4119
        %v4121 = vand.u32 2147483647, %v381
        %vm4122 = vcmp.le.f32.partialorder %v4121, 0.7853982
        %vm4123 = vcmp.lt.s32.totalorder %v381, 0
        %v4124 = vand.u32 %v381, 2139095040
        %v4125 = vshrl.u32 %v4124, 23
        %v4126 = vsub.s32 %v4125, 127
        %v4127 = vand.u32 2147483647, %v381
        %v4128 = vand.u32 %v4127, 8388607
        %v4129 = vor.u32 %v4128, 8388608
        %v4130 = vsub.s32 0, %v4129
        %v4131 = vadd.s32 %v4126, 1
        %vm4132 = vcmp.gt.s32.totalorder %v4131, 0
        %v4133 = vsel %vm4132, %v4131, 0
        %v4134 = vshrl.u32 %v4133, 5
        %v4135 = vand.u32 %v4133, 31
        %v4136 = vsub.s32 32, %v4135
        %v4137 = vshrl.u32 683565275, %v4136
        %v4138 = vshll.u32 683565275, %v4135
        %v4139 = vshrl.u32 2475754826, %v4136
        %v4140 = vor.u32 %v4138, %v4139
        %v4141 = vshll.u32 2475754826, %v4135
        %v4142 = vshrl.u32 2131351028, %v4136
        %v4143 = vor.u32 %v4141, %v4142
        %v4144 = vshll.u32 2131351028, %v4135
        %v4145 = vshrl.u32 2102212464, %v4136
        %v4146 = vor.u32 %v4144, %v4145
        %v4147 = vshll.u32 2102212464, %v4135
        %v4148 = vshrl.u32 920167782, %v4136
        %v4149 = vor.u32 %v4147, %v4148
        %v4150 = vshll.u32 920167782, %v4135
        %v4151 = vshrl.u32 1326507024, %v4136
        %v4152 = vor.u32 %v4150, %v4151
        %vm4153 = vcmp.lt.s32.totalorder %v4134, 1
        %vm4154 = vcmp.lt.s32.totalorder %v4134, 2
        %vm4155 = vcmp.lt.s32.totalorder %v4134, 3
        %vm4156 = vcmp.lt.s32.totalorder %v4134, 4
        %v4157 = vsel %vm4153, %v4137, %v4140
        %v4158 = vsel %vm4156, %v4146, 2102212464
        %v4159 = vsel %vm4155, %v4143, %v4158
        %v4160 = vsel %vm4154, %v4157, %v4159
        %v4161 = vsel %vm4153, %v4140, %v4143
        %v4162 = vsel %vm4156, %v4149, 920167782
        %v4163 = vsel %vm4155, %v4146, %v4162
        %v4164 = vsel %vm4154, %v4161, %v4163
        %v4165 = vsel %vm4153, %v4143, %v4146
        %v4166 = vsel %vm4156, %v4152, 1326507024
        %v4167 = vsel %vm4155, %v4149, %v4166
        %v4168 = vsel %vm4154, %v4165, %v4167
        %v4169 = vshll.u32 %v4129, 8
        %v4170 = vmul.u32.u64.compose %v4169, %v4168
        %v4171 = vextract.low.u32 %v4170
        %v4172 = vextract.high.u32 %v4170
        %v4173 = vmul.u32.u64.compose %v4169, %v4164
        %v4174 = vextract.low.u32 %v4173
        %v4175 = vextract.high.u32 %v4173
        %v4176 = vmul.u32 %v4169, %v4160
        %v4177 = vadd.s32 %v4172, %v4174
        %vm4178 = vc.u32 %v4172, %v4174
        %v4179 = vadd.s32 %v4175, 1
        %v4180 = vsel %vm4178, %v4179, %v4175
        %v4181 = vadd.s32 %v4176, %v4180
        %v4182 = vadd.s32 %v4181, 536870912
        %v4183 = vshrl.u32 %v4182, 30
        %v4184 = vshll.u32 %v4183, 30
        %v4185 = vsub.s32 %v4181, %v4184
        %vm4186 = vcmp.lt.s32.totalorder %v4185, 0
        %v4187 = vsub.s32 0, %v4185
        %v4188 = vsel %vm4186, %v4187, %v4185
        %v4189 = vclz %v4188
        %v4190 = vsub.s32 %v4189, 2
        %vm4191 = vcmp.gt.s32.totalorder 0, %v4190
        %v4192 = vsel %vm4191, 0, %v4190
        %v4193 = vsub.s32 32, %v4192
        %v4194 = vshll.u32 %v4185, %v4192
        %v4195 = vshrl.u32 %v4177, %v4193
        %v4196 = vor.u32 %v4194, %v4195
        %v4197 = vsub.s32 4294967266, %v4192
        %v4198 = vadd.s32 %v4197, 127
        %v4199 = vshll.u32 %v4198, 23
        %v4200 = vor.u32 4788187, %v4199
        %v4201 = vand.u32 2147483647, %v4200
        %v4203 = vcvt.s32.f32 %v4196
        %v4204 = vmul.f32 %v4203, %v4201
        %v4205 = vxor.u32 %v4204, 2147483648
        %v4206 = vsel %vm4123, %v4205, %v4204
        %v4207 = vsub.s32 4, %v4183
        %v4208 = vsel %vm4123, %v4207, %v4183
        %v4209 = vsel %vm4122, %v381, %v4206
        %v4210 = vsel %vm4122, 0, %v4208
        %v4211 = vcosq.f32.pop %v4209
        %v4212 = vsinq.f32.pop %v4209
        %vm4213 = vweird.f32 %v381
        %v4214 = vadd.s32 %v4210, 3
        %v4215 = vand.u32 %v4214, 3
        %vm4216 = vcmp.lt.s32.totalorder %v4215, 2
        %vm4217 = vcmp.eq.s32.totalorder %v4215, 0
        %v4218 = vxor.u32 %v4212, 2147483648
        %v4219 = vsel %vm4217, %v4211, %v4218
        %vm4220 = vcmp.eq.s32.totalorder %v4215, 2
        %v4221 = vxor.u32 %v4211, 2147483648
        %v4222 = vsel %vm4220, %v4221, %v4212
        %v4223 = vsel %vm4216, %v4219, %v4222
        %v4224 = vsel %vm4213, nan, %v4223
        %v4225 = vand.u32 2147483647, %v382
        %vm4226 = vcmp.le.f32.partialorder %v4225, 0.7853982
        %vm4227 = vcmp.lt.s32.totalorder %v382, 0
        %v4228 = vand.u32 %v382, 2139095040
        %v4229 = vshrl.u32 %v4228, 23
        %v4230 = vsub.s32 %v4229, 127
        %v4231 = vand.u32 2147483647, %v382
        %v4232 = vand.u32 %v4231, 8388607
        %v4233 = vor.u32 %v4232, 8388608
        %v4234 = vsub.s32 0, %v4233
        %v4235 = vadd.s32 %v4230, 1
        %vm4236 = vcmp.gt.s32.totalorder %v4235, 0
        %v4237 = vsel %vm4236, %v4235, 0
        %v4238 = vshrl.u32 %v4237, 5
        %v4239 = vand.u32 %v4237, 31
        %v4240 = vsub.s32 32, %v4239
        %v4241 = vshrl.u32 683565275, %v4240
        %v4242 = vshll.u32 683565275, %v4239
        %v4243 = vshrl.u32 2475754826, %v4240
        %v4244 = vor.u32 %v4242, %v4243
        %v4245 = vshll.u32 2475754826, %v4239
        %v4246 = vshrl.u32 2131351028, %v4240
        %v4247 = vor.u32 %v4245, %v4246
        %v4248 = vshll.u32 2131351028, %v4239
        %v4249 = vshrl.u32 2102212464, %v4240
        %v4250 = vor.u32 %v4248, %v4249
        %v4251 = vshll.u32 2102212464, %v4239
        %v4252 = vshrl.u32 920167782, %v4240
        %v4253 = vor.u32 %v4251, %v4252
        %v4254 = vshll.u32 920167782, %v4239
        %v4255 = vshrl.u32 1326507024, %v4240
        %v4256 = vor.u32 %v4254, %v4255
        %vm4257 = vcmp.lt.s32.totalorder %v4238, 1
        %vm4258 = vcmp.lt.s32.totalorder %v4238, 2
        %vm4259 = vcmp.lt.s32.totalorder %v4238, 3
        %vm4260 = vcmp.lt.s32.totalorder %v4238, 4
        %v4261 = vsel %vm4257, %v4241, %v4244
        %v4262 = vsel %vm4260, %v4250, 2102212464
        %v4263 = vsel %vm4259, %v4247, %v4262
        %v4264 = vsel %vm4258, %v4261, %v4263
        %v4265 = vsel %vm4257, %v4244, %v4247
        %v4266 = vsel %vm4260, %v4253, 920167782
        %v4267 = vsel %vm4259, %v4250, %v4266
        %v4268 = vsel %vm4258, %v4265, %v4267
        %v4269 = vsel %vm4257, %v4247, %v4250
        %v4270 = vsel %vm4260, %v4256, 1326507024
        %v4271 = vsel %vm4259, %v4253, %v4270
        %v4272 = vsel %vm4258, %v4269, %v4271
        %v4273 = vshll.u32 %v4233, 8
        %v4274 = vmul.u32.u64.compose %v4273, %v4272
        %v4275 = vextract.low.u32 %v4274
        %v4276 = vextract.high.u32 %v4274
        %v4277 = vmul.u32.u64.compose %v4273, %v4268
        %v4278 = vextract.low.u32 %v4277
        %v4279 = vextract.high.u32 %v4277
        %v4280 = vmul.u32 %v4273, %v4264
        %v4281 = vadd.s32 %v4276, %v4278
        %vm4282 = vc.u32 %v4276, %v4278
        %v4283 = vadd.s32 %v4279, 1
        %v4284 = vsel %vm4282, %v4283, %v4279
        %v4285 = vadd.s32 %v4280, %v4284
        %v4286 = vadd.s32 %v4285, 536870912
        %v4287 = vshrl.u32 %v4286, 30
        %v4288 = vshll.u32 %v4287, 30
        %v4289 = vsub.s32 %v4285, %v4288
        %vm4290 = vcmp.lt.s32.totalorder %v4289, 0
        %v4291 = vsub.s32 0, %v4289
        %v4292 = vsel %vm4290, %v4291, %v4289
        %v4293 = vclz %v4292
        %v4294 = vsub.s32 %v4293, 2
        %vm4295 = vcmp.gt.s32.totalorder 0, %v4294
        %v4296 = vsel %vm4295, 0, %v4294
        %v4297 = vsub.s32 32, %v4296
        %v4298 = vshll.u32 %v4289, %v4296
        %v4299 = vshrl.u32 %v4281, %v4297
        %v4300 = vor.u32 %v4298, %v4299
        %v4301 = vsub.s32 4294967266, %v4296
        %v4302 = vadd.s32 %v4301, 127
        %v4303 = vshll.u32 %v4302, 23
        %v4304 = vor.u32 4788187, %v4303
        %v4305 = vand.u32 2147483647, %v4304
        %v4307 = vcvt.s32.f32 %v4300
        %v4308 = vmul.f32 %v4307, %v4305
        %v4309 = vxor.u32 %v4308, 2147483648
        %v4310 = vsel %vm4227, %v4309, %v4308
        %v4311 = vsub.s32 4, %v4287
        %v4312 = vsel %vm4227, %v4311, %v4287
        %v4313 = vsel %vm4226, %v382, %v4310
        %v4314 = vsel %vm4226, 0, %v4312
        %v4315 = vcosq.f32.pop %v4313
        %v4316 = vsinq.f32.pop %v4313
        %vm4317 = vweird.f32 %v382
        %v4318 = vadd.s32 %v4314, 3
        %v4319 = vand.u32 %v4318, 3
        %vm4320 = vcmp.lt.s32.totalorder %v4319, 2
        %vm4321 = vcmp.eq.s32.totalorder %v4319, 0
        %v4322 = vxor.u32 %v4316, 2147483648
        %v4323 = vsel %vm4321, %v4315, %v4322
        %vm4324 = vcmp.eq.s32.totalorder %v4319, 2
        %v4325 = vxor.u32 %v4315, 2147483648
        %v4326 = vsel %vm4324, %v4325, %v4316
        %v4327 = vsel %vm4320, %v4323, %v4326
        %v4328 = vsel %vm4317, nan, %v4327
        %v4329 = vand.u32 2147483647, %v383
        %vm4330 = vcmp.le.f32.partialorder %v4329, 0.7853982
        %vm4331 = vcmp.lt.s32.totalorder %v383, 0
        %v4332 = vand.u32 %v383, 2139095040
        %v4333 = vshrl.u32 %v4332, 23
        %v4334 = vsub.s32 %v4333, 127
        %v4335 = vand.u32 2147483647, %v383
        %v4336 = vand.u32 %v4335, 8388607
        %v4337 = vor.u32 %v4336, 8388608
        %v4338 = vsub.s32 0, %v4337
        %v4339 = vadd.s32 %v4334, 1
        %vm4340 = vcmp.gt.s32.totalorder %v4339, 0
        %v4341 = vsel %vm4340, %v4339, 0
        %v4342 = vshrl.u32 %v4341, 5
        %v4343 = vand.u32 %v4341, 31
        %v4344 = vsub.s32 32, %v4343
        %v4345 = vshrl.u32 683565275, %v4344
        %v4346 = vshll.u32 683565275, %v4343
        %v4347 = vshrl.u32 2475754826, %v4344
        %v4348 = vor.u32 %v4346, %v4347
        %v4349 = vshll.u32 2475754826, %v4343
        %v4350 = vshrl.u32 2131351028, %v4344
        %v4351 = vor.u32 %v4349, %v4350
        %v4352 = vshll.u32 2131351028, %v4343
        %v4353 = vshrl.u32 2102212464, %v4344
        %v4354 = vor.u32 %v4352, %v4353
        %v4355 = vshll.u32 2102212464, %v4343
        %v4356 = vshrl.u32 920167782, %v4344
        %v4357 = vor.u32 %v4355, %v4356
        %v4358 = vshll.u32 920167782, %v4343
        %v4359 = vshrl.u32 1326507024, %v4344
        %v4360 = vor.u32 %v4358, %v4359
        %vm4361 = vcmp.lt.s32.totalorder %v4342, 1
        %vm4362 = vcmp.lt.s32.totalorder %v4342, 2
        %vm4363 = vcmp.lt.s32.totalorder %v4342, 3
        %vm4364 = vcmp.lt.s32.totalorder %v4342, 4
        %v4365 = vsel %vm4361, %v4345, %v4348
        %v4366 = vsel %vm4364, %v4354, 2102212464
        %v4367 = vsel %vm4363, %v4351, %v4366
        %v4368 = vsel %vm4362, %v4365, %v4367
        %v4369 = vsel %vm4361, %v4348, %v4351
        %v4370 = vsel %vm4364, %v4357, 920167782
        %v4371 = vsel %vm4363, %v4354, %v4370
        %v4372 = vsel %vm4362, %v4369, %v4371
        %v4373 = vsel %vm4361, %v4351, %v4354
        %v4374 = vsel %vm4364, %v4360, 1326507024
        %v4375 = vsel %vm4363, %v4357, %v4374
        %v4376 = vsel %vm4362, %v4373, %v4375
        %v4377 = vshll.u32 %v4337, 8
        %v4378 = vmul.u32.u64.compose %v4377, %v4376
        %v4379 = vextract.low.u32 %v4378
        %v4380 = vextract.high.u32 %v4378
        %v4381 = vmul.u32.u64.compose %v4377, %v4372
        %v4382 = vextract.low.u32 %v4381
        %v4383 = vextract.high.u32 %v4381
        %v4384 = vmul.u32 %v4377, %v4368
        %v4385 = vadd.s32 %v4380, %v4382
        %vm4386 = vc.u32 %v4380, %v4382
        %v4387 = vadd.s32 %v4383, 1
        %v4388 = vsel %vm4386, %v4387, %v4383
        %v4389 = vadd.s32 %v4384, %v4388
        %v4390 = vadd.s32 %v4389, 536870912
        %v4391 = vshrl.u32 %v4390, 30
        %v4392 = vshll.u32 %v4391, 30
        %v4393 = vsub.s32 %v4389, %v4392
        %vm4394 = vcmp.lt.s32.totalorder %v4393, 0
        %v4395 = vsub.s32 0, %v4393
        %v4396 = vsel %vm4394, %v4395, %v4393
        %v4397 = vclz %v4396
        %v4398 = vsub.s32 %v4397, 2
        %vm4399 = vcmp.gt.s32.totalorder 0, %v4398
        %v4400 = vsel %vm4399, 0, %v4398
        %v4401 = vsub.s32 32, %v4400
        %v4402 = vshll.u32 %v4393, %v4400
        %v4403 = vshrl.u32 %v4385, %v4401
        %v4404 = vor.u32 %v4402, %v4403
        %v4405 = vsub.s32 4294967266, %v4400
        %v4406 = vadd.s32 %v4405, 127
        %v4407 = vshll.u32 %v4406, 23
        %v4408 = vor.u32 4788187, %v4407
        %v4409 = vand.u32 2147483647, %v4408
        %v4411 = vcvt.s32.f32 %v4404
        %v4412 = vmul.f32 %v4411, %v4409
        %v4413 = vxor.u32 %v4412, 2147483648
        %v4414 = vsel %vm4331, %v4413, %v4412
        %v4415 = vsub.s32 4, %v4391
        %v4416 = vsel %vm4331, %v4415, %v4391
        %v4417 = vsel %vm4330, %v383, %v4414
        %v4418 = vsel %vm4330, 0, %v4416
        %v4419 = vcosq.f32.pop %v4417
        %v4420 = vsinq.f32.pop %v4417
        %vm4421 = vweird.f32 %v383
        %v4422 = vadd.s32 %v4418, 3
        %v4423 = vand.u32 %v4422, 3
        %vm4424 = vcmp.lt.s32.totalorder %v4423, 2
        %vm4425 = vcmp.eq.s32.totalorder %v4423, 0
        %v4426 = vxor.u32 %v4420, 2147483648
        %v4427 = vsel %vm4425, %v4419, %v4426
        %vm4428 = vcmp.eq.s32.totalorder %v4423, 2
        %v4429 = vxor.u32 %v4419, 2147483648
        %v4430 = vsel %vm4428, %v4429, %v4420
        %v4431 = vsel %vm4424, %v4427, %v4430
        %v4432 = vsel %vm4421, nan, %v4431
        %v4433 = vand.u32 2147483647, %v384
        %vm4434 = vcmp.le.f32.partialorder %v4433, 0.7853982
        %vm4435 = vcmp.lt.s32.totalorder %v384, 0
        %v4436 = vand.u32 %v384, 2139095040
        %v4437 = vshrl.u32 %v4436, 23
        %v4438 = vsub.s32 %v4437, 127
        %v4439 = vand.u32 2147483647, %v384
        %v4440 = vand.u32 %v4439, 8388607
        %v4441 = vor.u32 %v4440, 8388608
        %v4442 = vsub.s32 0, %v4441
        %v4443 = vadd.s32 %v4438, 1
        %vm4444 = vcmp.gt.s32.totalorder %v4443, 0
        %v4445 = vsel %vm4444, %v4443, 0
        %v4446 = vshrl.u32 %v4445, 5
        %v4447 = vand.u32 %v4445, 31
        %v4448 = vsub.s32 32, %v4447
        %v4449 = vshrl.u32 683565275, %v4448
        %v4450 = vshll.u32 683565275, %v4447
        %v4451 = vshrl.u32 2475754826, %v4448
        %v4452 = vor.u32 %v4450, %v4451
        %v4453 = vshll.u32 2475754826, %v4447
        %v4454 = vshrl.u32 2131351028, %v4448
        %v4455 = vor.u32 %v4453, %v4454
        %v4456 = vshll.u32 2131351028, %v4447
        %v4457 = vshrl.u32 2102212464, %v4448
        %v4458 = vor.u32 %v4456, %v4457
        %v4459 = vshll.u32 2102212464, %v4447
        %v4460 = vshrl.u32 920167782, %v4448
        %v4461 = vor.u32 %v4459, %v4460
        %v4462 = vshll.u32 920167782, %v4447
        %v4463 = vshrl.u32 1326507024, %v4448
        %v4464 = vor.u32 %v4462, %v4463
        %vm4465 = vcmp.lt.s32.totalorder %v4446, 1
        %vm4466 = vcmp.lt.s32.totalorder %v4446, 2
        %vm4467 = vcmp.lt.s32.totalorder %v4446, 3
        %vm4468 = vcmp.lt.s32.totalorder %v4446, 4
        %v4469 = vsel %vm4465, %v4449, %v4452
        %v4470 = vsel %vm4468, %v4458, 2102212464
        %v4471 = vsel %vm4467, %v4455, %v4470
        %v4472 = vsel %vm4466, %v4469, %v4471
        %v4473 = vsel %vm4465, %v4452, %v4455
        %v4474 = vsel %vm4468, %v4461, 920167782
        %v4475 = vsel %vm4467, %v4458, %v4474
        %v4476 = vsel %vm4466, %v4473, %v4475
        %v4477 = vsel %vm4465, %v4455, %v4458
        %v4478 = vsel %vm4468, %v4464, 1326507024
        %v4479 = vsel %vm4467, %v4461, %v4478
        %v4480 = vsel %vm4466, %v4477, %v4479
        %v4481 = vshll.u32 %v4441, 8
        %v4482 = vmul.u32.u64.compose %v4481, %v4480
        %v4483 = vextract.low.u32 %v4482
        %v4484 = vextract.high.u32 %v4482
        %v4485 = vmul.u32.u64.compose %v4481, %v4476
        %v4486 = vextract.low.u32 %v4485
        %v4487 = vextract.high.u32 %v4485
        %v4488 = vmul.u32 %v4481, %v4472
        %v4489 = vadd.s32 %v4484, %v4486
        %vm4490 = vc.u32 %v4484, %v4486
        %v4491 = vadd.s32 %v4487, 1
        %v4492 = vsel %vm4490, %v4491, %v4487
        %v4493 = vadd.s32 %v4488, %v4492
        %v4494 = vadd.s32 %v4493, 536870912
        %v4495 = vshrl.u32 %v4494, 30
        %v4496 = vshll.u32 %v4495, 30
        %v4497 = vsub.s32 %v4493, %v4496
        %vm4498 = vcmp.lt.s32.totalorder %v4497, 0
        %v4499 = vsub.s32 0, %v4497
        %v4500 = vsel %vm4498, %v4499, %v4497
        %v4501 = vclz %v4500
        %v4502 = vsub.s32 %v4501, 2
        %vm4503 = vcmp.gt.s32.totalorder 0, %v4502
        %v4504 = vsel %vm4503, 0, %v4502
        %v4505 = vsub.s32 32, %v4504
        %v4506 = vshll.u32 %v4497, %v4504
        %v4507 = vshrl.u32 %v4489, %v4505
        %v4508 = vor.u32 %v4506, %v4507
        %v4509 = vsub.s32 4294967266, %v4504
        %v4510 = vadd.s32 %v4509, 127
        %v4511 = vshll.u32 %v4510, 23
        %v4512 = vor.u32 4788187, %v4511
        %v4513 = vand.u32 2147483647, %v4512
        %v4515 = vcvt.s32.f32 %v4508
        %v4516 = vmul.f32 %v4515, %v4513
        %v4517 = vxor.u32 %v4516, 2147483648
        %v4518 = vsel %vm4435, %v4517, %v4516
        %v4519 = vsub.s32 4, %v4495
        %v4520 = vsel %vm4435, %v4519, %v4495
        %v4521 = vsel %vm4434, %v384, %v4518
        %v4522 = vsel %vm4434, 0, %v4520
        %v4523 = vcosq.f32.pop %v4521
        %v4524 = vsinq.f32.pop %v4521
        %vm4525 = vweird.f32 %v384
        %v4526 = vadd.s32 %v4522, 3
        %v4527 = vand.u32 %v4526, 3
        %vm4528 = vcmp.lt.s32.totalorder %v4527, 2
        %vm4529 = vcmp.eq.s32.totalorder %v4527, 0
        %v4530 = vxor.u32 %v4524, 2147483648
        %v4531 = vsel %vm4529, %v4523, %v4530
        %vm4532 = vcmp.eq.s32.totalorder %v4527, 2
        %v4533 = vxor.u32 %v4523, 2147483648
        %v4534 = vsel %vm4532, %v4533, %v4524
        %v4535 = vsel %vm4528, %v4531, %v4534
        %v4536 = vsel %vm4525, nan, %v4535
        %v4537 = vand.u32 2147483647, %v385
        %vm4538 = vcmp.le.f32.partialorder %v4537, 0.7853982
        %vm4539 = vcmp.lt.s32.totalorder %v385, 0
        %v4540 = vand.u32 %v385, 2139095040
        %v4541 = vshrl.u32 %v4540, 23
        %v4542 = vsub.s32 %v4541, 127
        %v4543 = vand.u32 2147483647, %v385
        %v4544 = vand.u32 %v4543, 8388607
        %v4545 = vor.u32 %v4544, 8388608
        %v4546 = vsub.s32 0, %v4545
        %v4547 = vadd.s32 %v4542, 1
        %vm4548 = vcmp.gt.s32.totalorder %v4547, 0
        %v4549 = vsel %vm4548, %v4547, 0
        %v4550 = vshrl.u32 %v4549, 5
        %v4551 = vand.u32 %v4549, 31
        %v4552 = vsub.s32 32, %v4551
        %v4553 = vshrl.u32 683565275, %v4552
        %v4554 = vshll.u32 683565275, %v4551
        %v4555 = vshrl.u32 2475754826, %v4552
        %v4556 = vor.u32 %v4554, %v4555
        %v4557 = vshll.u32 2475754826, %v4551
        %v4558 = vshrl.u32 2131351028, %v4552
        %v4559 = vor.u32 %v4557, %v4558
        %v4560 = vshll.u32 2131351028, %v4551
        %v4561 = vshrl.u32 2102212464, %v4552
        %v4562 = vor.u32 %v4560, %v4561
        %v4563 = vshll.u32 2102212464, %v4551
        %v4564 = vshrl.u32 920167782, %v4552
        %v4565 = vor.u32 %v4563, %v4564
        %v4566 = vshll.u32 920167782, %v4551
        %v4567 = vshrl.u32 1326507024, %v4552
        %v4568 = vor.u32 %v4566, %v4567
        %vm4569 = vcmp.lt.s32.totalorder %v4550, 1
        %vm4570 = vcmp.lt.s32.totalorder %v4550, 2
        %vm4571 = vcmp.lt.s32.totalorder %v4550, 3
        %vm4572 = vcmp.lt.s32.totalorder %v4550, 4
        %v4573 = vsel %vm4569, %v4553, %v4556
        %v4574 = vsel %vm4572, %v4562, 2102212464
        %v4575 = vsel %vm4571, %v4559, %v4574
        %v4576 = vsel %vm4570, %v4573, %v4575
        %v4577 = vsel %vm4569, %v4556, %v4559
        %v4578 = vsel %vm4572, %v4565, 920167782
        %v4579 = vsel %vm4571, %v4562, %v4578
        %v4580 = vsel %vm4570, %v4577, %v4579
        %v4581 = vsel %vm4569, %v4559, %v4562
        %v4582 = vsel %vm4572, %v4568, 1326507024
        %v4583 = vsel %vm4571, %v4565, %v4582
        %v4584 = vsel %vm4570, %v4581, %v4583
        %v4585 = vshll.u32 %v4545, 8
        %v4586 = vmul.u32.u64.compose %v4585, %v4584
        %v4587 = vextract.low.u32 %v4586
        %v4588 = vextract.high.u32 %v4586
        %v4589 = vmul.u32.u64.compose %v4585, %v4580
        %v4590 = vextract.low.u32 %v4589
        %v4591 = vextract.high.u32 %v4589
        %v4592 = vmul.u32 %v4585, %v4576
        %v4593 = vadd.s32 %v4588, %v4590
        %vm4594 = vc.u32 %v4588, %v4590
        %v4595 = vadd.s32 %v4591, 1
        %v4596 = vsel %vm4594, %v4595, %v4591
        %v4597 = vadd.s32 %v4592, %v4596
        %v4598 = vadd.s32 %v4597, 536870912
        %v4599 = vshrl.u32 %v4598, 30
        %v4600 = vshll.u32 %v4599, 30
        %v4601 = vsub.s32 %v4597, %v4600
        %vm4602 = vcmp.lt.s32.totalorder %v4601, 0
        %v4603 = vsub.s32 0, %v4601
        %v4604 = vsel %vm4602, %v4603, %v4601
        %v4605 = vclz %v4604
        %v4606 = vsub.s32 %v4605, 2
        %vm4607 = vcmp.gt.s32.totalorder 0, %v4606
        %v4608 = vsel %vm4607, 0, %v4606
        %v4609 = vsub.s32 32, %v4608
        %v4610 = vshll.u32 %v4601, %v4608
        %v4611 = vshrl.u32 %v4593, %v4609
        %v4612 = vor.u32 %v4610, %v4611
        %v4613 = vsub.s32 4294967266, %v4608
        %v4614 = vadd.s32 %v4613, 127
        %v4615 = vshll.u32 %v4614, 23
        %v4616 = vor.u32 4788187, %v4615
        %v4617 = vand.u32 2147483647, %v4616
        %v4619 = vcvt.s32.f32 %v4612
        %v4620 = vmul.f32 %v4619, %v4617
        %v4621 = vxor.u32 %v4620, 2147483648
        %v4622 = vsel %vm4539, %v4621, %v4620
        %v4623 = vsub.s32 4, %v4599
        %v4624 = vsel %vm4539, %v4623, %v4599
        %v4625 = vsel %vm4538, %v385, %v4622
        %v4626 = vsel %vm4538, 0, %v4624
        %v4627 = vcosq.f32.pop %v4625
        %v4628 = vsinq.f32.pop %v4625
        %vm4629 = vweird.f32 %v385
        %v4630 = vadd.s32 %v4626, 3
        %v4631 = vand.u32 %v4630, 3
        %vm4632 = vcmp.lt.s32.totalorder %v4631, 2
        %vm4633 = vcmp.eq.s32.totalorder %v4631, 0
        %v4634 = vxor.u32 %v4628, 2147483648
        %v4635 = vsel %vm4633, %v4627, %v4634
        %vm4636 = vcmp.eq.s32.totalorder %v4631, 2
        %v4637 = vxor.u32 %v4627, 2147483648
        %v4638 = vsel %vm4636, %v4637, %v4628
        %v4639 = vsel %vm4632, %v4635, %v4638
        %v4640 = vsel %vm4629, nan, %v4639
        %v4641 = vand.u32 2147483647, %v386
        %vm4642 = vcmp.le.f32.partialorder %v4641, 0.7853982
        %vm4643 = vcmp.lt.s32.totalorder %v386, 0
        %v4644 = vand.u32 %v386, 2139095040
        %v4645 = vshrl.u32 %v4644, 23
        %v4646 = vsub.s32 %v4645, 127
        %v4647 = vand.u32 2147483647, %v386
        %v4648 = vand.u32 %v4647, 8388607
        %v4649 = vor.u32 %v4648, 8388608
        %v4650 = vsub.s32 0, %v4649
        %v4651 = vadd.s32 %v4646, 1
        %vm4652 = vcmp.gt.s32.totalorder %v4651, 0
        %v4653 = vsel %vm4652, %v4651, 0
        %v4654 = vshrl.u32 %v4653, 5
        %v4655 = vand.u32 %v4653, 31
        %v4656 = vsub.s32 32, %v4655
        %v4657 = vshrl.u32 683565275, %v4656
        %v4658 = vshll.u32 683565275, %v4655
        %v4659 = vshrl.u32 2475754826, %v4656
        %v4660 = vor.u32 %v4658, %v4659
        %v4661 = vshll.u32 2475754826, %v4655
        %v4662 = vshrl.u32 2131351028, %v4656
        %v4663 = vor.u32 %v4661, %v4662
        %v4664 = vshll.u32 2131351028, %v4655
        %v4665 = vshrl.u32 2102212464, %v4656
        %v4666 = vor.u32 %v4664, %v4665
        %v4667 = vshll.u32 2102212464, %v4655
        %v4668 = vshrl.u32 920167782, %v4656
        %v4669 = vor.u32 %v4667, %v4668
        %v4670 = vshll.u32 920167782, %v4655
        %v4671 = vshrl.u32 1326507024, %v4656
        %v4672 = vor.u32 %v4670, %v4671
        %vm4673 = vcmp.lt.s32.totalorder %v4654, 1
        %vm4674 = vcmp.lt.s32.totalorder %v4654, 2
        %vm4675 = vcmp.lt.s32.totalorder %v4654, 3
        %vm4676 = vcmp.lt.s32.totalorder %v4654, 4
        %v4677 = vsel %vm4673, %v4657, %v4660
        %v4678 = vsel %vm4676, %v4666, 2102212464
        %v4679 = vsel %vm4675, %v4663, %v4678
        %v4680 = vsel %vm4674, %v4677, %v4679
        %v4681 = vsel %vm4673, %v4660, %v4663
        %v4682 = vsel %vm4676, %v4669, 920167782
        %v4683 = vsel %vm4675, %v4666, %v4682
        %v4684 = vsel %vm4674, %v4681, %v4683
        %v4685 = vsel %vm4673, %v4663, %v4666
        %v4686 = vsel %vm4676, %v4672, 1326507024
        %v4687 = vsel %vm4675, %v4669, %v4686
        %v4688 = vsel %vm4674, %v4685, %v4687
        %v4689 = vshll.u32 %v4649, 8
        %v4690 = vmul.u32.u64.compose %v4689, %v4688
        %v4691 = vextract.low.u32 %v4690
        %v4692 = vextract.high.u32 %v4690
        %v4693 = vmul.u32.u64.compose %v4689, %v4684
        %v4694 = vextract.low.u32 %v4693
        %v4695 = vextract.high.u32 %v4693
        %v4696 = vmul.u32 %v4689, %v4680
        %v4697 = vadd.s32 %v4692, %v4694
        %vm4698 = vc.u32 %v4692, %v4694
        %v4699 = vadd.s32 %v4695, 1
        %v4700 = vsel %vm4698, %v4699, %v4695
        %v4701 = vadd.s32 %v4696, %v4700
        %v4702 = vadd.s32 %v4701, 536870912
        %v4703 = vshrl.u32 %v4702, 30
        %v4704 = vshll.u32 %v4703, 30
        %v4705 = vsub.s32 %v4701, %v4704
        %vm4706 = vcmp.lt.s32.totalorder %v4705, 0
        %v4707 = vsub.s32 0, %v4705
        %v4708 = vsel %vm4706, %v4707, %v4705
        %v4709 = vclz %v4708
        %v4710 = vsub.s32 %v4709, 2
        %vm4711 = vcmp.gt.s32.totalorder 0, %v4710
        %v4712 = vsel %vm4711, 0, %v4710
        %v4713 = vsub.s32 32, %v4712
        %v4714 = vshll.u32 %v4705, %v4712
        %v4715 = vshrl.u32 %v4697, %v4713
        %v4716 = vor.u32 %v4714, %v4715
        %v4717 = vsub.s32 4294967266, %v4712
        %v4718 = vadd.s32 %v4717, 127
        %v4719 = vshll.u32 %v4718, 23
        %v4720 = vor.u32 4788187, %v4719
        %v4721 = vand.u32 2147483647, %v4720
        %v4723 = vcvt.s32.f32 %v4716
        %v4724 = vmul.f32 %v4723, %v4721
        %v4725 = vxor.u32 %v4724, 2147483648
        %v4726 = vsel %vm4643, %v4725, %v4724
        %v4727 = vsub.s32 4, %v4703
        %v4728 = vsel %vm4643, %v4727, %v4703
        %v4729 = vsel %vm4642, %v386, %v4726
        %v4730 = vsel %vm4642, 0, %v4728
        %v4731 = vcosq.f32.pop %v4729
        %v4732 = vsinq.f32.pop %v4729
        %vm4733 = vweird.f32 %v386
        %v4734 = vadd.s32 %v4730, 3
        %v4735 = vand.u32 %v4734, 3
        %vm4736 = vcmp.lt.s32.totalorder %v4735, 2
        %vm4737 = vcmp.eq.s32.totalorder %v4735, 0
        %v4738 = vxor.u32 %v4732, 2147483648
        %v4739 = vsel %vm4737, %v4731, %v4738
        %vm4740 = vcmp.eq.s32.totalorder %v4735, 2
        %v4741 = vxor.u32 %v4731, 2147483648
        %v4742 = vsel %vm4740, %v4741, %v4732
        %v4743 = vsel %vm4736, %v4739, %v4742
        %v4744 = vsel %vm4733, nan, %v4743
        %v4745 = vand.u32 2147483647, %v387
        %vm4746 = vcmp.le.f32.partialorder %v4745, 0.7853982
        %vm4747 = vcmp.lt.s32.totalorder %v387, 0
        %v4748 = vand.u32 %v387, 2139095040
        %v4749 = vshrl.u32 %v4748, 23
        %v4750 = vsub.s32 %v4749, 127
        %v4751 = vand.u32 2147483647, %v387
        %v4752 = vand.u32 %v4751, 8388607
        %v4753 = vor.u32 %v4752, 8388608
        %v4754 = vsub.s32 0, %v4753
        %v4755 = vadd.s32 %v4750, 1
        %vm4756 = vcmp.gt.s32.totalorder %v4755, 0
        %v4757 = vsel %vm4756, %v4755, 0
        %v4758 = vshrl.u32 %v4757, 5
        %v4759 = vand.u32 %v4757, 31
        %v4760 = vsub.s32 32, %v4759
        %v4761 = vshrl.u32 683565275, %v4760
        %v4762 = vshll.u32 683565275, %v4759
        %v4763 = vshrl.u32 2475754826, %v4760
        %v4764 = vor.u32 %v4762, %v4763
        %v4765 = vshll.u32 2475754826, %v4759
        %v4766 = vshrl.u32 2131351028, %v4760
        %v4767 = vor.u32 %v4765, %v4766
        %v4768 = vshll.u32 2131351028, %v4759
        %v4769 = vshrl.u32 2102212464, %v4760
        %v4770 = vor.u32 %v4768, %v4769
        %v4771 = vshll.u32 2102212464, %v4759
        %v4772 = vshrl.u32 920167782, %v4760
        %v4773 = vor.u32 %v4771, %v4772
        %v4774 = vshll.u32 920167782, %v4759
        %v4775 = vshrl.u32 1326507024, %v4760
        %v4776 = vor.u32 %v4774, %v4775
        %vm4777 = vcmp.lt.s32.totalorder %v4758, 1
        %vm4778 = vcmp.lt.s32.totalorder %v4758, 2
        %vm4779 = vcmp.lt.s32.totalorder %v4758, 3
        %vm4780 = vcmp.lt.s32.totalorder %v4758, 4
        %v4781 = vsel %vm4777, %v4761, %v4764
        %v4782 = vsel %vm4780, %v4770, 2102212464
        %v4783 = vsel %vm4779, %v4767, %v4782
        %v4784 = vsel %vm4778, %v4781, %v4783
        %v4785 = vsel %vm4777, %v4764, %v4767
        %v4786 = vsel %vm4780, %v4773, 920167782
        %v4787 = vsel %vm4779, %v4770, %v4786
        %v4788 = vsel %vm4778, %v4785, %v4787
        %v4789 = vsel %vm4777, %v4767, %v4770
        %v4790 = vsel %vm4780, %v4776, 1326507024
        %v4791 = vsel %vm4779, %v4773, %v4790
        %v4792 = vsel %vm4778, %v4789, %v4791
        %v4793 = vshll.u32 %v4753, 8
        %v4794 = vmul.u32.u64.compose %v4793, %v4792
        %v4795 = vextract.low.u32 %v4794
        %v4796 = vextract.high.u32 %v4794
        %v4797 = vmul.u32.u64.compose %v4793, %v4788
        %v4798 = vextract.low.u32 %v4797
        %v4799 = vextract.high.u32 %v4797
        %v4800 = vmul.u32 %v4793, %v4784
        %v4801 = vadd.s32 %v4796, %v4798
        %vm4802 = vc.u32 %v4796, %v4798
        %v4803 = vadd.s32 %v4799, 1
        %v4804 = vsel %vm4802, %v4803, %v4799
        %v4805 = vadd.s32 %v4800, %v4804
        %v4806 = vadd.s32 %v4805, 536870912
        %v4807 = vshrl.u32 %v4806, 30
        %v4808 = vshll.u32 %v4807, 30
        %v4809 = vsub.s32 %v4805, %v4808
        %vm4810 = vcmp.lt.s32.totalorder %v4809, 0
        %v4811 = vsub.s32 0, %v4809
        %v4812 = vsel %vm4810, %v4811, %v4809
        %v4813 = vclz %v4812
        %v4814 = vsub.s32 %v4813, 2
        %vm4815 = vcmp.gt.s32.totalorder 0, %v4814
        %v4816 = vsel %vm4815, 0, %v4814
        %v4817 = vsub.s32 32, %v4816
        %v4818 = vshll.u32 %v4809, %v4816
        %v4819 = vshrl.u32 %v4801, %v4817
        %v4820 = vor.u32 %v4818, %v4819
        %v4821 = vsub.s32 4294967266, %v4816
        %v4822 = vadd.s32 %v4821, 127
        %v4823 = vshll.u32 %v4822, 23
        %v4824 = vor.u32 4788187, %v4823
        %v4825 = vand.u32 2147483647, %v4824
        %v4827 = vcvt.s32.f32 %v4820
        %v4828 = vmul.f32 %v4827, %v4825
        %v4829 = vxor.u32 %v4828, 2147483648
        %v4830 = vsel %vm4747, %v4829, %v4828
        %v4831 = vsub.s32 4, %v4807
        %v4832 = vsel %vm4747, %v4831, %v4807
        %v4833 = vsel %vm4746, %v387, %v4830
        %v4834 = vsel %vm4746, 0, %v4832
        %v4835 = vcosq.f32.pop %v4833
        %v4836 = vsinq.f32.pop %v4833
        %vm4837 = vweird.f32 %v387
        %v4838 = vadd.s32 %v4834, 3
        %v4839 = vand.u32 %v4838, 3
        %vm4840 = vcmp.lt.s32.totalorder %v4839, 2
        %vm4841 = vcmp.eq.s32.totalorder %v4839, 0
        %v4842 = vxor.u32 %v4836, 2147483648
        %v4843 = vsel %vm4841, %v4835, %v4842
        %vm4844 = vcmp.eq.s32.totalorder %v4839, 2
        %v4845 = vxor.u32 %v4835, 2147483648
        %v4846 = vsel %vm4844, %v4845, %v4836
        %v4847 = vsel %vm4840, %v4843, %v4846
        %v4848 = vsel %vm4837, nan, %v4847
        %v4849 = vand.u32 2147483647, %v388
        %vm4850 = vcmp.le.f32.partialorder %v4849, 0.7853982
        %vm4851 = vcmp.lt.s32.totalorder %v388, 0
        %v4852 = vand.u32 %v388, 2139095040
        %v4853 = vshrl.u32 %v4852, 23
        %v4854 = vsub.s32 %v4853, 127
        %v4855 = vand.u32 2147483647, %v388
        %v4856 = vand.u32 %v4855, 8388607
        %v4857 = vor.u32 %v4856, 8388608
        %v4858 = vsub.s32 0, %v4857
        %v4859 = vadd.s32 %v4854, 1
        %vm4860 = vcmp.gt.s32.totalorder %v4859, 0
        %v4861 = vsel %vm4860, %v4859, 0
        %v4862 = vshrl.u32 %v4861, 5
        %v4863 = vand.u32 %v4861, 31
        %v4864 = vsub.s32 32, %v4863
        %v4865 = vshrl.u32 683565275, %v4864
        %v4866 = vshll.u32 683565275, %v4863
        %v4867 = vshrl.u32 2475754826, %v4864
        %v4868 = vor.u32 %v4866, %v4867
        %v4869 = vshll.u32 2475754826, %v4863
        %v4870 = vshrl.u32 2131351028, %v4864
        %v4871 = vor.u32 %v4869, %v4870
        %v4872 = vshll.u32 2131351028, %v4863
        %v4873 = vshrl.u32 2102212464, %v4864
        %v4874 = vor.u32 %v4872, %v4873
        %v4875 = vshll.u32 2102212464, %v4863
        %v4876 = vshrl.u32 920167782, %v4864
        %v4877 = vor.u32 %v4875, %v4876
        %v4878 = vshll.u32 920167782, %v4863
        %v4879 = vshrl.u32 1326507024, %v4864
        %v4880 = vor.u32 %v4878, %v4879
        %vm4881 = vcmp.lt.s32.totalorder %v4862, 1
        %vm4882 = vcmp.lt.s32.totalorder %v4862, 2
        %vm4883 = vcmp.lt.s32.totalorder %v4862, 3
        %vm4884 = vcmp.lt.s32.totalorder %v4862, 4
        %v4885 = vsel %vm4881, %v4865, %v4868
        %v4886 = vsel %vm4884, %v4874, 2102212464
        %v4887 = vsel %vm4883, %v4871, %v4886
        %v4888 = vsel %vm4882, %v4885, %v4887
        %v4889 = vsel %vm4881, %v4868, %v4871
        %v4890 = vsel %vm4884, %v4877, 920167782
        %v4891 = vsel %vm4883, %v4874, %v4890
        %v4892 = vsel %vm4882, %v4889, %v4891
        %v4893 = vsel %vm4881, %v4871, %v4874
        %v4894 = vsel %vm4884, %v4880, 1326507024
        %v4895 = vsel %vm4883, %v4877, %v4894
        %v4896 = vsel %vm4882, %v4893, %v4895
        %v4897 = vshll.u32 %v4857, 8
        %v4898 = vmul.u32.u64.compose %v4897, %v4896
        %v4899 = vextract.low.u32 %v4898
        %v4900 = vextract.high.u32 %v4898
        %v4901 = vmul.u32.u64.compose %v4897, %v4892
        %v4902 = vextract.low.u32 %v4901
        %v4903 = vextract.high.u32 %v4901
        %v4904 = vmul.u32 %v4897, %v4888
        %v4905 = vadd.s32 %v4900, %v4902
        %vm4906 = vc.u32 %v4900, %v4902
        %v4907 = vadd.s32 %v4903, 1
        %v4908 = vsel %vm4906, %v4907, %v4903
        %v4909 = vadd.s32 %v4904, %v4908
        %v4910 = vadd.s32 %v4909, 536870912
        %v4911 = vshrl.u32 %v4910, 30
        %v4912 = vshll.u32 %v4911, 30
        %v4913 = vsub.s32 %v4909, %v4912
        %vm4914 = vcmp.lt.s32.totalorder %v4913, 0
        %v4915 = vsub.s32 0, %v4913
        %v4916 = vsel %vm4914, %v4915, %v4913
        %v4917 = vclz %v4916
        %v4918 = vsub.s32 %v4917, 2
        %vm4919 = vcmp.gt.s32.totalorder 0, %v4918
        %v4920 = vsel %vm4919, 0, %v4918
        %v4921 = vsub.s32 32, %v4920
        %v4922 = vshll.u32 %v4913, %v4920
        %v4923 = vshrl.u32 %v4905, %v4921
        %v4924 = vor.u32 %v4922, %v4923
        %v4925 = vsub.s32 4294967266, %v4920
        %v4926 = vadd.s32 %v4925, 127
        %v4927 = vshll.u32 %v4926, 23
        %v4928 = vor.u32 4788187, %v4927
        %v4929 = vand.u32 2147483647, %v4928
        %v4931 = vcvt.s32.f32 %v4924
        %v4932 = vmul.f32 %v4931, %v4929
        %v4933 = vxor.u32 %v4932, 2147483648
        %v4934 = vsel %vm4851, %v4933, %v4932
        %v4935 = vsub.s32 4, %v4911
        %v4936 = vsel %vm4851, %v4935, %v4911
        %v4937 = vsel %vm4850, %v388, %v4934
        %v4938 = vsel %vm4850, 0, %v4936
        %v4939 = vcosq.f32.pop %v4937
        %v4940 = vsinq.f32.pop %v4937
        %vm4941 = vweird.f32 %v388
        %v4942 = vadd.s32 %v4938, 3
        %v4943 = vand.u32 %v4942, 3
        %vm4944 = vcmp.lt.s32.totalorder %v4943, 2
        %vm4945 = vcmp.eq.s32.totalorder %v4943, 0
        %v4946 = vxor.u32 %v4940, 2147483648
        %v4947 = vsel %vm4945, %v4939, %v4946
        %vm4948 = vcmp.eq.s32.totalorder %v4943, 2
        %v4949 = vxor.u32 %v4939, 2147483648
        %v4950 = vsel %vm4948, %v4949, %v4940
        %v4951 = vsel %vm4944, %v4947, %v4950
        %v4952 = vsel %vm4941, nan, %v4951
        %v4953 = vand.u32 2147483647, %v389
        %vm4954 = vcmp.le.f32.partialorder %v4953, 0.7853982
        %vm4955 = vcmp.lt.s32.totalorder %v389, 0
        %v4956 = vand.u32 %v389, 2139095040
        %v4957 = vshrl.u32 %v4956, 23
        %v4958 = vsub.s32 %v4957, 127
        %v4959 = vand.u32 2147483647, %v389
        %v4960 = vand.u32 %v4959, 8388607
        %v4961 = vor.u32 %v4960, 8388608
        %v4962 = vsub.s32 0, %v4961
        %v4963 = vadd.s32 %v4958, 1
        %vm4964 = vcmp.gt.s32.totalorder %v4963, 0
        %v4965 = vsel %vm4964, %v4963, 0
        %v4966 = vshrl.u32 %v4965, 5
        %v4967 = vand.u32 %v4965, 31
        %v4968 = vsub.s32 32, %v4967
        %v4969 = vshrl.u32 683565275, %v4968
        %v4970 = vshll.u32 683565275, %v4967
        %v4971 = vshrl.u32 2475754826, %v4968
        %v4972 = vor.u32 %v4970, %v4971
        %v4973 = vshll.u32 2475754826, %v4967
        %v4974 = vshrl.u32 2131351028, %v4968
        %v4975 = vor.u32 %v4973, %v4974
        %v4976 = vshll.u32 2131351028, %v4967
        %v4977 = vshrl.u32 2102212464, %v4968
        %v4978 = vor.u32 %v4976, %v4977
        %v4979 = vshll.u32 2102212464, %v4967
        %v4980 = vshrl.u32 920167782, %v4968
        %v4981 = vor.u32 %v4979, %v4980
        %v4982 = vshll.u32 920167782, %v4967
        %v4983 = vshrl.u32 1326507024, %v4968
        %v4984 = vor.u32 %v4982, %v4983
        %vm4985 = vcmp.lt.s32.totalorder %v4966, 1
        %vm4986 = vcmp.lt.s32.totalorder %v4966, 2
        %vm4987 = vcmp.lt.s32.totalorder %v4966, 3
        %vm4988 = vcmp.lt.s32.totalorder %v4966, 4
        %v4989 = vsel %vm4985, %v4969, %v4972
        %v4990 = vsel %vm4988, %v4978, 2102212464
        %v4991 = vsel %vm4987, %v4975, %v4990
        %v4992 = vsel %vm4986, %v4989, %v4991
        %v4993 = vsel %vm4985, %v4972, %v4975
        %v4994 = vsel %vm4988, %v4981, 920167782
        %v4995 = vsel %vm4987, %v4978, %v4994
        %v4996 = vsel %vm4986, %v4993, %v4995
        %v4997 = vsel %vm4985, %v4975, %v4978
        %v4998 = vsel %vm4988, %v4984, 1326507024
        %v4999 = vsel %vm4987, %v4981, %v4998
        %v5000 = vsel %vm4986, %v4997, %v4999
        %v5001 = vshll.u32 %v4961, 8
        %v5002 = vmul.u32.u64.compose %v5001, %v5000
        %v5003 = vextract.low.u32 %v5002
        %v5004 = vextract.high.u32 %v5002
        %v5005 = vmul.u32.u64.compose %v5001, %v4996
        %v5006 = vextract.low.u32 %v5005
        %v5007 = vextract.high.u32 %v5005
        %v5008 = vmul.u32 %v5001, %v4992
        %v5009 = vadd.s32 %v5004, %v5006
        %vm5010 = vc.u32 %v5004, %v5006
        %v5011 = vadd.s32 %v5007, 1
        %v5012 = vsel %vm5010, %v5011, %v5007
        %v5013 = vadd.s32 %v5008, %v5012
        %v5014 = vadd.s32 %v5013, 536870912
        %v5015 = vshrl.u32 %v5014, 30
        %v5016 = vshll.u32 %v5015, 30
        %v5017 = vsub.s32 %v5013, %v5016
        %vm5018 = vcmp.lt.s32.totalorder %v5017, 0
        %v5019 = vsub.s32 0, %v5017
        %v5020 = vsel %vm5018, %v5019, %v5017
        %v5021 = vclz %v5020
        %v5022 = vsub.s32 %v5021, 2
        %vm5023 = vcmp.gt.s32.totalorder 0, %v5022
        %v5024 = vsel %vm5023, 0, %v5022
        %v5025 = vsub.s32 32, %v5024
        %v5026 = vshll.u32 %v5017, %v5024
        %v5027 = vshrl.u32 %v5009, %v5025
        %v5028 = vor.u32 %v5026, %v5027
        %v5029 = vsub.s32 4294967266, %v5024
        %v5030 = vadd.s32 %v5029, 127
        %v5031 = vshll.u32 %v5030, 23
        %v5032 = vor.u32 4788187, %v5031
        %v5033 = vand.u32 2147483647, %v5032
        %v5035 = vcvt.s32.f32 %v5028
        %v5036 = vmul.f32 %v5035, %v5033
        %v5037 = vxor.u32 %v5036, 2147483648
        %v5038 = vsel %vm4955, %v5037, %v5036
        %v5039 = vsub.s32 4, %v5015
        %v5040 = vsel %vm4955, %v5039, %v5015
        %v5041 = vsel %vm4954, %v389, %v5038
        %v5042 = vsel %vm4954, 0, %v5040
        %v5043 = vcosq.f32.pop %v5041
        %v5044 = vsinq.f32.pop %v5041
        %vm5045 = vweird.f32 %v389
        %v5046 = vadd.s32 %v5042, 3
        %v5047 = vand.u32 %v5046, 3
        %vm5048 = vcmp.lt.s32.totalorder %v5047, 2
        %vm5049 = vcmp.eq.s32.totalorder %v5047, 0
        %v5050 = vxor.u32 %v5044, 2147483648
        %v5051 = vsel %vm5049, %v5043, %v5050
        %vm5052 = vcmp.eq.s32.totalorder %v5047, 2
        %v5053 = vxor.u32 %v5043, 2147483648
        %v5054 = vsel %vm5052, %v5053, %v5044
        %v5055 = vsel %vm5048, %v5051, %v5054
        %v5056 = vsel %vm5045, nan, %v5055
        %v5057 = vand.u32 2147483647, %v390
        %vm5058 = vcmp.le.f32.partialorder %v5057, 0.7853982
        %vm5059 = vcmp.lt.s32.totalorder %v390, 0
        %v5060 = vand.u32 %v390, 2139095040
        %v5061 = vshrl.u32 %v5060, 23
        %v5062 = vsub.s32 %v5061, 127
        %v5063 = vand.u32 2147483647, %v390
        %v5064 = vand.u32 %v5063, 8388607
        %v5065 = vor.u32 %v5064, 8388608
        %v5066 = vsub.s32 0, %v5065
        %v5067 = vadd.s32 %v5062, 1
        %vm5068 = vcmp.gt.s32.totalorder %v5067, 0
        %v5069 = vsel %vm5068, %v5067, 0
        %v5070 = vshrl.u32 %v5069, 5
        %v5071 = vand.u32 %v5069, 31
        %v5072 = vsub.s32 32, %v5071
        %v5073 = vshrl.u32 683565275, %v5072
        %v5074 = vshll.u32 683565275, %v5071
        %v5075 = vshrl.u32 2475754826, %v5072
        %v5076 = vor.u32 %v5074, %v5075
        %v5077 = vshll.u32 2475754826, %v5071
        %v5078 = vshrl.u32 2131351028, %v5072
        %v5079 = vor.u32 %v5077, %v5078
        %v5080 = vshll.u32 2131351028, %v5071
        %v5081 = vshrl.u32 2102212464, %v5072
        %v5082 = vor.u32 %v5080, %v5081
        %v5083 = vshll.u32 2102212464, %v5071
        %v5084 = vshrl.u32 920167782, %v5072
        %v5085 = vor.u32 %v5083, %v5084
        %v5086 = vshll.u32 920167782, %v5071
        %v5087 = vshrl.u32 1326507024, %v5072
        %v5088 = vor.u32 %v5086, %v5087
        %vm5089 = vcmp.lt.s32.totalorder %v5070, 1
        %vm5090 = vcmp.lt.s32.totalorder %v5070, 2
        %vm5091 = vcmp.lt.s32.totalorder %v5070, 3
        %vm5092 = vcmp.lt.s32.totalorder %v5070, 4
        %v5093 = vsel %vm5089, %v5073, %v5076
        %v5094 = vsel %vm5092, %v5082, 2102212464
        %v5095 = vsel %vm5091, %v5079, %v5094
        %v5096 = vsel %vm5090, %v5093, %v5095
        %v5097 = vsel %vm5089, %v5076, %v5079
        %v5098 = vsel %vm5092, %v5085, 920167782
        %v5099 = vsel %vm5091, %v5082, %v5098
        %v5100 = vsel %vm5090, %v5097, %v5099
        %v5101 = vsel %vm5089, %v5079, %v5082
        %v5102 = vsel %vm5092, %v5088, 1326507024
        %v5103 = vsel %vm5091, %v5085, %v5102
        %v5104 = vsel %vm5090, %v5101, %v5103
        %v5105 = vshll.u32 %v5065, 8
        %v5106 = vmul.u32.u64.compose %v5105, %v5104
        %v5107 = vextract.low.u32 %v5106
        %v5108 = vextract.high.u32 %v5106
        %v5109 = vmul.u32.u64.compose %v5105, %v5100
        %v5110 = vextract.low.u32 %v5109
        %v5111 = vextract.high.u32 %v5109
        %v5112 = vmul.u32 %v5105, %v5096
        %v5113 = vadd.s32 %v5108, %v5110
        %vm5114 = vc.u32 %v5108, %v5110
        %v5115 = vadd.s32 %v5111, 1
        %v5116 = vsel %vm5114, %v5115, %v5111
        %v5117 = vadd.s32 %v5112, %v5116
        %v5118 = vadd.s32 %v5117, 536870912
        %v5119 = vshrl.u32 %v5118, 30
        %v5120 = vshll.u32 %v5119, 30
        %v5121 = vsub.s32 %v5117, %v5120
        %vm5122 = vcmp.lt.s32.totalorder %v5121, 0
        %v5123 = vsub.s32 0, %v5121
        %v5124 = vsel %vm5122, %v5123, %v5121
        %v5125 = vclz %v5124
        %v5126 = vsub.s32 %v5125, 2
        %vm5127 = vcmp.gt.s32.totalorder 0, %v5126
        %v5128 = vsel %vm5127, 0, %v5126
        %v5129 = vsub.s32 32, %v5128
        %v5130 = vshll.u32 %v5121, %v5128
        %v5131 = vshrl.u32 %v5113, %v5129
        %v5132 = vor.u32 %v5130, %v5131
        %v5133 = vsub.s32 4294967266, %v5128
        %v5134 = vadd.s32 %v5133, 127
        %v5135 = vshll.u32 %v5134, 23
        %v5136 = vor.u32 4788187, %v5135
        %v5137 = vand.u32 2147483647, %v5136
        %v5139 = vcvt.s32.f32 %v5132
        %v5140 = vmul.f32 %v5139, %v5137
        %v5141 = vxor.u32 %v5140, 2147483648
        %v5142 = vsel %vm5059, %v5141, %v5140
        %v5143 = vsub.s32 4, %v5119
        %v5144 = vsel %vm5059, %v5143, %v5119
        %v5145 = vsel %vm5058, %v390, %v5142
        %v5146 = vsel %vm5058, 0, %v5144
        %v5147 = vcosq.f32.pop %v5145
        %v5148 = vsinq.f32.pop %v5145
        %vm5149 = vweird.f32 %v390
        %v5150 = vadd.s32 %v5146, 3
        %v5151 = vand.u32 %v5150, 3
        %vm5152 = vcmp.lt.s32.totalorder %v5151, 2
        %vm5153 = vcmp.eq.s32.totalorder %v5151, 0
        %v5154 = vxor.u32 %v5148, 2147483648
        %v5155 = vsel %vm5153, %v5147, %v5154
        %vm5156 = vcmp.eq.s32.totalorder %v5151, 2
        %v5157 = vxor.u32 %v5147, 2147483648
        %v5158 = vsel %vm5156, %v5157, %v5148
        %v5159 = vsel %vm5152, %v5155, %v5158
        %v5160 = vsel %vm5149, nan, %v5159
        %v5161 = vand.u32 2147483647, %v391
        %vm5162 = vcmp.le.f32.partialorder %v5161, 0.7853982
        %vm5163 = vcmp.lt.s32.totalorder %v391, 0
        %v5164 = vand.u32 %v391, 2139095040
        %v5165 = vshrl.u32 %v5164, 23
        %v5166 = vsub.s32 %v5165, 127
        %v5167 = vand.u32 2147483647, %v391
        %v5168 = vand.u32 %v5167, 8388607
        %v5169 = vor.u32 %v5168, 8388608
        %v5170 = vsub.s32 0, %v5169
        %v5171 = vadd.s32 %v5166, 1
        %vm5172 = vcmp.gt.s32.totalorder %v5171, 0
        %v5173 = vsel %vm5172, %v5171, 0
        %v5174 = vshrl.u32 %v5173, 5
        %v5175 = vand.u32 %v5173, 31
        %v5176 = vsub.s32 32, %v5175
        %v5177 = vshrl.u32 683565275, %v5176
        %v5178 = vshll.u32 683565275, %v5175
        %v5179 = vshrl.u32 2475754826, %v5176
        %v5180 = vor.u32 %v5178, %v5179
        %v5181 = vshll.u32 2475754826, %v5175
        %v5182 = vshrl.u32 2131351028, %v5176
        %v5183 = vor.u32 %v5181, %v5182
        %v5184 = vshll.u32 2131351028, %v5175
        %v5185 = vshrl.u32 2102212464, %v5176
        %v5186 = vor.u32 %v5184, %v5185
        %v5187 = vshll.u32 2102212464, %v5175
        %v5188 = vshrl.u32 920167782, %v5176
        %v5189 = vor.u32 %v5187, %v5188
        %v5190 = vshll.u32 920167782, %v5175
        %v5191 = vshrl.u32 1326507024, %v5176
        %v5192 = vor.u32 %v5190, %v5191
        %vm5193 = vcmp.lt.s32.totalorder %v5174, 1
        %vm5194 = vcmp.lt.s32.totalorder %v5174, 2
        %vm5195 = vcmp.lt.s32.totalorder %v5174, 3
        %vm5196 = vcmp.lt.s32.totalorder %v5174, 4
        %v5197 = vsel %vm5193, %v5177, %v5180
        %v5198 = vsel %vm5196, %v5186, 2102212464
        %v5199 = vsel %vm5195, %v5183, %v5198
        %v5200 = vsel %vm5194, %v5197, %v5199
        %v5201 = vsel %vm5193, %v5180, %v5183
        %v5202 = vsel %vm5196, %v5189, 920167782
        %v5203 = vsel %vm5195, %v5186, %v5202
        %v5204 = vsel %vm5194, %v5201, %v5203
        %v5205 = vsel %vm5193, %v5183, %v5186
        %v5206 = vsel %vm5196, %v5192, 1326507024
        %v5207 = vsel %vm5195, %v5189, %v5206
        %v5208 = vsel %vm5194, %v5205, %v5207
        %v5209 = vshll.u32 %v5169, 8
        %v5210 = vmul.u32.u64.compose %v5209, %v5208
        %v5211 = vextract.low.u32 %v5210
        %v5212 = vextract.high.u32 %v5210
        %v5213 = vmul.u32.u64.compose %v5209, %v5204
        %v5214 = vextract.low.u32 %v5213
        %v5215 = vextract.high.u32 %v5213
        %v5216 = vmul.u32 %v5209, %v5200
        %v5217 = vadd.s32 %v5212, %v5214
        %vm5218 = vc.u32 %v5212, %v5214
        %v5219 = vadd.s32 %v5215, 1
        %v5220 = vsel %vm5218, %v5219, %v5215
        %v5221 = vadd.s32 %v5216, %v5220
        %v5222 = vadd.s32 %v5221, 536870912
        %v5223 = vshrl.u32 %v5222, 30
        %v5224 = vshll.u32 %v5223, 30
        %v5225 = vsub.s32 %v5221, %v5224
        %vm5226 = vcmp.lt.s32.totalorder %v5225, 0
        %v5227 = vsub.s32 0, %v5225
        %v5228 = vsel %vm5226, %v5227, %v5225
        %v5229 = vclz %v5228
        %v5230 = vsub.s32 %v5229, 2
        %vm5231 = vcmp.gt.s32.totalorder 0, %v5230
        %v5232 = vsel %vm5231, 0, %v5230
        %v5233 = vsub.s32 32, %v5232
        %v5234 = vshll.u32 %v5225, %v5232
        %v5235 = vshrl.u32 %v5217, %v5233
        %v5236 = vor.u32 %v5234, %v5235
        %v5237 = vsub.s32 4294967266, %v5232
        %v5238 = vadd.s32 %v5237, 127
        %v5239 = vshll.u32 %v5238, 23
        %v5240 = vor.u32 4788187, %v5239
        %v5241 = vand.u32 2147483647, %v5240
        %v5243 = vcvt.s32.f32 %v5236
        %v5244 = vmul.f32 %v5243, %v5241
        %v5245 = vxor.u32 %v5244, 2147483648
        %v5246 = vsel %vm5163, %v5245, %v5244
        %v5247 = vsub.s32 4, %v5223
        %v5248 = vsel %vm5163, %v5247, %v5223
        %v5249 = vsel %vm5162, %v391, %v5246
        %v5250 = vsel %vm5162, 0, %v5248
        %v5251 = vcosq.f32.pop %v5249
        %v5252 = vsinq.f32.pop %v5249
        %vm5253 = vweird.f32 %v391
        %v5254 = vadd.s32 %v5250, 3
        %v5255 = vand.u32 %v5254, 3
        %vm5256 = vcmp.lt.s32.totalorder %v5255, 2
        %vm5257 = vcmp.eq.s32.totalorder %v5255, 0
        %v5258 = vxor.u32 %v5252, 2147483648
        %v5259 = vsel %vm5257, %v5251, %v5258
        %vm5260 = vcmp.eq.s32.totalorder %v5255, 2
        %v5261 = vxor.u32 %v5251, 2147483648
        %v5262 = vsel %vm5260, %v5261, %v5252
        %v5263 = vsel %vm5256, %v5259, %v5262
        %v5264 = vsel %vm5253, nan, %v5263
        %v5265 = vand.u32 2147483647, %v392
        %vm5266 = vcmp.le.f32.partialorder %v5265, 0.7853982
        %vm5267 = vcmp.lt.s32.totalorder %v392, 0
        %v5268 = vand.u32 %v392, 2139095040
        %v5269 = vshrl.u32 %v5268, 23
        %v5270 = vsub.s32 %v5269, 127
        %v5271 = vand.u32 2147483647, %v392
        %v5272 = vand.u32 %v5271, 8388607
        %v5273 = vor.u32 %v5272, 8388608
        %v5274 = vsub.s32 0, %v5273
        %v5275 = vadd.s32 %v5270, 1
        %vm5276 = vcmp.gt.s32.totalorder %v5275, 0
        %v5277 = vsel %vm5276, %v5275, 0
        %v5278 = vshrl.u32 %v5277, 5
        %v5279 = vand.u32 %v5277, 31
        %v5280 = vsub.s32 32, %v5279
        %v5281 = vshrl.u32 683565275, %v5280
        %v5282 = vshll.u32 683565275, %v5279
        %v5283 = vshrl.u32 2475754826, %v5280
        %v5284 = vor.u32 %v5282, %v5283
        %v5285 = vshll.u32 2475754826, %v5279
        %v5286 = vshrl.u32 2131351028, %v5280
        %v5287 = vor.u32 %v5285, %v5286
        %v5288 = vshll.u32 2131351028, %v5279
        %v5289 = vshrl.u32 2102212464, %v5280
        %v5290 = vor.u32 %v5288, %v5289
        %v5291 = vshll.u32 2102212464, %v5279
        %v5292 = vshrl.u32 920167782, %v5280
        %v5293 = vor.u32 %v5291, %v5292
        %v5294 = vshll.u32 920167782, %v5279
        %v5295 = vshrl.u32 1326507024, %v5280
        %v5296 = vor.u32 %v5294, %v5295
        %vm5297 = vcmp.lt.s32.totalorder %v5278, 1
        %vm5298 = vcmp.lt.s32.totalorder %v5278, 2
        %vm5299 = vcmp.lt.s32.totalorder %v5278, 3
        %vm5300 = vcmp.lt.s32.totalorder %v5278, 4
        %v5301 = vsel %vm5297, %v5281, %v5284
        %v5302 = vsel %vm5300, %v5290, 2102212464
        %v5303 = vsel %vm5299, %v5287, %v5302
        %v5304 = vsel %vm5298, %v5301, %v5303
        %v5305 = vsel %vm5297, %v5284, %v5287
        %v5306 = vsel %vm5300, %v5293, 920167782
        %v5307 = vsel %vm5299, %v5290, %v5306
        %v5308 = vsel %vm5298, %v5305, %v5307
        %v5309 = vsel %vm5297, %v5287, %v5290
        %v5310 = vsel %vm5300, %v5296, 1326507024
        %v5311 = vsel %vm5299, %v5293, %v5310
        %v5312 = vsel %vm5298, %v5309, %v5311
        %v5313 = vshll.u32 %v5273, 8
        %v5314 = vmul.u32.u64.compose %v5313, %v5312
        %v5315 = vextract.low.u32 %v5314
        %v5316 = vextract.high.u32 %v5314
        %v5317 = vmul.u32.u64.compose %v5313, %v5308
        %v5318 = vextract.low.u32 %v5317
        %v5319 = vextract.high.u32 %v5317
        %v5320 = vmul.u32 %v5313, %v5304
        %v5321 = vadd.s32 %v5316, %v5318
        %vm5322 = vc.u32 %v5316, %v5318
        %v5323 = vadd.s32 %v5319, 1
        %v5324 = vsel %vm5322, %v5323, %v5319
        %v5325 = vadd.s32 %v5320, %v5324
        %v5326 = vadd.s32 %v5325, 536870912
        %v5327 = vshrl.u32 %v5326, 30
        %v5328 = vshll.u32 %v5327, 30
        %v5329 = vsub.s32 %v5325, %v5328
        %vm5330 = vcmp.lt.s32.totalorder %v5329, 0
        %v5331 = vsub.s32 0, %v5329
        %v5332 = vsel %vm5330, %v5331, %v5329
        %v5333 = vclz %v5332
        %v5334 = vsub.s32 %v5333, 2
        %vm5335 = vcmp.gt.s32.totalorder 0, %v5334
        %v5336 = vsel %vm5335, 0, %v5334
        %v5337 = vsub.s32 32, %v5336
        %v5338 = vshll.u32 %v5329, %v5336
        %v5339 = vshrl.u32 %v5321, %v5337
        %v5340 = vor.u32 %v5338, %v5339
        %v5341 = vsub.s32 4294967266, %v5336
        %v5342 = vadd.s32 %v5341, 127
        %v5343 = vshll.u32 %v5342, 23
        %v5344 = vor.u32 4788187, %v5343
        %v5345 = vand.u32 2147483647, %v5344
        %v5347 = vcvt.s32.f32 %v5340
        %v5348 = vmul.f32 %v5347, %v5345
        %v5349 = vxor.u32 %v5348, 2147483648
        %v5350 = vsel %vm5267, %v5349, %v5348
        %v5351 = vsub.s32 4, %v5327
        %v5352 = vsel %vm5267, %v5351, %v5327
        %v5353 = vsel %vm5266, %v392, %v5350
        %v5354 = vsel %vm5266, 0, %v5352
        %v5355 = vcosq.f32.pop %v5353
        %v5356 = vsinq.f32.pop %v5353
        %vm5357 = vweird.f32 %v392
        %v5358 = vadd.s32 %v5354, 3
        %v5359 = vand.u32 %v5358, 3
        %vm5360 = vcmp.lt.s32.totalorder %v5359, 2
        %vm5361 = vcmp.eq.s32.totalorder %v5359, 0
        %v5362 = vxor.u32 %v5356, 2147483648
        %v5363 = vsel %vm5361, %v5355, %v5362
        %vm5364 = vcmp.eq.s32.totalorder %v5359, 2
        %v5365 = vxor.u32 %v5355, 2147483648
        %v5366 = vsel %vm5364, %v5365, %v5356
        %v5367 = vsel %vm5360, %v5363, %v5366
        %v5368 = vsel %vm5357, nan, %v5367
        %v5369 = vand.u32 2147483647, %v393
        %vm5370 = vcmp.le.f32.partialorder %v5369, 0.7853982
        %vm5371 = vcmp.lt.s32.totalorder %v393, 0
        %v5372 = vand.u32 %v393, 2139095040
        %v5373 = vshrl.u32 %v5372, 23
        %v5374 = vsub.s32 %v5373, 127
        %v5375 = vand.u32 2147483647, %v393
        %v5376 = vand.u32 %v5375, 8388607
        %v5377 = vor.u32 %v5376, 8388608
        %v5378 = vsub.s32 0, %v5377
        %v5379 = vadd.s32 %v5374, 1
        %vm5380 = vcmp.gt.s32.totalorder %v5379, 0
        %v5381 = vsel %vm5380, %v5379, 0
        %v5382 = vshrl.u32 %v5381, 5
        %v5383 = vand.u32 %v5381, 31
        %v5384 = vsub.s32 32, %v5383
        %v5385 = vshrl.u32 683565275, %v5384
        %v5386 = vshll.u32 683565275, %v5383
        %v5387 = vshrl.u32 2475754826, %v5384
        %v5388 = vor.u32 %v5386, %v5387
        %v5389 = vshll.u32 2475754826, %v5383
        %v5390 = vshrl.u32 2131351028, %v5384
        %v5391 = vor.u32 %v5389, %v5390
        %v5392 = vshll.u32 2131351028, %v5383
        %v5393 = vshrl.u32 2102212464, %v5384
        %v5394 = vor.u32 %v5392, %v5393
        %v5395 = vshll.u32 2102212464, %v5383
        %v5396 = vshrl.u32 920167782, %v5384
        %v5397 = vor.u32 %v5395, %v5396
        %v5398 = vshll.u32 920167782, %v5383
        %v5399 = vshrl.u32 1326507024, %v5384
        %v5400 = vor.u32 %v5398, %v5399
        %vm5401 = vcmp.lt.s32.totalorder %v5382, 1
        %vm5402 = vcmp.lt.s32.totalorder %v5382, 2
        %vm5403 = vcmp.lt.s32.totalorder %v5382, 3
        %vm5404 = vcmp.lt.s32.totalorder %v5382, 4
        %v5405 = vsel %vm5401, %v5385, %v5388
        %v5406 = vsel %vm5404, %v5394, 2102212464
        %v5407 = vsel %vm5403, %v5391, %v5406
        %v5408 = vsel %vm5402, %v5405, %v5407
        %v5409 = vsel %vm5401, %v5388, %v5391
        %v5410 = vsel %vm5404, %v5397, 920167782
        %v5411 = vsel %vm5403, %v5394, %v5410
        %v5412 = vsel %vm5402, %v5409, %v5411
        %v5413 = vsel %vm5401, %v5391, %v5394
        %v5414 = vsel %vm5404, %v5400, 1326507024
        %v5415 = vsel %vm5403, %v5397, %v5414
        %v5416 = vsel %vm5402, %v5413, %v5415
        %v5417 = vshll.u32 %v5377, 8
        %v5418 = vmul.u32.u64.compose %v5417, %v5416
        %v5419 = vextract.low.u32 %v5418
        %v5420 = vextract.high.u32 %v5418
        %v5421 = vmul.u32.u64.compose %v5417, %v5412
        %v5422 = vextract.low.u32 %v5421
        %v5423 = vextract.high.u32 %v5421
        %v5424 = vmul.u32 %v5417, %v5408
        %v5425 = vadd.s32 %v5420, %v5422
        %vm5426 = vc.u32 %v5420, %v5422
        %v5427 = vadd.s32 %v5423, 1
        %v5428 = vsel %vm5426, %v5427, %v5423
        %v5429 = vadd.s32 %v5424, %v5428
        %v5430 = vadd.s32 %v5429, 536870912
        %v5431 = vshrl.u32 %v5430, 30
        %v5432 = vshll.u32 %v5431, 30
        %v5433 = vsub.s32 %v5429, %v5432
        %vm5434 = vcmp.lt.s32.totalorder %v5433, 0
        %v5435 = vsub.s32 0, %v5433
        %v5436 = vsel %vm5434, %v5435, %v5433
        %v5437 = vclz %v5436
        %v5438 = vsub.s32 %v5437, 2
        %vm5439 = vcmp.gt.s32.totalorder 0, %v5438
        %v5440 = vsel %vm5439, 0, %v5438
        %v5441 = vsub.s32 32, %v5440
        %v5442 = vshll.u32 %v5433, %v5440
        %v5443 = vshrl.u32 %v5425, %v5441
        %v5444 = vor.u32 %v5442, %v5443
        %v5445 = vsub.s32 4294967266, %v5440
        %v5446 = vadd.s32 %v5445, 127
        %v5447 = vshll.u32 %v5446, 23
        %v5448 = vor.u32 4788187, %v5447
        %v5449 = vand.u32 2147483647, %v5448
        %v5451 = vcvt.s32.f32 %v5444
        %v5452 = vmul.f32 %v5451, %v5449
        %v5453 = vxor.u32 %v5452, 2147483648
        %v5454 = vsel %vm5371, %v5453, %v5452
        %v5455 = vsub.s32 4, %v5431
        %v5456 = vsel %vm5371, %v5455, %v5431
        %v5457 = vsel %vm5370, %v393, %v5454
        %v5458 = vsel %vm5370, 0, %v5456
        %v5459 = vcosq.f32.pop %v5457
        %v5460 = vsinq.f32.pop %v5457
        %vm5461 = vweird.f32 %v393
        %v5462 = vadd.s32 %v5458, 3
        %v5463 = vand.u32 %v5462, 3
        %vm5464 = vcmp.lt.s32.totalorder %v5463, 2
        %vm5465 = vcmp.eq.s32.totalorder %v5463, 0
        %v5466 = vxor.u32 %v5460, 2147483648
        %v5467 = vsel %vm5465, %v5459, %v5466
        %vm5468 = vcmp.eq.s32.totalorder %v5463, 2
        %v5469 = vxor.u32 %v5459, 2147483648
        %v5470 = vsel %vm5468, %v5469, %v5460
        %v5471 = vsel %vm5464, %v5467, %v5470
        %v5472 = vsel %vm5461, nan, %v5471
        %v5473 = vand.u32 2147483647, %v394
        %vm5474 = vcmp.le.f32.partialorder %v5473, 0.7853982
        %vm5475 = vcmp.lt.s32.totalorder %v394, 0
        %v5476 = vand.u32 %v394, 2139095040
        %v5477 = vshrl.u32 %v5476, 23
        %v5478 = vsub.s32 %v5477, 127
        %v5479 = vand.u32 2147483647, %v394
        %v5480 = vand.u32 %v5479, 8388607
        %v5481 = vor.u32 %v5480, 8388608
        %v5482 = vsub.s32 0, %v5481
        %v5483 = vadd.s32 %v5478, 1
        %vm5484 = vcmp.gt.s32.totalorder %v5483, 0
        %v5485 = vsel %vm5484, %v5483, 0
        %v5486 = vshrl.u32 %v5485, 5
        %v5487 = vand.u32 %v5485, 31
        %v5488 = vsub.s32 32, %v5487
        %v5489 = vshrl.u32 683565275, %v5488
        %v5490 = vshll.u32 683565275, %v5487
        %v5491 = vshrl.u32 2475754826, %v5488
        %v5492 = vor.u32 %v5490, %v5491
        %v5493 = vshll.u32 2475754826, %v5487
        %v5494 = vshrl.u32 2131351028, %v5488
        %v5495 = vor.u32 %v5493, %v5494
        %v5496 = vshll.u32 2131351028, %v5487
        %v5497 = vshrl.u32 2102212464, %v5488
        %v5498 = vor.u32 %v5496, %v5497
        %v5499 = vshll.u32 2102212464, %v5487
        %v5500 = vshrl.u32 920167782, %v5488
        %v5501 = vor.u32 %v5499, %v5500
        %v5502 = vshll.u32 920167782, %v5487
        %v5503 = vshrl.u32 1326507024, %v5488
        %v5504 = vor.u32 %v5502, %v5503
        %vm5505 = vcmp.lt.s32.totalorder %v5486, 1
        %vm5506 = vcmp.lt.s32.totalorder %v5486, 2
        %vm5507 = vcmp.lt.s32.totalorder %v5486, 3
        %vm5508 = vcmp.lt.s32.totalorder %v5486, 4
        %v5509 = vsel %vm5505, %v5489, %v5492
        %v5510 = vsel %vm5508, %v5498, 2102212464
        %v5511 = vsel %vm5507, %v5495, %v5510
        %v5512 = vsel %vm5506, %v5509, %v5511
        %v5513 = vsel %vm5505, %v5492, %v5495
        %v5514 = vsel %vm5508, %v5501, 920167782
        %v5515 = vsel %vm5507, %v5498, %v5514
        %v5516 = vsel %vm5506, %v5513, %v5515
        %v5517 = vsel %vm5505, %v5495, %v5498
        %v5518 = vsel %vm5508, %v5504, 1326507024
        %v5519 = vsel %vm5507, %v5501, %v5518
        %v5520 = vsel %vm5506, %v5517, %v5519
        %v5521 = vshll.u32 %v5481, 8
        %v5522 = vmul.u32.u64.compose %v5521, %v5520
        %v5523 = vextract.low.u32 %v5522
        %v5524 = vextract.high.u32 %v5522
        %v5525 = vmul.u32.u64.compose %v5521, %v5516
        %v5526 = vextract.low.u32 %v5525
        %v5527 = vextract.high.u32 %v5525
        %v5528 = vmul.u32 %v5521, %v5512
        %v5529 = vadd.s32 %v5524, %v5526
        %vm5530 = vc.u32 %v5524, %v5526
        %v5531 = vadd.s32 %v5527, 1
        %v5532 = vsel %vm5530, %v5531, %v5527
        %v5533 = vadd.s32 %v5528, %v5532
        %v5534 = vadd.s32 %v5533, 536870912
        %v5535 = vshrl.u32 %v5534, 30
        %v5536 = vshll.u32 %v5535, 30
        %v5537 = vsub.s32 %v5533, %v5536
        %vm5538 = vcmp.lt.s32.totalorder %v5537, 0
        %v5539 = vsub.s32 0, %v5537
        %v5540 = vsel %vm5538, %v5539, %v5537
        %v5541 = vclz %v5540
        %v5542 = vsub.s32 %v5541, 2
        %vm5543 = vcmp.gt.s32.totalorder 0, %v5542
        %v5544 = vsel %vm5543, 0, %v5542
        %v5545 = vsub.s32 32, %v5544
        %v5546 = vshll.u32 %v5537, %v5544
        %v5547 = vshrl.u32 %v5529, %v5545
        %v5548 = vor.u32 %v5546, %v5547
        %v5549 = vsub.s32 4294967266, %v5544
        %v5550 = vadd.s32 %v5549, 127
        %v5551 = vshll.u32 %v5550, 23
        %v5552 = vor.u32 4788187, %v5551
        %v5553 = vand.u32 2147483647, %v5552
        %v5555 = vcvt.s32.f32 %v5548
        %v5556 = vmul.f32 %v5555, %v5553
        %v5557 = vxor.u32 %v5556, 2147483648
        %v5558 = vsel %vm5475, %v5557, %v5556
        %v5559 = vsub.s32 4, %v5535
        %v5560 = vsel %vm5475, %v5559, %v5535
        %v5561 = vsel %vm5474, %v394, %v5558
        %v5562 = vsel %vm5474, 0, %v5560
        %v5563 = vcosq.f32.pop %v5561
        %v5564 = vsinq.f32.pop %v5561
        %vm5565 = vweird.f32 %v394
        %v5566 = vadd.s32 %v5562, 3
        %v5567 = vand.u32 %v5566, 3
        %vm5568 = vcmp.lt.s32.totalorder %v5567, 2
        %vm5569 = vcmp.eq.s32.totalorder %v5567, 0
        %v5570 = vxor.u32 %v5564, 2147483648
        %v5571 = vsel %vm5569, %v5563, %v5570
        %vm5572 = vcmp.eq.s32.totalorder %v5567, 2
        %v5573 = vxor.u32 %v5563, 2147483648
        %v5574 = vsel %vm5572, %v5573, %v5564
        %v5575 = vsel %vm5568, %v5571, %v5574
        %v5576 = vsel %vm5565, nan, %v5575
        %v5577 = vand.u32 2147483647, %v395
        %vm5578 = vcmp.le.f32.partialorder %v5577, 0.7853982
        %vm5579 = vcmp.lt.s32.totalorder %v395, 0
        %v5580 = vand.u32 %v395, 2139095040
        %v5581 = vshrl.u32 %v5580, 23
        %v5582 = vsub.s32 %v5581, 127
        %v5583 = vand.u32 2147483647, %v395
        %v5584 = vand.u32 %v5583, 8388607
        %v5585 = vor.u32 %v5584, 8388608
        %v5586 = vsub.s32 0, %v5585
        %v5587 = vadd.s32 %v5582, 1
        %vm5588 = vcmp.gt.s32.totalorder %v5587, 0
        %v5589 = vsel %vm5588, %v5587, 0
        %v5590 = vshrl.u32 %v5589, 5
        %v5591 = vand.u32 %v5589, 31
        %v5592 = vsub.s32 32, %v5591
        %v5593 = vshrl.u32 683565275, %v5592
        %v5594 = vshll.u32 683565275, %v5591
        %v5595 = vshrl.u32 2475754826, %v5592
        %v5596 = vor.u32 %v5594, %v5595
        %v5597 = vshll.u32 2475754826, %v5591
        %v5598 = vshrl.u32 2131351028, %v5592
        %v5599 = vor.u32 %v5597, %v5598
        %v5600 = vshll.u32 2131351028, %v5591
        %v5601 = vshrl.u32 2102212464, %v5592
        %v5602 = vor.u32 %v5600, %v5601
        %v5603 = vshll.u32 2102212464, %v5591
        %v5604 = vshrl.u32 920167782, %v5592
        %v5605 = vor.u32 %v5603, %v5604
        %v5606 = vshll.u32 920167782, %v5591
        %v5607 = vshrl.u32 1326507024, %v5592
        %v5608 = vor.u32 %v5606, %v5607
        %vm5609 = vcmp.lt.s32.totalorder %v5590, 1
        %vm5610 = vcmp.lt.s32.totalorder %v5590, 2
        %vm5611 = vcmp.lt.s32.totalorder %v5590, 3
        %vm5612 = vcmp.lt.s32.totalorder %v5590, 4
        %v5613 = vsel %vm5609, %v5593, %v5596
        %v5614 = vsel %vm5612, %v5602, 2102212464
        %v5615 = vsel %vm5611, %v5599, %v5614
        %v5616 = vsel %vm5610, %v5613, %v5615
        %v5617 = vsel %vm5609, %v5596, %v5599
        %v5618 = vsel %vm5612, %v5605, 920167782
        %v5619 = vsel %vm5611, %v5602, %v5618
        %v5620 = vsel %vm5610, %v5617, %v5619
        %v5621 = vsel %vm5609, %v5599, %v5602
        %v5622 = vsel %vm5612, %v5608, 1326507024
        %v5623 = vsel %vm5611, %v5605, %v5622
        %v5624 = vsel %vm5610, %v5621, %v5623
        %v5625 = vshll.u32 %v5585, 8
        %v5626 = vmul.u32.u64.compose %v5625, %v5624
        %v5627 = vextract.low.u32 %v5626
        %v5628 = vextract.high.u32 %v5626
        %v5629 = vmul.u32.u64.compose %v5625, %v5620
        %v5630 = vextract.low.u32 %v5629
        %v5631 = vextract.high.u32 %v5629
        %v5632 = vmul.u32 %v5625, %v5616
        %v5633 = vadd.s32 %v5628, %v5630
        %vm5634 = vc.u32 %v5628, %v5630
        %v5635 = vadd.s32 %v5631, 1
        %v5636 = vsel %vm5634, %v5635, %v5631
        %v5637 = vadd.s32 %v5632, %v5636
        %v5638 = vadd.s32 %v5637, 536870912
        %v5639 = vshrl.u32 %v5638, 30
        %v5640 = vshll.u32 %v5639, 30
        %v5641 = vsub.s32 %v5637, %v5640
        %vm5642 = vcmp.lt.s32.totalorder %v5641, 0
        %v5643 = vsub.s32 0, %v5641
        %v5644 = vsel %vm5642, %v5643, %v5641
        %v5645 = vclz %v5644
        %v5646 = vsub.s32 %v5645, 2
        %vm5647 = vcmp.gt.s32.totalorder 0, %v5646
        %v5648 = vsel %vm5647, 0, %v5646
        %v5649 = vsub.s32 32, %v5648
        %v5650 = vshll.u32 %v5641, %v5648
        %v5651 = vshrl.u32 %v5633, %v5649
        %v5652 = vor.u32 %v5650, %v5651
        %v5653 = vsub.s32 4294967266, %v5648
        %v5654 = vadd.s32 %v5653, 127
        %v5655 = vshll.u32 %v5654, 23
        %v5656 = vor.u32 4788187, %v5655
        %v5657 = vand.u32 2147483647, %v5656
        %v5659 = vcvt.s32.f32 %v5652
        %v5660 = vmul.f32 %v5659, %v5657
        %v5661 = vxor.u32 %v5660, 2147483648
        %v5662 = vsel %vm5579, %v5661, %v5660
        %v5663 = vsub.s32 4, %v5639
        %v5664 = vsel %vm5579, %v5663, %v5639
        %v5665 = vsel %vm5578, %v395, %v5662
        %v5666 = vsel %vm5578, 0, %v5664
        %v5667 = vcosq.f32.pop %v5665
        %v5668 = vsinq.f32.pop %v5665
        %vm5669 = vweird.f32 %v395
        %v5670 = vadd.s32 %v5666, 3
        %v5671 = vand.u32 %v5670, 3
        %vm5672 = vcmp.lt.s32.totalorder %v5671, 2
        %vm5673 = vcmp.eq.s32.totalorder %v5671, 0
        %v5674 = vxor.u32 %v5668, 2147483648
        %v5675 = vsel %vm5673, %v5667, %v5674
        %vm5676 = vcmp.eq.s32.totalorder %v5671, 2
        %v5677 = vxor.u32 %v5667, 2147483648
        %v5678 = vsel %vm5676, %v5677, %v5668
        %v5679 = vsel %vm5672, %v5675, %v5678
        %v5680 = vsel %vm5669, nan, %v5679
        %v5681 = vand.u32 2147483647, %v396
        %vm5682 = vcmp.le.f32.partialorder %v5681, 0.7853982
        %vm5683 = vcmp.lt.s32.totalorder %v396, 0
        %v5684 = vand.u32 %v396, 2139095040
        %v5685 = vshrl.u32 %v5684, 23
        %v5686 = vsub.s32 %v5685, 127
        %v5687 = vand.u32 2147483647, %v396
        %v5688 = vand.u32 %v5687, 8388607
        %v5689 = vor.u32 %v5688, 8388608
        %v5690 = vsub.s32 0, %v5689
        %v5691 = vadd.s32 %v5686, 1
        %vm5692 = vcmp.gt.s32.totalorder %v5691, 0
        %v5693 = vsel %vm5692, %v5691, 0
        %v5694 = vshrl.u32 %v5693, 5
        %v5695 = vand.u32 %v5693, 31
        %v5696 = vsub.s32 32, %v5695
        %v5697 = vshrl.u32 683565275, %v5696
        %v5698 = vshll.u32 683565275, %v5695
        %v5699 = vshrl.u32 2475754826, %v5696
        %v5700 = vor.u32 %v5698, %v5699
        %v5701 = vshll.u32 2475754826, %v5695
        %v5702 = vshrl.u32 2131351028, %v5696
        %v5703 = vor.u32 %v5701, %v5702
        %v5704 = vshll.u32 2131351028, %v5695
        %v5705 = vshrl.u32 2102212464, %v5696
        %v5706 = vor.u32 %v5704, %v5705
        %v5707 = vshll.u32 2102212464, %v5695
        %v5708 = vshrl.u32 920167782, %v5696
        %v5709 = vor.u32 %v5707, %v5708
        %v5710 = vshll.u32 920167782, %v5695
        %v5711 = vshrl.u32 1326507024, %v5696
        %v5712 = vor.u32 %v5710, %v5711
        %vm5713 = vcmp.lt.s32.totalorder %v5694, 1
        %vm5714 = vcmp.lt.s32.totalorder %v5694, 2
        %vm5715 = vcmp.lt.s32.totalorder %v5694, 3
        %vm5716 = vcmp.lt.s32.totalorder %v5694, 4
        %v5717 = vsel %vm5713, %v5697, %v5700
        %v5718 = vsel %vm5716, %v5706, 2102212464
        %v5719 = vsel %vm5715, %v5703, %v5718
        %v5720 = vsel %vm5714, %v5717, %v5719
        %v5721 = vsel %vm5713, %v5700, %v5703
        %v5722 = vsel %vm5716, %v5709, 920167782
        %v5723 = vsel %vm5715, %v5706, %v5722
        %v5724 = vsel %vm5714, %v5721, %v5723
        %v5725 = vsel %vm5713, %v5703, %v5706
        %v5726 = vsel %vm5716, %v5712, 1326507024
        %v5727 = vsel %vm5715, %v5709, %v5726
        %v5728 = vsel %vm5714, %v5725, %v5727
        %v5729 = vshll.u32 %v5689, 8
        %v5730 = vmul.u32.u64.compose %v5729, %v5728
        %v5731 = vextract.low.u32 %v5730
        %v5732 = vextract.high.u32 %v5730
        %v5733 = vmul.u32.u64.compose %v5729, %v5724
        %v5734 = vextract.low.u32 %v5733
        %v5735 = vextract.high.u32 %v5733
        %v5736 = vmul.u32 %v5729, %v5720
        %v5737 = vadd.s32 %v5732, %v5734
        %vm5738 = vc.u32 %v5732, %v5734
        %v5739 = vadd.s32 %v5735, 1
        %v5740 = vsel %vm5738, %v5739, %v5735
        %v5741 = vadd.s32 %v5736, %v5740
        %v5742 = vadd.s32 %v5741, 536870912
        %v5743 = vshrl.u32 %v5742, 30
        %v5744 = vshll.u32 %v5743, 30
        %v5745 = vsub.s32 %v5741, %v5744
        %vm5746 = vcmp.lt.s32.totalorder %v5745, 0
        %v5747 = vsub.s32 0, %v5745
        %v5748 = vsel %vm5746, %v5747, %v5745
        %v5749 = vclz %v5748
        %v5750 = vsub.s32 %v5749, 2
        %vm5751 = vcmp.gt.s32.totalorder 0, %v5750
        %v5752 = vsel %vm5751, 0, %v5750
        %v5753 = vsub.s32 32, %v5752
        %v5754 = vshll.u32 %v5745, %v5752
        %v5755 = vshrl.u32 %v5737, %v5753
        %v5756 = vor.u32 %v5754, %v5755
        %v5757 = vsub.s32 4294967266, %v5752
        %v5758 = vadd.s32 %v5757, 127
        %v5759 = vshll.u32 %v5758, 23
        %v5760 = vor.u32 4788187, %v5759
        %v5761 = vand.u32 2147483647, %v5760
        %v5763 = vcvt.s32.f32 %v5756
        %v5764 = vmul.f32 %v5763, %v5761
        %v5765 = vxor.u32 %v5764, 2147483648
        %v5766 = vsel %vm5683, %v5765, %v5764
        %v5767 = vsub.s32 4, %v5743
        %v5768 = vsel %vm5683, %v5767, %v5743
        %v5769 = vsel %vm5682, %v396, %v5766
        %v5770 = vsel %vm5682, 0, %v5768
        %v5771 = vcosq.f32.pop %v5769
        %v5772 = vsinq.f32.pop %v5769
        %vm5773 = vweird.f32 %v396
        %v5774 = vadd.s32 %v5770, 3
        %v5775 = vand.u32 %v5774, 3
        %vm5776 = vcmp.lt.s32.totalorder %v5775, 2
        %vm5777 = vcmp.eq.s32.totalorder %v5775, 0
        %v5778 = vxor.u32 %v5772, 2147483648
        %v5779 = vsel %vm5777, %v5771, %v5778
        %vm5780 = vcmp.eq.s32.totalorder %v5775, 2
        %v5781 = vxor.u32 %v5771, 2147483648
        %v5782 = vsel %vm5780, %v5781, %v5772
        %v5783 = vsel %vm5776, %v5779, %v5782
        %v5784 = vsel %vm5773, nan, %v5783
        %v5785 = vand.u32 2147483647, %v397
        %vm5786 = vcmp.le.f32.partialorder %v5785, 0.7853982
        %vm5787 = vcmp.lt.s32.totalorder %v397, 0
        %v5788 = vand.u32 %v397, 2139095040
        %v5789 = vshrl.u32 %v5788, 23
        %v5790 = vsub.s32 %v5789, 127
        %v5791 = vand.u32 2147483647, %v397
        %v5792 = vand.u32 %v5791, 8388607
        %v5793 = vor.u32 %v5792, 8388608
        %v5794 = vsub.s32 0, %v5793
        %v5795 = vadd.s32 %v5790, 1
        %vm5796 = vcmp.gt.s32.totalorder %v5795, 0
        %v5797 = vsel %vm5796, %v5795, 0
        %v5798 = vshrl.u32 %v5797, 5
        %v5799 = vand.u32 %v5797, 31
        %v5800 = vsub.s32 32, %v5799
        %v5801 = vshrl.u32 683565275, %v5800
        %v5802 = vshll.u32 683565275, %v5799
        %v5803 = vshrl.u32 2475754826, %v5800
        %v5804 = vor.u32 %v5802, %v5803
        %v5805 = vshll.u32 2475754826, %v5799
        %v5806 = vshrl.u32 2131351028, %v5800
        %v5807 = vor.u32 %v5805, %v5806
        %v5808 = vshll.u32 2131351028, %v5799
        %v5809 = vshrl.u32 2102212464, %v5800
        %v5810 = vor.u32 %v5808, %v5809
        %v5811 = vshll.u32 2102212464, %v5799
        %v5812 = vshrl.u32 920167782, %v5800
        %v5813 = vor.u32 %v5811, %v5812
        %v5814 = vshll.u32 920167782, %v5799
        %v5815 = vshrl.u32 1326507024, %v5800
        %v5816 = vor.u32 %v5814, %v5815
        %vm5817 = vcmp.lt.s32.totalorder %v5798, 1
        %vm5818 = vcmp.lt.s32.totalorder %v5798, 2
        %vm5819 = vcmp.lt.s32.totalorder %v5798, 3
        %vm5820 = vcmp.lt.s32.totalorder %v5798, 4
        %v5821 = vsel %vm5817, %v5801, %v5804
        %v5822 = vsel %vm5820, %v5810, 2102212464
        %v5823 = vsel %vm5819, %v5807, %v5822
        %v5824 = vsel %vm5818, %v5821, %v5823
        %v5825 = vsel %vm5817, %v5804, %v5807
        %v5826 = vsel %vm5820, %v5813, 920167782
        %v5827 = vsel %vm5819, %v5810, %v5826
        %v5828 = vsel %vm5818, %v5825, %v5827
        %v5829 = vsel %vm5817, %v5807, %v5810
        %v5830 = vsel %vm5820, %v5816, 1326507024
        %v5831 = vsel %vm5819, %v5813, %v5830
        %v5832 = vsel %vm5818, %v5829, %v5831
        %v5833 = vshll.u32 %v5793, 8
        %v5834 = vmul.u32.u64.compose %v5833, %v5832
        %v5835 = vextract.low.u32 %v5834
        %v5836 = vextract.high.u32 %v5834
        %v5837 = vmul.u32.u64.compose %v5833, %v5828
        %v5838 = vextract.low.u32 %v5837
        %v5839 = vextract.high.u32 %v5837
        %v5840 = vmul.u32 %v5833, %v5824
        %v5841 = vadd.s32 %v5836, %v5838
        %vm5842 = vc.u32 %v5836, %v5838
        %v5843 = vadd.s32 %v5839, 1
        %v5844 = vsel %vm5842, %v5843, %v5839
        %v5845 = vadd.s32 %v5840, %v5844
        %v5846 = vadd.s32 %v5845, 536870912
        %v5847 = vshrl.u32 %v5846, 30
        %v5848 = vshll.u32 %v5847, 30
        %v5849 = vsub.s32 %v5845, %v5848
        %vm5850 = vcmp.lt.s32.totalorder %v5849, 0
        %v5851 = vsub.s32 0, %v5849
        %v5852 = vsel %vm5850, %v5851, %v5849
        %v5853 = vclz %v5852
        %v5854 = vsub.s32 %v5853, 2
        %vm5855 = vcmp.gt.s32.totalorder 0, %v5854
        %v5856 = vsel %vm5855, 0, %v5854
        %v5857 = vsub.s32 32, %v5856
        %v5858 = vshll.u32 %v5849, %v5856
        %v5859 = vshrl.u32 %v5841, %v5857
        %v5860 = vor.u32 %v5858, %v5859
        %v5861 = vsub.s32 4294967266, %v5856
        %v5862 = vadd.s32 %v5861, 127
        %v5863 = vshll.u32 %v5862, 23
        %v5864 = vor.u32 4788187, %v5863
        %v5865 = vand.u32 2147483647, %v5864
        %v5867 = vcvt.s32.f32 %v5860
        %v5868 = vmul.f32 %v5867, %v5865
        %v5869 = vxor.u32 %v5868, 2147483648
        %v5870 = vsel %vm5787, %v5869, %v5868
        %v5871 = vsub.s32 4, %v5847
        %v5872 = vsel %vm5787, %v5871, %v5847
        %v5873 = vsel %vm5786, %v397, %v5870
        %v5874 = vsel %vm5786, 0, %v5872
        %v5875 = vcosq.f32.pop %v5873
        %v5876 = vsinq.f32.pop %v5873
        %vm5877 = vweird.f32 %v397
        %v5878 = vadd.s32 %v5874, 3
        %v5879 = vand.u32 %v5878, 3
        %vm5880 = vcmp.lt.s32.totalorder %v5879, 2
        %vm5881 = vcmp.eq.s32.totalorder %v5879, 0
        %v5882 = vxor.u32 %v5876, 2147483648
        %v5883 = vsel %vm5881, %v5875, %v5882
        %vm5884 = vcmp.eq.s32.totalorder %v5879, 2
        %v5885 = vxor.u32 %v5875, 2147483648
        %v5886 = vsel %vm5884, %v5885, %v5876
        %v5887 = vsel %vm5880, %v5883, %v5886
        %v5888 = vsel %vm5877, nan, %v5887
        %v5889 = vand.u32 2147483647, %v398
        %vm5890 = vcmp.le.f32.partialorder %v5889, 0.7853982
        %vm5891 = vcmp.lt.s32.totalorder %v398, 0
        %v5892 = vand.u32 %v398, 2139095040
        %v5893 = vshrl.u32 %v5892, 23
        %v5894 = vsub.s32 %v5893, 127
        %v5895 = vand.u32 2147483647, %v398
        %v5896 = vand.u32 %v5895, 8388607
        %v5897 = vor.u32 %v5896, 8388608
        %v5898 = vsub.s32 0, %v5897
        %v5899 = vadd.s32 %v5894, 1
        %vm5900 = vcmp.gt.s32.totalorder %v5899, 0
        %v5901 = vsel %vm5900, %v5899, 0
        %v5902 = vshrl.u32 %v5901, 5
        %v5903 = vand.u32 %v5901, 31
        %v5904 = vsub.s32 32, %v5903
        %v5905 = vshrl.u32 683565275, %v5904
        %v5906 = vshll.u32 683565275, %v5903
        %v5907 = vshrl.u32 2475754826, %v5904
        %v5908 = vor.u32 %v5906, %v5907
        %v5909 = vshll.u32 2475754826, %v5903
        %v5910 = vshrl.u32 2131351028, %v5904
        %v5911 = vor.u32 %v5909, %v5910
        %v5912 = vshll.u32 2131351028, %v5903
        %v5913 = vshrl.u32 2102212464, %v5904
        %v5914 = vor.u32 %v5912, %v5913
        %v5915 = vshll.u32 2102212464, %v5903
        %v5916 = vshrl.u32 920167782, %v5904
        %v5917 = vor.u32 %v5915, %v5916
        %v5918 = vshll.u32 920167782, %v5903
        %v5919 = vshrl.u32 1326507024, %v5904
        %v5920 = vor.u32 %v5918, %v5919
        %vm5921 = vcmp.lt.s32.totalorder %v5902, 1
        %vm5922 = vcmp.lt.s32.totalorder %v5902, 2
        %vm5923 = vcmp.lt.s32.totalorder %v5902, 3
        %vm5924 = vcmp.lt.s32.totalorder %v5902, 4
        %v5925 = vsel %vm5921, %v5905, %v5908
        %v5926 = vsel %vm5924, %v5914, 2102212464
        %v5927 = vsel %vm5923, %v5911, %v5926
        %v5928 = vsel %vm5922, %v5925, %v5927
        %v5929 = vsel %vm5921, %v5908, %v5911
        %v5930 = vsel %vm5924, %v5917, 920167782
        %v5931 = vsel %vm5923, %v5914, %v5930
        %v5932 = vsel %vm5922, %v5929, %v5931
        %v5933 = vsel %vm5921, %v5911, %v5914
        %v5934 = vsel %vm5924, %v5920, 1326507024
        %v5935 = vsel %vm5923, %v5917, %v5934
        %v5936 = vsel %vm5922, %v5933, %v5935
        %v5937 = vshll.u32 %v5897, 8
        %v5938 = vmul.u32.u64.compose %v5937, %v5936
        %v5939 = vextract.low.u32 %v5938
        %v5940 = vextract.high.u32 %v5938
        %v5941 = vmul.u32.u64.compose %v5937, %v5932
        %v5942 = vextract.low.u32 %v5941
        %v5943 = vextract.high.u32 %v5941
        %v5944 = vmul.u32 %v5937, %v5928
        %v5945 = vadd.s32 %v5940, %v5942
        %vm5946 = vc.u32 %v5940, %v5942
        %v5947 = vadd.s32 %v5943, 1
        %v5948 = vsel %vm5946, %v5947, %v5943
        %v5949 = vadd.s32 %v5944, %v5948
        %v5950 = vadd.s32 %v5949, 536870912
        %v5951 = vshrl.u32 %v5950, 30
        %v5952 = vshll.u32 %v5951, 30
        %v5953 = vsub.s32 %v5949, %v5952
        %vm5954 = vcmp.lt.s32.totalorder %v5953, 0
        %v5955 = vsub.s32 0, %v5953
        %v5956 = vsel %vm5954, %v5955, %v5953
        %v5957 = vclz %v5956
        %v5958 = vsub.s32 %v5957, 2
        %vm5959 = vcmp.gt.s32.totalorder 0, %v5958
        %v5960 = vsel %vm5959, 0, %v5958
        %v5961 = vsub.s32 32, %v5960
        %v5962 = vshll.u32 %v5953, %v5960
        %v5963 = vshrl.u32 %v5945, %v5961
        %v5964 = vor.u32 %v5962, %v5963
        %v5965 = vsub.s32 4294967266, %v5960
        %v5966 = vadd.s32 %v5965, 127
        %v5967 = vshll.u32 %v5966, 23
        %v5968 = vor.u32 4788187, %v5967
        %v5969 = vand.u32 2147483647, %v5968
        %v5971 = vcvt.s32.f32 %v5964
        %v5972 = vmul.f32 %v5971, %v5969
        %v5973 = vxor.u32 %v5972, 2147483648
        %v5974 = vsel %vm5891, %v5973, %v5972
        %v5975 = vsub.s32 4, %v5951
        %v5976 = vsel %vm5891, %v5975, %v5951
        %v5977 = vsel %vm5890, %v398, %v5974
        %v5978 = vsel %vm5890, 0, %v5976
        %v5979 = vcosq.f32.pop %v5977
        %v5980 = vsinq.f32.pop %v5977
        %vm5981 = vweird.f32 %v398
        %v5982 = vadd.s32 %v5978, 3
        %v5983 = vand.u32 %v5982, 3
        %vm5984 = vcmp.lt.s32.totalorder %v5983, 2
        %vm5985 = vcmp.eq.s32.totalorder %v5983, 0
        %v5986 = vxor.u32 %v5980, 2147483648
        %v5987 = vsel %vm5985, %v5979, %v5986
        %vm5988 = vcmp.eq.s32.totalorder %v5983, 2
        %v5989 = vxor.u32 %v5979, 2147483648
        %v5990 = vsel %vm5988, %v5989, %v5980
        %v5991 = vsel %vm5984, %v5987, %v5990
        %v5992 = vsel %vm5981, nan, %v5991
        %v5993 = vand.u32 2147483647, %v399
        %vm5994 = vcmp.le.f32.partialorder %v5993, 0.7853982
        %vm5995 = vcmp.lt.s32.totalorder %v399, 0
        %v5996 = vand.u32 %v399, 2139095040
        %v5997 = vshrl.u32 %v5996, 23
        %v5998 = vsub.s32 %v5997, 127
        %v5999 = vand.u32 2147483647, %v399
        %v6000 = vand.u32 %v5999, 8388607
        %v6001 = vor.u32 %v6000, 8388608
        %v6002 = vsub.s32 0, %v6001
        %v6003 = vadd.s32 %v5998, 1
        %vm6004 = vcmp.gt.s32.totalorder %v6003, 0
        %v6005 = vsel %vm6004, %v6003, 0
        %v6006 = vshrl.u32 %v6005, 5
        %v6007 = vand.u32 %v6005, 31
        %v6008 = vsub.s32 32, %v6007
        %v6009 = vshrl.u32 683565275, %v6008
        %v6010 = vshll.u32 683565275, %v6007
        %v6011 = vshrl.u32 2475754826, %v6008
        %v6012 = vor.u32 %v6010, %v6011
        %v6013 = vshll.u32 2475754826, %v6007
        %v6014 = vshrl.u32 2131351028, %v6008
        %v6015 = vor.u32 %v6013, %v6014
        %v6016 = vshll.u32 2131351028, %v6007
        %v6017 = vshrl.u32 2102212464, %v6008
        %v6018 = vor.u32 %v6016, %v6017
        %v6019 = vshll.u32 2102212464, %v6007
        %v6020 = vshrl.u32 920167782, %v6008
        %v6021 = vor.u32 %v6019, %v6020
        %v6022 = vshll.u32 920167782, %v6007
        %v6023 = vshrl.u32 1326507024, %v6008
        %v6024 = vor.u32 %v6022, %v6023
        %vm6025 = vcmp.lt.s32.totalorder %v6006, 1
        %vm6026 = vcmp.lt.s32.totalorder %v6006, 2
        %vm6027 = vcmp.lt.s32.totalorder %v6006, 3
        %vm6028 = vcmp.lt.s32.totalorder %v6006, 4
        %v6029 = vsel %vm6025, %v6009, %v6012
        %v6030 = vsel %vm6028, %v6018, 2102212464
        %v6031 = vsel %vm6027, %v6015, %v6030
        %v6032 = vsel %vm6026, %v6029, %v6031
        %v6033 = vsel %vm6025, %v6012, %v6015
        %v6034 = vsel %vm6028, %v6021, 920167782
        %v6035 = vsel %vm6027, %v6018, %v6034
        %v6036 = vsel %vm6026, %v6033, %v6035
        %v6037 = vsel %vm6025, %v6015, %v6018
        %v6038 = vsel %vm6028, %v6024, 1326507024
        %v6039 = vsel %vm6027, %v6021, %v6038
        %v6040 = vsel %vm6026, %v6037, %v6039
        %v6041 = vshll.u32 %v6001, 8
        %v6042 = vmul.u32.u64.compose %v6041, %v6040
        %v6043 = vextract.low.u32 %v6042
        %v6044 = vextract.high.u32 %v6042
        %v6045 = vmul.u32.u64.compose %v6041, %v6036
        %v6046 = vextract.low.u32 %v6045
        %v6047 = vextract.high.u32 %v6045
        %v6048 = vmul.u32 %v6041, %v6032
        %v6049 = vadd.s32 %v6044, %v6046
        %vm6050 = vc.u32 %v6044, %v6046
        %v6051 = vadd.s32 %v6047, 1
        %v6052 = vsel %vm6050, %v6051, %v6047
        %v6053 = vadd.s32 %v6048, %v6052
        %v6054 = vadd.s32 %v6053, 536870912
        %v6055 = vshrl.u32 %v6054, 30
        %v6056 = vshll.u32 %v6055, 30
        %v6057 = vsub.s32 %v6053, %v6056
        %vm6058 = vcmp.lt.s32.totalorder %v6057, 0
        %v6059 = vsub.s32 0, %v6057
        %v6060 = vsel %vm6058, %v6059, %v6057
        %v6061 = vclz %v6060
        %v6062 = vsub.s32 %v6061, 2
        %vm6063 = vcmp.gt.s32.totalorder 0, %v6062
        %v6064 = vsel %vm6063, 0, %v6062
        %v6065 = vsub.s32 32, %v6064
        %v6066 = vshll.u32 %v6057, %v6064
        %v6067 = vshrl.u32 %v6049, %v6065
        %v6068 = vor.u32 %v6066, %v6067
        %v6069 = vsub.s32 4294967266, %v6064
        %v6070 = vadd.s32 %v6069, 127
        %v6071 = vshll.u32 %v6070, 23
        %v6072 = vor.u32 4788187, %v6071
        %v6073 = vand.u32 2147483647, %v6072
        %v6075 = vcvt.s32.f32 %v6068
        %v6076 = vmul.f32 %v6075, %v6073
        %v6077 = vxor.u32 %v6076, 2147483648
        %v6078 = vsel %vm5995, %v6077, %v6076
        %v6079 = vsub.s32 4, %v6055
        %v6080 = vsel %vm5995, %v6079, %v6055
        %v6081 = vsel %vm5994, %v399, %v6078
        %v6082 = vsel %vm5994, 0, %v6080
        %v6083 = vcosq.f32.pop %v6081
        %v6084 = vsinq.f32.pop %v6081
        %vm6085 = vweird.f32 %v399
        %v6086 = vadd.s32 %v6082, 3
        %v6087 = vand.u32 %v6086, 3
        %vm6088 = vcmp.lt.s32.totalorder %v6087, 2
        %vm6089 = vcmp.eq.s32.totalorder %v6087, 0
        %v6090 = vxor.u32 %v6084, 2147483648
        %v6091 = vsel %vm6089, %v6083, %v6090
        %vm6092 = vcmp.eq.s32.totalorder %v6087, 2
        %v6093 = vxor.u32 %v6083, 2147483648
        %v6094 = vsel %vm6092, %v6093, %v6084
        %v6095 = vsel %vm6088, %v6091, %v6094
        %v6096 = vsel %vm6085, nan, %v6095
        %v6097 = vand.u32 2147483647, %v400
        %vm6098 = vcmp.le.f32.partialorder %v6097, 0.7853982
        %vm6099 = vcmp.lt.s32.totalorder %v400, 0
        %v6100 = vand.u32 %v400, 2139095040
        %v6101 = vshrl.u32 %v6100, 23
        %v6102 = vsub.s32 %v6101, 127
        %v6103 = vand.u32 2147483647, %v400
        %v6104 = vand.u32 %v6103, 8388607
        %v6105 = vor.u32 %v6104, 8388608
        %v6106 = vsub.s32 0, %v6105
        %v6107 = vadd.s32 %v6102, 1
        %vm6108 = vcmp.gt.s32.totalorder %v6107, 0
        %v6109 = vsel %vm6108, %v6107, 0
        %v6110 = vshrl.u32 %v6109, 5
        %v6111 = vand.u32 %v6109, 31
        %v6112 = vsub.s32 32, %v6111
        %v6113 = vshrl.u32 683565275, %v6112
        %v6114 = vshll.u32 683565275, %v6111
        %v6115 = vshrl.u32 2475754826, %v6112
        %v6116 = vor.u32 %v6114, %v6115
        %v6117 = vshll.u32 2475754826, %v6111
        %v6118 = vshrl.u32 2131351028, %v6112
        %v6119 = vor.u32 %v6117, %v6118
        %v6120 = vshll.u32 2131351028, %v6111
        %v6121 = vshrl.u32 2102212464, %v6112
        %v6122 = vor.u32 %v6120, %v6121
        %v6123 = vshll.u32 2102212464, %v6111
        %v6124 = vshrl.u32 920167782, %v6112
        %v6125 = vor.u32 %v6123, %v6124
        %v6126 = vshll.u32 920167782, %v6111
        %v6127 = vshrl.u32 1326507024, %v6112
        %v6128 = vor.u32 %v6126, %v6127
        %vm6129 = vcmp.lt.s32.totalorder %v6110, 1
        %vm6130 = vcmp.lt.s32.totalorder %v6110, 2
        %vm6131 = vcmp.lt.s32.totalorder %v6110, 3
        %vm6132 = vcmp.lt.s32.totalorder %v6110, 4
        %v6133 = vsel %vm6129, %v6113, %v6116
        %v6134 = vsel %vm6132, %v6122, 2102212464
        %v6135 = vsel %vm6131, %v6119, %v6134
        %v6136 = vsel %vm6130, %v6133, %v6135
        %v6137 = vsel %vm6129, %v6116, %v6119
        %v6138 = vsel %vm6132, %v6125, 920167782
        %v6139 = vsel %vm6131, %v6122, %v6138
        %v6140 = vsel %vm6130, %v6137, %v6139
        %v6141 = vsel %vm6129, %v6119, %v6122
        %v6142 = vsel %vm6132, %v6128, 1326507024
        %v6143 = vsel %vm6131, %v6125, %v6142
        %v6144 = vsel %vm6130, %v6141, %v6143
        %v6145 = vshll.u32 %v6105, 8
        %v6146 = vmul.u32.u64.compose %v6145, %v6144
        %v6147 = vextract.low.u32 %v6146
        %v6148 = vextract.high.u32 %v6146
        %v6149 = vmul.u32.u64.compose %v6145, %v6140
        %v6150 = vextract.low.u32 %v6149
        %v6151 = vextract.high.u32 %v6149
        %v6152 = vmul.u32 %v6145, %v6136
        %v6153 = vadd.s32 %v6148, %v6150
        %vm6154 = vc.u32 %v6148, %v6150
        %v6155 = vadd.s32 %v6151, 1
        %v6156 = vsel %vm6154, %v6155, %v6151
        %v6157 = vadd.s32 %v6152, %v6156
        %v6158 = vadd.s32 %v6157, 536870912
        %v6159 = vshrl.u32 %v6158, 30
        %v6160 = vshll.u32 %v6159, 30
        %v6161 = vsub.s32 %v6157, %v6160
        %vm6162 = vcmp.lt.s32.totalorder %v6161, 0
        %v6163 = vsub.s32 0, %v6161
        %v6164 = vsel %vm6162, %v6163, %v6161
        %v6165 = vclz %v6164
        %v6166 = vsub.s32 %v6165, 2
        %vm6167 = vcmp.gt.s32.totalorder 0, %v6166
        %v6168 = vsel %vm6167, 0, %v6166
        %v6169 = vsub.s32 32, %v6168
        %v6170 = vshll.u32 %v6161, %v6168
        %v6171 = vshrl.u32 %v6153, %v6169
        %v6172 = vor.u32 %v6170, %v6171
        %v6173 = vsub.s32 4294967266, %v6168
        %v6174 = vadd.s32 %v6173, 127
        %v6175 = vshll.u32 %v6174, 23
        %v6176 = vor.u32 4788187, %v6175
        %v6177 = vand.u32 2147483647, %v6176
        %v6179 = vcvt.s32.f32 %v6172
        %v6180 = vmul.f32 %v6179, %v6177
        %v6181 = vxor.u32 %v6180, 2147483648
        %v6182 = vsel %vm6099, %v6181, %v6180
        %v6183 = vsub.s32 4, %v6159
        %v6184 = vsel %vm6099, %v6183, %v6159
        %v6185 = vsel %vm6098, %v400, %v6182
        %v6186 = vsel %vm6098, 0, %v6184
        %v6187 = vcosq.f32.pop %v6185
        %v6188 = vsinq.f32.pop %v6185
        %vm6189 = vweird.f32 %v400
        %v6190 = vadd.s32 %v6186, 3
        %v6191 = vand.u32 %v6190, 3
        %vm6192 = vcmp.lt.s32.totalorder %v6191, 2
        %vm6193 = vcmp.eq.s32.totalorder %v6191, 0
        %v6194 = vxor.u32 %v6188, 2147483648
        %v6195 = vsel %vm6193, %v6187, %v6194
        %vm6196 = vcmp.eq.s32.totalorder %v6191, 2
        %v6197 = vxor.u32 %v6187, 2147483648
        %v6198 = vsel %vm6196, %v6197, %v6188
        %v6199 = vsel %vm6192, %v6195, %v6198
        %v6200 = vsel %vm6189, nan, %v6199
        %v6201 = vand.u32 2147483647, %v401
        %vm6202 = vcmp.le.f32.partialorder %v6201, 0.7853982
        %vm6203 = vcmp.lt.s32.totalorder %v401, 0
        %v6204 = vand.u32 %v401, 2139095040
        %v6205 = vshrl.u32 %v6204, 23
        %v6206 = vsub.s32 %v6205, 127
        %v6207 = vand.u32 2147483647, %v401
        %v6208 = vand.u32 %v6207, 8388607
        %v6209 = vor.u32 %v6208, 8388608
        %v6210 = vsub.s32 0, %v6209
        %v6211 = vadd.s32 %v6206, 1
        %vm6212 = vcmp.gt.s32.totalorder %v6211, 0
        %v6213 = vsel %vm6212, %v6211, 0
        %v6214 = vshrl.u32 %v6213, 5
        %v6215 = vand.u32 %v6213, 31
        %v6216 = vsub.s32 32, %v6215
        %v6217 = vshrl.u32 683565275, %v6216
        %v6218 = vshll.u32 683565275, %v6215
        %v6219 = vshrl.u32 2475754826, %v6216
        %v6220 = vor.u32 %v6218, %v6219
        %v6221 = vshll.u32 2475754826, %v6215
        %v6222 = vshrl.u32 2131351028, %v6216
        %v6223 = vor.u32 %v6221, %v6222
        %v6224 = vshll.u32 2131351028, %v6215
        %v6225 = vshrl.u32 2102212464, %v6216
        %v6226 = vor.u32 %v6224, %v6225
        %v6227 = vshll.u32 2102212464, %v6215
        %v6228 = vshrl.u32 920167782, %v6216
        %v6229 = vor.u32 %v6227, %v6228
        %v6230 = vshll.u32 920167782, %v6215
        %v6231 = vshrl.u32 1326507024, %v6216
        %v6232 = vor.u32 %v6230, %v6231
        %vm6233 = vcmp.lt.s32.totalorder %v6214, 1
        %vm6234 = vcmp.lt.s32.totalorder %v6214, 2
        %vm6235 = vcmp.lt.s32.totalorder %v6214, 3
        %vm6236 = vcmp.lt.s32.totalorder %v6214, 4
        %v6237 = vsel %vm6233, %v6217, %v6220
        %v6238 = vsel %vm6236, %v6226, 2102212464
        %v6239 = vsel %vm6235, %v6223, %v6238
        %v6240 = vsel %vm6234, %v6237, %v6239
        %v6241 = vsel %vm6233, %v6220, %v6223
        %v6242 = vsel %vm6236, %v6229, 920167782
        %v6243 = vsel %vm6235, %v6226, %v6242
        %v6244 = vsel %vm6234, %v6241, %v6243
        %v6245 = vsel %vm6233, %v6223, %v6226
        %v6246 = vsel %vm6236, %v6232, 1326507024
        %v6247 = vsel %vm6235, %v6229, %v6246
        %v6248 = vsel %vm6234, %v6245, %v6247
        %v6249 = vshll.u32 %v6209, 8
        %v6250 = vmul.u32.u64.compose %v6249, %v6248
        %v6251 = vextract.low.u32 %v6250
        %v6252 = vextract.high.u32 %v6250
        %v6253 = vmul.u32.u64.compose %v6249, %v6244
        %v6254 = vextract.low.u32 %v6253
        %v6255 = vextract.high.u32 %v6253
        %v6256 = vmul.u32 %v6249, %v6240
        %v6257 = vadd.s32 %v6252, %v6254
        %vm6258 = vc.u32 %v6252, %v6254
        %v6259 = vadd.s32 %v6255, 1
        %v6260 = vsel %vm6258, %v6259, %v6255
        %v6261 = vadd.s32 %v6256, %v6260
        %v6262 = vadd.s32 %v6261, 536870912
        %v6263 = vshrl.u32 %v6262, 30
        %v6264 = vshll.u32 %v6263, 30
        %v6265 = vsub.s32 %v6261, %v6264
        %vm6266 = vcmp.lt.s32.totalorder %v6265, 0
        %v6267 = vsub.s32 0, %v6265
        %v6268 = vsel %vm6266, %v6267, %v6265
        %v6269 = vclz %v6268
        %v6270 = vsub.s32 %v6269, 2
        %vm6271 = vcmp.gt.s32.totalorder 0, %v6270
        %v6272 = vsel %vm6271, 0, %v6270
        %v6273 = vsub.s32 32, %v6272
        %v6274 = vshll.u32 %v6265, %v6272
        %v6275 = vshrl.u32 %v6257, %v6273
        %v6276 = vor.u32 %v6274, %v6275
        %v6277 = vsub.s32 4294967266, %v6272
        %v6278 = vadd.s32 %v6277, 127
        %v6279 = vshll.u32 %v6278, 23
        %v6280 = vor.u32 4788187, %v6279
        %v6281 = vand.u32 2147483647, %v6280
        %v6283 = vcvt.s32.f32 %v6276
        %v6284 = vmul.f32 %v6283, %v6281
        %v6285 = vxor.u32 %v6284, 2147483648
        %v6286 = vsel %vm6203, %v6285, %v6284
        %v6287 = vsub.s32 4, %v6263
        %v6288 = vsel %vm6203, %v6287, %v6263
        %v6289 = vsel %vm6202, %v401, %v6286
        %v6290 = vsel %vm6202, 0, %v6288
        %v6291 = vcosq.f32.pop %v6289
        %v6292 = vsinq.f32.pop %v6289
        %vm6293 = vweird.f32 %v401
        %v6294 = vadd.s32 %v6290, 3
        %v6295 = vand.u32 %v6294, 3
        %vm6296 = vcmp.lt.s32.totalorder %v6295, 2
        %vm6297 = vcmp.eq.s32.totalorder %v6295, 0
        %v6298 = vxor.u32 %v6292, 2147483648
        %v6299 = vsel %vm6297, %v6291, %v6298
        %vm6300 = vcmp.eq.s32.totalorder %v6295, 2
        %v6301 = vxor.u32 %v6291, 2147483648
        %v6302 = vsel %vm6300, %v6301, %v6292
        %v6303 = vsel %vm6296, %v6299, %v6302
        %v6304 = vsel %vm6293, nan, %v6303
        %v6305 = vand.u32 2147483647, %v402
        %vm6306 = vcmp.le.f32.partialorder %v6305, 0.7853982
        %vm6307 = vcmp.lt.s32.totalorder %v402, 0
        %v6308 = vand.u32 %v402, 2139095040
        %v6309 = vshrl.u32 %v6308, 23
        %v6310 = vsub.s32 %v6309, 127
        %v6311 = vand.u32 2147483647, %v402
        %v6312 = vand.u32 %v6311, 8388607
        %v6313 = vor.u32 %v6312, 8388608
        %v6314 = vsub.s32 0, %v6313
        %v6315 = vadd.s32 %v6310, 1
        %vm6316 = vcmp.gt.s32.totalorder %v6315, 0
        %v6317 = vsel %vm6316, %v6315, 0
        %v6318 = vshrl.u32 %v6317, 5
        %v6319 = vand.u32 %v6317, 31
        %v6320 = vsub.s32 32, %v6319
        %v6321 = vshrl.u32 683565275, %v6320
        %v6322 = vshll.u32 683565275, %v6319
        %v6323 = vshrl.u32 2475754826, %v6320
        %v6324 = vor.u32 %v6322, %v6323
        %v6325 = vshll.u32 2475754826, %v6319
        %v6326 = vshrl.u32 2131351028, %v6320
        %v6327 = vor.u32 %v6325, %v6326
        %v6328 = vshll.u32 2131351028, %v6319
        %v6329 = vshrl.u32 2102212464, %v6320
        %v6330 = vor.u32 %v6328, %v6329
        %v6331 = vshll.u32 2102212464, %v6319
        %v6332 = vshrl.u32 920167782, %v6320
        %v6333 = vor.u32 %v6331, %v6332
        %v6334 = vshll.u32 920167782, %v6319
        %v6335 = vshrl.u32 1326507024, %v6320
        %v6336 = vor.u32 %v6334, %v6335
        %vm6337 = vcmp.lt.s32.totalorder %v6318, 1
        %vm6338 = vcmp.lt.s32.totalorder %v6318, 2
        %vm6339 = vcmp.lt.s32.totalorder %v6318, 3
        %vm6340 = vcmp.lt.s32.totalorder %v6318, 4
        %v6341 = vsel %vm6337, %v6321, %v6324
        %v6342 = vsel %vm6340, %v6330, 2102212464
        %v6343 = vsel %vm6339, %v6327, %v6342
        %v6344 = vsel %vm6338, %v6341, %v6343
        %v6345 = vsel %vm6337, %v6324, %v6327
        %v6346 = vsel %vm6340, %v6333, 920167782
        %v6347 = vsel %vm6339, %v6330, %v6346
        %v6348 = vsel %vm6338, %v6345, %v6347
        %v6349 = vsel %vm6337, %v6327, %v6330
        %v6350 = vsel %vm6340, %v6336, 1326507024
        %v6351 = vsel %vm6339, %v6333, %v6350
        %v6352 = vsel %vm6338, %v6349, %v6351
        %v6353 = vshll.u32 %v6313, 8
        %v6354 = vmul.u32.u64.compose %v6353, %v6352
        %v6355 = vextract.low.u32 %v6354
        %v6356 = vextract.high.u32 %v6354
        %v6357 = vmul.u32.u64.compose %v6353, %v6348
        %v6358 = vextract.low.u32 %v6357
        %v6359 = vextract.high.u32 %v6357
        %v6360 = vmul.u32 %v6353, %v6344
        %v6361 = vadd.s32 %v6356, %v6358
        %vm6362 = vc.u32 %v6356, %v6358
        %v6363 = vadd.s32 %v6359, 1
        %v6364 = vsel %vm6362, %v6363, %v6359
        %v6365 = vadd.s32 %v6360, %v6364
        %v6366 = vadd.s32 %v6365, 536870912
        %v6367 = vshrl.u32 %v6366, 30
        %v6368 = vshll.u32 %v6367, 30
        %v6369 = vsub.s32 %v6365, %v6368
        %vm6370 = vcmp.lt.s32.totalorder %v6369, 0
        %v6371 = vsub.s32 0, %v6369
        %v6372 = vsel %vm6370, %v6371, %v6369
        %v6373 = vclz %v6372
        %v6374 = vsub.s32 %v6373, 2
        %vm6375 = vcmp.gt.s32.totalorder 0, %v6374
        %v6376 = vsel %vm6375, 0, %v6374
        %v6377 = vsub.s32 32, %v6376
        %v6378 = vshll.u32 %v6369, %v6376
        %v6379 = vshrl.u32 %v6361, %v6377
        %v6380 = vor.u32 %v6378, %v6379
        %v6381 = vsub.s32 4294967266, %v6376
        %v6382 = vadd.s32 %v6381, 127
        %v6383 = vshll.u32 %v6382, 23
        %v6384 = vor.u32 4788187, %v6383
        %v6385 = vand.u32 2147483647, %v6384
        %v6387 = vcvt.s32.f32 %v6380
        %v6388 = vmul.f32 %v6387, %v6385
        %v6389 = vxor.u32 %v6388, 2147483648
        %v6390 = vsel %vm6307, %v6389, %v6388
        %v6391 = vsub.s32 4, %v6367
        %v6392 = vsel %vm6307, %v6391, %v6367
        %v6393 = vsel %vm6306, %v402, %v6390
        %v6394 = vsel %vm6306, 0, %v6392
        %v6395 = vcosq.f32.pop %v6393
        %v6396 = vsinq.f32.pop %v6393
        %vm6397 = vweird.f32 %v402
        %v6398 = vadd.s32 %v6394, 3
        %v6399 = vand.u32 %v6398, 3
        %vm6400 = vcmp.lt.s32.totalorder %v6399, 2
        %vm6401 = vcmp.eq.s32.totalorder %v6399, 0
        %v6402 = vxor.u32 %v6396, 2147483648
        %v6403 = vsel %vm6401, %v6395, %v6402
        %vm6404 = vcmp.eq.s32.totalorder %v6399, 2
        %v6405 = vxor.u32 %v6395, 2147483648
        %v6406 = vsel %vm6404, %v6405, %v6396
        %v6407 = vsel %vm6400, %v6403, %v6406
        %v6408 = vsel %vm6397, nan, %v6407
        %v6409 = vand.u32 2147483647, %v403
        %vm6410 = vcmp.le.f32.partialorder %v6409, 0.7853982
        %vm6411 = vcmp.lt.s32.totalorder %v403, 0
        %v6412 = vand.u32 %v403, 2139095040
        %v6413 = vshrl.u32 %v6412, 23
        %v6414 = vsub.s32 %v6413, 127
        %v6415 = vand.u32 2147483647, %v403
        %v6416 = vand.u32 %v6415, 8388607
        %v6417 = vor.u32 %v6416, 8388608
        %v6418 = vsub.s32 0, %v6417
        %v6419 = vadd.s32 %v6414, 1
        %vm6420 = vcmp.gt.s32.totalorder %v6419, 0
        %v6421 = vsel %vm6420, %v6419, 0
        %v6422 = vshrl.u32 %v6421, 5
        %v6423 = vand.u32 %v6421, 31
        %v6424 = vsub.s32 32, %v6423
        %v6425 = vshrl.u32 683565275, %v6424
        %v6426 = vshll.u32 683565275, %v6423
        %v6427 = vshrl.u32 2475754826, %v6424
        %v6428 = vor.u32 %v6426, %v6427
        %v6429 = vshll.u32 2475754826, %v6423
        %v6430 = vshrl.u32 2131351028, %v6424
        %v6431 = vor.u32 %v6429, %v6430
        %v6432 = vshll.u32 2131351028, %v6423
        %v6433 = vshrl.u32 2102212464, %v6424
        %v6434 = vor.u32 %v6432, %v6433
        %v6435 = vshll.u32 2102212464, %v6423
        %v6436 = vshrl.u32 920167782, %v6424
        %v6437 = vor.u32 %v6435, %v6436
        %v6438 = vshll.u32 920167782, %v6423
        %v6439 = vshrl.u32 1326507024, %v6424
        %v6440 = vor.u32 %v6438, %v6439
        %vm6441 = vcmp.lt.s32.totalorder %v6422, 1
        %vm6442 = vcmp.lt.s32.totalorder %v6422, 2
        %vm6443 = vcmp.lt.s32.totalorder %v6422, 3
        %vm6444 = vcmp.lt.s32.totalorder %v6422, 4
        %v6445 = vsel %vm6441, %v6425, %v6428
        %v6446 = vsel %vm6444, %v6434, 2102212464
        %v6447 = vsel %vm6443, %v6431, %v6446
        %v6448 = vsel %vm6442, %v6445, %v6447
        %v6449 = vsel %vm6441, %v6428, %v6431
        %v6450 = vsel %vm6444, %v6437, 920167782
        %v6451 = vsel %vm6443, %v6434, %v6450
        %v6452 = vsel %vm6442, %v6449, %v6451
        %v6453 = vsel %vm6441, %v6431, %v6434
        %v6454 = vsel %vm6444, %v6440, 1326507024
        %v6455 = vsel %vm6443, %v6437, %v6454
        %v6456 = vsel %vm6442, %v6453, %v6455
        %v6457 = vshll.u32 %v6417, 8
        %v6458 = vmul.u32.u64.compose %v6457, %v6456
        %v6459 = vextract.low.u32 %v6458
        %v6460 = vextract.high.u32 %v6458
        %v6461 = vmul.u32.u64.compose %v6457, %v6452
        %v6462 = vextract.low.u32 %v6461
        %v6463 = vextract.high.u32 %v6461
        %v6464 = vmul.u32 %v6457, %v6448
        %v6465 = vadd.s32 %v6460, %v6462
        %vm6466 = vc.u32 %v6460, %v6462
        %v6467 = vadd.s32 %v6463, 1
        %v6468 = vsel %vm6466, %v6467, %v6463
        %v6469 = vadd.s32 %v6464, %v6468
        %v6470 = vadd.s32 %v6469, 536870912
        %v6471 = vshrl.u32 %v6470, 30
        %v6472 = vshll.u32 %v6471, 30
        %v6473 = vsub.s32 %v6469, %v6472
        %vm6474 = vcmp.lt.s32.totalorder %v6473, 0
        %v6475 = vsub.s32 0, %v6473
        %v6476 = vsel %vm6474, %v6475, %v6473
        %v6477 = vclz %v6476
        %v6478 = vsub.s32 %v6477, 2
        %vm6479 = vcmp.gt.s32.totalorder 0, %v6478
        %v6480 = vsel %vm6479, 0, %v6478
        %v6481 = vsub.s32 32, %v6480
        %v6482 = vshll.u32 %v6473, %v6480
        %v6483 = vshrl.u32 %v6465, %v6481
        %v6484 = vor.u32 %v6482, %v6483
        %v6485 = vsub.s32 4294967266, %v6480
        %v6486 = vadd.s32 %v6485, 127
        %v6487 = vshll.u32 %v6486, 23
        %v6488 = vor.u32 4788187, %v6487
        %v6489 = vand.u32 2147483647, %v6488
        %v6491 = vcvt.s32.f32 %v6484
        %v6492 = vmul.f32 %v6491, %v6489
        %v6493 = vxor.u32 %v6492, 2147483648
        %v6494 = vsel %vm6411, %v6493, %v6492
        %v6495 = vsub.s32 4, %v6471
        %v6496 = vsel %vm6411, %v6495, %v6471
        %v6497 = vsel %vm6410, %v403, %v6494
        %v6498 = vsel %vm6410, 0, %v6496
        %v6499 = vcosq.f32.pop %v6497
        %v6500 = vsinq.f32.pop %v6497
        %vm6501 = vweird.f32 %v403
        %v6502 = vadd.s32 %v6498, 3
        %v6503 = vand.u32 %v6502, 3
        %vm6504 = vcmp.lt.s32.totalorder %v6503, 2
        %vm6505 = vcmp.eq.s32.totalorder %v6503, 0
        %v6506 = vxor.u32 %v6500, 2147483648
        %v6507 = vsel %vm6505, %v6499, %v6506
        %vm6508 = vcmp.eq.s32.totalorder %v6503, 2
        %v6509 = vxor.u32 %v6499, 2147483648
        %v6510 = vsel %vm6508, %v6509, %v6500
        %v6511 = vsel %vm6504, %v6507, %v6510
        %v6512 = vsel %vm6501, nan, %v6511
        %v6513 = vand.u32 2147483647, %v404
        %vm6514 = vcmp.le.f32.partialorder %v6513, 0.7853982
        %vm6515 = vcmp.lt.s32.totalorder %v404, 0
        %v6516 = vand.u32 %v404, 2139095040
        %v6517 = vshrl.u32 %v6516, 23
        %v6518 = vsub.s32 %v6517, 127
        %v6519 = vand.u32 2147483647, %v404
        %v6520 = vand.u32 %v6519, 8388607
        %v6521 = vor.u32 %v6520, 8388608
        %v6522 = vsub.s32 0, %v6521
        %v6523 = vadd.s32 %v6518, 1
        %vm6524 = vcmp.gt.s32.totalorder %v6523, 0
        %v6525 = vsel %vm6524, %v6523, 0
        %v6526 = vshrl.u32 %v6525, 5
        %v6527 = vand.u32 %v6525, 31
        %v6528 = vsub.s32 32, %v6527
        %v6529 = vshrl.u32 683565275, %v6528
        %v6530 = vshll.u32 683565275, %v6527
        %v6531 = vshrl.u32 2475754826, %v6528
        %v6532 = vor.u32 %v6530, %v6531
        %v6533 = vshll.u32 2475754826, %v6527
        %v6534 = vshrl.u32 2131351028, %v6528
        %v6535 = vor.u32 %v6533, %v6534
        %v6536 = vshll.u32 2131351028, %v6527
        %v6537 = vshrl.u32 2102212464, %v6528
        %v6538 = vor.u32 %v6536, %v6537
        %v6539 = vshll.u32 2102212464, %v6527
        %v6540 = vshrl.u32 920167782, %v6528
        %v6541 = vor.u32 %v6539, %v6540
        %v6542 = vshll.u32 920167782, %v6527
        %v6543 = vshrl.u32 1326507024, %v6528
        %v6544 = vor.u32 %v6542, %v6543
        %vm6545 = vcmp.lt.s32.totalorder %v6526, 1
        %vm6546 = vcmp.lt.s32.totalorder %v6526, 2
        %vm6547 = vcmp.lt.s32.totalorder %v6526, 3
        %vm6548 = vcmp.lt.s32.totalorder %v6526, 4
        %v6549 = vsel %vm6545, %v6529, %v6532
        %v6550 = vsel %vm6548, %v6538, 2102212464
        %v6551 = vsel %vm6547, %v6535, %v6550
        %v6552 = vsel %vm6546, %v6549, %v6551
        %v6553 = vsel %vm6545, %v6532, %v6535
        %v6554 = vsel %vm6548, %v6541, 920167782
        %v6555 = vsel %vm6547, %v6538, %v6554
        %v6556 = vsel %vm6546, %v6553, %v6555
        %v6557 = vsel %vm6545, %v6535, %v6538
        %v6558 = vsel %vm6548, %v6544, 1326507024
        %v6559 = vsel %vm6547, %v6541, %v6558
        %v6560 = vsel %vm6546, %v6557, %v6559
        %v6561 = vshll.u32 %v6521, 8
        %v6562 = vmul.u32.u64.compose %v6561, %v6560
        %v6563 = vextract.low.u32 %v6562
        %v6564 = vextract.high.u32 %v6562
        %v6565 = vmul.u32.u64.compose %v6561, %v6556
        %v6566 = vextract.low.u32 %v6565
        %v6567 = vextract.high.u32 %v6565
        %v6568 = vmul.u32 %v6561, %v6552
        %v6569 = vadd.s32 %v6564, %v6566
        %vm6570 = vc.u32 %v6564, %v6566
        %v6571 = vadd.s32 %v6567, 1
        %v6572 = vsel %vm6570, %v6571, %v6567
        %v6573 = vadd.s32 %v6568, %v6572
        %v6574 = vadd.s32 %v6573, 536870912
        %v6575 = vshrl.u32 %v6574, 30
        %v6576 = vshll.u32 %v6575, 30
        %v6577 = vsub.s32 %v6573, %v6576
        %vm6578 = vcmp.lt.s32.totalorder %v6577, 0
        %v6579 = vsub.s32 0, %v6577
        %v6580 = vsel %vm6578, %v6579, %v6577
        %v6581 = vclz %v6580
        %v6582 = vsub.s32 %v6581, 2
        %vm6583 = vcmp.gt.s32.totalorder 0, %v6582
        %v6584 = vsel %vm6583, 0, %v6582
        %v6585 = vsub.s32 32, %v6584
        %v6586 = vshll.u32 %v6577, %v6584
        %v6587 = vshrl.u32 %v6569, %v6585
        %v6588 = vor.u32 %v6586, %v6587
        %v6589 = vsub.s32 4294967266, %v6584
        %v6590 = vadd.s32 %v6589, 127
        %v6591 = vshll.u32 %v6590, 23
        %v6592 = vor.u32 4788187, %v6591
        %v6593 = vand.u32 2147483647, %v6592
        %v6595 = vcvt.s32.f32 %v6588
        %v6596 = vmul.f32 %v6595, %v6593
        %v6597 = vxor.u32 %v6596, 2147483648
        %v6598 = vsel %vm6515, %v6597, %v6596
        %v6599 = vsub.s32 4, %v6575
        %v6600 = vsel %vm6515, %v6599, %v6575
        %v6601 = vsel %vm6514, %v404, %v6598
        %v6602 = vsel %vm6514, 0, %v6600
        %v6603 = vcosq.f32.pop %v6601
        %v6604 = vsinq.f32.pop %v6601
        %vm6605 = vweird.f32 %v404
        %v6606 = vadd.s32 %v6602, 3
        %v6607 = vand.u32 %v6606, 3
        %vm6608 = vcmp.lt.s32.totalorder %v6607, 2
        %vm6609 = vcmp.eq.s32.totalorder %v6607, 0
        %v6610 = vxor.u32 %v6604, 2147483648
        %v6611 = vsel %vm6609, %v6603, %v6610
        %vm6612 = vcmp.eq.s32.totalorder %v6607, 2
        %v6613 = vxor.u32 %v6603, 2147483648
        %v6614 = vsel %vm6612, %v6613, %v6604
        %v6615 = vsel %vm6608, %v6611, %v6614
        %v6616 = vsel %vm6605, nan, %v6615
        %v6617 = vand.u32 2147483647, %v405
        %vm6618 = vcmp.le.f32.partialorder %v6617, 0.7853982
        %vm6619 = vcmp.lt.s32.totalorder %v405, 0
        %v6620 = vand.u32 %v405, 2139095040
        %v6621 = vshrl.u32 %v6620, 23
        %v6622 = vsub.s32 %v6621, 127
        %v6623 = vand.u32 2147483647, %v405
        %v6624 = vand.u32 %v6623, 8388607
        %v6625 = vor.u32 %v6624, 8388608
        %v6626 = vsub.s32 0, %v6625
        %v6627 = vadd.s32 %v6622, 1
        %vm6628 = vcmp.gt.s32.totalorder %v6627, 0
        %v6629 = vsel %vm6628, %v6627, 0
        %v6630 = vshrl.u32 %v6629, 5
        %v6631 = vand.u32 %v6629, 31
        %v6632 = vsub.s32 32, %v6631
        %v6633 = vshrl.u32 683565275, %v6632
        %v6634 = vshll.u32 683565275, %v6631
        %v6635 = vshrl.u32 2475754826, %v6632
        %v6636 = vor.u32 %v6634, %v6635
        %v6637 = vshll.u32 2475754826, %v6631
        %v6638 = vshrl.u32 2131351028, %v6632
        %v6639 = vor.u32 %v6637, %v6638
        %v6640 = vshll.u32 2131351028, %v6631
        %v6641 = vshrl.u32 2102212464, %v6632
        %v6642 = vor.u32 %v6640, %v6641
        %v6643 = vshll.u32 2102212464, %v6631
        %v6644 = vshrl.u32 920167782, %v6632
        %v6645 = vor.u32 %v6643, %v6644
        %v6646 = vshll.u32 920167782, %v6631
        %v6647 = vshrl.u32 1326507024, %v6632
        %v6648 = vor.u32 %v6646, %v6647
        %vm6649 = vcmp.lt.s32.totalorder %v6630, 1
        %vm6650 = vcmp.lt.s32.totalorder %v6630, 2
        %vm6651 = vcmp.lt.s32.totalorder %v6630, 3
        %vm6652 = vcmp.lt.s32.totalorder %v6630, 4
        %v6653 = vsel %vm6649, %v6633, %v6636
        %v6654 = vsel %vm6652, %v6642, 2102212464
        %v6655 = vsel %vm6651, %v6639, %v6654
        %v6656 = vsel %vm6650, %v6653, %v6655
        %v6657 = vsel %vm6649, %v6636, %v6639
        %v6658 = vsel %vm6652, %v6645, 920167782
        %v6659 = vsel %vm6651, %v6642, %v6658
        %v6660 = vsel %vm6650, %v6657, %v6659
        %v6661 = vsel %vm6649, %v6639, %v6642
        %v6662 = vsel %vm6652, %v6648, 1326507024
        %v6663 = vsel %vm6651, %v6645, %v6662
        %v6664 = vsel %vm6650, %v6661, %v6663
        %v6665 = vshll.u32 %v6625, 8
        %v6666 = vmul.u32.u64.compose %v6665, %v6664
        %v6667 = vextract.low.u32 %v6666
        %v6668 = vextract.high.u32 %v6666
        %v6669 = vmul.u32.u64.compose %v6665, %v6660
        %v6670 = vextract.low.u32 %v6669
        %v6671 = vextract.high.u32 %v6669
        %v6672 = vmul.u32 %v6665, %v6656
        %v6673 = vadd.s32 %v6668, %v6670
        %vm6674 = vc.u32 %v6668, %v6670
        %v6675 = vadd.s32 %v6671, 1
        %v6676 = vsel %vm6674, %v6675, %v6671
        %v6677 = vadd.s32 %v6672, %v6676
        %v6678 = vadd.s32 %v6677, 536870912
        %v6679 = vshrl.u32 %v6678, 30
        %v6680 = vshll.u32 %v6679, 30
        %v6681 = vsub.s32 %v6677, %v6680
        %vm6682 = vcmp.lt.s32.totalorder %v6681, 0
        %v6683 = vsub.s32 0, %v6681
        %v6684 = vsel %vm6682, %v6683, %v6681
        %v6685 = vclz %v6684
        %v6686 = vsub.s32 %v6685, 2
        %vm6687 = vcmp.gt.s32.totalorder 0, %v6686
        %v6688 = vsel %vm6687, 0, %v6686
        %v6689 = vsub.s32 32, %v6688
        %v6690 = vshll.u32 %v6681, %v6688
        %v6691 = vshrl.u32 %v6673, %v6689
        %v6692 = vor.u32 %v6690, %v6691
        %v6693 = vsub.s32 4294967266, %v6688
        %v6694 = vadd.s32 %v6693, 127
        %v6695 = vshll.u32 %v6694, 23
        %v6696 = vor.u32 4788187, %v6695
        %v6697 = vand.u32 2147483647, %v6696
        %v6699 = vcvt.s32.f32 %v6692
        %v6700 = vmul.f32 %v6699, %v6697
        %v6701 = vxor.u32 %v6700, 2147483648
        %v6702 = vsel %vm6619, %v6701, %v6700
        %v6703 = vsub.s32 4, %v6679
        %v6704 = vsel %vm6619, %v6703, %v6679
        %v6705 = vsel %vm6618, %v405, %v6702
        %v6706 = vsel %vm6618, 0, %v6704
        %v6707 = vcosq.f32.pop %v6705
        %v6708 = vsinq.f32.pop %v6705
        %vm6709 = vweird.f32 %v405
        %v6710 = vadd.s32 %v6706, 3
        %v6711 = vand.u32 %v6710, 3
        %vm6712 = vcmp.lt.s32.totalorder %v6711, 2
        %vm6713 = vcmp.eq.s32.totalorder %v6711, 0
        %v6714 = vxor.u32 %v6708, 2147483648
        %v6715 = vsel %vm6713, %v6707, %v6714
        %vm6716 = vcmp.eq.s32.totalorder %v6711, 2
        %v6717 = vxor.u32 %v6707, 2147483648
        %v6718 = vsel %vm6716, %v6717, %v6708
        %v6719 = vsel %vm6712, %v6715, %v6718
        %v6720 = vsel %vm6709, nan, %v6719
        %v6721 = vand.u32 2147483647, %v406
        %vm6722 = vcmp.le.f32.partialorder %v6721, 0.7853982
        %vm6723 = vcmp.lt.s32.totalorder %v406, 0
        %v6724 = vand.u32 %v406, 2139095040
        %v6725 = vshrl.u32 %v6724, 23
        %v6726 = vsub.s32 %v6725, 127
        %v6727 = vand.u32 2147483647, %v406
        %v6728 = vand.u32 %v6727, 8388607
        %v6729 = vor.u32 %v6728, 8388608
        %v6730 = vsub.s32 0, %v6729
        %v6731 = vadd.s32 %v6726, 1
        %vm6732 = vcmp.gt.s32.totalorder %v6731, 0
        %v6733 = vsel %vm6732, %v6731, 0
        %v6734 = vshrl.u32 %v6733, 5
        %v6735 = vand.u32 %v6733, 31
        %v6736 = vsub.s32 32, %v6735
        %v6737 = vshrl.u32 683565275, %v6736
        %v6738 = vshll.u32 683565275, %v6735
        %v6739 = vshrl.u32 2475754826, %v6736
        %v6740 = vor.u32 %v6738, %v6739
        %v6741 = vshll.u32 2475754826, %v6735
        %v6742 = vshrl.u32 2131351028, %v6736
        %v6743 = vor.u32 %v6741, %v6742
        %v6744 = vshll.u32 2131351028, %v6735
        %v6745 = vshrl.u32 2102212464, %v6736
        %v6746 = vor.u32 %v6744, %v6745
        %v6747 = vshll.u32 2102212464, %v6735
        %v6748 = vshrl.u32 920167782, %v6736
        %v6749 = vor.u32 %v6747, %v6748
        %v6750 = vshll.u32 920167782, %v6735
        %v6751 = vshrl.u32 1326507024, %v6736
        %v6752 = vor.u32 %v6750, %v6751
        %vm6753 = vcmp.lt.s32.totalorder %v6734, 1
        %vm6754 = vcmp.lt.s32.totalorder %v6734, 2
        %vm6755 = vcmp.lt.s32.totalorder %v6734, 3
        %vm6756 = vcmp.lt.s32.totalorder %v6734, 4
        %v6757 = vsel %vm6753, %v6737, %v6740
        %v6758 = vsel %vm6756, %v6746, 2102212464
        %v6759 = vsel %vm6755, %v6743, %v6758
        %v6760 = vsel %vm6754, %v6757, %v6759
        %v6761 = vsel %vm6753, %v6740, %v6743
        %v6762 = vsel %vm6756, %v6749, 920167782
        %v6763 = vsel %vm6755, %v6746, %v6762
        %v6764 = vsel %vm6754, %v6761, %v6763
        %v6765 = vsel %vm6753, %v6743, %v6746
        %v6766 = vsel %vm6756, %v6752, 1326507024
        %v6767 = vsel %vm6755, %v6749, %v6766
        %v6768 = vsel %vm6754, %v6765, %v6767
        %v6769 = vshll.u32 %v6729, 8
        %v6770 = vmul.u32.u64.compose %v6769, %v6768
        %v6771 = vextract.low.u32 %v6770
        %v6772 = vextract.high.u32 %v6770
        %v6773 = vmul.u32.u64.compose %v6769, %v6764
        %v6774 = vextract.low.u32 %v6773
        %v6775 = vextract.high.u32 %v6773
        %v6776 = vmul.u32 %v6769, %v6760
        %v6777 = vadd.s32 %v6772, %v6774
        %vm6778 = vc.u32 %v6772, %v6774
        %v6779 = vadd.s32 %v6775, 1
        %v6780 = vsel %vm6778, %v6779, %v6775
        %v6781 = vadd.s32 %v6776, %v6780
        %v6782 = vadd.s32 %v6781, 536870912
        %v6783 = vshrl.u32 %v6782, 30
        %v6784 = vshll.u32 %v6783, 30
        %v6785 = vsub.s32 %v6781, %v6784
        %vm6786 = vcmp.lt.s32.totalorder %v6785, 0
        %v6787 = vsub.s32 0, %v6785
        %v6788 = vsel %vm6786, %v6787, %v6785
        %v6789 = vclz %v6788
        %v6790 = vsub.s32 %v6789, 2
        %vm6791 = vcmp.gt.s32.totalorder 0, %v6790
        %v6792 = vsel %vm6791, 0, %v6790
        %v6793 = vsub.s32 32, %v6792
        %v6794 = vshll.u32 %v6785, %v6792
        %v6795 = vshrl.u32 %v6777, %v6793
        %v6796 = vor.u32 %v6794, %v6795
        %v6797 = vsub.s32 4294967266, %v6792
        %v6798 = vadd.s32 %v6797, 127
        %v6799 = vshll.u32 %v6798, 23
        %v6800 = vor.u32 4788187, %v6799
        %v6801 = vand.u32 2147483647, %v6800
        %v6803 = vcvt.s32.f32 %v6796
        %v6804 = vmul.f32 %v6803, %v6801
        %v6805 = vxor.u32 %v6804, 2147483648
        %v6806 = vsel %vm6723, %v6805, %v6804
        %v6807 = vsub.s32 4, %v6783
        %v6808 = vsel %vm6723, %v6807, %v6783
        %v6809 = vsel %vm6722, %v406, %v6806
        %v6810 = vsel %vm6722, 0, %v6808
        %v6811 = vcosq.f32.pop %v6809
        %v6812 = vsinq.f32.pop %v6809
        %vm6813 = vweird.f32 %v406
        %v6814 = vadd.s32 %v6810, 3
        %v6815 = vand.u32 %v6814, 3
        %vm6816 = vcmp.lt.s32.totalorder %v6815, 2
        %vm6817 = vcmp.eq.s32.totalorder %v6815, 0
        %v6818 = vxor.u32 %v6812, 2147483648
        %v6819 = vsel %vm6817, %v6811, %v6818
        %vm6820 = vcmp.eq.s32.totalorder %v6815, 2
        %v6821 = vxor.u32 %v6811, 2147483648
        %v6822 = vsel %vm6820, %v6821, %v6812
        %v6823 = vsel %vm6816, %v6819, %v6822
        %v6824 = vsel %vm6813, nan, %v6823
        %v6825 = vand.u32 2147483647, %v407
        %vm6826 = vcmp.le.f32.partialorder %v6825, 0.7853982
        %vm6827 = vcmp.lt.s32.totalorder %v407, 0
        %v6828 = vand.u32 %v407, 2139095040
        %v6829 = vshrl.u32 %v6828, 23
        %v6830 = vsub.s32 %v6829, 127
        %v6831 = vand.u32 2147483647, %v407
        %v6832 = vand.u32 %v6831, 8388607
        %v6833 = vor.u32 %v6832, 8388608
        %v6834 = vsub.s32 0, %v6833
        %v6835 = vadd.s32 %v6830, 1
        %vm6836 = vcmp.gt.s32.totalorder %v6835, 0
        %v6837 = vsel %vm6836, %v6835, 0
        %v6838 = vshrl.u32 %v6837, 5
        %v6839 = vand.u32 %v6837, 31
        %v6840 = vsub.s32 32, %v6839
        %v6841 = vshrl.u32 683565275, %v6840
        %v6842 = vshll.u32 683565275, %v6839
        %v6843 = vshrl.u32 2475754826, %v6840
        %v6844 = vor.u32 %v6842, %v6843
        %v6845 = vshll.u32 2475754826, %v6839
        %v6846 = vshrl.u32 2131351028, %v6840
        %v6847 = vor.u32 %v6845, %v6846
        %v6848 = vshll.u32 2131351028, %v6839
        %v6849 = vshrl.u32 2102212464, %v6840
        %v6850 = vor.u32 %v6848, %v6849
        %v6851 = vshll.u32 2102212464, %v6839
        %v6852 = vshrl.u32 920167782, %v6840
        %v6853 = vor.u32 %v6851, %v6852
        %v6854 = vshll.u32 920167782, %v6839
        %v6855 = vshrl.u32 1326507024, %v6840
        %v6856 = vor.u32 %v6854, %v6855
        %vm6857 = vcmp.lt.s32.totalorder %v6838, 1
        %vm6858 = vcmp.lt.s32.totalorder %v6838, 2
        %vm6859 = vcmp.lt.s32.totalorder %v6838, 3
        %vm6860 = vcmp.lt.s32.totalorder %v6838, 4
        %v6861 = vsel %vm6857, %v6841, %v6844
        %v6862 = vsel %vm6860, %v6850, 2102212464
        %v6863 = vsel %vm6859, %v6847, %v6862
        %v6864 = vsel %vm6858, %v6861, %v6863
        %v6865 = vsel %vm6857, %v6844, %v6847
        %v6866 = vsel %vm6860, %v6853, 920167782
        %v6867 = vsel %vm6859, %v6850, %v6866
        %v6868 = vsel %vm6858, %v6865, %v6867
        %v6869 = vsel %vm6857, %v6847, %v6850
        %v6870 = vsel %vm6860, %v6856, 1326507024
        %v6871 = vsel %vm6859, %v6853, %v6870
        %v6872 = vsel %vm6858, %v6869, %v6871
        %v6873 = vshll.u32 %v6833, 8
        %v6874 = vmul.u32.u64.compose %v6873, %v6872
        %v6875 = vextract.low.u32 %v6874
        %v6876 = vextract.high.u32 %v6874
        %v6877 = vmul.u32.u64.compose %v6873, %v6868
        %v6878 = vextract.low.u32 %v6877
        %v6879 = vextract.high.u32 %v6877
        %v6880 = vmul.u32 %v6873, %v6864
        %v6881 = vadd.s32 %v6876, %v6878
        %vm6882 = vc.u32 %v6876, %v6878
        %v6883 = vadd.s32 %v6879, 1
        %v6884 = vsel %vm6882, %v6883, %v6879
        %v6885 = vadd.s32 %v6880, %v6884
        %v6886 = vadd.s32 %v6885, 536870912
        %v6887 = vshrl.u32 %v6886, 30
        %v6888 = vshll.u32 %v6887, 30
        %v6889 = vsub.s32 %v6885, %v6888
        %vm6890 = vcmp.lt.s32.totalorder %v6889, 0
        %v6891 = vsub.s32 0, %v6889
        %v6892 = vsel %vm6890, %v6891, %v6889
        %v6893 = vclz %v6892
        %v6894 = vsub.s32 %v6893, 2
        %vm6895 = vcmp.gt.s32.totalorder 0, %v6894
        %v6896 = vsel %vm6895, 0, %v6894
        %v6897 = vsub.s32 32, %v6896
        %v6898 = vshll.u32 %v6889, %v6896
        %v6899 = vshrl.u32 %v6881, %v6897
        %v6900 = vor.u32 %v6898, %v6899
        %v6901 = vsub.s32 4294967266, %v6896
        %v6902 = vadd.s32 %v6901, 127
        %v6903 = vshll.u32 %v6902, 23
        %v6904 = vor.u32 4788187, %v6903
        %v6905 = vand.u32 2147483647, %v6904
        %v6907 = vcvt.s32.f32 %v6900
        %v6908 = vmul.f32 %v6907, %v6905
        %v6909 = vxor.u32 %v6908, 2147483648
        %v6910 = vsel %vm6827, %v6909, %v6908
        %v6911 = vsub.s32 4, %v6887
        %v6912 = vsel %vm6827, %v6911, %v6887
        %v6913 = vsel %vm6826, %v407, %v6910
        %v6914 = vsel %vm6826, 0, %v6912
        %v6915 = vcosq.f32.pop %v6913
        %v6916 = vsinq.f32.pop %v6913
        %vm6917 = vweird.f32 %v407
        %v6918 = vadd.s32 %v6914, 3
        %v6919 = vand.u32 %v6918, 3
        %vm6920 = vcmp.lt.s32.totalorder %v6919, 2
        %vm6921 = vcmp.eq.s32.totalorder %v6919, 0
        %v6922 = vxor.u32 %v6916, 2147483648
        %v6923 = vsel %vm6921, %v6915, %v6922
        %vm6924 = vcmp.eq.s32.totalorder %v6919, 2
        %v6925 = vxor.u32 %v6915, 2147483648
        %v6926 = vsel %vm6924, %v6925, %v6916
        %v6927 = vsel %vm6920, %v6923, %v6926
        %v6928 = vsel %vm6917, nan, %v6927
        %v6929 = vand.u32 2147483647, %v408
        %vm6930 = vcmp.le.f32.partialorder %v6929, 0.7853982
        %vm6931 = vcmp.lt.s32.totalorder %v408, 0
        %v6932 = vand.u32 %v408, 2139095040
        %v6933 = vshrl.u32 %v6932, 23
        %v6934 = vsub.s32 %v6933, 127
        %v6935 = vand.u32 2147483647, %v408
        %v6936 = vand.u32 %v6935, 8388607
        %v6937 = vor.u32 %v6936, 8388608
        %v6938 = vsub.s32 0, %v6937
        %v6939 = vadd.s32 %v6934, 1
        %vm6940 = vcmp.gt.s32.totalorder %v6939, 0
        %v6941 = vsel %vm6940, %v6939, 0
        %v6942 = vshrl.u32 %v6941, 5
        %v6943 = vand.u32 %v6941, 31
        %v6944 = vsub.s32 32, %v6943
        %v6945 = vshrl.u32 683565275, %v6944
        %v6946 = vshll.u32 683565275, %v6943
        %v6947 = vshrl.u32 2475754826, %v6944
        %v6948 = vor.u32 %v6946, %v6947
        %v6949 = vshll.u32 2475754826, %v6943
        %v6950 = vshrl.u32 2131351028, %v6944
        %v6951 = vor.u32 %v6949, %v6950
        %v6952 = vshll.u32 2131351028, %v6943
        %v6953 = vshrl.u32 2102212464, %v6944
        %v6954 = vor.u32 %v6952, %v6953
        %v6955 = vshll.u32 2102212464, %v6943
        %v6956 = vshrl.u32 920167782, %v6944
        %v6957 = vor.u32 %v6955, %v6956
        %v6958 = vshll.u32 920167782, %v6943
        %v6959 = vshrl.u32 1326507024, %v6944
        %v6960 = vor.u32 %v6958, %v6959
        %vm6961 = vcmp.lt.s32.totalorder %v6942, 1
        %vm6962 = vcmp.lt.s32.totalorder %v6942, 2
        %vm6963 = vcmp.lt.s32.totalorder %v6942, 3
        %vm6964 = vcmp.lt.s32.totalorder %v6942, 4
        %v6965 = vsel %vm6961, %v6945, %v6948
        %v6966 = vsel %vm6964, %v6954, 2102212464
        %v6967 = vsel %vm6963, %v6951, %v6966
        %v6968 = vsel %vm6962, %v6965, %v6967
        %v6969 = vsel %vm6961, %v6948, %v6951
        %v6970 = vsel %vm6964, %v6957, 920167782
        %v6971 = vsel %vm6963, %v6954, %v6970
        %v6972 = vsel %vm6962, %v6969, %v6971
        %v6973 = vsel %vm6961, %v6951, %v6954
        %v6974 = vsel %vm6964, %v6960, 1326507024
        %v6975 = vsel %vm6963, %v6957, %v6974
        %v6976 = vsel %vm6962, %v6973, %v6975
        %v6977 = vshll.u32 %v6937, 8
        %v6978 = vmul.u32.u64.compose %v6977, %v6976
        %v6979 = vextract.low.u32 %v6978
        %v6980 = vextract.high.u32 %v6978
        %v6981 = vmul.u32.u64.compose %v6977, %v6972
        %v6982 = vextract.low.u32 %v6981
        %v6983 = vextract.high.u32 %v6981
        %v6984 = vmul.u32 %v6977, %v6968
        %v6985 = vadd.s32 %v6980, %v6982
        %vm6986 = vc.u32 %v6980, %v6982
        %v6987 = vadd.s32 %v6983, 1
        %v6988 = vsel %vm6986, %v6987, %v6983
        %v6989 = vadd.s32 %v6984, %v6988
        %v6990 = vadd.s32 %v6989, 536870912
        %v6991 = vshrl.u32 %v6990, 30
        %v6992 = vshll.u32 %v6991, 30
        %v6993 = vsub.s32 %v6989, %v6992
        %vm6994 = vcmp.lt.s32.totalorder %v6993, 0
        %v6995 = vsub.s32 0, %v6993
        %v6996 = vsel %vm6994, %v6995, %v6993
        %v6997 = vclz %v6996
        %v6998 = vsub.s32 %v6997, 2
        %vm6999 = vcmp.gt.s32.totalorder 0, %v6998
        %v7000 = vsel %vm6999, 0, %v6998
        %v7001 = vsub.s32 32, %v7000
        %v7002 = vshll.u32 %v6993, %v7000
        %v7003 = vshrl.u32 %v6985, %v7001
        %v7004 = vor.u32 %v7002, %v7003
        %v7005 = vsub.s32 4294967266, %v7000
        %v7006 = vadd.s32 %v7005, 127
        %v7007 = vshll.u32 %v7006, 23
        %v7008 = vor.u32 4788187, %v7007
        %v7009 = vand.u32 2147483647, %v7008
        %v7011 = vcvt.s32.f32 %v7004
        %v7012 = vmul.f32 %v7011, %v7009
        %v7013 = vxor.u32 %v7012, 2147483648
        %v7014 = vsel %vm6931, %v7013, %v7012
        %v7015 = vsub.s32 4, %v6991
        %v7016 = vsel %vm6931, %v7015, %v6991
        %v7017 = vsel %vm6930, %v408, %v7014
        %v7018 = vsel %vm6930, 0, %v7016
        %v7019 = vcosq.f32.pop %v7017
        %v7020 = vsinq.f32.pop %v7017
        %vm7021 = vweird.f32 %v408
        %v7022 = vadd.s32 %v7018, 3
        %v7023 = vand.u32 %v7022, 3
        %vm7024 = vcmp.lt.s32.totalorder %v7023, 2
        %vm7025 = vcmp.eq.s32.totalorder %v7023, 0
        %v7026 = vxor.u32 %v7020, 2147483648
        %v7027 = vsel %vm7025, %v7019, %v7026
        %vm7028 = vcmp.eq.s32.totalorder %v7023, 2
        %v7029 = vxor.u32 %v7019, 2147483648
        %v7030 = vsel %vm7028, %v7029, %v7020
        %v7031 = vsel %vm7024, %v7027, %v7030
        %v7032 = vsel %vm7021, nan, %v7031
        %v7033 = vld [vmem:[%s286] sm:$0xff]
        %v7034 = vld [vmem:[%s286 + $0x8] sm:$0xff]
        %v7035 = vld [vmem:[%s286 + $0x10] sm:$0xff]
        %v7036 = vld [vmem:[%s286 + $0x18] sm:$0xff]
        %v7037 = vld [vmem:[%s286 + $0x20] sm:$0xff]
        %v7038 = vld [vmem:[%s286 + $0x28] sm:$0xff]
        %v7039 = vld [vmem:[%s286 + $0x30] sm:$0xff]
        %v7040 = vld [vmem:[%s286 + $0x38] sm:$0xff]
        %v7041 = vld [vmem:[%s286 + $0x40] sm:$0xff]
        %v7042 = vld [vmem:[%s286 + $0x48] sm:$0xff]
        %v7043 = vld [vmem:[%s286 + $0x50] sm:$0xff]
        %v7044 = vld [vmem:[%s286 + $0x58] sm:$0xff]
        %v7045 = vld [vmem:[%s286 + $0x60] sm:$0xff]
        %v7046 = vld [vmem:[%s286 + $0x68] sm:$0xff]
        %v7047 = vld [vmem:[%s286 + $0x70] sm:$0xff]
        %v7048 = vld [vmem:[%s286 + $0x78] sm:$0xff]
        %v7049 = vld [vmem:[%s286 + $0x80] sm:$0xff]
        %v7050 = vld [vmem:[%s286 + $0x88] sm:$0xff]
        %v7051 = vld [vmem:[%s286 + $0x90] sm:$0xff]
        %v7052 = vld [vmem:[%s286 + $0x98] sm:$0xff]
        %v7053 = vld [vmem:[%s286 + $0xa0] sm:$0xff]
        %v7054 = vld [vmem:[%s286 + $0xa8] sm:$0xff]
        %v7055 = vld [vmem:[%s286 + $0xb0] sm:$0xff]
        %v7056 = vld [vmem:[%s286 + $0xb8] sm:$0xff]
        %v7057 = vld [vmem:[%s286 + $0xc0] sm:$0xff]
        %v7058 = vld [vmem:[%s286 + $0xc8] sm:$0xff]
        %v7059 = vld [vmem:[%s286 + $0xd0] sm:$0xff]
        %v7060 = vld [vmem:[%s286 + $0xd8] sm:$0xff]
        %v7061 = vld [vmem:[%s286 + $0xe0] sm:$0xff]
        %v7062 = vld [vmem:[%s286 + $0xe8] sm:$0xff]
        %v7063 = vld [vmem:[%s286 + $0xf0] sm:$0xff]
        %v7064 = vld [vmem:[%s286 + $0xf8] sm:$0xff]
        %v7065 = vld [vmem:[%s295] sm:$0xff]
        %v7066 = vld [vmem:[%s295 + $0x8] sm:$0xff]
        %v7067 = vld [vmem:[%s295 + $0x10] sm:$0xff]
        %v7068 = vld [vmem:[%s295 + $0x18] sm:$0xff]
        %v7069 = vld [vmem:[%s295 + $0x20] sm:$0xff]
        %v7070 = vld [vmem:[%s295 + $0x28] sm:$0xff]
        %v7071 = vld [vmem:[%s295 + $0x30] sm:$0xff]
        %v7072 = vld [vmem:[%s295 + $0x38] sm:$0xff]
        %v7073 = vld [vmem:[%s295 + $0x40] sm:$0xff]
        %v7074 = vld [vmem:[%s295 + $0x48] sm:$0xff]
        %v7075 = vld [vmem:[%s295 + $0x50] sm:$0xff]
        %v7076 = vld [vmem:[%s295 + $0x58] sm:$0xff]
        %v7077 = vld [vmem:[%s295 + $0x60] sm:$0xff]
        %v7078 = vld [vmem:[%s295 + $0x68] sm:$0xff]
        %v7079 = vld [vmem:[%s295 + $0x70] sm:$0xff]
        %v7080 = vld [vmem:[%s295 + $0x78] sm:$0xff]
        %v7081 = vld [vmem:[%s295 + $0x80] sm:$0xff]
        %v7082 = vld [vmem:[%s295 + $0x88] sm:$0xff]
        %v7083 = vld [vmem:[%s295 + $0x90] sm:$0xff]
        %v7084 = vld [vmem:[%s295 + $0x98] sm:$0xff]
        %v7085 = vld [vmem:[%s295 + $0xa0] sm:$0xff]
        %v7086 = vld [vmem:[%s295 + $0xa8] sm:$0xff]
        %v7087 = vld [vmem:[%s295 + $0xb0] sm:$0xff]
        %v7088 = vld [vmem:[%s295 + $0xb8] sm:$0xff]
        %v7089 = vld [vmem:[%s295 + $0xc0] sm:$0xff]
        %v7090 = vld [vmem:[%s295 + $0xc8] sm:$0xff]
        %v7091 = vld [vmem:[%s295 + $0xd0] sm:$0xff]
        %v7092 = vld [vmem:[%s295 + $0xd8] sm:$0xff]
        %v7093 = vld [vmem:[%s295 + $0xe0] sm:$0xff]
        %v7094 = vld [vmem:[%s295 + $0xe8] sm:$0xff]
        %v7095 = vld [vmem:[%s295 + $0xf0] sm:$0xff]
        %v7096 = vld [vmem:[%s295 + $0xf8] sm:$0xff]
        %v7097 = vmul.f32 %v7033, %v511
        %v7098 = vmul.f32 %v7034, %v614
        %v7099 = vmul.f32 %v7035, %v717
        %v7100 = vmul.f32 %v7036, %v820
        %v7101 = vmul.f32 %v7037, %v923
        %v7102 = vmul.f32 %v7038, %v1026
        %v7103 = vmul.f32 %v7039, %v1129
        %v7104 = vmul.f32 %v7040, %v1232
        %v7105 = vmul.f32 %v7041, %v1335
        %v7106 = vmul.f32 %v7042, %v1438
        %v7107 = vmul.f32 %v7043, %v1541
        %v7108 = vmul.f32 %v7044, %v1644
        %v7109 = vmul.f32 %v7045, %v1747
        %v7110 = vmul.f32 %v7046, %v1850
        %v7111 = vmul.f32 %v7047, %v1953
        %v7112 = vmul.f32 %v7048, %v2056
        %v7113 = vmul.f32 %v7049, %v2159
        %v7114 = vmul.f32 %v7050, %v2262
        %v7115 = vmul.f32 %v7051, %v2365
        %v7116 = vmul.f32 %v7052, %v2468
        %v7117 = vmul.f32 %v7053, %v2571
        %v7118 = vmul.f32 %v7054, %v2674
        %v7119 = vmul.f32 %v7055, %v2777
        %v7120 = vmul.f32 %v7056, %v2880
        %v7121 = vmul.f32 %v7057, %v2983
        %v7122 = vmul.f32 %v7058, %v3086
        %v7123 = vmul.f32 %v7059, %v3189
        %v7124 = vmul.f32 %v7060, %v3292
        %v7125 = vmul.f32 %v7061, %v3395
        %v7126 = vmul.f32 %v7062, %v3498
        %v7127 = vmul.f32 %v7063, %v3601
        %v7128 = vmul.f32 %v7064, %v3704
        %v7129 = vmul.f32 %v7065, %v3808
        %v7130 = vmul.f32 %v7066, %v3912
        %v7131 = vmul.f32 %v7067, %v4016
        %v7132 = vmul.f32 %v7068, %v4120
        %v7133 = vmul.f32 %v7069, %v4224
        %v7134 = vmul.f32 %v7070, %v4328
        %v7135 = vmul.f32 %v7071, %v4432
        %v7136 = vmul.f32 %v7072, %v4536
        %v7137 = vmul.f32 %v7073, %v4640
        %v7138 = vmul.f32 %v7074, %v4744
        %v7139 = vmul.f32 %v7075, %v4848
        %v7140 = vmul.f32 %v7076, %v4952
        %v7141 = vmul.f32 %v7077, %v5056
        %v7142 = vmul.f32 %v7078, %v5160
        %v7143 = vmul.f32 %v7079, %v5264
        %v7144 = vmul.f32 %v7080, %v5368
        %v7145 = vmul.f32 %v7081, %v5472
        %v7146 = vmul.f32 %v7082, %v5576
        %v7147 = vmul.f32 %v7083, %v5680
        %v7148 = vmul.f32 %v7084, %v5784
        %v7149 = vmul.f32 %v7085, %v5888
        %v7150 = vmul.f32 %v7086, %v5992
        %v7151 = vmul.f32 %v7087, %v6096
        %v7152 = vmul.f32 %v7088, %v6200
        %v7153 = vmul.f32 %v7089, %v6304
        %v7154 = vmul.f32 %v7090, %v6408
        %v7155 = vmul.f32 %v7091, %v6512
        %v7156 = vmul.f32 %v7092, %v6616
        %v7157 = vmul.f32 %v7093, %v6720
        %v7158 = vmul.f32 %v7094, %v6824
        %v7159 = vmul.f32 %v7095, %v6928
        %v7160 = vmul.f32 %v7096, %v7032
        %v7161 = vsub.f32 %v7097, %v7129
        %v7162 = vsub.f32 %v7098, %v7130
        %v7163 = vsub.f32 %v7099, %v7131
        %v7164 = vsub.f32 %v7100, %v7132
        %v7165 = vsub.f32 %v7101, %v7133
        %v7166 = vsub.f32 %v7102, %v7134
        %v7167 = vsub.f32 %v7103, %v7135
        %v7168 = vsub.f32 %v7104, %v7136
        %v7169 = vsub.f32 %v7105, %v7137
        %v7170 = vsub.f32 %v7106, %v7138
        %v7171 = vsub.f32 %v7107, %v7139
        %v7172 = vsub.f32 %v7108, %v7140
        %v7173 = vsub.f32 %v7109, %v7141
        %v7174 = vsub.f32 %v7110, %v7142
        %v7175 = vsub.f32 %v7111, %v7143
        %v7176 = vsub.f32 %v7112, %v7144
        %v7177 = vsub.f32 %v7113, %v7145
        %v7178 = vsub.f32 %v7114, %v7146
        %v7179 = vsub.f32 %v7115, %v7147
        %v7180 = vsub.f32 %v7116, %v7148
        %v7181 = vsub.f32 %v7117, %v7149
        %v7182 = vsub.f32 %v7118, %v7150
        %v7183 = vsub.f32 %v7119, %v7151
        %v7184 = vsub.f32 %v7120, %v7152
        %v7185 = vsub.f32 %v7121, %v7153
        %v7186 = vsub.f32 %v7122, %v7154
        %v7187 = vsub.f32 %v7123, %v7155
        %v7188 = vsub.f32 %v7124, %v7156
        %v7189 = vsub.f32 %v7125, %v7157
        %v7190 = vsub.f32 %v7126, %v7158
        %v7191 = vsub.f32 %v7127, %v7159
        %v7192 = vsub.f32 %v7128, %v7160
        %7193 = vst [vmem:[%s327] sm:$0xff] %v7161
        %7194 = vst [vmem:[%s327 + $0x8] sm:$0xff] %v7162
        %7195 = vst [vmem:[%s327 + $0x10] sm:$0xff] %v7163
        %7196 = vst [vmem:[%s327 + $0x18] sm:$0xff] %v7164
        %7197 = vst [vmem:[%s327 + $0x20] sm:$0xff] %v7165
        %7198 = vst [vmem:[%s327 + $0x28] sm:$0xff] %v7166
        %7199 = vst [vmem:[%s327 + $0x30] sm:$0xff] %v7167
        %7200 = vst [vmem:[%s327 + $0x38] sm:$0xff] %v7168
        %7201 = vst [vmem:[%s327 + $0x40] sm:$0xff] %v7169
        %7202 = vst [vmem:[%s327 + $0x48] sm:$0xff] %v7170
        %7203 = vst [vmem:[%s327 + $0x50] sm:$0xff] %v7171
        %7204 = vst [vmem:[%s327 + $0x58] sm:$0xff] %v7172
        %7205 = vst [vmem:[%s327 + $0x60] sm:$0xff] %v7173
        %7206 = vst [vmem:[%s327 + $0x68] sm:$0xff] %v7174
        %7207 = vst [vmem:[%s327 + $0x70] sm:$0xff] %v7175
        %7208 = vst [vmem:[%s327 + $0x78] sm:$0xff] %v7176
        %7209 = vst [vmem:[%s327 + $0x80] sm:$0xff] %v7177
        %7210 = vst [vmem:[%s327 + $0x88] sm:$0xff] %v7178
        %7211 = vst [vmem:[%s327 + $0x90] sm:$0xff] %v7179
        %7212 = vst [vmem:[%s327 + $0x98] sm:$0xff] %v7180
        %7213 = vst [vmem:[%s327 + $0xa0] sm:$0xff] %v7181
        %7214 = vst [vmem:[%s327 + $0xa8] sm:$0xff] %v7182
        %7215 = vst [vmem:[%s327 + $0xb0] sm:$0xff] %v7183
        %7216 = vst [vmem:[%s327 + $0xb8] sm:$0xff] %v7184
        %7217 = vst [vmem:[%s327 + $0xc0] sm:$0xff] %v7185
        %7218 = vst [vmem:[%s327 + $0xc8] sm:$0xff] %v7186
        %7219 = vst [vmem:[%s327 + $0xd0] sm:$0xff] %v7187
        %7220 = vst [vmem:[%s327 + $0xd8] sm:$0xff] %v7188
        %7221 = vst [vmem:[%s327 + $0xe0] sm:$0xff] %v7189
        %7222 = vst [vmem:[%s327 + $0xe8] sm:$0xff] %v7190
        %7223 = vst [vmem:[%s327 + $0xf0] sm:$0xff] %v7191
        %7224 = vst [vmem:[%s327 + $0xf8] sm:$0xff] %v7192
        %v7225 = vmul.f32 %v7033, %v3808
        %v7226 = vmul.f32 %v7034, %v3912
        %v7227 = vmul.f32 %v7035, %v4016
        %v7228 = vmul.f32 %v7036, %v4120
        %v7229 = vmul.f32 %v7037, %v4224
        %v7230 = vmul.f32 %v7038, %v4328
        %v7231 = vmul.f32 %v7039, %v4432
        %v7232 = vmul.f32 %v7040, %v4536
        %v7233 = vmul.f32 %v7041, %v4640
        %v7234 = vmul.f32 %v7042, %v4744
        %v7235 = vmul.f32 %v7043, %v4848
        %v7236 = vmul.f32 %v7044, %v4952
        %v7237 = vmul.f32 %v7045, %v5056
        %v7238 = vmul.f32 %v7046, %v5160
        %v7239 = vmul.f32 %v7047, %v5264
        %v7240 = vmul.f32 %v7048, %v5368
        %v7241 = vmul.f32 %v7049, %v5472
        %v7242 = vmul.f32 %v7050, %v5576
        %v7243 = vmul.f32 %v7051, %v5680
        %v7244 = vmul.f32 %v7052, %v5784
        %v7245 = vmul.f32 %v7053, %v5888
        %v7246 = vmul.f32 %v7054, %v5992
        %v7247 = vmul.f32 %v7055, %v6096
        %v7248 = vmul.f32 %v7056, %v6200
        %v7249 = vmul.f32 %v7057, %v6304
        %v7250 = vmul.f32 %v7058, %v6408
        %v7251 = vmul.f32 %v7059, %v6512
        %v7252 = vmul.f32 %v7060, %v6616
        %v7253 = vmul.f32 %v7061, %v6720
        %v7254 = vmul.f32 %v7062, %v6824
        %v7255 = vmul.f32 %v7063, %v6928
        %v7256 = vmul.f32 %v7064, %v7032
        %v7257 = vmul.f32 %v7065, %v511
        %v7258 = vmul.f32 %v7066, %v614
        %v7259 = vmul.f32 %v7067, %v717
        %v7260 = vmul.f32 %v7068, %v820
        %v7261 = vmul.f32 %v7069, %v923
        %v7262 = vmul.f32 %v7070, %v1026
        %v7263 = vmul.f32 %v7071, %v1129
        %v7264 = vmul.f32 %v7072, %v1232
        %v7265 = vmul.f32 %v7073, %v1335
        %v7266 = vmul.f32 %v7074, %v1438
        %v7267 = vmul.f32 %v7075, %v1541
        %v7268 = vmul.f32 %v7076, %v1644
        %v7269 = vmul.f32 %v7077, %v1747
        %v7270 = vmul.f32 %v7078, %v1850
        %v7271 = vmul.f32 %v7079, %v1953
        %v7272 = vmul.f32 %v7080, %v2056
        %v7273 = vmul.f32 %v7081, %v2159
        %v7274 = vmul.f32 %v7082, %v2262
        %v7275 = vmul.f32 %v7083, %v2365
        %v7276 = vmul.f32 %v7084, %v2468
        %v7277 = vmul.f32 %v7085, %v2571
        %v7278 = vmul.f32 %v7086, %v2674
        %v7279 = vmul.f32 %v7087, %v2777
        %v7280 = vmul.f32 %v7088, %v2880
        %v7281 = vmul.f32 %v7089, %v2983
        %v7282 = vmul.f32 %v7090, %v3086
        %v7283 = vmul.f32 %v7091, %v3189
        %v7284 = vmul.f32 %v7092, %v3292
        %v7285 = vmul.f32 %v7093, %v3395
        %v7286 = vmul.f32 %v7094, %v3498
        %v7287 = vmul.f32 %v7095, %v3601
        %v7288 = vmul.f32 %v7096, %v3704
        %v7289 = vadd.f32 %v7225, %v7257
        %v7290 = vadd.f32 %v7226, %v7258
        %v7291 = vadd.f32 %v7227, %v7259
        %v7292 = vadd.f32 %v7228, %v7260
        %v7293 = vadd.f32 %v7229, %v7261
        %v7294 = vadd.f32 %v7230, %v7262
        %v7295 = vadd.f32 %v7231, %v7263
        %v7296 = vadd.f32 %v7232, %v7264
        %v7297 = vadd.f32 %v7233, %v7265
        %v7298 = vadd.f32 %v7234, %v7266
        %v7299 = vadd.f32 %v7235, %v7267
        %v7300 = vadd.f32 %v7236, %v7268
        %v7301 = vadd.f32 %v7237, %v7269
        %v7302 = vadd.f32 %v7238, %v7270
        %v7303 = vadd.f32 %v7239, %v7271
        %v7304 = vadd.f32 %v7240, %v7272
        %v7305 = vadd.f32 %v7241, %v7273
        %v7306 = vadd.f32 %v7242, %v7274
        %v7307 = vadd.f32 %v7243, %v7275
        %v7308 = vadd.f32 %v7244, %v7276
        %v7309 = vadd.f32 %v7245, %v7277
        %v7310 = vadd.f32 %v7246, %v7278
        %v7311 = vadd.f32 %v7247, %v7279
        %v7312 = vadd.f32 %v7248, %v7280
        %v7313 = vadd.f32 %v7249, %v7281
        %v7314 = vadd.f32 %v7250, %v7282
        %v7315 = vadd.f32 %v7251, %v7283
        %v7316 = vadd.f32 %v7252, %v7284
        %v7317 = vadd.f32 %v7253, %v7285
        %v7318 = vadd.f32 %v7254, %v7286
        %v7319 = vadd.f32 %v7255, %v7287
        %v7320 = vadd.f32 %v7256, %v7288
        %7321 = vst [vmem:[%s334] sm:$0xff] %v7289
        %7322 = vst [vmem:[%s334 + $0x8] sm:$0xff] %v7290
        %7323 = vst [vmem:[%s334 + $0x10] sm:$0xff] %v7291
        %7324 = vst [vmem:[%s334 + $0x18] sm:$0xff] %v7292
        %7325 = vst [vmem:[%s334 + $0x20] sm:$0xff] %v7293
        %7326 = vst [vmem:[%s334 + $0x28] sm:$0xff] %v7294
        %7327 = vst [vmem:[%s334 + $0x30] sm:$0xff] %v7295
        %7328 = vst [vmem:[%s334 + $0x38] sm:$0xff] %v7296
        %7329 = vst [vmem:[%s334 + $0x40] sm:$0xff] %v7297
        %7330 = vst [vmem:[%s334 + $0x48] sm:$0xff] %v7298
        %7331 = vst [vmem:[%s334 + $0x50] sm:$0xff] %v7299
        %7332 = vst [vmem:[%s334 + $0x58] sm:$0xff] %v7300
        %7333 = vst [vmem:[%s334 + $0x60] sm:$0xff] %v7301
        %7334 = vst [vmem:[%s334 + $0x68] sm:$0xff] %v7302
        %7335 = vst [vmem:[%s334 + $0x70] sm:$0xff] %v7303
        %7336 = vst [vmem:[%s334 + $0x78] sm:$0xff] %v7304
        %7337 = vst [vmem:[%s334 + $0x80] sm:$0xff] %v7305
        %7338 = vst [vmem:[%s334 + $0x88] sm:$0xff] %v7306
        %7339 = vst [vmem:[%s334 + $0x90] sm:$0xff] %v7307
        %7340 = vst [vmem:[%s334 + $0x98] sm:$0xff] %v7308
        %7341 = vst [vmem:[%s334 + $0xa0] sm:$0xff] %v7309
        %7342 = vst [vmem:[%s334 + $0xa8] sm:$0xff] %v7310
        %7343 = vst [vmem:[%s334 + $0xb0] sm:$0xff] %v7311
        %7344 = vst [vmem:[%s334 + $0xb8] sm:$0xff] %v7312
        %7345 = vst [vmem:[%s334 + $0xc0] sm:$0xff] %v7313
        %7346 = vst [vmem:[%s334 + $0xc8] sm:$0xff] %v7314
        %7347 = vst [vmem:[%s334 + $0xd0] sm:$0xff] %v7315
        %7348 = vst [vmem:[%s334 + $0xd8] sm:$0xff] %v7316
        %7349 = vst [vmem:[%s334 + $0xe0] sm:$0xff] %v7317
        %7350 = vst [vmem:[%s334 + $0xe8] sm:$0xff] %v7318
        %7351 = vst [vmem:[%s334 + $0xf0] sm:$0xff] %v7319
        %7352 = vst [vmem:[%s334 + $0xf8] sm:$0xff] %v7320
        %s7353 = sand.u32 %s134, 1
        %s7354 = scalar_lea.sflag [#allocation4], %s7353
        %s7355 = sand.u32 %s134, 1
        %s7356 = smul.addr %s7355, 256
        %s7357 = scalar_lea.vmem [#allocation8], %s7356
        %s7358 = sand.u32 %s162, 1
        %s7359 = scalar_lea.sflag [#allocation10], %s7358
        %s7360 = sand.u32 %s162, 1
        %s7361 = smul.addr %s7360, 256
        %s7362 = scalar_lea.vmem [#allocation9], %s7361
        // Predicated region
        $region45: #{tpu_custom_call.1} parent=31 // pred_check
          %p7363 = pneg %p144
        $region46: #{tpu_custom_call.1} parent=31 // pred_check_branch
          %7365 = sbr.rel (%p7363) target = $region48
        $region47: #{tpu_custom_call.1} parent=31 // pred_region
          %s7366 = smul.u32 16, %s32
          %s7367 = smul.u32 2, %s33
          %s7369 = ssub.s32 4096, 4096
          %7370 = vsyncadd %s7354, %s7369
          %s7371 = smul.addr %s7366, 2
          %s7372 = sadd.s32 %s7367, %s7371
          %s7373 = smul.addr %s7372, 128
          %s7374 = scalar_lea.hbm %s3, %s7373
          %s7375 = sshll.u32 %s7357, 4
          %s7376 = int_to_ptr.vmem [resolvable:$true] %s7375
          %7381 = dma.vmem_to_hbm [thread:$0]  %s7376, 4096, %s7374, %s7354, 256, 256, 16
        $region48: #{tpu_custom_call.1} parent=31 // pred_fallthru
          _
        // Predicated region
        $region49: #{tpu_custom_call.1} parent=31 // pred_check
          %p7382 = pneg %p172
        $region50: #{tpu_custom_call.1} parent=31 // pred_check_branch
          %7384 = sbr.rel (%p7382) target = $region52
        $region51: #{tpu_custom_call.1} parent=31 // pred_region
          %s7385 = smul.u32 16, %s32
          %s7386 = smul.u32 2, %s33
          %s7388 = ssub.s32 4096, 4096
          %7389 = vsyncadd %s7359, %s7388
          %s7390 = smul.addr %s7385, 2
          %s7391 = sadd.s32 %s7386, %s7390
          %s7392 = smul.addr %s7391, 128
          %s7393 = scalar_lea.hbm %s4, %s7392
          %s7394 = sshll.u32 %s7362, 4
          %s7395 = int_to_ptr.vmem [resolvable:$true] %s7394
          %7400 = dma.vmem_to_hbm [thread:$0]  %s7395, 4096, %s7393, %s7359, 256, 256, 16
        $region52: #{tpu_custom_call.1} parent=31 // pred_fallthru
          _
      $region32: #{tpu_custom_call.1} parent=5 // pred_fallthru
        _
      %p7401 = scmp.le.s32.totalorder 2, %s23
      // Predicated region
      $region53: #{tpu_custom_call.1} parent=5 // pred_check
        %p7402 = pneg %p7401
      $region54: #{tpu_custom_call.1} parent=5 // pred_check_branch
        %7404 = sbr.rel (%p7402) target = $region56
      $region55: #{tpu_custom_call.1} parent=5 // pred_region
        %s7405 = ssub.s32 %s23, 2
        // Predicated region
        $region57: #{tpu_custom_call.1} parent=55 // pred_check
          %p7406 = pneg %p150
        $region58: #{tpu_custom_call.1} parent=55 // pred_check_branch
          %7408 = sbr.rel (%p7406) target = $region60
        $region59: #{tpu_custom_call.1} parent=55 // pred_region
          %s7409 = sand.u32 %s135, 1
          %s7410 = scalar_lea.sflag [#allocation4], %s7409
          %s7411 = sand.u32 %s135, 1
          %s7412 = smul.addr %s7411, 256
          %s7413 = scalar_lea.vmem [#allocation8], %s7412
          %7414 = dma.done %s7410, 4096
        $region60: #{tpu_custom_call.1} parent=55 // pred_fallthru
          _
        // Predicated region
        $region61: #{tpu_custom_call.1} parent=55 // pred_check
          %p7415 = pneg %p178
        $region62: #{tpu_custom_call.1} parent=55 // pred_check_branch
          %7417 = sbr.rel (%p7415) target = $region64
        $region63: #{tpu_custom_call.1} parent=55 // pred_region
          %s7418 = sand.u32 %s163, 1
          %s7419 = scalar_lea.sflag [#allocation10], %s7418
          %s7420 = sand.u32 %s163, 1
          %s7421 = smul.addr %s7420, 256
          %s7422 = scalar_lea.vmem [#allocation9], %s7421
          %7423 = dma.done %s7419, 4096
        $region64: #{tpu_custom_call.1} parent=55 // pred_fallthru
          _
      $region56: #{tpu_custom_call.1} parent=5 // pred_fallthru
        _
    $region6: #{tpu_custom_call.1} parent=1 // loop_footer
      %s27 = sadd.s32 1, %s23
    $region7: #{tpu_custom_call.1} parent=1 // loop_footer_branch
      %22 = sbr.rel target = $region3
    $region8: #{tpu_custom_call.1} parent=1 // loop_exit
      _
    %7424 = vsyncpa [#allocation3], 1
    %s7425 = scalar_lea.sflag [#allocation3], 1
    %7426 = vsyncpa %s7425, 1
    %7427 = vsyncpa [#allocation6], 1
    %s7428 = scalar_lea.sflag [#allocation6], 1
    %7429 = vsyncpa %s7428, 1
    %7430 = vsyncpa [#allocation4], 1
    %s7431 = scalar_lea.sflag [#allocation4], 1
    %7432 = vsyncpa %s7431, 1
    %7433 = vsyncpa [#allocation10], 1
    %s7434 = scalar_lea.sflag [#allocation10], 1
    %7435 = vsyncpa %s7434, 1

</llo_original>
